<compile_context>
chip_gen: v7x
topology: tpu7x:2x2x1
jax: 0.10.0
libtpu: 0.0.40
codegen_flags: <defaults>
</compile_context>

<pallas_src>
import math

import jax
import jax.numpy as jnp
import numpy as np
from jax.experimental import pallas as pl
from jax.experimental.pallas import tpu as pltpu

# ----------------------- small synthetic config -----------------------------
B = 2             # batch
S_T = 8           # text sequence length
S_F = 4           # number of video frames
H = 32            # hidden size
N_HEADS = 2
D_HEAD = H // N_HEADS
FFN = 4 * H       # intermediate size
N_LAYERS = 4
FUSION_LAYER = N_LAYERS // 2     # bert_config.fusion_layer = num_hidden_layers // 2
N_XLAYERS = N_LAYERS - FUSION_LAYER
VOCAB = 50
N_TYPES = 2
MAX_POS = 16
N_CLASSES = 10    # stands in for len(CATEGORY_ID_LIST)
LN_EPS = 1e-12
N_VEC = 9         # per-layer packed H-wide rows: bq bk bv bo ln1_g ln1_b b2 ln2_g ln2_b
N_XVEC = 6        # per-fusion-layer rows:        cbq cbk cbv cbo lnc_g lnc_b


# ----------------------- shared math helpers (kernel + reference) -----------
def _mm(a, b):
    # bf16 MXU inputs, f32 accumulation (v5e/v6e/v7x)
    return jnp.dot(a.astype(jnp.bfloat16), b.astype(jnp.bfloat16),
                   preferred_element_type=jnp.float32)


def _bmm_qk(q, k):
    return jnp.einsum('bqd,bkd->bqk', q.astype(jnp.bfloat16),
                      k.astype(jnp.bfloat16),
                      preferred_element_type=jnp.float32)


def _bmm_pv(p, v):
    return jnp.einsum('bqk,bkd->bqd', p.astype(jnp.bfloat16),
                      v.astype(jnp.bfloat16),
                      preferred_element_type=jnp.float32)


def _layer_norm(x, g, b):
    mu = jnp.mean(x, axis=-1, keepdims=True)
    var = jnp.mean(jnp.square(x - mu), axis=-1, keepdims=True)
    return (x - mu) * jax.lax.rsqrt(var + LN_EPS) * g + b


def _ffn(x, w1, b1, w2, b2):
    bsz, s, _ = x.shape
    x2 = x.reshape(bsz * s, H)
    h1 = jax.nn.gelu(_mm(x2, w1) + b1, approximate=True)
    return (_mm(h1, w2) + b2).reshape(bsz, s, H)


def _head_math(hidden, label2d, wc, bc):
    pooled = jnp.mean(hidden, axis=1)                           # torch.mean(dim=1)
    logits = _mm(pooled, wc) + bc                               # [B, C]
    ncls = logits.shape[1]
    idx = jax.lax.broadcasted_iota(jnp.int32, logits.shape, 1)
    onehot = (idx == label2d).astype(jnp.float32)
    mx = jnp.max(logits, axis=1, keepdims=True)
    lse = jnp.log(jnp.sum(jnp.exp(logits - mx), axis=1, keepdims=True)) + mx
    picked = jnp.sum(logits * onehot, axis=1, keepdims=True)
    loss = jnp.mean(lse - picked)                               # CrossEntropyLoss(mean)
    pred2d = jnp.min(jnp.where(logits == mx, idx, ncls),
                     axis=1, keepdims=True)                     # argmax (first max)
    acc = jnp.mean((pred2d == label2d).astype(jnp.float32))
    return loss, acc, pred2d


# ----------------------- kernel-side attention (fused projections) ----------
def _softmax_rows(s):
    s = s - jnp.max(s, axis=-1, keepdims=True)
    p = jnp.exp(s)
    # EUP approximate reciprocal; divergence from exact division is covered by
    # the documented rtol=2e-2 loss tolerance.
    return p * pl.reciprocal(jnp.sum(p, axis=-1, keepdims=True), approx=True)


def _mha_core(q, k, v, bias):
    """Per-head scores / softmax / PV (intrinsically per-head batched matmuls)."""
    scale = 1.0 / math.sqrt(D_HEAD)
    ctx = []
    for h in range(N_HEADS):                                    # static, small
        sl = slice(h * D_HEAD, (h + 1) * D_HEAD)
        p = _softmax_rows(_bmm_qk(q[:, :, sl], k[:, :, sl]) * scale + bias)
        ctx.append(_bmm_pv(p, v[:, :, sl]))
    # lane-contiguous head concat -> single full-K output projection afterwards
    return jnp.concatenate(ctx, axis=-1)                        # [B, Sq, H]


def _self_attention(x, bias, w_qkv, w_o, vec):
    """x:[B,Sq,H] f32; w_qkv:[H,3H] bf16; w_o:[H,H] bf16; vec rows 0..3 = bq,bk,bv,bo."""
    bsz, sq, _ = x.shape
    x_bf = x.reshape(bsz * sq, H).astype(jnp.bfloat16)          # single bf16 cast
    qkv = jnp.dot(x_bf, w_qkv, preferred_element_type=jnp.float32)   # fused lane-dense QKV
    q = (qkv[:, 0 * H:1 * H] + vec[0:1]).reshape(bsz, sq, H)
    k = (qkv[:, 1 * H:2 * H] + vec[1:2]).reshape(bsz, sq, H)
    v = (qkv[:, 2 * H:3 * H] + vec[2:3]).reshape(bsz, sq, H)
    ctx = _mha_core(q, k, v, bias)
    out = _mm(ctx.reshape(bsz * sq, H), w_o) + vec[3:4]          # single [H,H] O proj
    return out.reshape(bsz, sq, H)


def _cross_attention(x, y_bf, bias, w_q, w_kv, w_o, xvec):
    """x:[B,St,H] f32; y_bf:[B*Sf,H] bf16 (pre-cast once); w_kv:[H,2H] bf16."""
    bsz, sq, _ = x.shape
    x_bf = x.reshape(bsz * sq, H).astype(jnp.bfloat16)
    q = (jnp.dot(x_bf, w_q, preferred_element_type=jnp.float32)
         + xvec[0:1]).reshape(bsz, sq, H)
    kv = jnp.dot(y_bf, w_kv, preferred_element_type=jnp.float32)     # fused K/V proj
    k = (kv[:, 0:H] + xvec[1:2]).reshape(bsz, S_F, H)
    v = (kv[:, H:2 * H] + xvec[2:3]).reshape(bsz, S_F, H)
    ctx = _mha_core(q, k, v, bias)
    out = _mm(ctx.reshape(bsz * sq, H), w_o) + xvec[3:4]
    return out.reshape(bsz, sq, H)


# ----------------------- fused Pallas kernel ---------------------------------
def _albef_kernel(label_ref, x0_ref, y_ref, tbias_ref, fbias_ref,
                  w_qkv_ref, w_o_ref, w_ff1_ref, b_ff1_ref, w_ff2_ref,
                  vec_ref, xw_q_ref, xw_kv_ref, xw_o_ref, xvec_ref,
                  head_ref, out_ref):
    tbias = tbias_ref[...]                                       # [B, 1, S_T]
    fbias = fbias_ref[...]                                       # [B, 1, S_F]
    # Frame activations: cast to bf16 once, reused by every fusion layer's K/V matmul.
    y_bf = y_ref[...].reshape(B * S_F, H).astype(jnp.bfloat16)
    x = x0_ref[...]                                              # resident text activations (f32)

    for li in range(N_LAYERS):                                   # static layer loop (grid collapsed)
        vec = vec_ref[li]                                        # lane-dense [N_VEC, H] bias/LN slab
        # ---- self-attention + LN1 (weights indexed at use site) -------------
        attn = _self_attention(x, tbias, w_qkv_ref[li], w_o_ref[li], vec)
        x = _layer_norm(x + attn, vec[4:5], vec[5:6])
        # ---- ALBEF cross-attention over frames + LNc (fusion layers only;
        #      separate stack -> no zero-weight storage for layers < FUSION_LAYER)
        if li >= FUSION_LAYER:
            xi = li - FUSION_LAYER
            xvec = xvec_ref[xi]
            xattn = _cross_attention(x, y_bf, fbias, xw_q_ref[xi],
                                     xw_kv_ref[xi], xw_o_ref[xi], xvec)
            x = _layer_norm(x + xattn, xvec[4:5], xvec[5:6])
        # ---- FFN + LN2 -------------------------------------------------------
        ff = _ffn(x, w_ff1_ref[li], b_ff1_ref[li], w_ff2_ref[li], vec[6:7])
        x = _layer_norm(x + ff, vec[7:8], vec[8:9])

    # ---- mean-pool + classifier + CE loss + argmax accuracy ------------------
    # Note: mean over all S_T positions (incl. pad) == torch.mean(dim=1) in the spec.
    head = head_ref[...]                                         # [H+1, C]: rows 0..H-1 = W, row H = b
    row1 = jax.lax.broadcasted_iota(jnp.int32, (B, 1), 0)
    label2d = jnp.zeros((B, 1), jnp.int32)
    for b in range(B):                                           # label scalars live in SMEM
        label2d = jnp.where(row1 == b, label_ref[b], label2d)
    loss, acc, pred2d = _head_math(x, label2d, head[0:H, :], head[H:H + 1, :])
    lane = jax.lax.broadcasted_iota(jnp.int32, (B, 128), 1)
    out_ref[...] = jnp.where(lane == 0, pred2d.astype(jnp.float32),
                   jnp.where(lane == 1, loss,
                   jnp.where(lane == 2, acc, 0.0)))              # lane-dense (B,128)


# ----------------------- parameters (deterministic synthetic init) ----------
def init_params(key):
    counter = [0]

    def nk():
        counter[0] += 1
        return jax.random.fold_in(key, counter[0])

    def dense(din, dout):
        w = 0.02 * jax.random.normal(nk(), (din, dout), jnp.float32)
        b = 0.02 * jax.random.normal(nk(), (1, dout), jnp.float32)
        return w, b

    ones = lambda: jnp.ones((1, H), jnp.float32)
    zeros = lambda: jnp.zeros((1, H), jnp.float32)

    p = {}
    p['word_emb'] = 0.02 * jax.random.normal(nk(), (VOCAB, H), jnp.float32)
    p['pos_emb'] = 0.02 * jax.random.normal(nk(), (MAX_POS, H), jnp.float32)
    p['type_emb'] = 0.02 * jax.random.normal(nk(), (N_TYPES, H), jnp.float32)
    p['emb_ln_g'], p['emb_ln_b'] = ones(), zeros()
    p['frame_w'], p['frame_b'] = dense(H, H)
    p['frame_ln_g'], p['frame_ln_b'] = ones(), zeros()

    layers = []
    for li in range(N_LAYERS):
        lp = {}
        lp['wq'], lp['bq'] = dense(H, H)
        lp['wk'], lp['bk'] = dense(H, H)
        lp['wv'], lp['bv'] = dense(H, H)
        lp['wo'], lp['bo'] = dense(H, H)
        lp['ln1_g'], lp['ln1_b'] = ones(), zeros()
        if li >= FUSION_LAYER:
            lp['cwq'], lp['cbq'] = dense(H, H)
            lp['cwk'], lp['cbk'] = dense(H, H)
            lp['cwv'], lp['cbv'] = dense(H, H)
            lp['cwo'], lp['cbo'] = dense(H, H)
            lp['lnc_g'], lp['lnc_b'] = ones(), zeros()
        lp['w1'], lp['b1'] = dense(H, FFN)
        lp['w2'], lp['b2'] = dense(FFN, H)
        lp['ln2_g'], lp['ln2_b'] = ones(), zeros()
        layers.append(lp)
    p['layers'] = layers
    p['cls_w'], p['cls_b'] = dense(H, N_CLASSES)
    return p


# ----------------------- packing into layer-stacked kernel operands ---------
def pack_params(params):
    w_qkv, w_o, w_ff1, b_ff1, w_ff2, vecs = [], [], [], [], [], []
    xw_q, xw_kv, xw_o, xvecs = [], [], [], []
    for li in range(N_LAYERS):
        lp = params['layers'][li]
        # fused lane-dense QKV: columns [0:H]=Wq [H:2H]=Wk [2H:3H]=Wv
        w_qkv.append(jnp.concatenate([lp['wq'], lp['wk'], lp['wv']], axis=1))
        w_o.append(lp['wo'])                                    # full [H, H] O projection
        w_ff1.append(lp['w1'])
        b_ff1.append(lp['b1'])
        w_ff2.append(lp['w2'])
        # lane-dense bias/LN slab: bq bk bv bo ln1_g ln1_b b2 ln2_g ln2_b
        vecs.append(jnp.concatenate([lp['bq'], lp['bk'], lp['bv'], lp['bo'],
                                     lp['ln1_g'], lp['ln1_b'],
                                     lp['b2'], lp['ln2_g'], lp['ln2_b']], axis=0))
        if li >= FUSION_LAYER:                                  # cross stack only for fusion layers
            xw_q.append(lp['cwq'])
            xw_kv.append(jnp.concatenate([lp['cwk'], lp['cwv']], axis=1))  # fused [H, 2H]
            xw_o.append(lp['cwo'])
            xvecs.append(jnp.concatenate([lp['cbq'], lp['cbk'], lp['cbv'],
                                          lp['cbo'], lp['lnc_g'], lp['lnc_b']], axis=0))
    head = jnp.concatenate([params['cls_w'], params['cls_b']], axis=0)   # [H+1, C]
    return {
        'w_qkv': jnp.stack(w_qkv).astype(jnp.bfloat16),   # [L, H, 3H]
        'w_o': jnp.stack(w_o).astype(jnp.bfloat16),       # [L, H, H]
        'w_ff1': jnp.stack(w_ff1).astype(jnp.bfloat16),   # [L, H, FFN]
        'b_ff1': jnp.stack(b_ff1),                        # [L, 1, FFN]   f32
        'w_ff2': jnp.stack(w_ff2).astype(jnp.bfloat16),   # [L, FFN, H]
        'vecs': jnp.stack(vecs),                          # [L, N_VEC, H] f32
        'xw_q': jnp.stack(xw_q).astype(jnp.bfloat16),     # [Lx, H, H]
        'xw_kv': jnp.stack(xw_kv).astype(jnp.bfloat16),   # [Lx, H, 2H]
        'xw_o': jnp.stack(xw_o).astype(jnp.bfloat16),     # [Lx, H, H]
        'xvecs': jnp.stack(xvecs),                        # [Lx, N_XVEC, H] f32
        'head': head,                                     # [H+1, C]      f32
    }


# ----------------------- embeddings / frame projection (glue) ---------------
def _embed(params, text_input, text_token_type_ids, frame_input):
    we = params['word_emb'][text_input]                         # gather (glue)
    pe = params['pos_emb'][:S_T][None, :, :]
    te = params['type_emb'][text_token_type_ids]
    x = _layer_norm(we + pe + te, params['emb_ln_g'], params['emb_ln_b'])
    y = jnp.einsum('bfd,dh->bfh', frame_input, params['frame_w']) + params['frame_b']
    y = _layer_norm(y, params['frame_ln_g'], params['frame_ln_b'])
    return x, y


def _additive_mask(mask):
    # hoisted out of attention: (1 - mask) * -1e4, computed once per forward
    return (1.0 - mask.astype(jnp.float32))[:, None, :] * -10000.0


# ----------------------- forward (single fused pallas_call, no grid) ---------
def albef_forward(params, frame_input, frame_mask, text_input, text_mask,
                  text_token_type_ids, label):
    x0, y = _embed(params, text_input, text_token_type_ids, frame_input)
    tbias = _additive_mask(text_mask)                           # [B, 1, S_T]
    fbias = _additive_mask(frame_mask)                          # [B, 1, S_F]
    pk = pack_params(params)
    label_flat = label[:, 0].astype(jnp.int32)                  # -> SMEM scalars

    vmem = lambda: pl.BlockSpec(memory_space=pltpu.MemorySpace.VMEM)
    in_specs = ([pl.BlockSpec(memory_space=pltpu.MemorySpace.SMEM)]   # label
                + [vmem() for _ in range(15)])

    out = pl.pallas_call(
        _albef_kernel,
        out_shape=jax.ShapeDtypeStruct((B, 128), jnp.float32),
        in_specs=in_specs,
        out_specs=pl.BlockSpec(memory_space=pltpu.MemorySpace.VMEM),
        compiler_params=pltpu.CompilerParams(
            vmem_limit_bytes=32 * 1024 * 1024),    # explicit; toy usage is <1 MiB
    )(label_flat, x0, y, tbias, fbias,
      pk['w_qkv'], pk['w_o'], pk['w_ff1'], pk['b_ff1'], pk['w_ff2'], pk['vecs'],
      pk['xw_q'], pk['xw_kv'], pk['xw_o'], pk['xvecs'], pk['head'])

    pred = out[:, 0].astype(jnp.int32)
    loss = out[0, 1]
    acc = out[0, 2]
    return loss, acc, pred, label[:, 0]


# ----------------------- pure-JAX reference (original formulation) -----------
def _linear3(x, w, b):
    bsz, s, d = x.shape
    return (_mm(x.reshape(bsz * s, d), w) + b).reshape(bsz, s, w.shape[1])


def _mha_ref(xq, xkv, bias, wq, bq, wk, bk, wv, bv, wo, bo):
    q = _linear3(xq, wq, bq)
    k = _linear3(xkv, wk, bk)
    v = _linear3(xkv, wv, bv)
    scale = 1.0 / math.sqrt(D_HEAD)
    ctx = []
    for h in range(N_HEADS):
        sl = slice(h * D_HEAD, (h + 1) * D_HEAD)
        qh, kh, vh = q[:, :, sl], k[:, :, sl], v[:, :, sl]
        s = _bmm_qk(qh, kh) * scale + bias
        s = s - jnp.max(s, axis=-1, keepdims=True)
        p = jnp.exp(s)
        p = p / jnp.sum(p, axis=-1, keepdims=True)
        ctx.append(_bmm_pv(p, vh))
    ctx = jnp.concatenate(ctx, axis=-1)
    return _linear3(ctx, wo, bo)


def albef_forward_ref(params, frame_input, frame_mask, text_input, text_mask,
                      text_token_type_ids, label):
    x, y = _embed(params, text_input, text_token_type_ids, frame_input)
    tbias = _additive_mask(text_mask)
    fbias = _additive_mask(frame_mask)
    for li in range(N_LAYERS):
        lp = params['layers'][li]
        attn = _mha_ref(x, x, tbias, lp['wq'], lp['bq'], lp['wk'], lp['bk'],
                        lp['wv'], lp['bv'], lp['wo'], lp['bo'])
        x = _layer_norm(x + attn, lp['ln1_g'], lp['ln1_b'])
        if li >= FUSION_LAYER:
            xattn = _mha_ref(x, y, fbias, lp['cwq'], lp['cbq'], lp['cwk'],
                             lp['cbk'], lp['cwv'], lp['cbv'], lp['cwo'], lp['cbo'])
            x = _layer_norm(x + xattn, lp['lnc_g'], lp['lnc_b'])
        ff = _ffn(x, lp['w1'], lp['b1'], lp['w2'], lp['b2'])
        x = _layer_norm(x + ff, lp['ln2_g'], lp['ln2_b'])
    loss, acc, pred2d = _head_math(x, label, params['cls_w'], params['cls_b'])
    return loss, acc, pred2d[:, 0], label[:, 0]


# ----------------------- main ------------------------------------------------
if __name__ == "__main__":
    key = jax.random.PRNGKey(0)
    k_frame, k_text, k_label, k_param = jax.random.split(key, 4)

    frame_input = jax.random.normal(k_frame, (B, S_F, H), jnp.float32)
    frame_mask = jnp.array([[1, 1, 1, 0],
                            [1, 1, 0, 0]], dtype=jnp.int32)
    text_input = jax.random.randint(k_text, (B, S_T), 0, VOCAB, dtype=jnp.int32)
    text_mask = jnp.array([[1, 1, 1, 1, 1, 1, 0, 0],
                           [1, 1, 1, 1, 1, 1, 1, 1]], dtype=jnp.int32)
    text_token_type_ids = jnp.zeros((B, S_T), jnp.int32)
    label = jax.random.randint(k_label, (B, 1), 0, N_CLASSES, dtype=jnp.int32)

    params = init_params(k_param)

    fwd = jax.jit(albef_forward)
    loss, acc, pred, lab = fwd(params, frame_input, frame_mask, text_input,
                               text_mask, text_token_type_ids, label)
    jax.block_until_ready((loss, acc, pred, lab))

    loss_r, acc_r, pred_r, lab_r = jax.jit(albef_forward_ref)(
        params, frame_input, frame_mask, text_input, text_mask,
        text_token_type_ids, label)
    jax.block_until_ready((loss_r, acc_r, pred_r, lab_r))

    np.testing.assert_allclose(np.asarray(loss), np.asarray(loss_r),
                               rtol=2e-2, atol=2e-3)
    np.testing.assert_allclose(np.asarray(acc), np.asarray(acc_r),
                               rtol=0, atol=1e-6)
    assert np.array_equal(np.asarray(pred), np.asarray(pred_r))
    assert np.array_equal(np.asarray(lab), np.asarray(lab_r))

    print("KERNEL_OK")
</pallas_src>

<mosaic_0001>
module attributes {stable_mosaic.version = 11 : i64} {
  func.func @_albef_kernel(%arg0: memref<2xi32, #tpu.memory_space<smem>>, %arg1: memref<2x8x32xf32, #tpu.memory_space<vmem>>, %arg2: memref<2x4x32xf32, #tpu.memory_space<vmem>>, %arg3: memref<2x1x8xf32, #tpu.memory_space<vmem>>, %arg4: memref<2x1x4xf32, #tpu.memory_space<vmem>>, %arg5: memref<4x32x96xbf16, #tpu.memory_space<vmem>>, %arg6: memref<4x32x32xbf16, #tpu.memory_space<vmem>>, %arg7: memref<4x32x128xbf16, #tpu.memory_space<vmem>>, %arg8: memref<4x1x128xf32, #tpu.memory_space<vmem>>, %arg9: memref<4x128x32xbf16, #tpu.memory_space<vmem>>, %arg10: memref<4x9x32xf32, #tpu.memory_space<vmem>>, %arg11: memref<2x32x32xbf16, #tpu.memory_space<vmem>>, %arg12: memref<2x32x64xbf16, #tpu.memory_space<vmem>>, %arg13: memref<2x32x32xbf16, #tpu.memory_space<vmem>>, %arg14: memref<2x6x32xf32, #tpu.memory_space<vmem>>, %arg15: memref<33x10xf32, #tpu.memory_space<vmem>>, %arg16: memref<2x128xf32, #tpu.memory_space<vmem>>) attributes {dimension_semantics = [], scalar_prefetch = 0 : i64, scratch_operands = 0 : i64, tpu.core_type = #tpu.core_type<tc>} {
    %c0 = arith.constant 0 : index
    %c0_0 = arith.constant 0 : index
    %c0_1 = arith.constant 0 : index
    %0 = vector.load %arg3[%c0, %c0_0, %c0_1] : memref<2x1x8xf32, #tpu.memory_space<vmem>>, vector<2x1x8xf32>
    %c0_2 = arith.constant 0 : index
    %c0_3 = arith.constant 0 : index
    %c0_4 = arith.constant 0 : index
    %1 = vector.load %arg4[%c0_2, %c0_3, %c0_4] : memref<2x1x4xf32, #tpu.memory_space<vmem>>, vector<2x1x4xf32>
    %c0_5 = arith.constant 0 : index
    %c0_6 = arith.constant 0 : index
    %c0_7 = arith.constant 0 : index
    %2 = vector.load %arg2[%c0_5, %c0_6, %c0_7] : memref<2x4x32xf32, #tpu.memory_space<vmem>>, vector<2x4x32xf32>
    %3 = vector.shape_cast %2 : vector<2x4x32xf32> to vector<8x32xf32>
    %4 = arith.truncf %3 : vector<8x32xf32> to vector<8x32xbf16>
    %c0_8 = arith.constant 0 : index
    %c0_9 = arith.constant 0 : index
    %c0_10 = arith.constant 0 : index
    %5 = vector.load %arg1[%c0_8, %c0_9, %c0_10] : memref<2x8x32xf32, #tpu.memory_space<vmem>>, vector<2x8x32xf32>
    %c0_11 = arith.constant 0 : index
    %c0_12 = arith.constant 0 : index
    %c0_13 = arith.constant 0 : index
    %6 = vector.load %arg10[%c0_11, %c0_12, %c0_13] : memref<4x9x32xf32, #tpu.memory_space<vmem>>, vector<1x9x32xf32>
    %7 = vector.shape_cast %6 : vector<1x9x32xf32> to vector<9x32xf32>
    %c0_14 = arith.constant 0 : index
    %c0_15 = arith.constant 0 : index
    %c0_16 = arith.constant 0 : index
    %8 = vector.load %arg5[%c0_14, %c0_15, %c0_16] : memref<4x32x96xbf16, #tpu.memory_space<vmem>>, vector<1x32x96xbf16>
    %9 = vector.shape_cast %8 : vector<1x32x96xbf16> to vector<32x96xbf16>
    %c0_17 = arith.constant 0 : index
    %c0_18 = arith.constant 0 : index
    %c0_19 = arith.constant 0 : index
    %10 = vector.load %arg6[%c0_17, %c0_18, %c0_19] : memref<4x32x32xbf16, #tpu.memory_space<vmem>>, vector<1x32x32xbf16>
    %11 = vector.shape_cast %10 : vector<1x32x32xbf16> to vector<32x32xbf16>
    %12 = vector.shape_cast %5 : vector<2x8x32xf32> to vector<16x32xf32>
    %13 = arith.truncf %12 : vector<16x32xf32> to vector<16x32xbf16>
    %cst = arith.constant dense<0.000000e+00> : vector<16x96xf32>
    %14 = tpu.matmul %13, %9, %cst {dimension_numbers = #tpu.dot_dimension_numbers<[1], [0], [0], [1], [0, 0, 1, 1], [], []>} : vector<16x32xbf16>, vector<32x96xbf16>, vector<16x96xf32> -> vector<16x96xf32>
    %15 = vector.extract_strided_slice %14 {offsets = [0, 0], sizes = [16, 32], strides = [1, 1]} : vector<16x96xf32> to vector<16x32xf32>
    %16 = vector.extract_strided_slice %7 {offsets = [0, 0], sizes = [1, 32], strides = [1, 1]} : vector<9x32xf32> to vector<1x32xf32>
    %17 = vector.broadcast %16 : vector<1x32xf32> to vector<16x32xf32>
    %18 = arith.addf %15, %17 : vector<16x32xf32>
    %19 = vector.shape_cast %18 : vector<16x32xf32> to vector<2x8x32xf32>
    %20 = vector.extract_strided_slice %14 {offsets = [0, 32], sizes = [16, 32], strides = [1, 1]} : vector<16x96xf32> to vector<16x32xf32>
    %21 = vector.extract_strided_slice %7 {offsets = [1, 0], sizes = [1, 32], strides = [1, 1]} : vector<9x32xf32> to vector<1x32xf32>
    %22 = vector.broadcast %21 : vector<1x32xf32> to vector<16x32xf32>
    %23 = arith.addf %20, %22 : vector<16x32xf32>
    %24 = vector.shape_cast %23 : vector<16x32xf32> to vector<2x8x32xf32>
    %25 = vector.extract_strided_slice %14 {offsets = [0, 64], sizes = [16, 32], strides = [1, 1]} : vector<16x96xf32> to vector<16x32xf32>
    %26 = vector.extract_strided_slice %7 {offsets = [2, 0], sizes = [1, 32], strides = [1, 1]} : vector<9x32xf32> to vector<1x32xf32>
    %27 = vector.broadcast %26 : vector<1x32xf32> to vector<16x32xf32>
    %28 = arith.addf %25, %27 : vector<16x32xf32>
    %29 = vector.shape_cast %28 : vector<16x32xf32> to vector<2x8x32xf32>
    %30 = vector.extract_strided_slice %19 {offsets = [0, 0, 0], sizes = [2, 8, 16], strides = [1, 1, 1]} : vector<2x8x32xf32> to vector<2x8x16xf32>
    %31 = vector.extract_strided_slice %24 {offsets = [0, 0, 0], sizes = [2, 8, 16], strides = [1, 1, 1]} : vector<2x8x32xf32> to vector<2x8x16xf32>
    %32 = arith.truncf %30 : vector<2x8x16xf32> to vector<2x8x16xbf16>
    %33 = arith.truncf %31 : vector<2x8x16xf32> to vector<2x8x16xbf16>
    "tpu.trace_start"() <{level = 10 : i32, message = "bqd,bkd->bqk"}> : () -> ()
    %cst_20 = arith.constant dense<0.000000e+00> : vector<2x8x8xf32>
    %34 = tpu.matmul %32, %33, %cst_20 {dimension_numbers = #tpu.dot_dimension_numbers<[2], [2], [1], [1], [0, 0, 0, 1, 1, 1], [0], [0]>} : vector<2x8x16xbf16>, vector<2x8x16xbf16>, vector<2x8x8xf32> -> vector<2x8x8xf32>
    "tpu.trace_stop"() : () -> ()
    %cst_21 = arith.constant 2.500000e-01 : f32
    %35 = vector.broadcast %cst_21 : f32 to vector<2x8x8xf32>
    %36 = arith.mulf %34, %35 : vector<2x8x8xf32>
    %37 = vector.broadcast %0 : vector<2x1x8xf32> to vector<2x8x8xf32>
    %38 = arith.addf %36, %37 : vector<2x8x8xf32>
    %cst_22 = arith.constant dense<0xFF800000> : vector<2x8xf32>
    %39 = vector.multi_reduction <maximumf>, %38, %cst_22 [2] : vector<2x8x8xf32> to vector<2x8xf32>
    %40 = vector.shape_cast %39 : vector<2x8xf32> to vector<2x8x1xf32>
    %41 = vector.broadcast %40 : vector<2x8x1xf32> to vector<2x8x8xf32>
    %42 = arith.subf %38, %41 : vector<2x8x8xf32>
    %43 = math.exp %42 : vector<2x8x8xf32>
    %cst_23 = arith.constant dense<0.000000e+00> : vector<2x8xf32>
    %44 = vector.multi_reduction <add>, %43, %cst_23 [2] : vector<2x8x8xf32> to vector<2x8xf32>
    %45 = vector.shape_cast %44 : vector<2x8xf32> to vector<2x8x1xf32>
    %46 = tpu.reciprocal %45 {approx = true} : vector<2x8x1xf32> -> vector<2x8x1xf32>
    %47 = vector.broadcast %46 : vector<2x8x1xf32> to vector<2x8x8xf32>
    %48 = arith.mulf %43, %47 : vector<2x8x8xf32>
    %49 = vector.extract_strided_slice %29 {offsets = [0, 0, 0], sizes = [2, 8, 16], strides = [1, 1, 1]} : vector<2x8x32xf32> to vector<2x8x16xf32>
    %50 = arith.truncf %48 : vector<2x8x8xf32> to vector<2x8x8xbf16>
    %51 = arith.truncf %49 : vector<2x8x16xf32> to vector<2x8x16xbf16>
    "tpu.trace_start"() <{level = 10 : i32, message = "bqk,bkd->bqd"}> : () -> ()
    %cst_24 = arith.constant dense<0.000000e+00> : vector<2x8x16xf32>
    %52 = tpu.matmul %50, %51, %cst_24 {dimension_numbers = #tpu.dot_dimension_numbers<[2], [1], [1], [2], [0, 0, 0, 1, 1, 2], [0], [0]>} : vector<2x8x8xbf16>, vector<2x8x16xbf16>, vector<2x8x16xf32> -> vector<2x8x16xf32>
    "tpu.trace_stop"() : () -> ()
    %53 = vector.extract_strided_slice %19 {offsets = [0, 0, 16], sizes = [2, 8, 16], strides = [1, 1, 1]} : vector<2x8x32xf32> to vector<2x8x16xf32>
    %54 = vector.extract_strided_slice %24 {offsets = [0, 0, 16], sizes = [2, 8, 16], strides = [1, 1, 1]} : vector<2x8x32xf32> to vector<2x8x16xf32>
    %55 = arith.truncf %53 : vector<2x8x16xf32> to vector<2x8x16xbf16>
    %56 = arith.truncf %54 : vector<2x8x16xf32> to vector<2x8x16xbf16>
    "tpu.trace_start"() <{level = 10 : i32, message = "bqd,bkd->bqk"}> : () -> ()
    %cst_25 = arith.constant dense<0.000000e+00> : vector<2x8x8xf32>
    %57 = tpu.matmul %55, %56, %cst_25 {dimension_numbers = #tpu.dot_dimension_numbers<[2], [2], [1], [1], [0, 0, 0, 1, 1, 1], [0], [0]>} : vector<2x8x16xbf16>, vector<2x8x16xbf16>, vector<2x8x8xf32> -> vector<2x8x8xf32>
    "tpu.trace_stop"() : () -> ()
    %cst_26 = arith.constant 2.500000e-01 : f32
    %58 = vector.broadcast %cst_26 : f32 to vector<2x8x8xf32>
    %59 = arith.mulf %57, %58 : vector<2x8x8xf32>
    %60 = vector.broadcast %0 : vector<2x1x8xf32> to vector<2x8x8xf32>
    %61 = arith.addf %59, %60 : vector<2x8x8xf32>
    %cst_27 = arith.constant dense<0xFF800000> : vector<2x8xf32>
    %62 = vector.multi_reduction <maximumf>, %61, %cst_27 [2] : vector<2x8x8xf32> to vector<2x8xf32>
    %63 = vector.shape_cast %62 : vector<2x8xf32> to vector<2x8x1xf32>
    %64 = vector.broadcast %63 : vector<2x8x1xf32> to vector<2x8x8xf32>
    %65 = arith.subf %61, %64 : vector<2x8x8xf32>
    %66 = math.exp %65 : vector<2x8x8xf32>
    %cst_28 = arith.constant dense<0.000000e+00> : vector<2x8xf32>
    %67 = vector.multi_reduction <add>, %66, %cst_28 [2] : vector<2x8x8xf32> to vector<2x8xf32>
    %68 = vector.shape_cast %67 : vector<2x8xf32> to vector<2x8x1xf32>
    %69 = tpu.reciprocal %68 {approx = true} : vector<2x8x1xf32> -> vector<2x8x1xf32>
    %70 = vector.broadcast %69 : vector<2x8x1xf32> to vector<2x8x8xf32>
    %71 = arith.mulf %66, %70 : vector<2x8x8xf32>
    %72 = vector.extract_strided_slice %29 {offsets = [0, 0, 16], sizes = [2, 8, 16], strides = [1, 1, 1]} : vector<2x8x32xf32> to vector<2x8x16xf32>
    %73 = arith.truncf %71 : vector<2x8x8xf32> to vector<2x8x8xbf16>
    %74 = arith.truncf %72 : vector<2x8x16xf32> to vector<2x8x16xbf16>
    "tpu.trace_start"() <{level = 10 : i32, message = "bqk,bkd->bqd"}> : () -> ()
    %cst_29 = arith.constant dense<0.000000e+00> : vector<2x8x16xf32>
    %75 = tpu.matmul %73, %74, %cst_29 {dimension_numbers = #tpu.dot_dimension_numbers<[2], [1], [1], [2], [0, 0, 0, 1, 1, 2], [0], [0]>} : vector<2x8x8xbf16>, vector<2x8x16xbf16>, vector<2x8x16xf32> -> vector<2x8x16xf32>
    "tpu.trace_stop"() : () -> ()
    %76 = tpu.concatenate %52, %75 in 2 : vector<2x8x16xf32>, vector<2x8x16xf32> -> vector<2x8x32xf32>
    %77 = vector.shape_cast %76 : vector<2x8x32xf32> to vector<16x32xf32>
    %78 = arith.truncf %77 : vector<16x32xf32> to vector<16x32xbf16>
    %cst_30 = arith.constant dense<0.000000e+00> : vector<16x32xf32>
    %79 = tpu.matmul %78, %11, %cst_30 {dimension_numbers = #tpu.dot_dimension_numbers<[1], [0], [0], [1], [0, 0, 1, 1], [], []>} : vector<16x32xbf16>, vector<32x32xbf16>, vector<16x32xf32> -> vector<16x32xf32>
    %80 = vector.extract_strided_slice %7 {offsets = [3, 0], sizes = [1, 32], strides = [1, 1]} : vector<9x32xf32> to vector<1x32xf32>
    %81 = vector.broadcast %80 : vector<1x32xf32> to vector<16x32xf32>
    %82 = arith.addf %79, %81 : vector<16x32xf32>
    %83 = vector.shape_cast %82 : vector<16x32xf32> to vector<2x8x32xf32>
    %84 = arith.addf %5, %83 : vector<2x8x32xf32>
    %85 = vector.extract_strided_slice %7 {offsets = [4, 0], sizes = [1, 32], strides = [1, 1]} : vector<9x32xf32> to vector<1x32xf32>
    %86 = vector.extract_strided_slice %7 {offsets = [5, 0], sizes = [1, 32], strides = [1, 1]} : vector<9x32xf32> to vector<1x32xf32>
    %cst_31 = arith.constant dense<0.000000e+00> : vector<2x8xf32>
    %87 = vector.multi_reduction <add>, %84, %cst_31 [2] : vector<2x8x32xf32> to vector<2x8xf32>
    %88 = vector.shape_cast %87 : vector<2x8xf32> to vector<2x8x1xf32>
    %cst_32 = arith.constant 3.200000e+01 : f32
    %89 = vector.broadcast %cst_32 : f32 to vector<2x8x1xf32>
    %90 = arith.divf %88, %89 : vector<2x8x1xf32>
    %91 = vector.broadcast %90 : vector<2x8x1xf32> to vector<2x8x32xf32>
    %92 = arith.subf %84, %91 : vector<2x8x32xf32>
    %93 = arith.mulf %92, %92 : vector<2x8x32xf32>
    %cst_33 = arith.constant dense<0.000000e+00> : vector<2x8xf32>
    %94 = vector.multi_reduction <add>, %93, %cst_33 [2] : vector<2x8x32xf32> to vector<2x8xf32>
    %95 = vector.shape_cast %94 : vector<2x8xf32> to vector<2x8x1xf32>
    %cst_34 = arith.constant 3.200000e+01 : f32
    %96 = vector.broadcast %cst_34 : f32 to vector<2x8x1xf32>
    %97 = arith.divf %95, %96 : vector<2x8x1xf32>
    %98 = vector.broadcast %90 : vector<2x8x1xf32> to vector<2x8x32xf32>
    %99 = arith.subf %84, %98 : vector<2x8x32xf32>
    %cst_35 = arith.constant 9.99999996E-13 : f32
    %100 = vector.broadcast %cst_35 : f32 to vector<2x8x1xf32>
    %101 = arith.addf %97, %100 : vector<2x8x1xf32>
    %102 = math.rsqrt %101 : vector<2x8x1xf32>
    %103 = vector.broadcast %102 : vector<2x8x1xf32> to vector<2x8x32xf32>
    %104 = arith.mulf %99, %103 : vector<2x8x32xf32>
    %105 = vector.shape_cast %85 : vector<1x32xf32> to vector<1x1x32xf32>
    %106 = vector.broadcast %105 : vector<1x1x32xf32> to vector<2x8x32xf32>
    %107 = arith.mulf %104, %106 : vector<2x8x32xf32>
    %108 = vector.shape_cast %86 : vector<1x32xf32> to vector<1x1x32xf32>
    %109 = vector.broadcast %108 : vector<1x1x32xf32> to vector<2x8x32xf32>
    %110 = arith.addf %107, %109 : vector<2x8x32xf32>
    %c0_36 = arith.constant 0 : index
    %c0_37 = arith.constant 0 : index
    %c0_38 = arith.constant 0 : index
    %111 = vector.load %arg7[%c0_36, %c0_37, %c0_38] : memref<4x32x128xbf16, #tpu.memory_space<vmem>>, vector<1x32x128xbf16>
    %112 = vector.shape_cast %111 : vector<1x32x128xbf16> to vector<32x128xbf16>
    %c0_39 = arith.constant 0 : index
    %c0_40 = arith.constant 0 : index
    %c0_41 = arith.constant 0 : index
    %113 = vector.load %arg8[%c0_39, %c0_40, %c0_41] : memref<4x1x128xf32, #tpu.memory_space<vmem>>, vector<1x1x128xf32>
    %114 = vector.shape_cast %113 : vector<1x1x128xf32> to vector<1x128xf32>
    %c0_42 = arith.constant 0 : index
    %c0_43 = arith.constant 0 : index
    %c0_44 = arith.constant 0 : index
    %115 = vector.load %arg9[%c0_42, %c0_43, %c0_44] : memref<4x128x32xbf16, #tpu.memory_space<vmem>>, vector<1x128x32xbf16>
    %116 = vector.shape_cast %115 : vector<1x128x32xbf16> to vector<128x32xbf16>
    %117 = vector.extract_strided_slice %7 {offsets = [6, 0], sizes = [1, 32], strides = [1, 1]} : vector<9x32xf32> to vector<1x32xf32>
    %118 = vector.shape_cast %110 : vector<2x8x32xf32> to vector<16x32xf32>
    %119 = arith.truncf %118 : vector<16x32xf32> to vector<16x32xbf16>
    %cst_45 = arith.constant dense<0.000000e+00> : vector<16x128xf32>
    %120 = tpu.matmul %119, %112, %cst_45 {dimension_numbers = #tpu.dot_dimension_numbers<[1], [0], [0], [1], [0, 0, 1, 1], [], []>} : vector<16x32xbf16>, vector<32x128xbf16>, vector<16x128xf32> -> vector<16x128xf32>
    %121 = vector.broadcast %114 : vector<1x128xf32> to vector<16x128xf32>
    %122 = arith.addf %120, %121 : vector<16x128xf32>
    %123 = arith.mulf %122, %122 : vector<16x128xf32>
    %124 = arith.mulf %122, %123 : vector<16x128xf32>
    %cst_46 = arith.constant 4.471500e-02 : f32
    %125 = vector.broadcast %cst_46 : f32 to vector<16x128xf32>
    %126 = arith.mulf %125, %124 : vector<16x128xf32>
    %127 = arith.addf %122, %126 : vector<16x128xf32>
    %cst_47 = arith.constant 0.797884583 : f32
    %128 = vector.broadcast %cst_47 : f32 to vector<16x128xf32>
    %129 = arith.mulf %128, %127 : vector<16x128xf32>
    %130 = math.tanh %129 : vector<16x128xf32>
    %cst_48 = arith.constant 1.000000e+00 : f32
    %131 = vector.broadcast %cst_48 : f32 to vector<16x128xf32>
    %132 = arith.addf %131, %130 : vector<16x128xf32>
    %cst_49 = arith.constant 5.000000e-01 : f32
    %133 = vector.broadcast %cst_49 : f32 to vector<16x128xf32>
    %134 = arith.mulf %133, %132 : vector<16x128xf32>
    %135 = arith.mulf %122, %134 : vector<16x128xf32>
    %136 = arith.truncf %135 : vector<16x128xf32> to vector<16x128xbf16>
    %cst_50 = arith.constant dense<0.000000e+00> : vector<16x32xf32>
    %137 = tpu.matmul %136, %116, %cst_50 {dimension_numbers = #tpu.dot_dimension_numbers<[1], [0], [0], [1], [0, 0, 1, 1], [], []>} : vector<16x128xbf16>, vector<128x32xbf16>, vector<16x32xf32> -> vector<16x32xf32>
    %138 = vector.broadcast %117 : vector<1x32xf32> to vector<16x32xf32>
    %139 = arith.addf %137, %138 : vector<16x32xf32>
    %140 = vector.shape_cast %139 : vector<16x32xf32> to vector<2x8x32xf32>
    %141 = arith.addf %110, %140 : vector<2x8x32xf32>
    %142 = vector.extract_strided_slice %7 {offsets = [7, 0], sizes = [1, 32], strides = [1, 1]} : vector<9x32xf32> to vector<1x32xf32>
    %143 = vector.extract_strided_slice %7 {offsets = [8, 0], sizes = [1, 32], strides = [1, 1]} : vector<9x32xf32> to vector<1x32xf32>
    %cst_51 = arith.constant dense<0.000000e+00> : vector<2x8xf32>
    %144 = vector.multi_reduction <add>, %141, %cst_51 [2] : vector<2x8x32xf32> to vector<2x8xf32>
    %145 = vector.shape_cast %144 : vector<2x8xf32> to vector<2x8x1xf32>
    %cst_52 = arith.constant 3.200000e+01 : f32
    %146 = vector.broadcast %cst_52 : f32 to vector<2x8x1xf32>
    %147 = arith.divf %145, %146 : vector<2x8x1xf32>
    %148 = vector.broadcast %147 : vector<2x8x1xf32> to vector<2x8x32xf32>
    %149 = arith.subf %141, %148 : vector<2x8x32xf32>
    %150 = arith.mulf %149, %149 : vector<2x8x32xf32>
    %cst_53 = arith.constant dense<0.000000e+00> : vector<2x8xf32>
    %151 = vector.multi_reduction <add>, %150, %cst_53 [2] : vector<2x8x32xf32> to vector<2x8xf32>
    %152 = vector.shape_cast %151 : vector<2x8xf32> to vector<2x8x1xf32>
    %cst_54 = arith.constant 3.200000e+01 : f32
    %153 = vector.broadcast %cst_54 : f32 to vector<2x8x1xf32>
    %154 = arith.divf %152, %153 : vector<2x8x1xf32>
    %155 = vector.broadcast %147 : vector<2x8x1xf32> to vector<2x8x32xf32>
    %156 = arith.subf %141, %155 : vector<2x8x32xf32>
    %cst_55 = arith.constant 9.99999996E-13 : f32
    %157 = vector.broadcast %cst_55 : f32 to vector<2x8x1xf32>
    %158 = arith.addf %154, %157 : vector<2x8x1xf32>
    %159 = math.rsqrt %158 : vector<2x8x1xf32>
    %160 = vector.broadcast %159 : vector<2x8x1xf32> to vector<2x8x32xf32>
    %161 = arith.mulf %156, %160 : vector<2x8x32xf32>
    %162 = vector.shape_cast %142 : vector<1x32xf32> to vector<1x1x32xf32>
    %163 = vector.broadcast %162 : vector<1x1x32xf32> to vector<2x8x32xf32>
    %164 = arith.mulf %161, %163 : vector<2x8x32xf32>
    %165 = vector.shape_cast %143 : vector<1x32xf32> to vector<1x1x32xf32>
    %166 = vector.broadcast %165 : vector<1x1x32xf32> to vector<2x8x32xf32>
    %167 = arith.addf %164, %166 : vector<2x8x32xf32>
    %c1 = arith.constant 1 : index
    %c0_56 = arith.constant 0 : index
    %c0_57 = arith.constant 0 : index
    %168 = vector.load %arg10[%c1, %c0_56, %c0_57] : memref<4x9x32xf32, #tpu.memory_space<vmem>>, vector<1x9x32xf32>
    %169 = vector.shape_cast %168 : vector<1x9x32xf32> to vector<9x32xf32>
    %c1_58 = arith.constant 1 : index
    %c0_59 = arith.constant 0 : index
    %c0_60 = arith.constant 0 : index
    %170 = vector.load %arg5[%c1_58, %c0_59, %c0_60] : memref<4x32x96xbf16, #tpu.memory_space<vmem>>, vector<1x32x96xbf16>
    %171 = vector.shape_cast %170 : vector<1x32x96xbf16> to vector<32x96xbf16>
    %c1_61 = arith.constant 1 : index
    %c0_62 = arith.constant 0 : index
    %c0_63 = arith.constant 0 : index
    %172 = vector.load %arg6[%c1_61, %c0_62, %c0_63] : memref<4x32x32xbf16, #tpu.memory_space<vmem>>, vector<1x32x32xbf16>
    %173 = vector.shape_cast %172 : vector<1x32x32xbf16> to vector<32x32xbf16>
    %174 = vector.shape_cast %167 : vector<2x8x32xf32> to vector<16x32xf32>
    %175 = arith.truncf %174 : vector<16x32xf32> to vector<16x32xbf16>
    %cst_64 = arith.constant dense<0.000000e+00> : vector<16x96xf32>
    %176 = tpu.matmul %175, %171, %cst_64 {dimension_numbers = #tpu.dot_dimension_numbers<[1], [0], [0], [1], [0, 0, 1, 1], [], []>} : vector<16x32xbf16>, vector<32x96xbf16>, vector<16x96xf32> -> vector<16x96xf32>
    %177 = vector.extract_strided_slice %176 {offsets = [0, 0], sizes = [16, 32], strides = [1, 1]} : vector<16x96xf32> to vector<16x32xf32>
    %178 = vector.extract_strided_slice %169 {offsets = [0, 0], sizes = [1, 32], strides = [1, 1]} : vector<9x32xf32> to vector<1x32xf32>
    %179 = vector.broadcast %178 : vector<1x32xf32> to vector<16x32xf32>
    %180 = arith.addf %177, %179 : vector<16x32xf32>
    %181 = vector.shape_cast %180 : vector<16x32xf32> to vector<2x8x32xf32>
    %182 = vector.extract_strided_slice %176 {offsets = [0, 32], sizes = [16, 32], strides = [1, 1]} : vector<16x96xf32> to vector<16x32xf32>
    %183 = vector.extract_strided_slice %169 {offsets = [1, 0], sizes = [1, 32], strides = [1, 1]} : vector<9x32xf32> to vector<1x32xf32>
    %184 = vector.broadcast %183 : vector<1x32xf32> to vector<16x32xf32>
    %185 = arith.addf %182, %184 : vector<16x32xf32>
    %186 = vector.shape_cast %185 : vector<16x32xf32> to vector<2x8x32xf32>
    %187 = vector.extract_strided_slice %176 {offsets = [0, 64], sizes = [16, 32], strides = [1, 1]} : vector<16x96xf32> to vector<16x32xf32>
    %188 = vector.extract_strided_slice %169 {offsets = [2, 0], sizes = [1, 32], strides = [1, 1]} : vector<9x32xf32> to vector<1x32xf32>
    %189 = vector.broadcast %188 : vector<1x32xf32> to vector<16x32xf32>
    %190 = arith.addf %187, %189 : vector<16x32xf32>
    %191 = vector.shape_cast %190 : vector<16x32xf32> to vector<2x8x32xf32>
    %192 = vector.extract_strided_slice %181 {offsets = [0, 0, 0], sizes = [2, 8, 16], strides = [1, 1, 1]} : vector<2x8x32xf32> to vector<2x8x16xf32>
    %193 = vector.extract_strided_slice %186 {offsets = [0, 0, 0], sizes = [2, 8, 16], strides = [1, 1, 1]} : vector<2x8x32xf32> to vector<2x8x16xf32>
    %194 = arith.truncf %192 : vector<2x8x16xf32> to vector<2x8x16xbf16>
    %195 = arith.truncf %193 : vector<2x8x16xf32> to vector<2x8x16xbf16>
    "tpu.trace_start"() <{level = 10 : i32, message = "bqd,bkd->bqk"}> : () -> ()
    %cst_65 = arith.constant dense<0.000000e+00> : vector<2x8x8xf32>
    %196 = tpu.matmul %194, %195, %cst_65 {dimension_numbers = #tpu.dot_dimension_numbers<[2], [2], [1], [1], [0, 0, 0, 1, 1, 1], [0], [0]>} : vector<2x8x16xbf16>, vector<2x8x16xbf16>, vector<2x8x8xf32> -> vector<2x8x8xf32>
    "tpu.trace_stop"() : () -> ()
    %cst_66 = arith.constant 2.500000e-01 : f32
    %197 = vector.broadcast %cst_66 : f32 to vector<2x8x8xf32>
    %198 = arith.mulf %196, %197 : vector<2x8x8xf32>
    %199 = vector.broadcast %0 : vector<2x1x8xf32> to vector<2x8x8xf32>
    %200 = arith.addf %198, %199 : vector<2x8x8xf32>
    %cst_67 = arith.constant dense<0xFF800000> : vector<2x8xf32>
    %201 = vector.multi_reduction <maximumf>, %200, %cst_67 [2] : vector<2x8x8xf32> to vector<2x8xf32>
    %202 = vector.shape_cast %201 : vector<2x8xf32> to vector<2x8x1xf32>
    %203 = vector.broadcast %202 : vector<2x8x1xf32> to vector<2x8x8xf32>
    %204 = arith.subf %200, %203 : vector<2x8x8xf32>
    %205 = math.exp %204 : vector<2x8x8xf32>
    %cst_68 = arith.constant dense<0.000000e+00> : vector<2x8xf32>
    %206 = vector.multi_reduction <add>, %205, %cst_68 [2] : vector<2x8x8xf32> to vector<2x8xf32>
    %207 = vector.shape_cast %206 : vector<2x8xf32> to vector<2x8x1xf32>
    %208 = tpu.reciprocal %207 {approx = true} : vector<2x8x1xf32> -> vector<2x8x1xf32>
    %209 = vector.broadcast %208 : vector<2x8x1xf32> to vector<2x8x8xf32>
    %210 = arith.mulf %205, %209 : vector<2x8x8xf32>
    %211 = vector.extract_strided_slice %191 {offsets = [0, 0, 0], sizes = [2, 8, 16], strides = [1, 1, 1]} : vector<2x8x32xf32> to vector<2x8x16xf32>
    %212 = arith.truncf %210 : vector<2x8x8xf32> to vector<2x8x8xbf16>
    %213 = arith.truncf %211 : vector<2x8x16xf32> to vector<2x8x16xbf16>
    "tpu.trace_start"() <{level = 10 : i32, message = "bqk,bkd->bqd"}> : () -> ()
    %cst_69 = arith.constant dense<0.000000e+00> : vector<2x8x16xf32>
    %214 = tpu.matmul %212, %213, %cst_69 {dimension_numbers = #tpu.dot_dimension_numbers<[2], [1], [1], [2], [0, 0, 0, 1, 1, 2], [0], [0]>} : vector<2x8x8xbf16>, vector<2x8x16xbf16>, vector<2x8x16xf32> -> vector<2x8x16xf32>
    "tpu.trace_stop"() : () -> ()
    %215 = vector.extract_strided_slice %181 {offsets = [0, 0, 16], sizes = [2, 8, 16], strides = [1, 1, 1]} : vector<2x8x32xf32> to vector<2x8x16xf32>
    %216 = vector.extract_strided_slice %186 {offsets = [0, 0, 16], sizes = [2, 8, 16], strides = [1, 1, 1]} : vector<2x8x32xf32> to vector<2x8x16xf32>
    %217 = arith.truncf %215 : vector<2x8x16xf32> to vector<2x8x16xbf16>
    %218 = arith.truncf %216 : vector<2x8x16xf32> to vector<2x8x16xbf16>
    "tpu.trace_start"() <{level = 10 : i32, message = "bqd,bkd->bqk"}> : () -> ()
    %cst_70 = arith.constant dense<0.000000e+00> : vector<2x8x8xf32>
    %219 = tpu.matmul %217, %218, %cst_70 {dimension_numbers = #tpu.dot_dimension_numbers<[2], [2], [1], [1], [0, 0, 0, 1, 1, 1], [0], [0]>} : vector<2x8x16xbf16>, vector<2x8x16xbf16>, vector<2x8x8xf32> -> vector<2x8x8xf32>
    "tpu.trace_stop"() : () -> ()
    %cst_71 = arith.constant 2.500000e-01 : f32
    %220 = vector.broadcast %cst_71 : f32 to vector<2x8x8xf32>
    %221 = arith.mulf %219, %220 : vector<2x8x8xf32>
    %222 = vector.broadcast %0 : vector<2x1x8xf32> to vector<2x8x8xf32>
    %223 = arith.addf %221, %222 : vector<2x8x8xf32>
    %cst_72 = arith.constant dense<0xFF800000> : vector<2x8xf32>
    %224 = vector.multi_reduction <maximumf>, %223, %cst_72 [2] : vector<2x8x8xf32> to vector<2x8xf32>
    %225 = vector.shape_cast %224 : vector<2x8xf32> to vector<2x8x1xf32>
    %226 = vector.broadcast %225 : vector<2x8x1xf32> to vector<2x8x8xf32>
    %227 = arith.subf %223, %226 : vector<2x8x8xf32>
    %228 = math.exp %227 : vector<2x8x8xf32>
    %cst_73 = arith.constant dense<0.000000e+00> : vector<2x8xf32>
    %229 = vector.multi_reduction <add>, %228, %cst_73 [2] : vector<2x8x8xf32> to vector<2x8xf32>
    %230 = vector.shape_cast %229 : vector<2x8xf32> to vector<2x8x1xf32>
    %231 = tpu.reciprocal %230 {approx = true} : vector<2x8x1xf32> -> vector<2x8x1xf32>
    %232 = vector.broadcast %231 : vector<2x8x1xf32> to vector<2x8x8xf32>
    %233 = arith.mulf %228, %232 : vector<2x8x8xf32>
    %234 = vector.extract_strided_slice %191 {offsets = [0, 0, 16], sizes = [2, 8, 16], strides = [1, 1, 1]} : vector<2x8x32xf32> to vector<2x8x16xf32>
    %235 = arith.truncf %233 : vector<2x8x8xf32> to vector<2x8x8xbf16>
    %236 = arith.truncf %234 : vector<2x8x16xf32> to vector<2x8x16xbf16>
    "tpu.trace_start"() <{level = 10 : i32, message = "bqk,bkd->bqd"}> : () -> ()
    %cst_74 = arith.constant dense<0.000000e+00> : vector<2x8x16xf32>
    %237 = tpu.matmul %235, %236, %cst_74 {dimension_numbers = #tpu.dot_dimension_numbers<[2], [1], [1], [2], [0, 0, 0, 1, 1, 2], [0], [0]>} : vector<2x8x8xbf16>, vector<2x8x16xbf16>, vector<2x8x16xf32> -> vector<2x8x16xf32>
    "tpu.trace_stop"() : () -> ()
    %238 = tpu.concatenate %214, %237 in 2 : vector<2x8x16xf32>, vector<2x8x16xf32> -> vector<2x8x32xf32>
    %239 = vector.shape_cast %238 : vector<2x8x32xf32> to vector<16x32xf32>
    %240 = arith.truncf %239 : vector<16x32xf32> to vector<16x32xbf16>
    %cst_75 = arith.constant dense<0.000000e+00> : vector<16x32xf32>
    %241 = tpu.matmul %240, %173, %cst_75 {dimension_numbers = #tpu.dot_dimension_numbers<[1], [0], [0], [1], [0, 0, 1, 1], [], []>} : vector<16x32xbf16>, vector<32x32xbf16>, vector<16x32xf32> -> vector<16x32xf32>
    %242 = vector.extract_strided_slice %169 {offsets = [3, 0], sizes = [1, 32], strides = [1, 1]} : vector<9x32xf32> to vector<1x32xf32>
    %243 = vector.broadcast %242 : vector<1x32xf32> to vector<16x32xf32>
    %244 = arith.addf %241, %243 : vector<16x32xf32>
    %245 = vector.shape_cast %244 : vector<16x32xf32> to vector<2x8x32xf32>
    %246 = arith.addf %167, %245 : vector<2x8x32xf32>
    %247 = vector.extract_strided_slice %169 {offsets = [4, 0], sizes = [1, 32], strides = [1, 1]} : vector<9x32xf32> to vector<1x32xf32>
    %248 = vector.extract_strided_slice %169 {offsets = [5, 0], sizes = [1, 32], strides = [1, 1]} : vector<9x32xf32> to vector<1x32xf32>
    %cst_76 = arith.constant dense<0.000000e+00> : vector<2x8xf32>
    %249 = vector.multi_reduction <add>, %246, %cst_76 [2] : vector<2x8x32xf32> to vector<2x8xf32>
    %250 = vector.shape_cast %249 : vector<2x8xf32> to vector<2x8x1xf32>
    %cst_77 = arith.constant 3.200000e+01 : f32
    %251 = vector.broadcast %cst_77 : f32 to vector<2x8x1xf32>
    %252 = arith.divf %250, %251 : vector<2x8x1xf32>
    %253 = vector.broadcast %252 : vector<2x8x1xf32> to vector<2x8x32xf32>
    %254 = arith.subf %246, %253 : vector<2x8x32xf32>
    %255 = arith.mulf %254, %254 : vector<2x8x32xf32>
    %cst_78 = arith.constant dense<0.000000e+00> : vector<2x8xf32>
    %256 = vector.multi_reduction <add>, %255, %cst_78 [2] : vector<2x8x32xf32> to vector<2x8xf32>
    %257 = vector.shape_cast %256 : vector<2x8xf32> to vector<2x8x1xf32>
    %cst_79 = arith.constant 3.200000e+01 : f32
    %258 = vector.broadcast %cst_79 : f32 to vector<2x8x1xf32>
    %259 = arith.divf %257, %258 : vector<2x8x1xf32>
    %260 = vector.broadcast %252 : vector<2x8x1xf32> to vector<2x8x32xf32>
    %261 = arith.subf %246, %260 : vector<2x8x32xf32>
    %cst_80 = arith.constant 9.99999996E-13 : f32
    %262 = vector.broadcast %cst_80 : f32 to vector<2x8x1xf32>
    %263 = arith.addf %259, %262 : vector<2x8x1xf32>
    %264 = math.rsqrt %263 : vector<2x8x1xf32>
    %265 = vector.broadcast %264 : vector<2x8x1xf32> to vector<2x8x32xf32>
    %266 = arith.mulf %261, %265 : vector<2x8x32xf32>
    %267 = vector.shape_cast %247 : vector<1x32xf32> to vector<1x1x32xf32>
    %268 = vector.broadcast %267 : vector<1x1x32xf32> to vector<2x8x32xf32>
    %269 = arith.mulf %266, %268 : vector<2x8x32xf32>
    %270 = vector.shape_cast %248 : vector<1x32xf32> to vector<1x1x32xf32>
    %271 = vector.broadcast %270 : vector<1x1x32xf32> to vector<2x8x32xf32>
    %272 = arith.addf %269, %271 : vector<2x8x32xf32>
    %c1_81 = arith.constant 1 : index
    %c0_82 = arith.constant 0 : index
    %c0_83 = arith.constant 0 : index
    %273 = vector.load %arg7[%c1_81, %c0_82, %c0_83] : memref<4x32x128xbf16, #tpu.memory_space<vmem>>, vector<1x32x128xbf16>
    %274 = vector.shape_cast %273 : vector<1x32x128xbf16> to vector<32x128xbf16>
    %c1_84 = arith.constant 1 : index
    %c0_85 = arith.constant 0 : index
    %c0_86 = arith.constant 0 : index
    %275 = vector.load %arg8[%c1_84, %c0_85, %c0_86] : memref<4x1x128xf32, #tpu.memory_space<vmem>>, vector<1x1x128xf32>
    %276 = vector.shape_cast %275 : vector<1x1x128xf32> to vector<1x128xf32>
    %c1_87 = arith.constant 1 : index
    %c0_88 = arith.constant 0 : index
    %c0_89 = arith.constant 0 : index
    %277 = vector.load %arg9[%c1_87, %c0_88, %c0_89] : memref<4x128x32xbf16, #tpu.memory_space<vmem>>, vector<1x128x32xbf16>
    %278 = vector.shape_cast %277 : vector<1x128x32xbf16> to vector<128x32xbf16>
    %279 = vector.extract_strided_slice %169 {offsets = [6, 0], sizes = [1, 32], strides = [1, 1]} : vector<9x32xf32> to vector<1x32xf32>
    %280 = vector.shape_cast %272 : vector<2x8x32xf32> to vector<16x32xf32>
    %281 = arith.truncf %280 : vector<16x32xf32> to vector<16x32xbf16>
    %cst_90 = arith.constant dense<0.000000e+00> : vector<16x128xf32>
    %282 = tpu.matmul %281, %274, %cst_90 {dimension_numbers = #tpu.dot_dimension_numbers<[1], [0], [0], [1], [0, 0, 1, 1], [], []>} : vector<16x32xbf16>, vector<32x128xbf16>, vector<16x128xf32> -> vector<16x128xf32>
    %283 = vector.broadcast %276 : vector<1x128xf32> to vector<16x128xf32>
    %284 = arith.addf %282, %283 : vector<16x128xf32>
    %285 = arith.mulf %284, %284 : vector<16x128xf32>
    %286 = arith.mulf %284, %285 : vector<16x128xf32>
    %cst_91 = arith.constant 4.471500e-02 : f32
    %287 = vector.broadcast %cst_91 : f32 to vector<16x128xf32>
    %288 = arith.mulf %287, %286 : vector<16x128xf32>
    %289 = arith.addf %284, %288 : vector<16x128xf32>
    %cst_92 = arith.constant 0.797884583 : f32
    %290 = vector.broadcast %cst_92 : f32 to vector<16x128xf32>
    %291 = arith.mulf %290, %289 : vector<16x128xf32>
    %292 = math.tanh %291 : vector<16x128xf32>
    %cst_93 = arith.constant 1.000000e+00 : f32
    %293 = vector.broadcast %cst_93 : f32 to vector<16x128xf32>
    %294 = arith.addf %293, %292 : vector<16x128xf32>
    %cst_94 = arith.constant 5.000000e-01 : f32
    %295 = vector.broadcast %cst_94 : f32 to vector<16x128xf32>
    %296 = arith.mulf %295, %294 : vector<16x128xf32>
    %297 = arith.mulf %284, %296 : vector<16x128xf32>
    %298 = arith.truncf %297 : vector<16x128xf32> to vector<16x128xbf16>
    %cst_95 = arith.constant dense<0.000000e+00> : vector<16x32xf32>
    %299 = tpu.matmul %298, %278, %cst_95 {dimension_numbers = #tpu.dot_dimension_numbers<[1], [0], [0], [1], [0, 0, 1, 1], [], []>} : vector<16x128xbf16>, vector<128x32xbf16>, vector<16x32xf32> -> vector<16x32xf32>
    %300 = vector.broadcast %279 : vector<1x32xf32> to vector<16x32xf32>
    %301 = arith.addf %299, %300 : vector<16x32xf32>
    %302 = vector.shape_cast %301 : vector<16x32xf32> to vector<2x8x32xf32>
    %303 = arith.addf %272, %302 : vector<2x8x32xf32>
    %304 = vector.extract_strided_slice %169 {offsets = [7, 0], sizes = [1, 32], strides = [1, 1]} : vector<9x32xf32> to vector<1x32xf32>
    %305 = vector.extract_strided_slice %169 {offsets = [8, 0], sizes = [1, 32], strides = [1, 1]} : vector<9x32xf32> to vector<1x32xf32>
    %cst_96 = arith.constant dense<0.000000e+00> : vector<2x8xf32>
    %306 = vector.multi_reduction <add>, %303, %cst_96 [2] : vector<2x8x32xf32> to vector<2x8xf32>
    %307 = vector.shape_cast %306 : vector<2x8xf32> to vector<2x8x1xf32>
    %cst_97 = arith.constant 3.200000e+01 : f32
    %308 = vector.broadcast %cst_97 : f32 to vector<2x8x1xf32>
    %309 = arith.divf %307, %308 : vector<2x8x1xf32>
    %310 = vector.broadcast %309 : vector<2x8x1xf32> to vector<2x8x32xf32>
    %311 = arith.subf %303, %310 : vector<2x8x32xf32>
    %312 = arith.mulf %311, %311 : vector<2x8x32xf32>
    %cst_98 = arith.constant dense<0.000000e+00> : vector<2x8xf32>
    %313 = vector.multi_reduction <add>, %312, %cst_98 [2] : vector<2x8x32xf32> to vector<2x8xf32>
    %314 = vector.shape_cast %313 : vector<2x8xf32> to vector<2x8x1xf32>
    %cst_99 = arith.constant 3.200000e+01 : f32
    %315 = vector.broadcast %cst_99 : f32 to vector<2x8x1xf32>
    %316 = arith.divf %314, %315 : vector<2x8x1xf32>
    %317 = vector.broadcast %309 : vector<2x8x1xf32> to vector<2x8x32xf32>
    %318 = arith.subf %303, %317 : vector<2x8x32xf32>
    %cst_100 = arith.constant 9.99999996E-13 : f32
    %319 = vector.broadcast %cst_100 : f32 to vector<2x8x1xf32>
    %320 = arith.addf %316, %319 : vector<2x8x1xf32>
    %321 = math.rsqrt %320 : vector<2x8x1xf32>
    %322 = vector.broadcast %321 : vector<2x8x1xf32> to vector<2x8x32xf32>
    %323 = arith.mulf %318, %322 : vector<2x8x32xf32>
    %324 = vector.shape_cast %304 : vector<1x32xf32> to vector<1x1x32xf32>
    %325 = vector.broadcast %324 : vector<1x1x32xf32> to vector<2x8x32xf32>
    %326 = arith.mulf %323, %325 : vector<2x8x32xf32>
    %327 = vector.shape_cast %305 : vector<1x32xf32> to vector<1x1x32xf32>
    %328 = vector.broadcast %327 : vector<1x1x32xf32> to vector<2x8x32xf32>
    %329 = arith.addf %326, %328 : vector<2x8x32xf32>
    %c2 = arith.constant 2 : index
    %c0_101 = arith.constant 0 : index
    %c0_102 = arith.constant 0 : index
    %330 = vector.load %arg10[%c2, %c0_101, %c0_102] : memref<4x9x32xf32, #tpu.memory_space<vmem>>, vector<1x9x32xf32>
    %331 = vector.shape_cast %330 : vector<1x9x32xf32> to vector<9x32xf32>
    %c2_103 = arith.constant 2 : index
    %c0_104 = arith.constant 0 : index
    %c0_105 = arith.constant 0 : index
    %332 = vector.load %arg5[%c2_103, %c0_104, %c0_105] : memref<4x32x96xbf16, #tpu.memory_space<vmem>>, vector<1x32x96xbf16>
    %333 = vector.shape_cast %332 : vector<1x32x96xbf16> to vector<32x96xbf16>
    %c2_106 = arith.constant 2 : index
    %c0_107 = arith.constant 0 : index
    %c0_108 = arith.constant 0 : index
    %334 = vector.load %arg6[%c2_106, %c0_107, %c0_108] : memref<4x32x32xbf16, #tpu.memory_space<vmem>>, vector<1x32x32xbf16>
    %335 = vector.shape_cast %334 : vector<1x32x32xbf16> to vector<32x32xbf16>
    %336 = vector.shape_cast %329 : vector<2x8x32xf32> to vector<16x32xf32>
    %337 = arith.truncf %336 : vector<16x32xf32> to vector<16x32xbf16>
    %cst_109 = arith.constant dense<0.000000e+00> : vector<16x96xf32>
    %338 = tpu.matmul %337, %333, %cst_109 {dimension_numbers = #tpu.dot_dimension_numbers<[1], [0], [0], [1], [0, 0, 1, 1], [], []>} : vector<16x32xbf16>, vector<32x96xbf16>, vector<16x96xf32> -> vector<16x96xf32>
    %339 = vector.extract_strided_slice %338 {offsets = [0, 0], sizes = [16, 32], strides = [1, 1]} : vector<16x96xf32> to vector<16x32xf32>
    %340 = vector.extract_strided_slice %331 {offsets = [0, 0], sizes = [1, 32], strides = [1, 1]} : vector<9x32xf32> to vector<1x32xf32>
    %341 = vector.broadcast %340 : vector<1x32xf32> to vector<16x32xf32>
    %342 = arith.addf %339, %341 : vector<16x32xf32>
    %343 = vector.shape_cast %342 : vector<16x32xf32> to vector<2x8x32xf32>
    %344 = vector.extract_strided_slice %338 {offsets = [0, 32], sizes = [16, 32], strides = [1, 1]} : vector<16x96xf32> to vector<16x32xf32>
    %345 = vector.extract_strided_slice %331 {offsets = [1, 0], sizes = [1, 32], strides = [1, 1]} : vector<9x32xf32> to vector<1x32xf32>
    %346 = vector.broadcast %345 : vector<1x32xf32> to vector<16x32xf32>
    %347 = arith.addf %344, %346 : vector<16x32xf32>
    %348 = vector.shape_cast %347 : vector<16x32xf32> to vector<2x8x32xf32>
    %349 = vector.extract_strided_slice %338 {offsets = [0, 64], sizes = [16, 32], strides = [1, 1]} : vector<16x96xf32> to vector<16x32xf32>
    %350 = vector.extract_strided_slice %331 {offsets = [2, 0], sizes = [1, 32], strides = [1, 1]} : vector<9x32xf32> to vector<1x32xf32>
    %351 = vector.broadcast %350 : vector<1x32xf32> to vector<16x32xf32>
    %352 = arith.addf %349, %351 : vector<16x32xf32>
    %353 = vector.shape_cast %352 : vector<16x32xf32> to vector<2x8x32xf32>
    %354 = vector.extract_strided_slice %343 {offsets = [0, 0, 0], sizes = [2, 8, 16], strides = [1, 1, 1]} : vector<2x8x32xf32> to vector<2x8x16xf32>
    %355 = vector.extract_strided_slice %348 {offsets = [0, 0, 0], sizes = [2, 8, 16], strides = [1, 1, 1]} : vector<2x8x32xf32> to vector<2x8x16xf32>
    %356 = arith.truncf %354 : vector<2x8x16xf32> to vector<2x8x16xbf16>
    %357 = arith.truncf %355 : vector<2x8x16xf32> to vector<2x8x16xbf16>
    "tpu.trace_start"() <{level = 10 : i32, message = "bqd,bkd->bqk"}> : () -> ()
    %cst_110 = arith.constant dense<0.000000e+00> : vector<2x8x8xf32>
    %358 = tpu.matmul %356, %357, %cst_110 {dimension_numbers = #tpu.dot_dimension_numbers<[2], [2], [1], [1], [0, 0, 0, 1, 1, 1], [0], [0]>} : vector<2x8x16xbf16>, vector<2x8x16xbf16>, vector<2x8x8xf32> -> vector<2x8x8xf32>
    "tpu.trace_stop"() : () -> ()
    %cst_111 = arith.constant 2.500000e-01 : f32
    %359 = vector.broadcast %cst_111 : f32 to vector<2x8x8xf32>
    %360 = arith.mulf %358, %359 : vector<2x8x8xf32>
    %361 = vector.broadcast %0 : vector<2x1x8xf32> to vector<2x8x8xf32>
    %362 = arith.addf %360, %361 : vector<2x8x8xf32>
    %cst_112 = arith.constant dense<0xFF800000> : vector<2x8xf32>
    %363 = vector.multi_reduction <maximumf>, %362, %cst_112 [2] : vector<2x8x8xf32> to vector<2x8xf32>
    %364 = vector.shape_cast %363 : vector<2x8xf32> to vector<2x8x1xf32>
    %365 = vector.broadcast %364 : vector<2x8x1xf32> to vector<2x8x8xf32>
    %366 = arith.subf %362, %365 : vector<2x8x8xf32>
    %367 = math.exp %366 : vector<2x8x8xf32>
    %cst_113 = arith.constant dense<0.000000e+00> : vector<2x8xf32>
    %368 = vector.multi_reduction <add>, %367, %cst_113 [2] : vector<2x8x8xf32> to vector<2x8xf32>
    %369 = vector.shape_cast %368 : vector<2x8xf32> to vector<2x8x1xf32>
    %370 = tpu.reciprocal %369 {approx = true} : vector<2x8x1xf32> -> vector<2x8x1xf32>
    %371 = vector.broadcast %370 : vector<2x8x1xf32> to vector<2x8x8xf32>
    %372 = arith.mulf %367, %371 : vector<2x8x8xf32>
    %373 = vector.extract_strided_slice %353 {offsets = [0, 0, 0], sizes = [2, 8, 16], strides = [1, 1, 1]} : vector<2x8x32xf32> to vector<2x8x16xf32>
    %374 = arith.truncf %372 : vector<2x8x8xf32> to vector<2x8x8xbf16>
    %375 = arith.truncf %373 : vector<2x8x16xf32> to vector<2x8x16xbf16>
    "tpu.trace_start"() <{level = 10 : i32, message = "bqk,bkd->bqd"}> : () -> ()
    %cst_114 = arith.constant dense<0.000000e+00> : vector<2x8x16xf32>
    %376 = tpu.matmul %374, %375, %cst_114 {dimension_numbers = #tpu.dot_dimension_numbers<[2], [1], [1], [2], [0, 0, 0, 1, 1, 2], [0], [0]>} : vector<2x8x8xbf16>, vector<2x8x16xbf16>, vector<2x8x16xf32> -> vector<2x8x16xf32>
    "tpu.trace_stop"() : () -> ()
    %377 = vector.extract_strided_slice %343 {offsets = [0, 0, 16], sizes = [2, 8, 16], strides = [1, 1, 1]} : vector<2x8x32xf32> to vector<2x8x16xf32>
    %378 = vector.extract_strided_slice %348 {offsets = [0, 0, 16], sizes = [2, 8, 16], strides = [1, 1, 1]} : vector<2x8x32xf32> to vector<2x8x16xf32>
    %379 = arith.truncf %377 : vector<2x8x16xf32> to vector<2x8x16xbf16>
    %380 = arith.truncf %378 : vector<2x8x16xf32> to vector<2x8x16xbf16>
    "tpu.trace_start"() <{level = 10 : i32, message = "bqd,bkd->bqk"}> : () -> ()
    %cst_115 = arith.constant dense<0.000000e+00> : vector<2x8x8xf32>
    %381 = tpu.matmul %379, %380, %cst_115 {dimension_numbers = #tpu.dot_dimension_numbers<[2], [2], [1], [1], [0, 0, 0, 1, 1, 1], [0], [0]>} : vector<2x8x16xbf16>, vector<2x8x16xbf16>, vector<2x8x8xf32> -> vector<2x8x8xf32>
    "tpu.trace_stop"() : () -> ()
    %cst_116 = arith.constant 2.500000e-01 : f32
    %382 = vector.broadcast %cst_116 : f32 to vector<2x8x8xf32>
    %383 = arith.mulf %381, %382 : vector<2x8x8xf32>
    %384 = vector.broadcast %0 : vector<2x1x8xf32> to vector<2x8x8xf32>
    %385 = arith.addf %383, %384 : vector<2x8x8xf32>
    %cst_117 = arith.constant dense<0xFF800000> : vector<2x8xf32>
    %386 = vector.multi_reduction <maximumf>, %385, %cst_117 [2] : vector<2x8x8xf32> to vector<2x8xf32>
    %387 = vector.shape_cast %386 : vector<2x8xf32> to vector<2x8x1xf32>
    %388 = vector.broadcast %387 : vector<2x8x1xf32> to vector<2x8x8xf32>
    %389 = arith.subf %385, %388 : vector<2x8x8xf32>
    %390 = math.exp %389 : vector<2x8x8xf32>
    %cst_118 = arith.constant dense<0.000000e+00> : vector<2x8xf32>
    %391 = vector.multi_reduction <add>, %390, %cst_118 [2] : vector<2x8x8xf32> to vector<2x8xf32>
    %392 = vector.shape_cast %391 : vector<2x8xf32> to vector<2x8x1xf32>
    %393 = tpu.reciprocal %392 {approx = true} : vector<2x8x1xf32> -> vector<2x8x1xf32>
    %394 = vector.broadcast %393 : vector<2x8x1xf32> to vector<2x8x8xf32>
    %395 = arith.mulf %390, %394 : vector<2x8x8xf32>
    %396 = vector.extract_strided_slice %353 {offsets = [0, 0, 16], sizes = [2, 8, 16], strides = [1, 1, 1]} : vector<2x8x32xf32> to vector<2x8x16xf32>
    %397 = arith.truncf %395 : vector<2x8x8xf32> to vector<2x8x8xbf16>
    %398 = arith.truncf %396 : vector<2x8x16xf32> to vector<2x8x16xbf16>
    "tpu.trace_start"() <{level = 10 : i32, message = "bqk,bkd->bqd"}> : () -> ()
    %cst_119 = arith.constant dense<0.000000e+00> : vector<2x8x16xf32>
    %399 = tpu.matmul %397, %398, %cst_119 {dimension_numbers = #tpu.dot_dimension_numbers<[2], [1], [1], [2], [0, 0, 0, 1, 1, 2], [0], [0]>} : vector<2x8x8xbf16>, vector<2x8x16xbf16>, vector<2x8x16xf32> -> vector<2x8x16xf32>
    "tpu.trace_stop"() : () -> ()
    %400 = tpu.concatenate %376, %399 in 2 : vector<2x8x16xf32>, vector<2x8x16xf32> -> vector<2x8x32xf32>
    %401 = vector.shape_cast %400 : vector<2x8x32xf32> to vector<16x32xf32>
    %402 = arith.truncf %401 : vector<16x32xf32> to vector<16x32xbf16>
    %cst_120 = arith.constant dense<0.000000e+00> : vector<16x32xf32>
    %403 = tpu.matmul %402, %335, %cst_120 {dimension_numbers = #tpu.dot_dimension_numbers<[1], [0], [0], [1], [0, 0, 1, 1], [], []>} : vector<16x32xbf16>, vector<32x32xbf16>, vector<16x32xf32> -> vector<16x32xf32>
    %404 = vector.extract_strided_slice %331 {offsets = [3, 0], sizes = [1, 32], strides = [1, 1]} : vector<9x32xf32> to vector<1x32xf32>
    %405 = vector.broadcast %404 : vector<1x32xf32> to vector<16x32xf32>
    %406 = arith.addf %403, %405 : vector<16x32xf32>
    %407 = vector.shape_cast %406 : vector<16x32xf32> to vector<2x8x32xf32>
    %408 = arith.addf %329, %407 : vector<2x8x32xf32>
    %409 = vector.extract_strided_slice %331 {offsets = [4, 0], sizes = [1, 32], strides = [1, 1]} : vector<9x32xf32> to vector<1x32xf32>
    %410 = vector.extract_strided_slice %331 {offsets = [5, 0], sizes = [1, 32], strides = [1, 1]} : vector<9x32xf32> to vector<1x32xf32>
    %cst_121 = arith.constant dense<0.000000e+00> : vector<2x8xf32>
    %411 = vector.multi_reduction <add>, %408, %cst_121 [2] : vector<2x8x32xf32> to vector<2x8xf32>
    %412 = vector.shape_cast %411 : vector<2x8xf32> to vector<2x8x1xf32>
    %cst_122 = arith.constant 3.200000e+01 : f32
    %413 = vector.broadcast %cst_122 : f32 to vector<2x8x1xf32>
    %414 = arith.divf %412, %413 : vector<2x8x1xf32>
    %415 = vector.broadcast %414 : vector<2x8x1xf32> to vector<2x8x32xf32>
    %416 = arith.subf %408, %415 : vector<2x8x32xf32>
    %417 = arith.mulf %416, %416 : vector<2x8x32xf32>
    %cst_123 = arith.constant dense<0.000000e+00> : vector<2x8xf32>
    %418 = vector.multi_reduction <add>, %417, %cst_123 [2] : vector<2x8x32xf32> to vector<2x8xf32>
    %419 = vector.shape_cast %418 : vector<2x8xf32> to vector<2x8x1xf32>
    %cst_124 = arith.constant 3.200000e+01 : f32
    %420 = vector.broadcast %cst_124 : f32 to vector<2x8x1xf32>
    %421 = arith.divf %419, %420 : vector<2x8x1xf32>
    %422 = vector.broadcast %414 : vector<2x8x1xf32> to vector<2x8x32xf32>
    %423 = arith.subf %408, %422 : vector<2x8x32xf32>
    %cst_125 = arith.constant 9.99999996E-13 : f32
    %424 = vector.broadcast %cst_125 : f32 to vector<2x8x1xf32>
    %425 = arith.addf %421, %424 : vector<2x8x1xf32>
    %426 = math.rsqrt %425 : vector<2x8x1xf32>
    %427 = vector.broadcast %426 : vector<2x8x1xf32> to vector<2x8x32xf32>
    %428 = arith.mulf %423, %427 : vector<2x8x32xf32>
    %429 = vector.shape_cast %409 : vector<1x32xf32> to vector<1x1x32xf32>
    %430 = vector.broadcast %429 : vector<1x1x32xf32> to vector<2x8x32xf32>
    %431 = arith.mulf %428, %430 : vector<2x8x32xf32>
    %432 = vector.shape_cast %410 : vector<1x32xf32> to vector<1x1x32xf32>
    %433 = vector.broadcast %432 : vector<1x1x32xf32> to vector<2x8x32xf32>
    %434 = arith.addf %431, %433 : vector<2x8x32xf32>
    %c0_126 = arith.constant 0 : index
    %c0_127 = arith.constant 0 : index
    %c0_128 = arith.constant 0 : index
    %435 = vector.load %arg14[%c0_126, %c0_127, %c0_128] : memref<2x6x32xf32, #tpu.memory_space<vmem>>, vector<1x6x32xf32>
    %436 = vector.shape_cast %435 : vector<1x6x32xf32> to vector<6x32xf32>
    %c0_129 = arith.constant 0 : index
    %c0_130 = arith.constant 0 : index
    %c0_131 = arith.constant 0 : index
    %437 = vector.load %arg11[%c0_129, %c0_130, %c0_131] : memref<2x32x32xbf16, #tpu.memory_space<vmem>>, vector<1x32x32xbf16>
    %438 = vector.shape_cast %437 : vector<1x32x32xbf16> to vector<32x32xbf16>
    %c0_132 = arith.constant 0 : index
    %c0_133 = arith.constant 0 : index
    %c0_134 = arith.constant 0 : index
    %439 = vector.load %arg12[%c0_132, %c0_133, %c0_134] : memref<2x32x64xbf16, #tpu.memory_space<vmem>>, vector<1x32x64xbf16>
    %440 = vector.shape_cast %439 : vector<1x32x64xbf16> to vector<32x64xbf16>
    %c0_135 = arith.constant 0 : index
    %c0_136 = arith.constant 0 : index
    %c0_137 = arith.constant 0 : index
    %441 = vector.load %arg13[%c0_135, %c0_136, %c0_137] : memref<2x32x32xbf16, #tpu.memory_space<vmem>>, vector<1x32x32xbf16>
    %442 = vector.shape_cast %441 : vector<1x32x32xbf16> to vector<32x32xbf16>
    %443 = vector.shape_cast %434 : vector<2x8x32xf32> to vector<16x32xf32>
    %444 = arith.truncf %443 : vector<16x32xf32> to vector<16x32xbf16>
    %cst_138 = arith.constant dense<0.000000e+00> : vector<16x32xf32>
    %445 = tpu.matmul %444, %438, %cst_138 {dimension_numbers = #tpu.dot_dimension_numbers<[1], [0], [0], [1], [0, 0, 1, 1], [], []>} : vector<16x32xbf16>, vector<32x32xbf16>, vector<16x32xf32> -> vector<16x32xf32>
    %446 = vector.extract_strided_slice %436 {offsets = [0, 0], sizes = [1, 32], strides = [1, 1]} : vector<6x32xf32> to vector<1x32xf32>
    %447 = vector.broadcast %446 : vector<1x32xf32> to vector<16x32xf32>
    %448 = arith.addf %445, %447 : vector<16x32xf32>
    %449 = vector.shape_cast %448 : vector<16x32xf32> to vector<2x8x32xf32>
    %cst_139 = arith.constant dense<0.000000e+00> : vector<8x64xf32>
    %450 = tpu.matmul %4, %440, %cst_139 {dimension_numbers = #tpu.dot_dimension_numbers<[1], [0], [0], [1], [0, 0, 1, 1], [], []>} : vector<8x32xbf16>, vector<32x64xbf16>, vector<8x64xf32> -> vector<8x64xf32>
    %451 = vector.extract_strided_slice %450 {offsets = [0, 0], sizes = [8, 32], strides = [1, 1]} : vector<8x64xf32> to vector<8x32xf32>
    %452 = vector.extract_strided_slice %436 {offsets = [1, 0], sizes = [1, 32], strides = [1, 1]} : vector<6x32xf32> to vector<1x32xf32>
    %453 = vector.broadcast %452 : vector<1x32xf32> to vector<8x32xf32>
    %454 = arith.addf %451, %453 : vector<8x32xf32>
    %455 = vector.shape_cast %454 : vector<8x32xf32> to vector<2x4x32xf32>
    %456 = vector.extract_strided_slice %450 {offsets = [0, 32], sizes = [8, 32], strides = [1, 1]} : vector<8x64xf32> to vector<8x32xf32>
    %457 = vector.extract_strided_slice %436 {offsets = [2, 0], sizes = [1, 32], strides = [1, 1]} : vector<6x32xf32> to vector<1x32xf32>
    %458 = vector.broadcast %457 : vector<1x32xf32> to vector<8x32xf32>
    %459 = arith.addf %456, %458 : vector<8x32xf32>
    %460 = vector.shape_cast %459 : vector<8x32xf32> to vector<2x4x32xf32>
    %461 = vector.extract_strided_slice %449 {offsets = [0, 0, 0], sizes = [2, 8, 16], strides = [1, 1, 1]} : vector<2x8x32xf32> to vector<2x8x16xf32>
    %462 = vector.extract_strided_slice %455 {offsets = [0, 0, 0], sizes = [2, 4, 16], strides = [1, 1, 1]} : vector<2x4x32xf32> to vector<2x4x16xf32>
    %463 = arith.truncf %461 : vector<2x8x16xf32> to vector<2x8x16xbf16>
    %464 = arith.truncf %462 : vector<2x4x16xf32> to vector<2x4x16xbf16>
    "tpu.trace_start"() <{level = 10 : i32, message = "bqd,bkd->bqk"}> : () -> ()
    %cst_140 = arith.constant dense<0.000000e+00> : vector<2x8x4xf32>
    %465 = tpu.matmul %463, %464, %cst_140 {dimension_numbers = #tpu.dot_dimension_numbers<[2], [2], [1], [1], [0, 0, 0, 1, 1, 1], [0], [0]>} : vector<2x8x16xbf16>, vector<2x4x16xbf16>, vector<2x8x4xf32> -> vector<2x8x4xf32>
    "tpu.trace_stop"() : () -> ()
    %cst_141 = arith.constant 2.500000e-01 : f32
    %466 = vector.broadcast %cst_141 : f32 to vector<2x8x4xf32>
    %467 = arith.mulf %465, %466 : vector<2x8x4xf32>
    %468 = vector.broadcast %1 : vector<2x1x4xf32> to vector<2x8x4xf32>
    %469 = arith.addf %467, %468 : vector<2x8x4xf32>
    %cst_142 = arith.constant dense<0xFF800000> : vector<2x8xf32>
    %470 = vector.multi_reduction <maximumf>, %469, %cst_142 [2] : vector<2x8x4xf32> to vector<2x8xf32>
    %471 = vector.shape_cast %470 : vector<2x8xf32> to vector<2x8x1xf32>
    %472 = vector.broadcast %471 : vector<2x8x1xf32> to vector<2x8x4xf32>
    %473 = arith.subf %469, %472 : vector<2x8x4xf32>
    %474 = math.exp %473 : vector<2x8x4xf32>
    %cst_143 = arith.constant dense<0.000000e+00> : vector<2x8xf32>
    %475 = vector.multi_reduction <add>, %474, %cst_143 [2] : vector<2x8x4xf32> to vector<2x8xf32>
    %476 = vector.shape_cast %475 : vector<2x8xf32> to vector<2x8x1xf32>
    %477 = tpu.reciprocal %476 {approx = true} : vector<2x8x1xf32> -> vector<2x8x1xf32>
    %478 = vector.broadcast %477 : vector<2x8x1xf32> to vector<2x8x4xf32>
    %479 = arith.mulf %474, %478 : vector<2x8x4xf32>
    %480 = vector.extract_strided_slice %460 {offsets = [0, 0, 0], sizes = [2, 4, 16], strides = [1, 1, 1]} : vector<2x4x32xf32> to vector<2x4x16xf32>
    %481 = arith.truncf %479 : vector<2x8x4xf32> to vector<2x8x4xbf16>
    %482 = arith.truncf %480 : vector<2x4x16xf32> to vector<2x4x16xbf16>
    "tpu.trace_start"() <{level = 10 : i32, message = "bqk,bkd->bqd"}> : () -> ()
    %cst_144 = arith.constant dense<0.000000e+00> : vector<2x8x16xf32>
    %483 = tpu.matmul %481, %482, %cst_144 {dimension_numbers = #tpu.dot_dimension_numbers<[2], [1], [1], [2], [0, 0, 0, 1, 1, 2], [0], [0]>} : vector<2x8x4xbf16>, vector<2x4x16xbf16>, vector<2x8x16xf32> -> vector<2x8x16xf32>
    "tpu.trace_stop"() : () -> ()
    %484 = vector.extract_strided_slice %449 {offsets = [0, 0, 16], sizes = [2, 8, 16], strides = [1, 1, 1]} : vector<2x8x32xf32> to vector<2x8x16xf32>
    %485 = vector.extract_strided_slice %455 {offsets = [0, 0, 16], sizes = [2, 4, 16], strides = [1, 1, 1]} : vector<2x4x32xf32> to vector<2x4x16xf32>
    %486 = arith.truncf %484 : vector<2x8x16xf32> to vector<2x8x16xbf16>
    %487 = arith.truncf %485 : vector<2x4x16xf32> to vector<2x4x16xbf16>
    "tpu.trace_start"() <{level = 10 : i32, message = "bqd,bkd->bqk"}> : () -> ()
    %cst_145 = arith.constant dense<0.000000e+00> : vector<2x8x4xf32>
    %488 = tpu.matmul %486, %487, %cst_145 {dimension_numbers = #tpu.dot_dimension_numbers<[2], [2], [1], [1], [0, 0, 0, 1, 1, 1], [0], [0]>} : vector<2x8x16xbf16>, vector<2x4x16xbf16>, vector<2x8x4xf32> -> vector<2x8x4xf32>
    "tpu.trace_stop"() : () -> ()
    %cst_146 = arith.constant 2.500000e-01 : f32
    %489 = vector.broadcast %cst_146 : f32 to vector<2x8x4xf32>
    %490 = arith.mulf %488, %489 : vector<2x8x4xf32>
    %491 = vector.broadcast %1 : vector<2x1x4xf32> to vector<2x8x4xf32>
    %492 = arith.addf %490, %491 : vector<2x8x4xf32>
    %cst_147 = arith.constant dense<0xFF800000> : vector<2x8xf32>
    %493 = vector.multi_reduction <maximumf>, %492, %cst_147 [2] : vector<2x8x4xf32> to vector<2x8xf32>
    %494 = vector.shape_cast %493 : vector<2x8xf32> to vector<2x8x1xf32>
    %495 = vector.broadcast %494 : vector<2x8x1xf32> to vector<2x8x4xf32>
    %496 = arith.subf %492, %495 : vector<2x8x4xf32>
    %497 = math.exp %496 : vector<2x8x4xf32>
    %cst_148 = arith.constant dense<0.000000e+00> : vector<2x8xf32>
    %498 = vector.multi_reduction <add>, %497, %cst_148 [2] : vector<2x8x4xf32> to vector<2x8xf32>
    %499 = vector.shape_cast %498 : vector<2x8xf32> to vector<2x8x1xf32>
    %500 = tpu.reciprocal %499 {approx = true} : vector<2x8x1xf32> -> vector<2x8x1xf32>
    %501 = vector.broadcast %500 : vector<2x8x1xf32> to vector<2x8x4xf32>
    %502 = arith.mulf %497, %501 : vector<2x8x4xf32>
    %503 = vector.extract_strided_slice %460 {offsets = [0, 0, 16], sizes = [2, 4, 16], strides = [1, 1, 1]} : vector<2x4x32xf32> to vector<2x4x16xf32>
    %504 = arith.truncf %502 : vector<2x8x4xf32> to vector<2x8x4xbf16>
    %505 = arith.truncf %503 : vector<2x4x16xf32> to vector<2x4x16xbf16>
    "tpu.trace_start"() <{level = 10 : i32, message = "bqk,bkd->bqd"}> : () -> ()
    %cst_149 = arith.constant dense<0.000000e+00> : vector<2x8x16xf32>
    %506 = tpu.matmul %504, %505, %cst_149 {dimension_numbers = #tpu.dot_dimension_numbers<[2], [1], [1], [2], [0, 0, 0, 1, 1, 2], [0], [0]>} : vector<2x8x4xbf16>, vector<2x4x16xbf16>, vector<2x8x16xf32> -> vector<2x8x16xf32>
    "tpu.trace_stop"() : () -> ()
    %507 = tpu.concatenate %483, %506 in 2 : vector<2x8x16xf32>, vector<2x8x16xf32> -> vector<2x8x32xf32>
    %508 = vector.shape_cast %507 : vector<2x8x32xf32> to vector<16x32xf32>
    %509 = arith.truncf %508 : vector<16x32xf32> to vector<16x32xbf16>
    %cst_150 = arith.constant dense<0.000000e+00> : vector<16x32xf32>
    %510 = tpu.matmul %509, %442, %cst_150 {dimension_numbers = #tpu.dot_dimension_numbers<[1], [0], [0], [1], [0, 0, 1, 1], [], []>} : vector<16x32xbf16>, vector<32x32xbf16>, vector<16x32xf32> -> vector<16x32xf32>
    %511 = vector.extract_strided_slice %436 {offsets = [3, 0], sizes = [1, 32], strides = [1, 1]} : vector<6x32xf32> to vector<1x32xf32>
    %512 = vector.broadcast %511 : vector<1x32xf32> to vector<16x32xf32>
    %513 = arith.addf %510, %512 : vector<16x32xf32>
    %514 = vector.shape_cast %513 : vector<16x32xf32> to vector<2x8x32xf32>
    %515 = arith.addf %434, %514 : vector<2x8x32xf32>
    %516 = vector.extract_strided_slice %436 {offsets = [4, 0], sizes = [1, 32], strides = [1, 1]} : vector<6x32xf32> to vector<1x32xf32>
    %517 = vector.extract_strided_slice %436 {offsets = [5, 0], sizes = [1, 32], strides = [1, 1]} : vector<6x32xf32> to vector<1x32xf32>
    %cst_151 = arith.constant dense<0.000000e+00> : vector<2x8xf32>
    %518 = vector.multi_reduction <add>, %515, %cst_151 [2] : vector<2x8x32xf32> to vector<2x8xf32>
    %519 = vector.shape_cast %518 : vector<2x8xf32> to vector<2x8x1xf32>
    %cst_152 = arith.constant 3.200000e+01 : f32
    %520 = vector.broadcast %cst_152 : f32 to vector<2x8x1xf32>
    %521 = arith.divf %519, %520 : vector<2x8x1xf32>
    %522 = vector.broadcast %521 : vector<2x8x1xf32> to vector<2x8x32xf32>
    %523 = arith.subf %515, %522 : vector<2x8x32xf32>
    %524 = arith.mulf %523, %523 : vector<2x8x32xf32>
    %cst_153 = arith.constant dense<0.000000e+00> : vector<2x8xf32>
    %525 = vector.multi_reduction <add>, %524, %cst_153 [2] : vector<2x8x32xf32> to vector<2x8xf32>
    %526 = vector.shape_cast %525 : vector<2x8xf32> to vector<2x8x1xf32>
    %cst_154 = arith.constant 3.200000e+01 : f32
    %527 = vector.broadcast %cst_154 : f32 to vector<2x8x1xf32>
    %528 = arith.divf %526, %527 : vector<2x8x1xf32>
    %529 = vector.broadcast %521 : vector<2x8x1xf32> to vector<2x8x32xf32>
    %530 = arith.subf %515, %529 : vector<2x8x32xf32>
    %cst_155 = arith.constant 9.99999996E-13 : f32
    %531 = vector.broadcast %cst_155 : f32 to vector<2x8x1xf32>
    %532 = arith.addf %528, %531 : vector<2x8x1xf32>
    %533 = math.rsqrt %532 : vector<2x8x1xf32>
    %534 = vector.broadcast %533 : vector<2x8x1xf32> to vector<2x8x32xf32>
    %535 = arith.mulf %530, %534 : vector<2x8x32xf32>
    %536 = vector.shape_cast %516 : vector<1x32xf32> to vector<1x1x32xf32>
    %537 = vector.broadcast %536 : vector<1x1x32xf32> to vector<2x8x32xf32>
    %538 = arith.mulf %535, %537 : vector<2x8x32xf32>
    %539 = vector.shape_cast %517 : vector<1x32xf32> to vector<1x1x32xf32>
    %540 = vector.broadcast %539 : vector<1x1x32xf32> to vector<2x8x32xf32>
    %541 = arith.addf %538, %540 : vector<2x8x32xf32>
    %c2_156 = arith.constant 2 : index
    %c0_157 = arith.constant 0 : index
    %c0_158 = arith.constant 0 : index
    %542 = vector.load %arg7[%c2_156, %c0_157, %c0_158] : memref<4x32x128xbf16, #tpu.memory_space<vmem>>, vector<1x32x128xbf16>
    %543 = vector.shape_cast %542 : vector<1x32x128xbf16> to vector<32x128xbf16>
    %c2_159 = arith.constant 2 : index
    %c0_160 = arith.constant 0 : index
    %c0_161 = arith.constant 0 : index
    %544 = vector.load %arg8[%c2_159, %c0_160, %c0_161] : memref<4x1x128xf32, #tpu.memory_space<vmem>>, vector<1x1x128xf32>
    %545 = vector.shape_cast %544 : vector<1x1x128xf32> to vector<1x128xf32>
    %c2_162 = arith.constant 2 : index
    %c0_163 = arith.constant 0 : index
    %c0_164 = arith.constant 0 : index
    %546 = vector.load %arg9[%c2_162, %c0_163, %c0_164] : memref<4x128x32xbf16, #tpu.memory_space<vmem>>, vector<1x128x32xbf16>
    %547 = vector.shape_cast %546 : vector<1x128x32xbf16> to vector<128x32xbf16>
    %548 = vector.extract_strided_slice %331 {offsets = [6, 0], sizes = [1, 32], strides = [1, 1]} : vector<9x32xf32> to vector<1x32xf32>
    %549 = vector.shape_cast %541 : vector<2x8x32xf32> to vector<16x32xf32>
    %550 = arith.truncf %549 : vector<16x32xf32> to vector<16x32xbf16>
    %cst_165 = arith.constant dense<0.000000e+00> : vector<16x128xf32>
    %551 = tpu.matmul %550, %543, %cst_165 {dimension_numbers = #tpu.dot_dimension_numbers<[1], [0], [0], [1], [0, 0, 1, 1], [], []>} : vector<16x32xbf16>, vector<32x128xbf16>, vector<16x128xf32> -> vector<16x128xf32>
    %552 = vector.broadcast %545 : vector<1x128xf32> to vector<16x128xf32>
    %553 = arith.addf %551, %552 : vector<16x128xf32>
    %554 = arith.mulf %553, %553 : vector<16x128xf32>
    %555 = arith.mulf %553, %554 : vector<16x128xf32>
    %cst_166 = arith.constant 4.471500e-02 : f32
    %556 = vector.broadcast %cst_166 : f32 to vector<16x128xf32>
    %557 = arith.mulf %556, %555 : vector<16x128xf32>
    %558 = arith.addf %553, %557 : vector<16x128xf32>
    %cst_167 = arith.constant 0.797884583 : f32
    %559 = vector.broadcast %cst_167 : f32 to vector<16x128xf32>
    %560 = arith.mulf %559, %558 : vector<16x128xf32>
    %561 = math.tanh %560 : vector<16x128xf32>
    %cst_168 = arith.constant 1.000000e+00 : f32
    %562 = vector.broadcast %cst_168 : f32 to vector<16x128xf32>
    %563 = arith.addf %562, %561 : vector<16x128xf32>
    %cst_169 = arith.constant 5.000000e-01 : f32
    %564 = vector.broadcast %cst_169 : f32 to vector<16x128xf32>
    %565 = arith.mulf %564, %563 : vector<16x128xf32>
    %566 = arith.mulf %553, %565 : vector<16x128xf32>
    %567 = arith.truncf %566 : vector<16x128xf32> to vector<16x128xbf16>
    %cst_170 = arith.constant dense<0.000000e+00> : vector<16x32xf32>
    %568 = tpu.matmul %567, %547, %cst_170 {dimension_numbers = #tpu.dot_dimension_numbers<[1], [0], [0], [1], [0, 0, 1, 1], [], []>} : vector<16x128xbf16>, vector<128x32xbf16>, vector<16x32xf32> -> vector<16x32xf32>
    %569 = vector.broadcast %548 : vector<1x32xf32> to vector<16x32xf32>
    %570 = arith.addf %568, %569 : vector<16x32xf32>
    %571 = vector.shape_cast %570 : vector<16x32xf32> to vector<2x8x32xf32>
    %572 = arith.addf %541, %571 : vector<2x8x32xf32>
    %573 = vector.extract_strided_slice %331 {offsets = [7, 0], sizes = [1, 32], strides = [1, 1]} : vector<9x32xf32> to vector<1x32xf32>
    %574 = vector.extract_strided_slice %331 {offsets = [8, 0], sizes = [1, 32], strides = [1, 1]} : vector<9x32xf32> to vector<1x32xf32>
    %cst_171 = arith.constant dense<0.000000e+00> : vector<2x8xf32>
    %575 = vector.multi_reduction <add>, %572, %cst_171 [2] : vector<2x8x32xf32> to vector<2x8xf32>
    %576 = vector.shape_cast %575 : vector<2x8xf32> to vector<2x8x1xf32>
    %cst_172 = arith.constant 3.200000e+01 : f32
    %577 = vector.broadcast %cst_172 : f32 to vector<2x8x1xf32>
    %578 = arith.divf %576, %577 : vector<2x8x1xf32>
    %579 = vector.broadcast %578 : vector<2x8x1xf32> to vector<2x8x32xf32>
    %580 = arith.subf %572, %579 : vector<2x8x32xf32>
    %581 = arith.mulf %580, %580 : vector<2x8x32xf32>
    %cst_173 = arith.constant dense<0.000000e+00> : vector<2x8xf32>
    %582 = vector.multi_reduction <add>, %581, %cst_173 [2] : vector<2x8x32xf32> to vector<2x8xf32>
    %583 = vector.shape_cast %582 : vector<2x8xf32> to vector<2x8x1xf32>
    %cst_174 = arith.constant 3.200000e+01 : f32
    %584 = vector.broadcast %cst_174 : f32 to vector<2x8x1xf32>
    %585 = arith.divf %583, %584 : vector<2x8x1xf32>
    %586 = vector.broadcast %578 : vector<2x8x1xf32> to vector<2x8x32xf32>
    %587 = arith.subf %572, %586 : vector<2x8x32xf32>
    %cst_175 = arith.constant 9.99999996E-13 : f32
    %588 = vector.broadcast %cst_175 : f32 to vector<2x8x1xf32>
    %589 = arith.addf %585, %588 : vector<2x8x1xf32>
    %590 = math.rsqrt %589 : vector<2x8x1xf32>
    %591 = vector.broadcast %590 : vector<2x8x1xf32> to vector<2x8x32xf32>
    %592 = arith.mulf %587, %591 : vector<2x8x32xf32>
    %593 = vector.shape_cast %573 : vector<1x32xf32> to vector<1x1x32xf32>
    %594 = vector.broadcast %593 : vector<1x1x32xf32> to vector<2x8x32xf32>
    %595 = arith.mulf %592, %594 : vector<2x8x32xf32>
    %596 = vector.shape_cast %574 : vector<1x32xf32> to vector<1x1x32xf32>
    %597 = vector.broadcast %596 : vector<1x1x32xf32> to vector<2x8x32xf32>
    %598 = arith.addf %595, %597 : vector<2x8x32xf32>
    %c3 = arith.constant 3 : index
    %c0_176 = arith.constant 0 : index
    %c0_177 = arith.constant 0 : index
    %599 = vector.load %arg10[%c3, %c0_176, %c0_177] : memref<4x9x32xf32, #tpu.memory_space<vmem>>, vector<1x9x32xf32>
    %600 = vector.shape_cast %599 : vector<1x9x32xf32> to vector<9x32xf32>
    %c3_178 = arith.constant 3 : index
    %c0_179 = arith.constant 0 : index
    %c0_180 = arith.constant 0 : index
    %601 = vector.load %arg5[%c3_178, %c0_179, %c0_180] : memref<4x32x96xbf16, #tpu.memory_space<vmem>>, vector<1x32x96xbf16>
    %602 = vector.shape_cast %601 : vector<1x32x96xbf16> to vector<32x96xbf16>
    %c3_181 = arith.constant 3 : index
    %c0_182 = arith.constant 0 : index
    %c0_183 = arith.constant 0 : index
    %603 = vector.load %arg6[%c3_181, %c0_182, %c0_183] : memref<4x32x32xbf16, #tpu.memory_space<vmem>>, vector<1x32x32xbf16>
    %604 = vector.shape_cast %603 : vector<1x32x32xbf16> to vector<32x32xbf16>
    %605 = vector.shape_cast %598 : vector<2x8x32xf32> to vector<16x32xf32>
    %606 = arith.truncf %605 : vector<16x32xf32> to vector<16x32xbf16>
    %cst_184 = arith.constant dense<0.000000e+00> : vector<16x96xf32>
    %607 = tpu.matmul %606, %602, %cst_184 {dimension_numbers = #tpu.dot_dimension_numbers<[1], [0], [0], [1], [0, 0, 1, 1], [], []>} : vector<16x32xbf16>, vector<32x96xbf16>, vector<16x96xf32> -> vector<16x96xf32>
    %608 = vector.extract_strided_slice %607 {offsets = [0, 0], sizes = [16, 32], strides = [1, 1]} : vector<16x96xf32> to vector<16x32xf32>
    %609 = vector.extract_strided_slice %600 {offsets = [0, 0], sizes = [1, 32], strides = [1, 1]} : vector<9x32xf32> to vector<1x32xf32>
    %610 = vector.broadcast %609 : vector<1x32xf32> to vector<16x32xf32>
    %611 = arith.addf %608, %610 : vector<16x32xf32>
    %612 = vector.shape_cast %611 : vector<16x32xf32> to vector<2x8x32xf32>
    %613 = vector.extract_strided_slice %607 {offsets = [0, 32], sizes = [16, 32], strides = [1, 1]} : vector<16x96xf32> to vector<16x32xf32>
    %614 = vector.extract_strided_slice %600 {offsets = [1, 0], sizes = [1, 32], strides = [1, 1]} : vector<9x32xf32> to vector<1x32xf32>
    %615 = vector.broadcast %614 : vector<1x32xf32> to vector<16x32xf32>
    %616 = arith.addf %613, %615 : vector<16x32xf32>
    %617 = vector.shape_cast %616 : vector<16x32xf32> to vector<2x8x32xf32>
    %618 = vector.extract_strided_slice %607 {offsets = [0, 64], sizes = [16, 32], strides = [1, 1]} : vector<16x96xf32> to vector<16x32xf32>
    %619 = vector.extract_strided_slice %600 {offsets = [2, 0], sizes = [1, 32], strides = [1, 1]} : vector<9x32xf32> to vector<1x32xf32>
    %620 = vector.broadcast %619 : vector<1x32xf32> to vector<16x32xf32>
    %621 = arith.addf %618, %620 : vector<16x32xf32>
    %622 = vector.shape_cast %621 : vector<16x32xf32> to vector<2x8x32xf32>
    %623 = vector.extract_strided_slice %612 {offsets = [0, 0, 0], sizes = [2, 8, 16], strides = [1, 1, 1]} : vector<2x8x32xf32> to vector<2x8x16xf32>
    %624 = vector.extract_strided_slice %617 {offsets = [0, 0, 0], sizes = [2, 8, 16], strides = [1, 1, 1]} : vector<2x8x32xf32> to vector<2x8x16xf32>
    %625 = arith.truncf %623 : vector<2x8x16xf32> to vector<2x8x16xbf16>
    %626 = arith.truncf %624 : vector<2x8x16xf32> to vector<2x8x16xbf16>
    "tpu.trace_start"() <{level = 10 : i32, message = "bqd,bkd->bqk"}> : () -> ()
    %cst_185 = arith.constant dense<0.000000e+00> : vector<2x8x8xf32>
    %627 = tpu.matmul %625, %626, %cst_185 {dimension_numbers = #tpu.dot_dimension_numbers<[2], [2], [1], [1], [0, 0, 0, 1, 1, 1], [0], [0]>} : vector<2x8x16xbf16>, vector<2x8x16xbf16>, vector<2x8x8xf32> -> vector<2x8x8xf32>
    "tpu.trace_stop"() : () -> ()
    %cst_186 = arith.constant 2.500000e-01 : f32
    %628 = vector.broadcast %cst_186 : f32 to vector<2x8x8xf32>
    %629 = arith.mulf %627, %628 : vector<2x8x8xf32>
    %630 = vector.broadcast %0 : vector<2x1x8xf32> to vector<2x8x8xf32>
    %631 = arith.addf %629, %630 : vector<2x8x8xf32>
    %cst_187 = arith.constant dense<0xFF800000> : vector<2x8xf32>
    %632 = vector.multi_reduction <maximumf>, %631, %cst_187 [2] : vector<2x8x8xf32> to vector<2x8xf32>
    %633 = vector.shape_cast %632 : vector<2x8xf32> to vector<2x8x1xf32>
    %634 = vector.broadcast %633 : vector<2x8x1xf32> to vector<2x8x8xf32>
    %635 = arith.subf %631, %634 : vector<2x8x8xf32>
    %636 = math.exp %635 : vector<2x8x8xf32>
    %cst_188 = arith.constant dense<0.000000e+00> : vector<2x8xf32>
    %637 = vector.multi_reduction <add>, %636, %cst_188 [2] : vector<2x8x8xf32> to vector<2x8xf32>
    %638 = vector.shape_cast %637 : vector<2x8xf32> to vector<2x8x1xf32>
    %639 = tpu.reciprocal %638 {approx = true} : vector<2x8x1xf32> -> vector<2x8x1xf32>
    %640 = vector.broadcast %639 : vector<2x8x1xf32> to vector<2x8x8xf32>
    %641 = arith.mulf %636, %640 : vector<2x8x8xf32>
    %642 = vector.extract_strided_slice %622 {offsets = [0, 0, 0], sizes = [2, 8, 16], strides = [1, 1, 1]} : vector<2x8x32xf32> to vector<2x8x16xf32>
    %643 = arith.truncf %641 : vector<2x8x8xf32> to vector<2x8x8xbf16>
    %644 = arith.truncf %642 : vector<2x8x16xf32> to vector<2x8x16xbf16>
    "tpu.trace_start"() <{level = 10 : i32, message = "bqk,bkd->bqd"}> : () -> ()
    %cst_189 = arith.constant dense<0.000000e+00> : vector<2x8x16xf32>
    %645 = tpu.matmul %643, %644, %cst_189 {dimension_numbers = #tpu.dot_dimension_numbers<[2], [1], [1], [2], [0, 0, 0, 1, 1, 2], [0], [0]>} : vector<2x8x8xbf16>, vector<2x8x16xbf16>, vector<2x8x16xf32> -> vector<2x8x16xf32>
    "tpu.trace_stop"() : () -> ()
    %646 = vector.extract_strided_slice %612 {offsets = [0, 0, 16], sizes = [2, 8, 16], strides = [1, 1, 1]} : vector<2x8x32xf32> to vector<2x8x16xf32>
    %647 = vector.extract_strided_slice %617 {offsets = [0, 0, 16], sizes = [2, 8, 16], strides = [1, 1, 1]} : vector<2x8x32xf32> to vector<2x8x16xf32>
    %648 = arith.truncf %646 : vector<2x8x16xf32> to vector<2x8x16xbf16>
    %649 = arith.truncf %647 : vector<2x8x16xf32> to vector<2x8x16xbf16>
    "tpu.trace_start"() <{level = 10 : i32, message = "bqd,bkd->bqk"}> : () -> ()
    %cst_190 = arith.constant dense<0.000000e+00> : vector<2x8x8xf32>
    %650 = tpu.matmul %648, %649, %cst_190 {dimension_numbers = #tpu.dot_dimension_numbers<[2], [2], [1], [1], [0, 0, 0, 1, 1, 1], [0], [0]>} : vector<2x8x16xbf16>, vector<2x8x16xbf16>, vector<2x8x8xf32> -> vector<2x8x8xf32>
    "tpu.trace_stop"() : () -> ()
    %cst_191 = arith.constant 2.500000e-01 : f32
    %651 = vector.broadcast %cst_191 : f32 to vector<2x8x8xf32>
    %652 = arith.mulf %650, %651 : vector<2x8x8xf32>
    %653 = vector.broadcast %0 : vector<2x1x8xf32> to vector<2x8x8xf32>
    %654 = arith.addf %652, %653 : vector<2x8x8xf32>
    %cst_192 = arith.constant dense<0xFF800000> : vector<2x8xf32>
    %655 = vector.multi_reduction <maximumf>, %654, %cst_192 [2] : vector<2x8x8xf32> to vector<2x8xf32>
    %656 = vector.shape_cast %655 : vector<2x8xf32> to vector<2x8x1xf32>
    %657 = vector.broadcast %656 : vector<2x8x1xf32> to vector<2x8x8xf32>
    %658 = arith.subf %654, %657 : vector<2x8x8xf32>
    %659 = math.exp %658 : vector<2x8x8xf32>
    %cst_193 = arith.constant dense<0.000000e+00> : vector<2x8xf32>
    %660 = vector.multi_reduction <add>, %659, %cst_193 [2] : vector<2x8x8xf32> to vector<2x8xf32>
    %661 = vector.shape_cast %660 : vector<2x8xf32> to vector<2x8x1xf32>
    %662 = tpu.reciprocal %661 {approx = true} : vector<2x8x1xf32> -> vector<2x8x1xf32>
    %663 = vector.broadcast %662 : vector<2x8x1xf32> to vector<2x8x8xf32>
    %664 = arith.mulf %659, %663 : vector<2x8x8xf32>
    %665 = vector.extract_strided_slice %622 {offsets = [0, 0, 16], sizes = [2, 8, 16], strides = [1, 1, 1]} : vector<2x8x32xf32> to vector<2x8x16xf32>
    %666 = arith.truncf %664 : vector<2x8x8xf32> to vector<2x8x8xbf16>
    %667 = arith.truncf %665 : vector<2x8x16xf32> to vector<2x8x16xbf16>
    "tpu.trace_start"() <{level = 10 : i32, message = "bqk,bkd->bqd"}> : () -> ()
    %cst_194 = arith.constant dense<0.000000e+00> : vector<2x8x16xf32>
    %668 = tpu.matmul %666, %667, %cst_194 {dimension_numbers = #tpu.dot_dimension_numbers<[2], [1], [1], [2], [0, 0, 0, 1, 1, 2], [0], [0]>} : vector<2x8x8xbf16>, vector<2x8x16xbf16>, vector<2x8x16xf32> -> vector<2x8x16xf32>
    "tpu.trace_stop"() : () -> ()
    %669 = tpu.concatenate %645, %668 in 2 : vector<2x8x16xf32>, vector<2x8x16xf32> -> vector<2x8x32xf32>
    %670 = vector.shape_cast %669 : vector<2x8x32xf32> to vector<16x32xf32>
    %671 = arith.truncf %670 : vector<16x32xf32> to vector<16x32xbf16>
    %cst_195 = arith.constant dense<0.000000e+00> : vector<16x32xf32>
    %672 = tpu.matmul %671, %604, %cst_195 {dimension_numbers = #tpu.dot_dimension_numbers<[1], [0], [0], [1], [0, 0, 1, 1], [], []>} : vector<16x32xbf16>, vector<32x32xbf16>, vector<16x32xf32> -> vector<16x32xf32>
    %673 = vector.extract_strided_slice %600 {offsets = [3, 0], sizes = [1, 32], strides = [1, 1]} : vector<9x32xf32> to vector<1x32xf32>
    %674 = vector.broadcast %673 : vector<1x32xf32> to vector<16x32xf32>
    %675 = arith.addf %672, %674 : vector<16x32xf32>
    %676 = vector.shape_cast %675 : vector<16x32xf32> to vector<2x8x32xf32>
    %677 = arith.addf %598, %676 : vector<2x8x32xf32>
    %678 = vector.extract_strided_slice %600 {offsets = [4, 0], sizes = [1, 32], strides = [1, 1]} : vector<9x32xf32> to vector<1x32xf32>
    %679 = vector.extract_strided_slice %600 {offsets = [5, 0], sizes = [1, 32], strides = [1, 1]} : vector<9x32xf32> to vector<1x32xf32>
    %cst_196 = arith.constant dense<0.000000e+00> : vector<2x8xf32>
    %680 = vector.multi_reduction <add>, %677, %cst_196 [2] : vector<2x8x32xf32> to vector<2x8xf32>
    %681 = vector.shape_cast %680 : vector<2x8xf32> to vector<2x8x1xf32>
    %cst_197 = arith.constant 3.200000e+01 : f32
    %682 = vector.broadcast %cst_197 : f32 to vector<2x8x1xf32>
    %683 = arith.divf %681, %682 : vector<2x8x1xf32>
    %684 = vector.broadcast %683 : vector<2x8x1xf32> to vector<2x8x32xf32>
    %685 = arith.subf %677, %684 : vector<2x8x32xf32>
    %686 = arith.mulf %685, %685 : vector<2x8x32xf32>
    %cst_198 = arith.constant dense<0.000000e+00> : vector<2x8xf32>
    %687 = vector.multi_reduction <add>, %686, %cst_198 [2] : vector<2x8x32xf32> to vector<2x8xf32>
    %688 = vector.shape_cast %687 : vector<2x8xf32> to vector<2x8x1xf32>
    %cst_199 = arith.constant 3.200000e+01 : f32
    %689 = vector.broadcast %cst_199 : f32 to vector<2x8x1xf32>
    %690 = arith.divf %688, %689 : vector<2x8x1xf32>
    %691 = vector.broadcast %683 : vector<2x8x1xf32> to vector<2x8x32xf32>
    %692 = arith.subf %677, %691 : vector<2x8x32xf32>
    %cst_200 = arith.constant 9.99999996E-13 : f32
    %693 = vector.broadcast %cst_200 : f32 to vector<2x8x1xf32>
    %694 = arith.addf %690, %693 : vector<2x8x1xf32>
    %695 = math.rsqrt %694 : vector<2x8x1xf32>
    %696 = vector.broadcast %695 : vector<2x8x1xf32> to vector<2x8x32xf32>
    %697 = arith.mulf %692, %696 : vector<2x8x32xf32>
    %698 = vector.shape_cast %678 : vector<1x32xf32> to vector<1x1x32xf32>
    %699 = vector.broadcast %698 : vector<1x1x32xf32> to vector<2x8x32xf32>
    %700 = arith.mulf %697, %699 : vector<2x8x32xf32>
    %701 = vector.shape_cast %679 : vector<1x32xf32> to vector<1x1x32xf32>
    %702 = vector.broadcast %701 : vector<1x1x32xf32> to vector<2x8x32xf32>
    %703 = arith.addf %700, %702 : vector<2x8x32xf32>
    %c1_201 = arith.constant 1 : index
    %c0_202 = arith.constant 0 : index
    %c0_203 = arith.constant 0 : index
    %704 = vector.load %arg14[%c1_201, %c0_202, %c0_203] : memref<2x6x32xf32, #tpu.memory_space<vmem>>, vector<1x6x32xf32>
    %705 = vector.shape_cast %704 : vector<1x6x32xf32> to vector<6x32xf32>
    %c1_204 = arith.constant 1 : index
    %c0_205 = arith.constant 0 : index
    %c0_206 = arith.constant 0 : index
    %706 = vector.load %arg11[%c1_204, %c0_205, %c0_206] : memref<2x32x32xbf16, #tpu.memory_space<vmem>>, vector<1x32x32xbf16>
    %707 = vector.shape_cast %706 : vector<1x32x32xbf16> to vector<32x32xbf16>
    %c1_207 = arith.constant 1 : index
    %c0_208 = arith.constant 0 : index
    %c0_209 = arith.constant 0 : index
    %708 = vector.load %arg12[%c1_207, %c0_208, %c0_209] : memref<2x32x64xbf16, #tpu.memory_space<vmem>>, vector<1x32x64xbf16>
    %709 = vector.shape_cast %708 : vector<1x32x64xbf16> to vector<32x64xbf16>
    %c1_210 = arith.constant 1 : index
    %c0_211 = arith.constant 0 : index
    %c0_212 = arith.constant 0 : index
    %710 = vector.load %arg13[%c1_210, %c0_211, %c0_212] : memref<2x32x32xbf16, #tpu.memory_space<vmem>>, vector<1x32x32xbf16>
    %711 = vector.shape_cast %710 : vector<1x32x32xbf16> to vector<32x32xbf16>
    %712 = vector.shape_cast %703 : vector<2x8x32xf32> to vector<16x32xf32>
    %713 = arith.truncf %712 : vector<16x32xf32> to vector<16x32xbf16>
    %cst_213 = arith.constant dense<0.000000e+00> : vector<16x32xf32>
    %714 = tpu.matmul %713, %707, %cst_213 {dimension_numbers = #tpu.dot_dimension_numbers<[1], [0], [0], [1], [0, 0, 1, 1], [], []>} : vector<16x32xbf16>, vector<32x32xbf16>, vector<16x32xf32> -> vector<16x32xf32>
    %715 = vector.extract_strided_slice %705 {offsets = [0, 0], sizes = [1, 32], strides = [1, 1]} : vector<6x32xf32> to vector<1x32xf32>
    %716 = vector.broadcast %715 : vector<1x32xf32> to vector<16x32xf32>
    %717 = arith.addf %714, %716 : vector<16x32xf32>
    %718 = vector.shape_cast %717 : vector<16x32xf32> to vector<2x8x32xf32>
    %cst_214 = arith.constant dense<0.000000e+00> : vector<8x64xf32>
    %719 = tpu.matmul %4, %709, %cst_214 {dimension_numbers = #tpu.dot_dimension_numbers<[1], [0], [0], [1], [0, 0, 1, 1], [], []>} : vector<8x32xbf16>, vector<32x64xbf16>, vector<8x64xf32> -> vector<8x64xf32>
    %720 = vector.extract_strided_slice %719 {offsets = [0, 0], sizes = [8, 32], strides = [1, 1]} : vector<8x64xf32> to vector<8x32xf32>
    %721 = vector.extract_strided_slice %705 {offsets = [1, 0], sizes = [1, 32], strides = [1, 1]} : vector<6x32xf32> to vector<1x32xf32>
    %722 = vector.broadcast %721 : vector<1x32xf32> to vector<8x32xf32>
    %723 = arith.addf %720, %722 : vector<8x32xf32>
    %724 = vector.shape_cast %723 : vector<8x32xf32> to vector<2x4x32xf32>
    %725 = vector.extract_strided_slice %719 {offsets = [0, 32], sizes = [8, 32], strides = [1, 1]} : vector<8x64xf32> to vector<8x32xf32>
    %726 = vector.extract_strided_slice %705 {offsets = [2, 0], sizes = [1, 32], strides = [1, 1]} : vector<6x32xf32> to vector<1x32xf32>
    %727 = vector.broadcast %726 : vector<1x32xf32> to vector<8x32xf32>
    %728 = arith.addf %725, %727 : vector<8x32xf32>
    %729 = vector.shape_cast %728 : vector<8x32xf32> to vector<2x4x32xf32>
    %730 = vector.extract_strided_slice %718 {offsets = [0, 0, 0], sizes = [2, 8, 16], strides = [1, 1, 1]} : vector<2x8x32xf32> to vector<2x8x16xf32>
    %731 = vector.extract_strided_slice %724 {offsets = [0, 0, 0], sizes = [2, 4, 16], strides = [1, 1, 1]} : vector<2x4x32xf32> to vector<2x4x16xf32>
    %732 = arith.truncf %730 : vector<2x8x16xf32> to vector<2x8x16xbf16>
    %733 = arith.truncf %731 : vector<2x4x16xf32> to vector<2x4x16xbf16>
    "tpu.trace_start"() <{level = 10 : i32, message = "bqd,bkd->bqk"}> : () -> ()
    %cst_215 = arith.constant dense<0.000000e+00> : vector<2x8x4xf32>
    %734 = tpu.matmul %732, %733, %cst_215 {dimension_numbers = #tpu.dot_dimension_numbers<[2], [2], [1], [1], [0, 0, 0, 1, 1, 1], [0], [0]>} : vector<2x8x16xbf16>, vector<2x4x16xbf16>, vector<2x8x4xf32> -> vector<2x8x4xf32>
    "tpu.trace_stop"() : () -> ()
    %cst_216 = arith.constant 2.500000e-01 : f32
    %735 = vector.broadcast %cst_216 : f32 to vector<2x8x4xf32>
    %736 = arith.mulf %734, %735 : vector<2x8x4xf32>
    %737 = vector.broadcast %1 : vector<2x1x4xf32> to vector<2x8x4xf32>
    %738 = arith.addf %736, %737 : vector<2x8x4xf32>
    %cst_217 = arith.constant dense<0xFF800000> : vector<2x8xf32>
    %739 = vector.multi_reduction <maximumf>, %738, %cst_217 [2] : vector<2x8x4xf32> to vector<2x8xf32>
    %740 = vector.shape_cast %739 : vector<2x8xf32> to vector<2x8x1xf32>
    %741 = vector.broadcast %740 : vector<2x8x1xf32> to vector<2x8x4xf32>
    %742 = arith.subf %738, %741 : vector<2x8x4xf32>
    %743 = math.exp %742 : vector<2x8x4xf32>
    %cst_218 = arith.constant dense<0.000000e+00> : vector<2x8xf32>
    %744 = vector.multi_reduction <add>, %743, %cst_218 [2] : vector<2x8x4xf32> to vector<2x8xf32>
    %745 = vector.shape_cast %744 : vector<2x8xf32> to vector<2x8x1xf32>
    %746 = tpu.reciprocal %745 {approx = true} : vector<2x8x1xf32> -> vector<2x8x1xf32>
    %747 = vector.broadcast %746 : vector<2x8x1xf32> to vector<2x8x4xf32>
    %748 = arith.mulf %743, %747 : vector<2x8x4xf32>
    %749 = vector.extract_strided_slice %729 {offsets = [0, 0, 0], sizes = [2, 4, 16], strides = [1, 1, 1]} : vector<2x4x32xf32> to vector<2x4x16xf32>
    %750 = arith.truncf %748 : vector<2x8x4xf32> to vector<2x8x4xbf16>
    %751 = arith.truncf %749 : vector<2x4x16xf32> to vector<2x4x16xbf16>
    "tpu.trace_start"() <{level = 10 : i32, message = "bqk,bkd->bqd"}> : () -> ()
    %cst_219 = arith.constant dense<0.000000e+00> : vector<2x8x16xf32>
    %752 = tpu.matmul %750, %751, %cst_219 {dimension_numbers = #tpu.dot_dimension_numbers<[2], [1], [1], [2], [0, 0, 0, 1, 1, 2], [0], [0]>} : vector<2x8x4xbf16>, vector<2x4x16xbf16>, vector<2x8x16xf32> -> vector<2x8x16xf32>
    "tpu.trace_stop"() : () -> ()
    %753 = vector.extract_strided_slice %718 {offsets = [0, 0, 16], sizes = [2, 8, 16], strides = [1, 1, 1]} : vector<2x8x32xf32> to vector<2x8x16xf32>
    %754 = vector.extract_strided_slice %724 {offsets = [0, 0, 16], sizes = [2, 4, 16], strides = [1, 1, 1]} : vector<2x4x32xf32> to vector<2x4x16xf32>
    %755 = arith.truncf %753 : vector<2x8x16xf32> to vector<2x8x16xbf16>
    %756 = arith.truncf %754 : vector<2x4x16xf32> to vector<2x4x16xbf16>
    "tpu.trace_start"() <{level = 10 : i32, message = "bqd,bkd->bqk"}> : () -> ()
    %cst_220 = arith.constant dense<0.000000e+00> : vector<2x8x4xf32>
    %757 = tpu.matmul %755, %756, %cst_220 {dimension_numbers = #tpu.dot_dimension_numbers<[2], [2], [1], [1], [0, 0, 0, 1, 1, 1], [0], [0]>} : vector<2x8x16xbf16>, vector<2x4x16xbf16>, vector<2x8x4xf32> -> vector<2x8x4xf32>
    "tpu.trace_stop"() : () -> ()
    %cst_221 = arith.constant 2.500000e-01 : f32
    %758 = vector.broadcast %cst_221 : f32 to vector<2x8x4xf32>
    %759 = arith.mulf %757, %758 : vector<2x8x4xf32>
    %760 = vector.broadcast %1 : vector<2x1x4xf32> to vector<2x8x4xf32>
    %761 = arith.addf %759, %760 : vector<2x8x4xf32>
    %cst_222 = arith.constant dense<0xFF800000> : vector<2x8xf32>
    %762 = vector.multi_reduction <maximumf>, %761, %cst_222 [2] : vector<2x8x4xf32> to vector<2x8xf32>
    %763 = vector.shape_cast %762 : vector<2x8xf32> to vector<2x8x1xf32>
    %764 = vector.broadcast %763 : vector<2x8x1xf32> to vector<2x8x4xf32>
    %765 = arith.subf %761, %764 : vector<2x8x4xf32>
    %766 = math.exp %765 : vector<2x8x4xf32>
    %cst_223 = arith.constant dense<0.000000e+00> : vector<2x8xf32>
    %767 = vector.multi_reduction <add>, %766, %cst_223 [2] : vector<2x8x4xf32> to vector<2x8xf32>
    %768 = vector.shape_cast %767 : vector<2x8xf32> to vector<2x8x1xf32>
    %769 = tpu.reciprocal %768 {approx = true} : vector<2x8x1xf32> -> vector<2x8x1xf32>
    %770 = vector.broadcast %769 : vector<2x8x1xf32> to vector<2x8x4xf32>
    %771 = arith.mulf %766, %770 : vector<2x8x4xf32>
    %772 = vector.extract_strided_slice %729 {offsets = [0, 0, 16], sizes = [2, 4, 16], strides = [1, 1, 1]} : vector<2x4x32xf32> to vector<2x4x16xf32>
    %773 = arith.truncf %771 : vector<2x8x4xf32> to vector<2x8x4xbf16>
    %774 = arith.truncf %772 : vector<2x4x16xf32> to vector<2x4x16xbf16>
    "tpu.trace_start"() <{level = 10 : i32, message = "bqk,bkd->bqd"}> : () -> ()
    %cst_224 = arith.constant dense<0.000000e+00> : vector<2x8x16xf32>
    %775 = tpu.matmul %773, %774, %cst_224 {dimension_numbers = #tpu.dot_dimension_numbers<[2], [1], [1], [2], [0, 0, 0, 1, 1, 2], [0], [0]>} : vector<2x8x4xbf16>, vector<2x4x16xbf16>, vector<2x8x16xf32> -> vector<2x8x16xf32>
    "tpu.trace_stop"() : () -> ()
    %776 = tpu.concatenate %752, %775 in 2 : vector<2x8x16xf32>, vector<2x8x16xf32> -> vector<2x8x32xf32>
    %777 = vector.shape_cast %776 : vector<2x8x32xf32> to vector<16x32xf32>
    %778 = arith.truncf %777 : vector<16x32xf32> to vector<16x32xbf16>
    %cst_225 = arith.constant dense<0.000000e+00> : vector<16x32xf32>
    %779 = tpu.matmul %778, %711, %cst_225 {dimension_numbers = #tpu.dot_dimension_numbers<[1], [0], [0], [1], [0, 0, 1, 1], [], []>} : vector<16x32xbf16>, vector<32x32xbf16>, vector<16x32xf32> -> vector<16x32xf32>
    %780 = vector.extract_strided_slice %705 {offsets = [3, 0], sizes = [1, 32], strides = [1, 1]} : vector<6x32xf32> to vector<1x32xf32>
    %781 = vector.broadcast %780 : vector<1x32xf32> to vector<16x32xf32>
    %782 = arith.addf %779, %781 : vector<16x32xf32>
    %783 = vector.shape_cast %782 : vector<16x32xf32> to vector<2x8x32xf32>
    %784 = arith.addf %703, %783 : vector<2x8x32xf32>
    %785 = vector.extract_strided_slice %705 {offsets = [4, 0], sizes = [1, 32], strides = [1, 1]} : vector<6x32xf32> to vector<1x32xf32>
    %786 = vector.extract_strided_slice %705 {offsets = [5, 0], sizes = [1, 32], strides = [1, 1]} : vector<6x32xf32> to vector<1x32xf32>
    %cst_226 = arith.constant dense<0.000000e+00> : vector<2x8xf32>
    %787 = vector.multi_reduction <add>, %784, %cst_226 [2] : vector<2x8x32xf32> to vector<2x8xf32>
    %788 = vector.shape_cast %787 : vector<2x8xf32> to vector<2x8x1xf32>
    %cst_227 = arith.constant 3.200000e+01 : f32
    %789 = vector.broadcast %cst_227 : f32 to vector<2x8x1xf32>
    %790 = arith.divf %788, %789 : vector<2x8x1xf32>
    %791 = vector.broadcast %790 : vector<2x8x1xf32> to vector<2x8x32xf32>
    %792 = arith.subf %784, %791 : vector<2x8x32xf32>
    %793 = arith.mulf %792, %792 : vector<2x8x32xf32>
    %cst_228 = arith.constant dense<0.000000e+00> : vector<2x8xf32>
    %794 = vector.multi_reduction <add>, %793, %cst_228 [2] : vector<2x8x32xf32> to vector<2x8xf32>
    %795 = vector.shape_cast %794 : vector<2x8xf32> to vector<2x8x1xf32>
    %cst_229 = arith.constant 3.200000e+01 : f32
    %796 = vector.broadcast %cst_229 : f32 to vector<2x8x1xf32>
    %797 = arith.divf %795, %796 : vector<2x8x1xf32>
    %798 = vector.broadcast %790 : vector<2x8x1xf32> to vector<2x8x32xf32>
    %799 = arith.subf %784, %798 : vector<2x8x32xf32>
    %cst_230 = arith.constant 9.99999996E-13 : f32
    %800 = vector.broadcast %cst_230 : f32 to vector<2x8x1xf32>
    %801 = arith.addf %797, %800 : vector<2x8x1xf32>
    %802 = math.rsqrt %801 : vector<2x8x1xf32>
    %803 = vector.broadcast %802 : vector<2x8x1xf32> to vector<2x8x32xf32>
    %804 = arith.mulf %799, %803 : vector<2x8x32xf32>
    %805 = vector.shape_cast %785 : vector<1x32xf32> to vector<1x1x32xf32>
    %806 = vector.broadcast %805 : vector<1x1x32xf32> to vector<2x8x32xf32>
    %807 = arith.mulf %804, %806 : vector<2x8x32xf32>
    %808 = vector.shape_cast %786 : vector<1x32xf32> to vector<1x1x32xf32>
    %809 = vector.broadcast %808 : vector<1x1x32xf32> to vector<2x8x32xf32>
    %810 = arith.addf %807, %809 : vector<2x8x32xf32>
    %c3_231 = arith.constant 3 : index
    %c0_232 = arith.constant 0 : index
    %c0_233 = arith.constant 0 : index
    %811 = vector.load %arg7[%c3_231, %c0_232, %c0_233] : memref<4x32x128xbf16, #tpu.memory_space<vmem>>, vector<1x32x128xbf16>
    %812 = vector.shape_cast %811 : vector<1x32x128xbf16> to vector<32x128xbf16>
    %c3_234 = arith.constant 3 : index
    %c0_235 = arith.constant 0 : index
    %c0_236 = arith.constant 0 : index
    %813 = vector.load %arg8[%c3_234, %c0_235, %c0_236] : memref<4x1x128xf32, #tpu.memory_space<vmem>>, vector<1x1x128xf32>
    %814 = vector.shape_cast %813 : vector<1x1x128xf32> to vector<1x128xf32>
    %c3_237 = arith.constant 3 : index
    %c0_238 = arith.constant 0 : index
    %c0_239 = arith.constant 0 : index
    %815 = vector.load %arg9[%c3_237, %c0_238, %c0_239] : memref<4x128x32xbf16, #tpu.memory_space<vmem>>, vector<1x128x32xbf16>
    %816 = vector.shape_cast %815 : vector<1x128x32xbf16> to vector<128x32xbf16>
    %817 = vector.extract_strided_slice %600 {offsets = [6, 0], sizes = [1, 32], strides = [1, 1]} : vector<9x32xf32> to vector<1x32xf32>
    %818 = vector.shape_cast %810 : vector<2x8x32xf32> to vector<16x32xf32>
    %819 = arith.truncf %818 : vector<16x32xf32> to vector<16x32xbf16>
    %cst_240 = arith.constant dense<0.000000e+00> : vector<16x128xf32>
    %820 = tpu.matmul %819, %812, %cst_240 {dimension_numbers = #tpu.dot_dimension_numbers<[1], [0], [0], [1], [0, 0, 1, 1], [], []>} : vector<16x32xbf16>, vector<32x128xbf16>, vector<16x128xf32> -> vector<16x128xf32>
    %821 = vector.broadcast %814 : vector<1x128xf32> to vector<16x128xf32>
    %822 = arith.addf %820, %821 : vector<16x128xf32>
    %823 = arith.mulf %822, %822 : vector<16x128xf32>
    %824 = arith.mulf %822, %823 : vector<16x128xf32>
    %cst_241 = arith.constant 4.471500e-02 : f32
    %825 = vector.broadcast %cst_241 : f32 to vector<16x128xf32>
    %826 = arith.mulf %825, %824 : vector<16x128xf32>
    %827 = arith.addf %822, %826 : vector<16x128xf32>
    %cst_242 = arith.constant 0.797884583 : f32
    %828 = vector.broadcast %cst_242 : f32 to vector<16x128xf32>
    %829 = arith.mulf %828, %827 : vector<16x128xf32>
    %830 = math.tanh %829 : vector<16x128xf32>
    %cst_243 = arith.constant 1.000000e+00 : f32
    %831 = vector.broadcast %cst_243 : f32 to vector<16x128xf32>
    %832 = arith.addf %831, %830 : vector<16x128xf32>
    %cst_244 = arith.constant 5.000000e-01 : f32
    %833 = vector.broadcast %cst_244 : f32 to vector<16x128xf32>
    %834 = arith.mulf %833, %832 : vector<16x128xf32>
    %835 = arith.mulf %822, %834 : vector<16x128xf32>
    %836 = arith.truncf %835 : vector<16x128xf32> to vector<16x128xbf16>
    %cst_245 = arith.constant dense<0.000000e+00> : vector<16x32xf32>
    %837 = tpu.matmul %836, %816, %cst_245 {dimension_numbers = #tpu.dot_dimension_numbers<[1], [0], [0], [1], [0, 0, 1, 1], [], []>} : vector<16x128xbf16>, vector<128x32xbf16>, vector<16x32xf32> -> vector<16x32xf32>
    %838 = vector.broadcast %817 : vector<1x32xf32> to vector<16x32xf32>
    %839 = arith.addf %837, %838 : vector<16x32xf32>
    %840 = vector.shape_cast %839 : vector<16x32xf32> to vector<2x8x32xf32>
    %841 = arith.addf %810, %840 : vector<2x8x32xf32>
    %842 = vector.extract_strided_slice %600 {offsets = [7, 0], sizes = [1, 32], strides = [1, 1]} : vector<9x32xf32> to vector<1x32xf32>
    %843 = vector.extract_strided_slice %600 {offsets = [8, 0], sizes = [1, 32], strides = [1, 1]} : vector<9x32xf32> to vector<1x32xf32>
    %cst_246 = arith.constant dense<0.000000e+00> : vector<2x8xf32>
    %844 = vector.multi_reduction <add>, %841, %cst_246 [2] : vector<2x8x32xf32> to vector<2x8xf32>
    %845 = vector.shape_cast %844 : vector<2x8xf32> to vector<2x8x1xf32>
    %cst_247 = arith.constant 3.200000e+01 : f32
    %846 = vector.broadcast %cst_247 : f32 to vector<2x8x1xf32>
    %847 = arith.divf %845, %846 : vector<2x8x1xf32>
    %848 = vector.broadcast %847 : vector<2x8x1xf32> to vector<2x8x32xf32>
    %849 = arith.subf %841, %848 : vector<2x8x32xf32>
    %850 = arith.mulf %849, %849 : vector<2x8x32xf32>
    %cst_248 = arith.constant dense<0.000000e+00> : vector<2x8xf32>
    %851 = vector.multi_reduction <add>, %850, %cst_248 [2] : vector<2x8x32xf32> to vector<2x8xf32>
    %852 = vector.shape_cast %851 : vector<2x8xf32> to vector<2x8x1xf32>
    %cst_249 = arith.constant 3.200000e+01 : f32
    %853 = vector.broadcast %cst_249 : f32 to vector<2x8x1xf32>
    %854 = arith.divf %852, %853 : vector<2x8x1xf32>
    %855 = vector.broadcast %847 : vector<2x8x1xf32> to vector<2x8x32xf32>
    %856 = arith.subf %841, %855 : vector<2x8x32xf32>
    %cst_250 = arith.constant 9.99999996E-13 : f32
    %857 = vector.broadcast %cst_250 : f32 to vector<2x8x1xf32>
    %858 = arith.addf %854, %857 : vector<2x8x1xf32>
    %859 = math.rsqrt %858 : vector<2x8x1xf32>
    %860 = vector.broadcast %859 : vector<2x8x1xf32> to vector<2x8x32xf32>
    %861 = arith.mulf %856, %860 : vector<2x8x32xf32>
    %862 = vector.shape_cast %842 : vector<1x32xf32> to vector<1x1x32xf32>
    %863 = vector.broadcast %862 : vector<1x1x32xf32> to vector<2x8x32xf32>
    %864 = arith.mulf %861, %863 : vector<2x8x32xf32>
    %865 = vector.shape_cast %843 : vector<1x32xf32> to vector<1x1x32xf32>
    %866 = vector.broadcast %865 : vector<1x1x32xf32> to vector<2x8x32xf32>
    %867 = arith.addf %864, %866 : vector<2x8x32xf32>
    %c0_251 = arith.constant 0 : index
    %c0_252 = arith.constant 0 : index
    %868 = vector.load %arg15[%c0_251, %c0_252] : memref<33x10xf32, #tpu.memory_space<vmem>>, vector<33x10xf32>
    %869 = tpu.iota {dimensions = array<i32: 0>} : vector<2x1xi32>
    %c0_i32 = arith.constant 0 : i32
    %870 = vector.broadcast %c0_i32 : i32 to vector<2x1xi32>
    %c0_i32_253 = arith.constant 0 : i32
    %871 = vector.broadcast %c0_i32_253 : i32 to vector<2x1xi32>
    %872 = arith.cmpi eq, %869, %871 : vector<2x1xi32>
    %c0_254 = arith.constant 0 : index
    %873 = memref.load %arg0[%c0_254] : memref<2xi32, #tpu.memory_space<smem>>
    %874 = vector.broadcast %873 : i32 to vector<2x1xi32>
    %875 = arith.select %872, %874, %870 : vector<2x1xi1>, vector<2x1xi32>
    %c1_i32 = arith.constant 1 : i32
    %876 = vector.broadcast %c1_i32 : i32 to vector<2x1xi32>
    %877 = arith.cmpi eq, %869, %876 : vector<2x1xi32>
    %c1_255 = arith.constant 1 : index
    %878 = memref.load %arg0[%c1_255] : memref<2xi32, #tpu.memory_space<smem>>
    %879 = vector.broadcast %878 : i32 to vector<2x1xi32>
    %880 = arith.select %877, %879, %875 : vector<2x1xi1>, vector<2x1xi32>
    %881 = vector.extract_strided_slice %868 {offsets = [0, 0], sizes = [32, 10], strides = [1, 1]} : vector<33x10xf32> to vector<32x10xf32>
    %882 = vector.extract_strided_slice %868 {offsets = [32, 0], sizes = [1, 10], strides = [1, 1]} : vector<33x10xf32> to vector<1x10xf32>
    %cst_256 = arith.constant dense<0.000000e+00> : vector<2x32xf32>
    %883 = vector.multi_reduction <add>, %867, %cst_256 [1] : vector<2x8x32xf32> to vector<2x32xf32>
    %cst_257 = arith.constant 8.000000e+00 : f32
    %884 = vector.broadcast %cst_257 : f32 to vector<2x32xf32>
    %885 = arith.divf %883, %884 : vector<2x32xf32>
    %886 = arith.truncf %885 : vector<2x32xf32> to vector<2x32xbf16>
    %887 = arith.truncf %881 : vector<32x10xf32> to vector<32x10xbf16>
    %cst_258 = arith.constant dense<0.000000e+00> : vector<2x10xf32>
    %888 = tpu.matmul %886, %887, %cst_258 {dimension_numbers = #tpu.dot_dimension_numbers<[1], [0], [0], [1], [0, 0, 1, 1], [], []>} : vector<2x32xbf16>, vector<32x10xbf16>, vector<2x10xf32> -> vector<2x10xf32>
    %889 = vector.broadcast %882 : vector<1x10xf32> to vector<2x10xf32>
    %890 = arith.addf %888, %889 : vector<2x10xf32>
    %891 = tpu.iota {dimensions = array<i32: 1>} : vector<2x10xi32>
    %892 = vector.broadcast %880 : vector<2x1xi32> to vector<2x10xi32>
    %893 = arith.cmpi eq, %891, %892 : vector<2x10xi32>
    %894 = arith.extui %893 : vector<2x10xi1> to vector<2x10xi32>
    %895 = arith.sitofp %894 : vector<2x10xi32> to vector<2x10xf32>
    %cst_259 = arith.constant dense<0xFF800000> : vector<2xf32>
    %896 = vector.multi_reduction <maximumf>, %890, %cst_259 [1] : vector<2x10xf32> to vector<2xf32>
    %897 = vector.shape_cast %896 : vector<2xf32> to vector<2x1xf32>
    %898 = vector.broadcast %897 : vector<2x1xf32> to vector<2x10xf32>
    %899 = arith.subf %890, %898 : vector<2x10xf32>
    %900 = math.exp %899 : vector<2x10xf32>
    %cst_260 = arith.constant dense<0.000000e+00> : vector<2xf32>
    %901 = vector.multi_reduction <add>, %900, %cst_260 [1] : vector<2x10xf32> to vector<2xf32>
    %902 = vector.shape_cast %901 : vector<2xf32> to vector<2x1xf32>
    %903 = math.log %902 : vector<2x1xf32>
    %904 = arith.addf %903, %897 : vector<2x1xf32>
    %905 = arith.mulf %890, %895 : vector<2x10xf32>
    %cst_261 = arith.constant dense<0.000000e+00> : vector<2xf32>
    %906 = vector.multi_reduction <add>, %905, %cst_261 [1] : vector<2x10xf32> to vector<2xf32>
    %907 = vector.shape_cast %906 : vector<2xf32> to vector<2x1xf32>
    %908 = arith.subf %904, %907 : vector<2x1xf32>
    %909 = vector.shape_cast %908 : vector<2x1xf32> to vector<1x2x1xf32>
    %cst_262 = arith.constant dense<0.000000e+00> : vector<1xf32>
    %910 = vector.multi_reduction <add>, %909, %cst_262 [1, 2] : vector<1x2x1xf32> to vector<1xf32>
    %911 = vector.shape_cast %910 : vector<1xf32> to vector<1x1x1xf32>
    %912 = vector.extract %911[0, 0, 0] : f32 from vector<1x1x1xf32>
    %cst_263 = arith.constant 2.000000e+00 : f32
    %913 = arith.divf %912, %cst_263 : f32
    %914 = vector.broadcast %897 : vector<2x1xf32> to vector<2x10xf32>
    %915 = arith.cmpf oeq, %890, %914 : vector<2x10xf32>
    %c10_i32 = arith.constant 10 : i32
    %916 = vector.broadcast %c10_i32 : i32 to vector<2x10xi32>
    %917 = arith.select %915, %891, %916 : vector<2x10xi1>, vector<2x10xi32>
    %cst_264 = arith.constant dense<2147483647> : vector<2xi32>
    %918 = vector.multi_reduction <minsi>, %917, %cst_264 [1] : vector<2x10xi32> to vector<2xi32>
    %919 = vector.shape_cast %918 : vector<2xi32> to vector<2x1xi32>
    %920 = arith.cmpi eq, %919, %880 : vector<2x1xi32>
    %921 = arith.extui %920 : vector<2x1xi1> to vector<2x1xi32>
    %922 = arith.sitofp %921 : vector<2x1xi32> to vector<2x1xf32>
    %923 = vector.shape_cast %922 : vector<2x1xf32> to vector<1x2x1xf32>
    %cst_265 = arith.constant dense<0.000000e+00> : vector<1xf32>
    %924 = vector.multi_reduction <add>, %923, %cst_265 [1, 2] : vector<1x2x1xf32> to vector<1xf32>
    %925 = vector.shape_cast %924 : vector<1xf32> to vector<1x1x1xf32>
    %926 = vector.extract %925[0, 0, 0] : f32 from vector<1x1x1xf32>
    %cst_266 = arith.constant 2.000000e+00 : f32
    %927 = arith.divf %926, %cst_266 : f32
    %928 = tpu.iota {dimensions = array<i32: 1>} : vector<2x128xi32>
    %c0_i32_267 = arith.constant 0 : i32
    %929 = vector.broadcast %c0_i32_267 : i32 to vector<2x128xi32>
    %930 = arith.cmpi eq, %928, %929 : vector<2x128xi32>
    %931 = arith.sitofp %919 : vector<2x1xi32> to vector<2x1xf32>
    %c1_i32_268 = arith.constant 1 : i32
    %932 = vector.broadcast %c1_i32_268 : i32 to vector<2x128xi32>
    %933 = arith.cmpi eq, %928, %932 : vector<2x128xi32>
    %c2_i32 = arith.constant 2 : i32
    %934 = vector.broadcast %c2_i32 : i32 to vector<2x128xi32>
    %935 = arith.cmpi eq, %928, %934 : vector<2x128xi32>
    %cst_269 = arith.constant 0.000000e+00 : f32
    %936 = vector.broadcast %927 : f32 to vector<2x128xf32>
    %937 = vector.broadcast %cst_269 : f32 to vector<2x128xf32>
    %938 = arith.select %935, %936, %937 : vector<2x128xi1>, vector<2x128xf32>
    %939 = vector.broadcast %913 : f32 to vector<2x128xf32>
    %940 = arith.select %933, %939, %938 : vector<2x128xi1>, vector<2x128xf32>
    %941 = vector.shape_cast %931 : vector<2x1xf32> to vector<2x1xf32>
    %942 = vector.broadcast %941 : vector<2x1xf32> to vector<2x128xf32>
    %943 = arith.select %930, %942, %940 : vector<2x128xi1>, vector<2x128xf32>
    %c0_270 = arith.constant 0 : index
    %c0_271 = arith.constant 0 : index
    %944 = vector.load %arg16[%c0_270, %c0_271] : memref<2x128xf32, #tpu.memory_space<vmem>>, vector<2x128xf32>
    tpu.vector_store %arg16[%c0_270, %c0_271], %943 {strides = array<i32>} : memref<2x128xf32, #tpu.memory_space<vmem>>, vector<2x128xf32>,
    return
  }
}

</mosaic_0001>

<llo_original>
// kernel: albef_forward.1
$region0: #{albef_forward.1}
  #allocation0 [shape = 'u32[]', space=smem, size = 0x4, offset = 0x4, fixed_abs, tag = 'smem constant byte address 0x4 - core index']
  #allocation1 [shape = 'u32[144,128]{1,0:T(1,128)}', space=vmem, size = 0x12000, scoped, tag = 'internal scratch']
  %s0 = inlined_call_operand.vmem [shape: s32[2], index: 0, kind: input, shape index: {}]
  %s1 = inlined_call_operand.vmem [shape: f32[2,8,32], index: 1, kind: input, shape index: {}]
  %s2 = inlined_call_operand.vmem [shape: f32[2,4,32], index: 2, kind: input, shape index: {}]
  %s3 = inlined_call_operand.vmem [shape: f32[2,1,8], index: 3, kind: input, shape index: {}]
  %s4 = inlined_call_operand.vmem [shape: f32[2,1,4], index: 4, kind: input, shape index: {}]
  %s5 = inlined_call_operand.vmem [shape: bf16[4,32,96], index: 5, kind: input, shape index: {}]
  %s6 = inlined_call_operand.vmem [shape: bf16[4,32,32], index: 6, kind: input, shape index: {}]
  %s7 = inlined_call_operand.vmem [shape: bf16[4,32,128], index: 7, kind: input, shape index: {}]
  %s8 = inlined_call_operand.vmem [shape: f32[4,1,128], index: 8, kind: input, shape index: {}]
  %s9 = inlined_call_operand.vmem [shape: bf16[4,128,32], index: 9, kind: input, shape index: {}]
  %s10 = inlined_call_operand.vmem [shape: f32[4,9,32], index: 10, kind: input, shape index: {}]
  %s11 = inlined_call_operand.vmem [shape: bf16[2,32,32], index: 11, kind: input, shape index: {}]
  %s12 = inlined_call_operand.vmem [shape: bf16[2,32,64], index: 12, kind: input, shape index: {}]
  %s13 = inlined_call_operand.vmem [shape: bf16[2,32,32], index: 13, kind: input, shape index: {}]
  %s14 = inlined_call_operand.vmem [shape: f32[2,6,32], index: 14, kind: input, shape index: {}]
  %s15 = inlined_call_operand.vmem [shape: f32[33,10], index: 15, kind: input, shape index: {}]
  %s16 = inlined_call_operand.vmem [shape: f32[2,128], index: 16, kind: output, shape index: {}]
  %s17 = sld [smem:[#allocation0]]
  $region78: #{albef_forward.1} parent=0
    _
  %s19 = ssub.s32 1, %s17
  %s20 = scalar_select 0, %s19, %s17
  $region1: #{albef_forward.1} parent=0
    #allocation2 [shape = 'u8[512]{0}', space=smem, size = 0x200, scoped, tag = 'input window, operand 0, single buffered']
    #allocation3 [shape = 's32[1]{0}', space=sflag, size = 0x4, scoped, tag = 'scoped memory for albef_forward.1']
    %21 = vsyncpa [#allocation3], 0
    // Predicated region
    $region2: #{albef_forward.1} parent=1 // pred_check
      _
    $region3: #{albef_forward.1} parent=1 // pred_check_branch
      %23 = sbr.rel (0) target = $region5
    $region4: #{albef_forward.1} parent=1 // pred_region
      %s25 = ssub.s32 16, 16
      %26 = vsyncadd [#allocation3], %s25
      %s28 = sshll.u32 %s0, 4
      %s29 = int_to_ptr.vmem [resolvable:$true] %s28
      %31 = dma.vmem_to_smem %s29, 16, [#allocation2], [#allocation3]
    $region5: #{albef_forward.1} parent=1 // pred_fallthru
      _
    // Predicated region
    $region6: #{albef_forward.1} parent=1 // pred_check
      _
    $region7: #{albef_forward.1} parent=1 // pred_check_branch
      %33 = sbr.rel (0) target = $region9
    $region8: #{albef_forward.1} parent=1 // pred_region
      _
    $region9: #{albef_forward.1} parent=1 // pred_fallthru
      _
    // Predicated region
    $region10: #{albef_forward.1} parent=1 // pred_check
      _
    $region11: #{albef_forward.1} parent=1 // pred_check_branch
      %35 = sbr.rel (0) target = $region13
    $region12: #{albef_forward.1} parent=1 // pred_region
      _
    $region13: #{albef_forward.1} parent=1 // pred_fallthru
      _
    // Predicated region
    $region14: #{albef_forward.1} parent=1 // pred_check
      _
    $region15: #{albef_forward.1} parent=1 // pred_check_branch
      %37 = sbr.rel (0) target = $region17
    $region16: #{albef_forward.1} parent=1 // pred_region
      _
    $region17: #{albef_forward.1} parent=1 // pred_fallthru
      _
    // Predicated region
    $region18: #{albef_forward.1} parent=1 // pred_check
      _
    $region19: #{albef_forward.1} parent=1 // pred_check_branch
      %39 = sbr.rel (0) target = $region21
    $region20: #{albef_forward.1} parent=1 // pred_region
      _
    $region21: #{albef_forward.1} parent=1 // pred_fallthru
      _
    // Predicated region
    $region22: #{albef_forward.1} parent=1 // pred_check
      _
    $region23: #{albef_forward.1} parent=1 // pred_check_branch
      %41 = sbr.rel (0) target = $region25
    $region24: #{albef_forward.1} parent=1 // pred_region
      _
    $region25: #{albef_forward.1} parent=1 // pred_fallthru
      _
    // Predicated region
    $region26: #{albef_forward.1} parent=1 // pred_check
      _
    $region27: #{albef_forward.1} parent=1 // pred_check_branch
      %43 = sbr.rel (0) target = $region29
    $region28: #{albef_forward.1} parent=1 // pred_region
      _
    $region29: #{albef_forward.1} parent=1 // pred_fallthru
      _
    // Predicated region
    $region30: #{albef_forward.1} parent=1 // pred_check
      _
    $region31: #{albef_forward.1} parent=1 // pred_check_branch
      %45 = sbr.rel (0) target = $region33
    $region32: #{albef_forward.1} parent=1 // pred_region
      _
    $region33: #{albef_forward.1} parent=1 // pred_fallthru
      _
    // Predicated region
    $region34: #{albef_forward.1} parent=1 // pred_check
      _
    $region35: #{albef_forward.1} parent=1 // pred_check_branch
      %47 = sbr.rel (0) target = $region37
    $region36: #{albef_forward.1} parent=1 // pred_region
      _
    $region37: #{albef_forward.1} parent=1 // pred_fallthru
      _
    // Predicated region
    $region38: #{albef_forward.1} parent=1 // pred_check
      _
    $region39: #{albef_forward.1} parent=1 // pred_check_branch
      %49 = sbr.rel (0) target = $region41
    $region40: #{albef_forward.1} parent=1 // pred_region
      _
    $region41: #{albef_forward.1} parent=1 // pred_fallthru
      _
    // Predicated region
    $region42: #{albef_forward.1} parent=1 // pred_check
      _
    $region43: #{albef_forward.1} parent=1 // pred_check_branch
      %51 = sbr.rel (0) target = $region45
    $region44: #{albef_forward.1} parent=1 // pred_region
      _
    $region45: #{albef_forward.1} parent=1 // pred_fallthru
      _
    // Predicated region
    $region46: #{albef_forward.1} parent=1 // pred_check
      _
    $region47: #{albef_forward.1} parent=1 // pred_check_branch
      %53 = sbr.rel (0) target = $region49
    $region48: #{albef_forward.1} parent=1 // pred_region
      _
    $region49: #{albef_forward.1} parent=1 // pred_fallthru
      _
    // Predicated region
    $region50: #{albef_forward.1} parent=1 // pred_check
      _
    $region51: #{albef_forward.1} parent=1 // pred_check_branch
      %55 = sbr.rel (0) target = $region53
    $region52: #{albef_forward.1} parent=1 // pred_region
      _
    $region53: #{albef_forward.1} parent=1 // pred_fallthru
      _
    // Predicated region
    $region54: #{albef_forward.1} parent=1 // pred_check
      _
    $region55: #{albef_forward.1} parent=1 // pred_check_branch
      %57 = sbr.rel (0) target = $region57
    $region56: #{albef_forward.1} parent=1 // pred_region
      _
    $region57: #{albef_forward.1} parent=1 // pred_fallthru
      _
    // Predicated region
    $region58: #{albef_forward.1} parent=1 // pred_check
      _
    $region59: #{albef_forward.1} parent=1 // pred_check_branch
      %59 = sbr.rel (0) target = $region61
    $region60: #{albef_forward.1} parent=1 // pred_region
      _
    $region61: #{albef_forward.1} parent=1 // pred_fallthru
      _
    // Predicated region
    $region62: #{albef_forward.1} parent=1 // pred_check
      _
    $region63: #{albef_forward.1} parent=1 // pred_check_branch
      %61 = sbr.rel (0) target = $region65
    $region64: #{albef_forward.1} parent=1 // pred_region
      _
    $region65: #{albef_forward.1} parent=1 // pred_fallthru
      _
    // Predicated region
    $region66: #{albef_forward.1} parent=1 // pred_check
      _
    $region67: #{albef_forward.1} parent=1 // pred_check_branch
      %63 = sbr.rel (0) target = $region69
    $region68: #{albef_forward.1} parent=1 // pred_region
      %64 = dma.done [#allocation3], 16
    $region69: #{albef_forward.1} parent=1 // pred_fallthru
      _
    %65 = sfence
    %v67 = vld [vmem:[%s3] sm:$0x1]
    %v68 = vld [vmem:[%s3 + $0x1] sm:$0x1]
    %v69 = vld [vmem:[%s4] sm:$0x1]
    %v70 = vld [vmem:[%s4 + $0x1] sm:$0x1]
    %v71 = vld [vmem:[%s2] sm:$0xf]
    %v72 = vld [vmem:[%s2 + $0x4] sm:$0xf]
    %v75 = vcombine.low %v71, %v72
    %v77 = vpack.c.bf16 %v75, %v75
    %v78 = vld [vmem:[%s1] sm:$0xff]
    %v79 = vld [vmem:[%s1 + $0x8] sm:$0xff]
    %v80 = vld [vmem:[%s10] sm:$0xff]
    %v81 = vld [vmem:[%s10 + $0x8] sm:$0x1]
    %v82 = vld [vmem:[%s5] sm:$0xf]
    %v83 = vld [vmem:[%s5 + $0x4] sm:$0xf]
    %v84 = vld [vmem:[%s5 + $0x8] sm:$0xf]
    %v85 = vld [vmem:[%s5 + $0xc] sm:$0xf]
    %v86 = vld [vmem:[%s6] sm:$0xf]
    %v87 = vld [vmem:[%s6 + $0x4] sm:$0xf]
    %v88 = vld [vmem:[%s6 + $0x8] sm:$0xf]
    %v89 = vld [vmem:[%s6 + $0xc] sm:$0xf]
    %v90 = vpack.c.bf16 %v79, %v78
    %v95 = vunpack.c.l.b16 %v82
    %v96 = vunpack.c.l.b16 %v83
    %v97 = vunpack.c.l.b16 %v84
    %v98 = vunpack.c.l.b16 %v85
    %v99 = vpack.c.b16 %v96, %v95
    %v100 = vpack.c.b16 %v98, %v97
    %vm103 = vcmask 261120
    %v105 = vsel %vm103, %v90, 0
    %107 = vmatprep.subr.bf16.mxu0 0
    %108 = vmatpush1.bf16.msra.mxu0 %v99
    %109 = vmatprep.subr.bf16.mxu0 0
    %110 = vmatpush1.bf16.msra.mxu0 %v100
    %111 = vmatprep.subr.bf16.mxu0 0
    %112 = vmatpush1.bf16.msra.mxu0 0
    %113 = vmatprep.subr.bf16.mxu0 0
    %114 = vmatpush1.bf16.msra.mxu0 0
    %115 = vmatprep.subr.bf16.mxu0 0
    %116 = vmatpush1.bf16.msra.mxu0 0
    %117 = vmatprep.subr.bf16.mxu0 0
    %118 = vmatpush1.bf16.msra.mxu0 0
    %119 = vmatprep.subr.bf16.mxu0 0
    %120 = vmatpush1.bf16.msra.mxu0 0
    %121 = vmatprep.subr.bf16.mxu0 0
    %122 = vmatpush1.bf16.msra.mxu0 0
    %123 = vmatprep.subr.bf16.mxu0 0
    %124 = vmatpush1.bf16.msra.mxu0 0
    %125 = vmatprep.subr.bf16.mxu0 0
    %126 = vmatpush1.bf16.msra.mxu0 0
    %127 = vmatprep.subr.bf16.mxu0 0
    %128 = vmatpush1.bf16.msra.mxu0 0
    %129 = vmatprep.subr.bf16.mxu0 0
    %130 = vmatpush1.bf16.msra.mxu0 0
    %131 = vmatprep.subr.bf16.mxu0 0
    %132 = vmatpush1.bf16.msra.mxu0 0
    %133 = vmatprep.subr.bf16.mxu0 0
    %134 = vmatpush1.bf16.msra.mxu0 0
    %135 = vmatprep.subr.bf16.mxu0 0
    %136 = vmatpush1.bf16.msra.mxu0 0
    %137 = vmatprep.subr.bf16.mxu0 0
    %138 = vmatpush1.bf16.msra.mxu0 0
    %139 = vmatprep.mubr.bf16.mxu0 0
    %140 = vmatmul.mubr.bf16.gmra.mrb[0].mxu0 %v105
    %v141 = vpop.f32.mrb[0].mxu0
    %v142 = vadd.f32 0.0, %v141
    %v143 = vpop.f32.mrb[0].mxu0
    %v144 = vpop.f32.mrb[0].mxu0
    %v145 = vadd.f32 0.0, %v144
    %v146 = vpop.f32.mrb[0].mxu0
    %147 = vdwg.mxu0
    %v148 = vlaneseq
    %v149 = vshrl.u32 %v148, 7
    %v150 = vsub.s32 0, %v149
    %v151 = vrot.slane %v80, %v150
    %v152 = vadd.f32 %v142, %v151
    %v153 = vadd.f32 %v145, %v151
    %v154 = vlaneseq
    %v155 = vshrl.u32 %v154, 7
    %v156 = vsub.s32 1, %v155
    %v157 = vrot.slane %v80, %v156
    %159 = vrot.lane.b32.xlu0 %v157, 32
    %v160 = vpop.permute.xlu0 %159
    %v162 = vadd.f32 %v142, %v160
    %v163 = vadd.f32 %v145, %v160
    %v164 = vlaneseq
    %v165 = vshrl.u32 %v164, 7
    %v166 = vsub.s32 2, %v165
    %v167 = vrot.slane %v80, %v166
    %169 = vrot.lane.b32.xlu0 %v167, 64
    %v170 = vpop.permute.xlu0 %169
    %v172 = vadd.f32 %v142, %v170
    %v173 = vadd.f32 %v145, %v170
    %v174 = vpack.c.bf16 %v152, %v152
    %v175 = vpack.c.bf16 %v153, %v153
    %v176 = vpack.c.bf16 %v162, %v162
    %v177 = vpack.c.bf16 %v163, %v163
    %179 = vrot.lane.b32.xlu0 %v176, 96
    %v180 = vpop.permute.xlu0 %179
    %vm181 = vcmask 130048
    %v183 = vsel %vm181, %v174, 0
    %v186 = vsel %vm181, %v180, 0
    %188 = vmatprep.subr.bf16.mxu0 0
    %189 = vmatpush1.bf16.xpose.msra.mxu0 %v186
    %190 = vmatprep.subr.bf16.mxu0 0
    %191 = vmatpush1.bf16.xpose.msra.mxu0 0
    %192 = vmatprep.subr.bf16.mxu0 0
    %193 = vmatpush1.bf16.xpose.msra.mxu0 0
    %194 = vmatprep.subr.bf16.mxu0 0
    %195 = vmatpush1.bf16.xpose.msra.mxu0 0
    %196 = vmatprep.subr.bf16.mxu0 0
    %197 = vmatpush1.bf16.xpose.msra.mxu0 0
    %198 = vmatprep.subr.bf16.mxu0 0
    %199 = vmatpush1.bf16.xpose.msra.mxu0 0
    %200 = vmatprep.subr.bf16.mxu0 0
    %201 = vmatpush1.bf16.xpose.msra.mxu0 0
    %202 = vmatprep.subr.bf16.mxu0 0
    %203 = vmatpush1.bf16.xpose.msra.mxu0 0
    %204 = vmatprep.subr.bf16.mxu0 0
    %205 = vmatpush1.bf16.xpose.msra.mxu0 0
    %206 = vmatprep.subr.bf16.mxu0 0
    %207 = vmatpush1.bf16.xpose.msra.mxu0 0
    %208 = vmatprep.subr.bf16.mxu0 0
    %209 = vmatpush1.bf16.xpose.msra.mxu0 0
    %210 = vmatprep.subr.bf16.mxu0 0
    %211 = vmatpush1.bf16.xpose.msra.mxu0 0
    %212 = vmatprep.subr.bf16.mxu0 0
    %213 = vmatpush1.bf16.xpose.msra.mxu0 0
    %214 = vmatprep.subr.bf16.mxu0 0
    %215 = vmatpush1.bf16.xpose.msra.mxu0 0
    %216 = vmatprep.subr.bf16.mxu0 0
    %217 = vmatpush1.bf16.xpose.msra.mxu0 0
    %218 = vmatprep.subr.bf16.mxu0 0
    %219 = vmatpush1.bf16.xpose.msra.mxu0 0
    %220 = vmatprep.mubr.bf16.mxu0 0
    %221 = vmatmul.mubr.bf16.gmra.mrb[0].mxu0 %v183
    %v222 = vpop.f32.mrb[0].mxu0
    %v223 = vadd.f32 0.0, %v222
    %v224 = vpop.f32.mrb[0].mxu0
    %v225 = vpop.f32.mrb[0].mxu0
    %v226 = vpop.f32.mrb[0].mxu0
    %227 = vdwg.mxu0
    %229 = vrot.lane.b32.xlu0 %v177, 96
    %v230 = vpop.permute.xlu0 %229
    %v232 = vsel %vm181, %v175, 0
    %v235 = vsel %vm181, %v230, 0
    %237 = vmatprep.subr.bf16.mxu0 0
    %238 = vmatpush1.bf16.xpose.msra.mxu0 %v235
    %239 = vmatprep.subr.bf16.mxu0 0
    %240 = vmatpush1.bf16.xpose.msra.mxu0 0
    %241 = vmatprep.subr.bf16.mxu0 0
    %242 = vmatpush1.bf16.xpose.msra.mxu0 0
    %243 = vmatprep.subr.bf16.mxu0 0
    %244 = vmatpush1.bf16.xpose.msra.mxu0 0
    %245 = vmatprep.subr.bf16.mxu0 0
    %246 = vmatpush1.bf16.xpose.msra.mxu0 0
    %247 = vmatprep.subr.bf16.mxu0 0
    %248 = vmatpush1.bf16.xpose.msra.mxu0 0
    %249 = vmatprep.subr.bf16.mxu0 0
    %250 = vmatpush1.bf16.xpose.msra.mxu0 0
    %251 = vmatprep.subr.bf16.mxu0 0
    %252 = vmatpush1.bf16.xpose.msra.mxu0 0
    %253 = vmatprep.subr.bf16.mxu0 0
    %254 = vmatpush1.bf16.xpose.msra.mxu0 0
    %255 = vmatprep.subr.bf16.mxu0 0
    %256 = vmatpush1.bf16.xpose.msra.mxu0 0
    %257 = vmatprep.subr.bf16.mxu0 0
    %258 = vmatpush1.bf16.xpose.msra.mxu0 0
    %259 = vmatprep.subr.bf16.mxu0 0
    %260 = vmatpush1.bf16.xpose.msra.mxu0 0
    %261 = vmatprep.subr.bf16.mxu0 0
    %262 = vmatpush1.bf16.xpose.msra.mxu0 0
    %263 = vmatprep.subr.bf16.mxu0 0
    %264 = vmatpush1.bf16.xpose.msra.mxu0 0
    %265 = vmatprep.subr.bf16.mxu0 0
    %266 = vmatpush1.bf16.xpose.msra.mxu0 0
    %267 = vmatprep.subr.bf16.mxu0 0
    %268 = vmatpush1.bf16.xpose.msra.mxu0 0
    %269 = vmatprep.mubr.bf16.mxu0 0
    %270 = vmatmul.mubr.bf16.gmra.mrb[0].mxu0 %v232
    %v271 = vpop.f32.mrb[0].mxu0
    %v272 = vadd.f32 0.0, %v271
    %v273 = vpop.f32.mrb[0].mxu0
    %v274 = vpop.f32.mrb[0].mxu0
    %v275 = vpop.f32.mrb[0].mxu0
    %276 = vdwg.mxu0
    %v277 = vmul.f32 %v223, 0.25
    %v278 = vmul.f32 %v272, 0.25
    %v281 = vlaneseq
    %v282 = vshrl.u32 %v281, 7
    %v283 = vsub.s32 0, %v282
    %v284 = vrot.slane %v67, %v283
    %v285 = vlaneseq
    %v286 = vshrl.u32 %v285, 7
    %v287 = vsub.s32 0, %v286
    %v288 = vrot.slane %v68, %v287
    %v291 = vadd.f32 %v277, %v284
    %v292 = vadd.f32 %v278, %v288
    %vm293 = vcmask 64512
    %v294 = vsel %vm293, %v291, -inf
    %295 = vmax.xlane.f32.xlu0 %v294
    %v296 = vpop.xlane.xlu0 %295
    %v297 = vsel %vm293, %v292, -inf
    %298 = vmax.xlane.f32.xlu0 %v297
    %v299 = vpop.xlane.xlu0 %298
    %v300 = vsub.f32 %v291, %v296
    %v301 = vsub.f32 %v292, %v299
    %v302 = vmul.f32 %v300, 1.442695
    %v303 = vpow.pop %v302
    %v304 = vmul.f32 %v301, 1.442695
    %v305 = vpow.pop %v304
    %v306 = vsel %vm293, %v303, 0.0
    %307 = vadd.xlane.f32.xlu0 %v306
    %v308 = vpop.xlane.xlu0 %307
    %v309 = vsel %vm293, %v305, 0.0
    %310 = vadd.xlane.f32.xlu0 %v309
    %v311 = vpop.xlane.xlu0 %310
    %v312 = vrcp.pop %v308
    %v313 = vrcp.pop %v311
    %v314 = vmul.f32 %v303, %v312
    %v315 = vmul.f32 %v305, %v313
    %v316 = vpack.c.bf16 %v314, %v314
    %v317 = vpack.c.bf16 %v315, %v315
    %v318 = vpack.c.bf16 %v172, %v172
    %v319 = vpack.c.bf16 %v173, %v173
    %321 = vrot.lane.b32.xlu0 %v318, 64
    %v322 = vpop.permute.xlu0 %321
    %v324 = vsel %vm293, %v316, 0
    %vm326 = vcmask 1043456
    %v328 = vsel %vm326, %v322, 0
    %330 = vmatprep.subr.bf16.mxu0 0
    %331 = vmatpush1.bf16.msra.mxu0 %v328
    %332 = vmatprep.subr.bf16.mxu0 0
    %333 = vmatpush1.bf16.msra.mxu0 0
    %334 = vmatprep.subr.bf16.mxu0 0
    %335 = vmatpush1.bf16.msra.mxu0 0
    %336 = vmatprep.subr.bf16.mxu0 0
    %337 = vmatpush1.bf16.msra.mxu0 0
    %338 = vmatprep.subr.bf16.mxu0 0
    %339 = vmatpush1.bf16.msra.mxu0 0
    %340 = vmatprep.subr.bf16.mxu0 0
    %341 = vmatpush1.bf16.msra.mxu0 0
    %342 = vmatprep.subr.bf16.mxu0 0
    %343 = vmatpush1.bf16.msra.mxu0 0
    %344 = vmatprep.subr.bf16.mxu0 0
    %345 = vmatpush1.bf16.msra.mxu0 0
    %346 = vmatprep.subr.bf16.mxu0 0
    %347 = vmatpush1.bf16.msra.mxu0 0
    %348 = vmatprep.subr.bf16.mxu0 0
    %349 = vmatpush1.bf16.msra.mxu0 0
    %350 = vmatprep.subr.bf16.mxu0 0
    %351 = vmatpush1.bf16.msra.mxu0 0
    %352 = vmatprep.subr.bf16.mxu0 0
    %353 = vmatpush1.bf16.msra.mxu0 0
    %354 = vmatprep.subr.bf16.mxu0 0
    %355 = vmatpush1.bf16.msra.mxu0 0
    %356 = vmatprep.subr.bf16.mxu0 0
    %357 = vmatpush1.bf16.msra.mxu0 0
    %358 = vmatprep.subr.bf16.mxu0 0
    %359 = vmatpush1.bf16.msra.mxu0 0
    %360 = vmatprep.subr.bf16.mxu0 0
    %361 = vmatpush1.bf16.msra.mxu0 0
    %362 = vmatprep.mubr.bf16.mxu0 0
    %363 = vmatmul.mubr.bf16.gmra.mrb[0].mxu0 %v324
    %v364 = vpop.f32.mrb[0].mxu0
    %v365 = vadd.f32 0.0, %v364
    %v366 = vpop.f32.mrb[0].mxu0
    %v367 = vpop.f32.mrb[0].mxu0
    %v368 = vpop.f32.mrb[0].mxu0
    %369 = vdwg.mxu0
    %371 = vrot.lane.b32.xlu0 %v319, 64
    %v372 = vpop.permute.xlu0 %371
    %v374 = vsel %vm293, %v317, 0
    %v377 = vsel %vm326, %v372, 0
    %379 = vmatprep.subr.bf16.mxu0 0
    %380 = vmatpush1.bf16.msra.mxu0 %v377
    %381 = vmatprep.subr.bf16.mxu0 0
    %382 = vmatpush1.bf16.msra.mxu0 0
    %383 = vmatprep.subr.bf16.mxu0 0
    %384 = vmatpush1.bf16.msra.mxu0 0
    %385 = vmatprep.subr.bf16.mxu0 0
    %386 = vmatpush1.bf16.msra.mxu0 0
    %387 = vmatprep.subr.bf16.mxu0 0
    %388 = vmatpush1.bf16.msra.mxu0 0
    %389 = vmatprep.subr.bf16.mxu0 0
    %390 = vmatpush1.bf16.msra.mxu0 0
    %391 = vmatprep.subr.bf16.mxu0 0
    %392 = vmatpush1.bf16.msra.mxu0 0
    %393 = vmatprep.subr.bf16.mxu0 0
    %394 = vmatpush1.bf16.msra.mxu0 0
    %395 = vmatprep.subr.bf16.mxu0 0
    %396 = vmatpush1.bf16.msra.mxu0 0
    %397 = vmatprep.subr.bf16.mxu0 0
    %398 = vmatpush1.bf16.msra.mxu0 0
    %399 = vmatprep.subr.bf16.mxu0 0
    %400 = vmatpush1.bf16.msra.mxu0 0
    %401 = vmatprep.subr.bf16.mxu0 0
    %402 = vmatpush1.bf16.msra.mxu0 0
    %403 = vmatprep.subr.bf16.mxu0 0
    %404 = vmatpush1.bf16.msra.mxu0 0
    %405 = vmatprep.subr.bf16.mxu0 0
    %406 = vmatpush1.bf16.msra.mxu0 0
    %407 = vmatprep.subr.bf16.mxu0 0
    %408 = vmatpush1.bf16.msra.mxu0 0
    %409 = vmatprep.subr.bf16.mxu0 0
    %410 = vmatpush1.bf16.msra.mxu0 0
    %411 = vmatprep.mubr.bf16.mxu0 0
    %412 = vmatmul.mubr.bf16.gmra.mrb[0].mxu0 %v374
    %v413 = vpop.f32.mrb[0].mxu0
    %v414 = vadd.f32 0.0, %v413
    %v415 = vpop.f32.mrb[0].mxu0
    %v416 = vpop.f32.mrb[0].mxu0
    %v417 = vpop.f32.mrb[0].mxu0
    %418 = vdwg.mxu0
    %420 = vrot.lane.b32.xlu0 %v174, 112
    %v421 = vpop.permute.xlu0 %420
    %422 = vrot.lane.b32.xlu0 %v176, 80
    %v423 = vpop.permute.xlu0 %422
    %v425 = vsel %vm181, %v421, 0
    %v428 = vsel %vm181, %v423, 0
    %430 = vmatprep.subr.bf16.mxu0 0
    %431 = vmatpush1.bf16.xpose.msra.mxu0 %v428
    %432 = vmatprep.subr.bf16.mxu0 0
    %433 = vmatpush1.bf16.xpose.msra.mxu0 0
    %434 = vmatprep.subr.bf16.mxu0 0
    %435 = vmatpush1.bf16.xpose.msra.mxu0 0
    %436 = vmatprep.subr.bf16.mxu0 0
    %437 = vmatpush1.bf16.xpose.msra.mxu0 0
    %438 = vmatprep.subr.bf16.mxu0 0
    %439 = vmatpush1.bf16.xpose.msra.mxu0 0
    %440 = vmatprep.subr.bf16.mxu0 0
    %441 = vmatpush1.bf16.xpose.msra.mxu0 0
    %442 = vmatprep.subr.bf16.mxu0 0
    %443 = vmatpush1.bf16.xpose.msra.mxu0 0
    %444 = vmatprep.subr.bf16.mxu0 0
    %445 = vmatpush1.bf16.xpose.msra.mxu0 0
    %446 = vmatprep.subr.bf16.mxu0 0
    %447 = vmatpush1.bf16.xpose.msra.mxu0 0
    %448 = vmatprep.subr.bf16.mxu0 0
    %449 = vmatpush1.bf16.xpose.msra.mxu0 0
    %450 = vmatprep.subr.bf16.mxu0 0
    %451 = vmatpush1.bf16.xpose.msra.mxu0 0
    %452 = vmatprep.subr.bf16.mxu0 0
    %453 = vmatpush1.bf16.xpose.msra.mxu0 0
    %454 = vmatprep.subr.bf16.mxu0 0
    %455 = vmatpush1.bf16.xpose.msra.mxu0 0
    %456 = vmatprep.subr.bf16.mxu0 0
    %457 = vmatpush1.bf16.xpose.msra.mxu0 0
    %458 = vmatprep.subr.bf16.mxu0 0
    %459 = vmatpush1.bf16.xpose.msra.mxu0 0
    %460 = vmatprep.subr.bf16.mxu0 0
    %461 = vmatpush1.bf16.xpose.msra.mxu0 0
    %462 = vmatprep.mubr.bf16.mxu0 0
    %463 = vmatmul.mubr.bf16.gmra.mrb[0].mxu0 %v425
    %v464 = vpop.f32.mrb[0].mxu0
    %v465 = vadd.f32 0.0, %v464
    %v466 = vpop.f32.mrb[0].mxu0
    %v467 = vpop.f32.mrb[0].mxu0
    %v468 = vpop.f32.mrb[0].mxu0
    %469 = vdwg.mxu0
    %471 = vrot.lane.b32.xlu0 %v175, 112
    %v472 = vpop.permute.xlu0 %471
    %473 = vrot.lane.b32.xlu0 %v177, 80
    %v474 = vpop.permute.xlu0 %473
    %v476 = vsel %vm181, %v472, 0
    %v479 = vsel %vm181, %v474, 0
    %481 = vmatprep.subr.bf16.mxu0 0
    %482 = vmatpush1.bf16.xpose.msra.mxu0 %v479
    %483 = vmatprep.subr.bf16.mxu0 0
    %484 = vmatpush1.bf16.xpose.msra.mxu0 0
    %485 = vmatprep.subr.bf16.mxu0 0
    %486 = vmatpush1.bf16.xpose.msra.mxu0 0
    %487 = vmatprep.subr.bf16.mxu0 0
    %488 = vmatpush1.bf16.xpose.msra.mxu0 0
    %489 = vmatprep.subr.bf16.mxu0 0
    %490 = vmatpush1.bf16.xpose.msra.mxu0 0
    %491 = vmatprep.subr.bf16.mxu0 0
    %492 = vmatpush1.bf16.xpose.msra.mxu0 0
    %493 = vmatprep.subr.bf16.mxu0 0
    %494 = vmatpush1.bf16.xpose.msra.mxu0 0
    %495 = vmatprep.subr.bf16.mxu0 0
    %496 = vmatpush1.bf16.xpose.msra.mxu0 0
    %497 = vmatprep.subr.bf16.mxu0 0
    %498 = vmatpush1.bf16.xpose.msra.mxu0 0
    %499 = vmatprep.subr.bf16.mxu0 0
    %500 = vmatpush1.bf16.xpose.msra.mxu0 0
    %501 = vmatprep.subr.bf16.mxu0 0
    %502 = vmatpush1.bf16.xpose.msra.mxu0 0
    %503 = vmatprep.subr.bf16.mxu0 0
    %504 = vmatpush1.bf16.xpose.msra.mxu0 0
    %505 = vmatprep.subr.bf16.mxu0 0
    %506 = vmatpush1.bf16.xpose.msra.mxu0 0
    %507 = vmatprep.subr.bf16.mxu0 0
    %508 = vmatpush1.bf16.xpose.msra.mxu0 0
    %509 = vmatprep.subr.bf16.mxu0 0
    %510 = vmatpush1.bf16.xpose.msra.mxu0 0
    %511 = vmatprep.subr.bf16.mxu0 0
    %512 = vmatpush1.bf16.xpose.msra.mxu0 0
    %513 = vmatprep.mubr.bf16.mxu0 0
    %514 = vmatmul.mubr.bf16.gmra.mrb[0].mxu0 %v476
    %v515 = vpop.f32.mrb[0].mxu0
    %v516 = vadd.f32 0.0, %v515
    %v517 = vpop.f32.mrb[0].mxu0
    %v518 = vpop.f32.mrb[0].mxu0
    %v519 = vpop.f32.mrb[0].mxu0
    %520 = vdwg.mxu0
    %v521 = vmul.f32 %v465, 0.25
    %v522 = vmul.f32 %v516, 0.25
    %v523 = vadd.f32 %v521, %v284
    %v524 = vadd.f32 %v522, %v288
    %v525 = vsel %vm293, %v523, -inf
    %526 = vmax.xlane.f32.xlu0 %v525
    %v527 = vpop.xlane.xlu0 %526
    %v528 = vsel %vm293, %v524, -inf
    %529 = vmax.xlane.f32.xlu0 %v528
    %v530 = vpop.xlane.xlu0 %529
    %v531 = vsub.f32 %v523, %v527
    %v532 = vsub.f32 %v524, %v530
    %v533 = vmul.f32 %v531, 1.442695
    %v534 = vpow.pop %v533
    %v535 = vmul.f32 %v532, 1.442695
    %v536 = vpow.pop %v535
    %v537 = vsel %vm293, %v534, 0.0
    %538 = vadd.xlane.f32.xlu0 %v537
    %v539 = vpop.xlane.xlu0 %538
    %v540 = vsel %vm293, %v536, 0.0
    %541 = vadd.xlane.f32.xlu0 %v540
    %v542 = vpop.xlane.xlu0 %541
    %v543 = vrcp.pop %v539
    %v544 = vrcp.pop %v542
    %v545 = vmul.f32 %v534, %v543
    %v546 = vmul.f32 %v536, %v544
    %v547 = vpack.c.bf16 %v545, %v545
    %v548 = vpack.c.bf16 %v546, %v546
    %549 = vrot.lane.b32.xlu0 %v318, 48
    %v550 = vpop.permute.xlu0 %549
    %v552 = vsel %vm293, %v547, 0
    %v555 = vsel %vm326, %v550, 0
    %557 = vmatprep.subr.bf16.mxu0 0
    %558 = vmatpush1.bf16.msra.mxu0 %v555
    %559 = vmatprep.subr.bf16.mxu0 0
    %560 = vmatpush1.bf16.msra.mxu0 0
    %561 = vmatprep.subr.bf16.mxu0 0
    %562 = vmatpush1.bf16.msra.mxu0 0
    %563 = vmatprep.subr.bf16.mxu0 0
    %564 = vmatpush1.bf16.msra.mxu0 0
    %565 = vmatprep.subr.bf16.mxu0 0
    %566 = vmatpush1.bf16.msra.mxu0 0
    %567 = vmatprep.subr.bf16.mxu0 0
    %568 = vmatpush1.bf16.msra.mxu0 0
    %569 = vmatprep.subr.bf16.mxu0 0
    %570 = vmatpush1.bf16.msra.mxu0 0
    %571 = vmatprep.subr.bf16.mxu0 0
    %572 = vmatpush1.bf16.msra.mxu0 0
    %573 = vmatprep.subr.bf16.mxu0 0
    %574 = vmatpush1.bf16.msra.mxu0 0
    %575 = vmatprep.subr.bf16.mxu0 0
    %576 = vmatpush1.bf16.msra.mxu0 0
    %577 = vmatprep.subr.bf16.mxu0 0
    %578 = vmatpush1.bf16.msra.mxu0 0
    %579 = vmatprep.subr.bf16.mxu0 0
    %580 = vmatpush1.bf16.msra.mxu0 0
    %581 = vmatprep.subr.bf16.mxu0 0
    %582 = vmatpush1.bf16.msra.mxu0 0
    %583 = vmatprep.subr.bf16.mxu0 0
    %584 = vmatpush1.bf16.msra.mxu0 0
    %585 = vmatprep.subr.bf16.mxu0 0
    %586 = vmatpush1.bf16.msra.mxu0 0
    %587 = vmatprep.subr.bf16.mxu0 0
    %588 = vmatpush1.bf16.msra.mxu0 0
    %589 = vmatprep.mubr.bf16.mxu0 0
    %590 = vmatmul.mubr.bf16.gmra.mrb[0].mxu0 %v552
    %v591 = vpop.f32.mrb[0].mxu0
    %v592 = vadd.f32 0.0, %v591
    %v593 = vpop.f32.mrb[0].mxu0
    %v594 = vpop.f32.mrb[0].mxu0
    %v595 = vpop.f32.mrb[0].mxu0
    %596 = vdwg.mxu0
    %597 = vrot.lane.b32.xlu0 %v319, 48
    %v598 = vpop.permute.xlu0 %597
    %v600 = vsel %vm293, %v548, 0
    %v603 = vsel %vm326, %v598, 0
    %605 = vmatprep.subr.bf16.mxu0 0
    %606 = vmatpush1.bf16.msra.mxu0 %v603
    %607 = vmatprep.subr.bf16.mxu0 0
    %608 = vmatpush1.bf16.msra.mxu0 0
    %609 = vmatprep.subr.bf16.mxu0 0
    %610 = vmatpush1.bf16.msra.mxu0 0
    %611 = vmatprep.subr.bf16.mxu0 0
    %612 = vmatpush1.bf16.msra.mxu0 0
    %613 = vmatprep.subr.bf16.mxu0 0
    %614 = vmatpush1.bf16.msra.mxu0 0
    %615 = vmatprep.subr.bf16.mxu0 0
    %616 = vmatpush1.bf16.msra.mxu0 0
    %617 = vmatprep.subr.bf16.mxu0 0
    %618 = vmatpush1.bf16.msra.mxu0 0
    %619 = vmatprep.subr.bf16.mxu0 0
    %620 = vmatpush1.bf16.msra.mxu0 0
    %621 = vmatprep.subr.bf16.mxu0 0
    %622 = vmatpush1.bf16.msra.mxu0 0
    %623 = vmatprep.subr.bf16.mxu0 0
    %624 = vmatpush1.bf16.msra.mxu0 0
    %625 = vmatprep.subr.bf16.mxu0 0
    %626 = vmatpush1.bf16.msra.mxu0 0
    %627 = vmatprep.subr.bf16.mxu0 0
    %628 = vmatpush1.bf16.msra.mxu0 0
    %629 = vmatprep.subr.bf16.mxu0 0
    %630 = vmatpush1.bf16.msra.mxu0 0
    %631 = vmatprep.subr.bf16.mxu0 0
    %632 = vmatpush1.bf16.msra.mxu0 0
    %633 = vmatprep.subr.bf16.mxu0 0
    %634 = vmatpush1.bf16.msra.mxu0 0
    %635 = vmatprep.subr.bf16.mxu0 0
    %636 = vmatpush1.bf16.msra.mxu0 0
    %637 = vmatprep.mubr.bf16.mxu0 0
    %638 = vmatmul.mubr.bf16.gmra.mrb[0].mxu0 %v600
    %v639 = vpop.f32.mrb[0].mxu0
    %v640 = vadd.f32 0.0, %v639
    %v641 = vpop.f32.mrb[0].mxu0
    %v642 = vpop.f32.mrb[0].mxu0
    %v643 = vpop.f32.mrb[0].mxu0
    %644 = vdwg.mxu0
    %647 = vrot.lane.b32.xlu0 %v592, 16
    %v648 = vpop.permute.xlu0 %647
    %649 = vrot.lane.b32.xlu0 %v640, 16
    %v650 = vpop.permute.xlu0 %649
    %v653 = vsel %vm181, %v365, %v648
    %v654 = vsel %vm181, %v414, %v650
    %v655 = vpack.c.bf16 %v654, %v653
    %v656 = vlaneseq
    %v657 = vshrl.u32 %v656, 7
    %v658 = vsub.s32 3, %v657
    %v659 = vrot.slane %v80, %v658
    %v664 = vunpack.c.l.b16 %v86
    %v665 = vunpack.c.l.b16 %v87
    %v666 = vunpack.c.l.b16 %v88
    %v667 = vunpack.c.l.b16 %v89
    %v668 = vpack.c.b16 %v665, %v664
    %v669 = vpack.c.b16 %v667, %v666
    %v673 = vsel %vm103, %v655, 0
    %675 = vmatprep.subr.bf16.mxu0 0
    %676 = vmatpush1.bf16.msra.mxu0 %v668
    %677 = vmatprep.subr.bf16.mxu0 0
    %678 = vmatpush1.bf16.msra.mxu0 %v669
    %679 = vmatprep.subr.bf16.mxu0 0
    %680 = vmatpush1.bf16.msra.mxu0 0
    %681 = vmatprep.subr.bf16.mxu0 0
    %682 = vmatpush1.bf16.msra.mxu0 0
    %683 = vmatprep.subr.bf16.mxu0 0
    %684 = vmatpush1.bf16.msra.mxu0 0
    %685 = vmatprep.subr.bf16.mxu0 0
    %686 = vmatpush1.bf16.msra.mxu0 0
    %687 = vmatprep.subr.bf16.mxu0 0
    %688 = vmatpush1.bf16.msra.mxu0 0
    %689 = vmatprep.subr.bf16.mxu0 0
    %690 = vmatpush1.bf16.msra.mxu0 0
    %691 = vmatprep.subr.bf16.mxu0 0
    %692 = vmatpush1.bf16.msra.mxu0 0
    %693 = vmatprep.subr.bf16.mxu0 0
    %694 = vmatpush1.bf16.msra.mxu0 0
    %695 = vmatprep.subr.bf16.mxu0 0
    %696 = vmatpush1.bf16.msra.mxu0 0
    %697 = vmatprep.subr.bf16.mxu0 0
    %698 = vmatpush1.bf16.msra.mxu0 0
    %699 = vmatprep.subr.bf16.mxu0 0
    %700 = vmatpush1.bf16.msra.mxu0 0
    %701 = vmatprep.subr.bf16.mxu0 0
    %702 = vmatpush1.bf16.msra.mxu0 0
    %703 = vmatprep.subr.bf16.mxu0 0
    %704 = vmatpush1.bf16.msra.mxu0 0
    %705 = vmatprep.subr.bf16.mxu0 0
    %706 = vmatpush1.bf16.msra.mxu0 0
    %707 = vmatprep.mubr.bf16.mxu0 0
    %708 = vmatmul.mubr.bf16.gmra.mrb[0].mxu0 %v673
    %v709 = vpop.f32.mrb[0].mxu0
    %v710 = vadd.f32 %v659, %v709
    %v711 = vpop.f32.mrb[0].mxu0
    %v712 = vpop.f32.mrb[0].mxu0
    %v713 = vadd.f32 %v659, %v712
    %v714 = vpop.f32.mrb[0].mxu0
    %715 = vdwg.mxu0
    %v716 = vadd.f32 %v78, %v710
    %v717 = vadd.f32 %v79, %v713
    %v718 = vsel %vm103, %v716, 0.0
    %719 = vadd.xlane.f32.xlu0 %v718
    %v720 = vpop.xlane.xlu0 %719
    %v721 = vsel %vm103, %v717, 0.0
    %722 = vadd.xlane.f32.xlu0 %v721
    %v723 = vpop.xlane.xlu0 %722
    %v724 = vrcp.pop 32.0
    %v725 = vmul.f32 %v720, %v724
    %v726 = vmul.f32 %v723, %v724
    %v727 = vsub.f32 %v716, %v725
    %v728 = vsub.f32 %v717, %v726
    %v729 = vmul.f32 %v727, %v727
    %v730 = vmul.f32 %v728, %v728
    %v731 = vsel %vm103, %v729, 0.0
    %732 = vadd.xlane.f32.xlu0 %v731
    %v733 = vpop.xlane.xlu0 %732
    %v734 = vsel %vm103, %v730, 0.0
    %735 = vadd.xlane.f32.xlu0 %v734
    %v736 = vpop.xlane.xlu0 %735
    %v737 = vmul.f32 %v733, %v724
    %v738 = vmul.f32 %v736, %v724
    %v739 = vadd.f32 %v737, 1e-12
    %v740 = vadd.f32 %v738, 1e-12
    %v741 = vrsqrt.pop %v739
    %v742 = vrsqrt.pop %v740
    %v743 = vmul.f32 %v727, %v741
    %v744 = vmul.f32 %v728, %v742
    %v745 = vlaneseq
    %v746 = vshrl.u32 %v745, 7
    %v747 = vsub.s32 4, %v746
    %v748 = vrot.slane %v80, %v747
    %v749 = vmul.f32 %v743, %v748
    %v750 = vmul.f32 %v744, %v748
    %v751 = vlaneseq
    %v752 = vshrl.u32 %v751, 7
    %v753 = vsub.s32 5, %v752
    %v754 = vrot.slane %v80, %v753
    %v755 = vadd.f32 %v749, %v754
    %v756 = vadd.f32 %v750, %v754
    %v757 = vld [vmem:[%s7] sm:$0xf]
    %v758 = vld [vmem:[%s7 + $0x4] sm:$0xf]
    %v759 = vld [vmem:[%s7 + $0x8] sm:$0xf]
    %v760 = vld [vmem:[%s7 + $0xc] sm:$0xf]
    %v761 = vld [vmem:[%s8] sm:$0x1]
    %v762 = vld [vmem:[%s9] sm:$0xf]
    %v763 = vld [vmem:[%s9 + $0x4] sm:$0xf]
    %v764 = vld [vmem:[%s9 + $0x8] sm:$0xf]
    %v765 = vld [vmem:[%s9 + $0xc] sm:$0xf]
    %v766 = vld [vmem:[%s9 + $0x10] sm:$0xf]
    %v767 = vld [vmem:[%s9 + $0x14] sm:$0xf]
    %v768 = vld [vmem:[%s9 + $0x18] sm:$0xf]
    %v769 = vld [vmem:[%s9 + $0x1c] sm:$0xf]
    %v770 = vld [vmem:[%s9 + $0x20] sm:$0xf]
    %v771 = vld [vmem:[%s9 + $0x24] sm:$0xf]
    %v772 = vld [vmem:[%s9 + $0x28] sm:$0xf]
    %v773 = vld [vmem:[%s9 + $0x2c] sm:$0xf]
    %v774 = vld [vmem:[%s9 + $0x30] sm:$0xf]
    %v775 = vld [vmem:[%s9 + $0x34] sm:$0xf]
    %v776 = vld [vmem:[%s9 + $0x38] sm:$0xf]
    %v777 = vld [vmem:[%s9 + $0x3c] sm:$0xf]
    %v778 = vpack.c.bf16 %v756, %v755
    %v780 = vlaneseq
    %v781 = vshrl.u32 %v780, 7
    %v782 = vsub.s32 0, %v781
    %v783 = vrot.slane %v761, %v782
    %v789 = vunpack.c.l.b16 %v757
    %v790 = vunpack.c.l.b16 %v758
    %v791 = vunpack.c.l.b16 %v759
    %v792 = vunpack.c.l.b16 %v760
    %v793 = vpack.c.b16 %v790, %v789
    %v794 = vpack.c.b16 %v792, %v791
    %v798 = vsel %vm103, %v778, 0
    %800 = vmatprep.subr.bf16.mxu0 0
    %801 = vmatpush1.bf16.msra.mxu0 %v793
    %802 = vmatprep.subr.bf16.mxu0 0
    %803 = vmatpush1.bf16.msra.mxu0 %v794
    %804 = vmatprep.subr.bf16.mxu0 0
    %805 = vmatpush1.bf16.msra.mxu0 0
    %806 = vmatprep.subr.bf16.mxu0 0
    %807 = vmatpush1.bf16.msra.mxu0 0
    %808 = vmatprep.subr.bf16.mxu0 0
    %809 = vmatpush1.bf16.msra.mxu0 0
    %810 = vmatprep.subr.bf16.mxu0 0
    %811 = vmatpush1.bf16.msra.mxu0 0
    %812 = vmatprep.subr.bf16.mxu0 0
    %813 = vmatpush1.bf16.msra.mxu0 0
    %814 = vmatprep.subr.bf16.mxu0 0
    %815 = vmatpush1.bf16.msra.mxu0 0
    %816 = vmatprep.subr.bf16.mxu0 0
    %817 = vmatpush1.bf16.msra.mxu0 0
    %818 = vmatprep.subr.bf16.mxu0 0
    %819 = vmatpush1.bf16.msra.mxu0 0
    %820 = vmatprep.subr.bf16.mxu0 0
    %821 = vmatpush1.bf16.msra.mxu0 0
    %822 = vmatprep.subr.bf16.mxu0 0
    %823 = vmatpush1.bf16.msra.mxu0 0
    %824 = vmatprep.subr.bf16.mxu0 0
    %825 = vmatpush1.bf16.msra.mxu0 0
    %826 = vmatprep.subr.bf16.mxu0 0
    %827 = vmatpush1.bf16.msra.mxu0 0
    %828 = vmatprep.subr.bf16.mxu0 0
    %829 = vmatpush1.bf16.msra.mxu0 0
    %830 = vmatprep.subr.bf16.mxu0 0
    %831 = vmatpush1.bf16.msra.mxu0 0
    %832 = vmatprep.mubr.bf16.mxu0 0
    %833 = vmatmul.mubr.bf16.gmra.mrb[0].mxu0 %v798
    %v834 = vpop.f32.mrb[0].mxu0
    %v835 = vadd.f32 %v783, %v834
    %v836 = vpop.f32.mrb[0].mxu0
    %v837 = vpop.f32.mrb[0].mxu0
    %v838 = vadd.f32 %v783, %v837
    %v839 = vpop.f32.mrb[0].mxu0
    %840 = vdwg.mxu0
    %v841 = vmul.f32 %v835, %v835
    %v842 = vmul.f32 %v838, %v838
    %v843 = vmul.f32 %v835, %v841
    %v844 = vmul.f32 %v838, %v842
    %v845 = vmul.f32 %v843, 0.044715
    %v846 = vmul.f32 %v844, 0.044715
    %v847 = vadd.f32 %v835, %v845
    %v848 = vadd.f32 %v838, %v846
    %v849 = vmul.f32 %v847, 0.7978846
    %v850 = vmul.f32 %v848, 0.7978846
    %v851 = vtanh.pop %v849
    %v852 = vtanh.pop %v850
    %v853 = vadd.f32 %v851, 1.0
    %v854 = vadd.f32 %v852, 1.0
    %v855 = vmul.f32 %v853, 0.5
    %v856 = vmul.f32 %v854, 0.5
    %v857 = vmul.f32 %v835, %v855
    %v858 = vmul.f32 %v838, %v856
    %v859 = vpack.c.bf16 %v858, %v857
    %v860 = vlaneseq
    %v861 = vshrl.u32 %v860, 7
    %v862 = vsub.s32 6, %v861
    %v863 = vrot.slane %v80, %v862
    %v880 = vunpack.c.l.b16 %v762
    %v881 = vunpack.c.l.b16 %v763
    %v882 = vunpack.c.l.b16 %v764
    %v883 = vunpack.c.l.b16 %v765
    %v884 = vunpack.c.l.b16 %v766
    %v885 = vunpack.c.l.b16 %v767
    %v886 = vunpack.c.l.b16 %v768
    %v887 = vunpack.c.l.b16 %v769
    %v888 = vunpack.c.l.b16 %v770
    %v889 = vunpack.c.l.b16 %v771
    %v890 = vunpack.c.l.b16 %v772
    %v891 = vunpack.c.l.b16 %v773
    %v892 = vunpack.c.l.b16 %v774
    %v893 = vunpack.c.l.b16 %v775
    %v894 = vunpack.c.l.b16 %v776
    %v895 = vunpack.c.l.b16 %v777
    %v896 = vpack.c.b16 %v881, %v880
    %v897 = vpack.c.b16 %v883, %v882
    %v898 = vpack.c.b16 %v885, %v884
    %v899 = vpack.c.b16 %v887, %v886
    %v900 = vpack.c.b16 %v889, %v888
    %v901 = vpack.c.b16 %v891, %v890
    %v902 = vpack.c.b16 %v893, %v892
    %v903 = vpack.c.b16 %v895, %v894
    %912 = vmatprep.subr.bf16.mxu0 0
    %913 = vmatpush1.bf16.msra.mxu0 %v896
    %914 = vmatprep.subr.bf16.mxu0 0
    %915 = vmatpush1.bf16.msra.mxu0 %v897
    %916 = vmatprep.subr.bf16.mxu0 0
    %917 = vmatpush1.bf16.msra.mxu0 %v898
    %918 = vmatprep.subr.bf16.mxu0 0
    %919 = vmatpush1.bf16.msra.mxu0 %v899
    %920 = vmatprep.subr.bf16.mxu0 0
    %921 = vmatpush1.bf16.msra.mxu0 %v900
    %922 = vmatprep.subr.bf16.mxu0 0
    %923 = vmatpush1.bf16.msra.mxu0 %v901
    %924 = vmatprep.subr.bf16.mxu0 0
    %925 = vmatpush1.bf16.msra.mxu0 %v902
    %926 = vmatprep.subr.bf16.mxu0 0
    %927 = vmatpush1.bf16.msra.mxu0 %v903
    %928 = vmatprep.subr.bf16.mxu0 0
    %929 = vmatpush1.bf16.msra.mxu0 0
    %930 = vmatprep.subr.bf16.mxu0 0
    %931 = vmatpush1.bf16.msra.mxu0 0
    %932 = vmatprep.subr.bf16.mxu0 0
    %933 = vmatpush1.bf16.msra.mxu0 0
    %934 = vmatprep.subr.bf16.mxu0 0
    %935 = vmatpush1.bf16.msra.mxu0 0
    %936 = vmatprep.subr.bf16.mxu0 0
    %937 = vmatpush1.bf16.msra.mxu0 0
    %938 = vmatprep.subr.bf16.mxu0 0
    %939 = vmatpush1.bf16.msra.mxu0 0
    %940 = vmatprep.subr.bf16.mxu0 0
    %941 = vmatpush1.bf16.msra.mxu0 0
    %942 = vmatprep.subr.bf16.mxu0 0
    %943 = vmatpush1.bf16.msra.mxu0 0
    %944 = vmatprep.mubr.bf16.mxu0 0
    %945 = vmatmul.mubr.bf16.gmra.mrb[0].mxu0 %v859
    %v946 = vpop.f32.mrb[0].mxu0
    %v947 = vadd.f32 %v863, %v946
    %v948 = vpop.f32.mrb[0].mxu0
    %v949 = vpop.f32.mrb[0].mxu0
    %v950 = vadd.f32 %v863, %v949
    %v951 = vpop.f32.mrb[0].mxu0
    %952 = vdwg.mxu0
    %v953 = vadd.f32 %v755, %v947
    %v954 = vadd.f32 %v756, %v950
    %v955 = vsel %vm103, %v953, 0.0
    %956 = vadd.xlane.f32.xlu0 %v955
    %v957 = vpop.xlane.xlu0 %956
    %v958 = vsel %vm103, %v954, 0.0
    %959 = vadd.xlane.f32.xlu0 %v958
    %v960 = vpop.xlane.xlu0 %959
    %v961 = vmul.f32 %v957, %v724
    %v962 = vmul.f32 %v960, %v724
    %v963 = vsub.f32 %v953, %v961
    %v964 = vsub.f32 %v954, %v962
    %v965 = vmul.f32 %v963, %v963
    %v966 = vmul.f32 %v964, %v964
    %v967 = vsel %vm103, %v965, 0.0
    %968 = vadd.xlane.f32.xlu0 %v967
    %v969 = vpop.xlane.xlu0 %968
    %v970 = vsel %vm103, %v966, 0.0
    %971 = vadd.xlane.f32.xlu0 %v970
    %v972 = vpop.xlane.xlu0 %971
    %v973 = vmul.f32 %v969, %v724
    %v974 = vmul.f32 %v972, %v724
    %v975 = vadd.f32 %v973, 1e-12
    %v976 = vadd.f32 %v974, 1e-12
    %v977 = vrsqrt.pop %v975
    %v978 = vrsqrt.pop %v976
    %v979 = vmul.f32 %v963, %v977
    %v980 = vmul.f32 %v964, %v978
    %v981 = vlaneseq
    %v982 = vshrl.u32 %v981, 7
    %v983 = vsub.s32 7, %v982
    %v984 = vrot.slane %v80, %v983
    %v985 = vmul.f32 %v979, %v984
    %v986 = vmul.f32 %v980, %v984
    %v987 = vlaneseq
    %v988 = vshrl.u32 %v987, 7
    %v989 = vsub.s32 0, %v988
    %v990 = vrot.slane %v81, %v989
    %v991 = vadd.f32 %v985, %v990
    %v992 = vadd.f32 %v986, %v990
    %s993 = scalar_lea.vmem %s10, 16
    %v994 = vld [vmem:[%s993] sm:$0xff]
    %v995 = vld [vmem:[%s993 + $0x8] sm:$0x1]
    %s996 = scalar_lea.vmem %s5, 16
    %v997 = vld [vmem:[%s996] sm:$0xf]
    %v998 = vld [vmem:[%s996 + $0x4] sm:$0xf]
    %v999 = vld [vmem:[%s996 + $0x8] sm:$0xf]
    %v1000 = vld [vmem:[%s996 + $0xc] sm:$0xf]
    %s1001 = scalar_lea.vmem %s6, 16
    %v1002 = vld [vmem:[%s1001] sm:$0xf]
    %v1003 = vld [vmem:[%s1001 + $0x4] sm:$0xf]
    %v1004 = vld [vmem:[%s1001 + $0x8] sm:$0xf]
    %v1005 = vld [vmem:[%s1001 + $0xc] sm:$0xf]
    %v1006 = vpack.c.bf16 %v992, %v991
    %v1011 = vunpack.c.l.b16 %v997
    %v1012 = vunpack.c.l.b16 %v998
    %v1013 = vunpack.c.l.b16 %v999
    %v1014 = vunpack.c.l.b16 %v1000
    %v1015 = vpack.c.b16 %v1012, %v1011
    %v1016 = vpack.c.b16 %v1014, %v1013
    %v1020 = vsel %vm103, %v1006, 0
    %1022 = vmatprep.subr.bf16.mxu0 0
    %1023 = vmatpush1.bf16.msra.mxu0 %v1015
    %1024 = vmatprep.subr.bf16.mxu0 0
    %1025 = vmatpush1.bf16.msra.mxu0 %v1016
    %1026 = vmatprep.subr.bf16.mxu0 0
    %1027 = vmatpush1.bf16.msra.mxu0 0
    %1028 = vmatprep.subr.bf16.mxu0 0
    %1029 = vmatpush1.bf16.msra.mxu0 0
    %1030 = vmatprep.subr.bf16.mxu0 0
    %1031 = vmatpush1.bf16.msra.mxu0 0
    %1032 = vmatprep.subr.bf16.mxu0 0
    %1033 = vmatpush1.bf16.msra.mxu0 0
    %1034 = vmatprep.subr.bf16.mxu0 0
    %1035 = vmatpush1.bf16.msra.mxu0 0
    %1036 = vmatprep.subr.bf16.mxu0 0
    %1037 = vmatpush1.bf16.msra.mxu0 0
    %1038 = vmatprep.subr.bf16.mxu0 0
    %1039 = vmatpush1.bf16.msra.mxu0 0
    %1040 = vmatprep.subr.bf16.mxu0 0
    %1041 = vmatpush1.bf16.msra.mxu0 0
    %1042 = vmatprep.subr.bf16.mxu0 0
    %1043 = vmatpush1.bf16.msra.mxu0 0
    %1044 = vmatprep.subr.bf16.mxu0 0
    %1045 = vmatpush1.bf16.msra.mxu0 0
    %1046 = vmatprep.subr.bf16.mxu0 0
    %1047 = vmatpush1.bf16.msra.mxu0 0
    %1048 = vmatprep.subr.bf16.mxu0 0
    %1049 = vmatpush1.bf16.msra.mxu0 0
    %1050 = vmatprep.subr.bf16.mxu0 0
    %1051 = vmatpush1.bf16.msra.mxu0 0
    %1052 = vmatprep.subr.bf16.mxu0 0
    %1053 = vmatpush1.bf16.msra.mxu0 0
    %1054 = vmatprep.mubr.bf16.mxu0 0
    %1055 = vmatmul.mubr.bf16.gmra.mrb[0].mxu0 %v1020
    %v1056 = vpop.f32.mrb[0].mxu0
    %v1057 = vadd.f32 0.0, %v1056
    %v1058 = vpop.f32.mrb[0].mxu0
    %v1059 = vpop.f32.mrb[0].mxu0
    %v1060 = vadd.f32 0.0, %v1059
    %v1061 = vpop.f32.mrb[0].mxu0
    %1062 = vdwg.mxu0
    %v1063 = vlaneseq
    %v1064 = vshrl.u32 %v1063, 7
    %v1065 = vsub.s32 0, %v1064
    %v1066 = vrot.slane %v994, %v1065
    %v1067 = vadd.f32 %v1057, %v1066
    %v1068 = vadd.f32 %v1060, %v1066
    %v1069 = vlaneseq
    %v1070 = vshrl.u32 %v1069, 7
    %v1071 = vsub.s32 1, %v1070
    %v1072 = vrot.slane %v994, %v1071
    %1074 = vrot.lane.b32.xlu0 %v1072, 32
    %v1075 = vpop.permute.xlu0 %1074
    %v1077 = vadd.f32 %v1057, %v1075
    %v1078 = vadd.f32 %v1060, %v1075
    %v1079 = vlaneseq
    %v1080 = vshrl.u32 %v1079, 7
    %v1081 = vsub.s32 2, %v1080
    %v1082 = vrot.slane %v994, %v1081
    %1084 = vrot.lane.b32.xlu0 %v1082, 64
    %v1085 = vpop.permute.xlu0 %1084
    %v1087 = vadd.f32 %v1057, %v1085
    %v1088 = vadd.f32 %v1060, %v1085
    %v1089 = vpack.c.bf16 %v1067, %v1067
    %v1090 = vpack.c.bf16 %v1068, %v1068
    %v1091 = vpack.c.bf16 %v1077, %v1077
    %v1092 = vpack.c.bf16 %v1078, %v1078
    %1094 = vrot.lane.b32.xlu0 %v1091, 96
    %v1095 = vpop.permute.xlu0 %1094
    %v1097 = vsel %vm181, %v1089, 0
    %v1100 = vsel %vm181, %v1095, 0
    %1102 = vmatprep.subr.bf16.mxu0 0
    %1103 = vmatpush1.bf16.xpose.msra.mxu0 %v1100
    %1104 = vmatprep.subr.bf16.mxu0 0
    %1105 = vmatpush1.bf16.xpose.msra.mxu0 0
    %1106 = vmatprep.subr.bf16.mxu0 0
    %1107 = vmatpush1.bf16.xpose.msra.mxu0 0
    %1108 = vmatprep.subr.bf16.mxu0 0
    %1109 = vmatpush1.bf16.xpose.msra.mxu0 0
    %1110 = vmatprep.subr.bf16.mxu0 0
    %1111 = vmatpush1.bf16.xpose.msra.mxu0 0
    %1112 = vmatprep.subr.bf16.mxu0 0
    %1113 = vmatpush1.bf16.xpose.msra.mxu0 0
    %1114 = vmatprep.subr.bf16.mxu0 0
    %1115 = vmatpush1.bf16.xpose.msra.mxu0 0
    %1116 = vmatprep.subr.bf16.mxu0 0
    %1117 = vmatpush1.bf16.xpose.msra.mxu0 0
    %1118 = vmatprep.subr.bf16.mxu0 0
    %1119 = vmatpush1.bf16.xpose.msra.mxu0 0
    %1120 = vmatprep.subr.bf16.mxu0 0
    %1121 = vmatpush1.bf16.xpose.msra.mxu0 0
    %1122 = vmatprep.subr.bf16.mxu0 0
    %1123 = vmatpush1.bf16.xpose.msra.mxu0 0
    %1124 = vmatprep.subr.bf16.mxu0 0
    %1125 = vmatpush1.bf16.xpose.msra.mxu0 0
    %1126 = vmatprep.subr.bf16.mxu0 0
    %1127 = vmatpush1.bf16.xpose.msra.mxu0 0
    %1128 = vmatprep.subr.bf16.mxu0 0
    %1129 = vmatpush1.bf16.xpose.msra.mxu0 0
    %1130 = vmatprep.subr.bf16.mxu0 0
    %1131 = vmatpush1.bf16.xpose.msra.mxu0 0
    %1132 = vmatprep.subr.bf16.mxu0 0
    %1133 = vmatpush1.bf16.xpose.msra.mxu0 0
    %1134 = vmatprep.mubr.bf16.mxu0 0
    %1135 = vmatmul.mubr.bf16.gmra.mrb[0].mxu0 %v1097
    %v1136 = vpop.f32.mrb[0].mxu0
    %v1137 = vadd.f32 0.0, %v1136
    %v1138 = vpop.f32.mrb[0].mxu0
    %v1139 = vpop.f32.mrb[0].mxu0
    %v1140 = vpop.f32.mrb[0].mxu0
    %1141 = vdwg.mxu0
    %1143 = vrot.lane.b32.xlu0 %v1092, 96
    %v1144 = vpop.permute.xlu0 %1143
    %v1146 = vsel %vm181, %v1090, 0
    %v1149 = vsel %vm181, %v1144, 0
    %1151 = vmatprep.subr.bf16.mxu0 0
    %1152 = vmatpush1.bf16.xpose.msra.mxu0 %v1149
    %1153 = vmatprep.subr.bf16.mxu0 0
    %1154 = vmatpush1.bf16.xpose.msra.mxu0 0
    %1155 = vmatprep.subr.bf16.mxu0 0
    %1156 = vmatpush1.bf16.xpose.msra.mxu0 0
    %1157 = vmatprep.subr.bf16.mxu0 0
    %1158 = vmatpush1.bf16.xpose.msra.mxu0 0
    %1159 = vmatprep.subr.bf16.mxu0 0
    %1160 = vmatpush1.bf16.xpose.msra.mxu0 0
    %1161 = vmatprep.subr.bf16.mxu0 0
    %1162 = vmatpush1.bf16.xpose.msra.mxu0 0
    %1163 = vmatprep.subr.bf16.mxu0 0
    %1164 = vmatpush1.bf16.xpose.msra.mxu0 0
    %1165 = vmatprep.subr.bf16.mxu0 0
    %1166 = vmatpush1.bf16.xpose.msra.mxu0 0
    %1167 = vmatprep.subr.bf16.mxu0 0
    %1168 = vmatpush1.bf16.xpose.msra.mxu0 0
    %1169 = vmatprep.subr.bf16.mxu0 0
    %1170 = vmatpush1.bf16.xpose.msra.mxu0 0
    %1171 = vmatprep.subr.bf16.mxu0 0
    %1172 = vmatpush1.bf16.xpose.msra.mxu0 0
    %1173 = vmatprep.subr.bf16.mxu0 0
    %1174 = vmatpush1.bf16.xpose.msra.mxu0 0
    %1175 = vmatprep.subr.bf16.mxu0 0
    %1176 = vmatpush1.bf16.xpose.msra.mxu0 0
    %1177 = vmatprep.subr.bf16.mxu0 0
    %1178 = vmatpush1.bf16.xpose.msra.mxu0 0
    %1179 = vmatprep.subr.bf16.mxu0 0
    %1180 = vmatpush1.bf16.xpose.msra.mxu0 0
    %1181 = vmatprep.subr.bf16.mxu0 0
    %1182 = vmatpush1.bf16.xpose.msra.mxu0 0
    %1183 = vmatprep.mubr.bf16.mxu0 0
    %1184 = vmatmul.mubr.bf16.gmra.mrb[0].mxu0 %v1146
    %v1185 = vpop.f32.mrb[0].mxu0
    %v1186 = vadd.f32 0.0, %v1185
    %v1187 = vpop.f32.mrb[0].mxu0
    %v1188 = vpop.f32.mrb[0].mxu0
    %v1189 = vpop.f32.mrb[0].mxu0
    %1190 = vdwg.mxu0
    %v1191 = vmul.f32 %v1137, 0.25
    %v1192 = vmul.f32 %v1186, 0.25
    %v1193 = vadd.f32 %v1191, %v284
    %v1194 = vadd.f32 %v1192, %v288
    %v1195 = vsel %vm293, %v1193, -inf
    %1196 = vmax.xlane.f32.xlu0 %v1195
    %v1197 = vpop.xlane.xlu0 %1196
    %v1198 = vsel %vm293, %v1194, -inf
    %1199 = vmax.xlane.f32.xlu0 %v1198
    %v1200 = vpop.xlane.xlu0 %1199
    %v1201 = vsub.f32 %v1193, %v1197
    %v1202 = vsub.f32 %v1194, %v1200
    %v1203 = vmul.f32 %v1201, 1.442695
    %v1204 = vpow.pop %v1203
    %v1205 = vmul.f32 %v1202, 1.442695
    %v1206 = vpow.pop %v1205
    %v1207 = vsel %vm293, %v1204, 0.0
    %1208 = vadd.xlane.f32.xlu0 %v1207
    %v1209 = vpop.xlane.xlu0 %1208
    %v1210 = vsel %vm293, %v1206, 0.0
    %1211 = vadd.xlane.f32.xlu0 %v1210
    %v1212 = vpop.xlane.xlu0 %1211
    %v1213 = vrcp.pop %v1209
    %v1214 = vrcp.pop %v1212
    %v1215 = vmul.f32 %v1204, %v1213
    %v1216 = vmul.f32 %v1206, %v1214
    %v1217 = vpack.c.bf16 %v1215, %v1215
    %v1218 = vpack.c.bf16 %v1216, %v1216
    %v1219 = vpack.c.bf16 %v1087, %v1087
    %v1220 = vpack.c.bf16 %v1088, %v1088
    %1222 = vrot.lane.b32.xlu0 %v1219, 64
    %v1223 = vpop.permute.xlu0 %1222
    %v1225 = vsel %vm293, %v1217, 0
    %v1228 = vsel %vm326, %v1223, 0
    %1230 = vmatprep.subr.bf16.mxu0 0
    %1231 = vmatpush1.bf16.msra.mxu0 %v1228
    %1232 = vmatprep.subr.bf16.mxu0 0
    %1233 = vmatpush1.bf16.msra.mxu0 0
    %1234 = vmatprep.subr.bf16.mxu0 0
    %1235 = vmatpush1.bf16.msra.mxu0 0
    %1236 = vmatprep.subr.bf16.mxu0 0
    %1237 = vmatpush1.bf16.msra.mxu0 0
    %1238 = vmatprep.subr.bf16.mxu0 0
    %1239 = vmatpush1.bf16.msra.mxu0 0
    %1240 = vmatprep.subr.bf16.mxu0 0
    %1241 = vmatpush1.bf16.msra.mxu0 0
    %1242 = vmatprep.subr.bf16.mxu0 0
    %1243 = vmatpush1.bf16.msra.mxu0 0
    %1244 = vmatprep.subr.bf16.mxu0 0
    %1245 = vmatpush1.bf16.msra.mxu0 0
    %1246 = vmatprep.subr.bf16.mxu0 0
    %1247 = vmatpush1.bf16.msra.mxu0 0
    %1248 = vmatprep.subr.bf16.mxu0 0
    %1249 = vmatpush1.bf16.msra.mxu0 0
    %1250 = vmatprep.subr.bf16.mxu0 0
    %1251 = vmatpush1.bf16.msra.mxu0 0
    %1252 = vmatprep.subr.bf16.mxu0 0
    %1253 = vmatpush1.bf16.msra.mxu0 0
    %1254 = vmatprep.subr.bf16.mxu0 0
    %1255 = vmatpush1.bf16.msra.mxu0 0
    %1256 = vmatprep.subr.bf16.mxu0 0
    %1257 = vmatpush1.bf16.msra.mxu0 0
    %1258 = vmatprep.subr.bf16.mxu0 0
    %1259 = vmatpush1.bf16.msra.mxu0 0
    %1260 = vmatprep.subr.bf16.mxu0 0
    %1261 = vmatpush1.bf16.msra.mxu0 0
    %1262 = vmatprep.mubr.bf16.mxu0 0
    %1263 = vmatmul.mubr.bf16.gmra.mrb[0].mxu0 %v1225
    %v1264 = vpop.f32.mrb[0].mxu0
    %v1265 = vadd.f32 0.0, %v1264
    %v1266 = vpop.f32.mrb[0].mxu0
    %v1267 = vpop.f32.mrb[0].mxu0
    %v1268 = vpop.f32.mrb[0].mxu0
    %1269 = vdwg.mxu0
    %1271 = vrot.lane.b32.xlu0 %v1220, 64
    %v1272 = vpop.permute.xlu0 %1271
    %v1274 = vsel %vm293, %v1218, 0
    %v1277 = vsel %vm326, %v1272, 0
    %1279 = vmatprep.subr.bf16.mxu0 0
    %1280 = vmatpush1.bf16.msra.mxu0 %v1277
    %1281 = vmatprep.subr.bf16.mxu0 0
    %1282 = vmatpush1.bf16.msra.mxu0 0
    %1283 = vmatprep.subr.bf16.mxu0 0
    %1284 = vmatpush1.bf16.msra.mxu0 0
    %1285 = vmatprep.subr.bf16.mxu0 0
    %1286 = vmatpush1.bf16.msra.mxu0 0
    %1287 = vmatprep.subr.bf16.mxu0 0
    %1288 = vmatpush1.bf16.msra.mxu0 0
    %1289 = vmatprep.subr.bf16.mxu0 0
    %1290 = vmatpush1.bf16.msra.mxu0 0
    %1291 = vmatprep.subr.bf16.mxu0 0
    %1292 = vmatpush1.bf16.msra.mxu0 0
    %1293 = vmatprep.subr.bf16.mxu0 0
    %1294 = vmatpush1.bf16.msra.mxu0 0
    %1295 = vmatprep.subr.bf16.mxu0 0
    %1296 = vmatpush1.bf16.msra.mxu0 0
    %1297 = vmatprep.subr.bf16.mxu0 0
    %1298 = vmatpush1.bf16.msra.mxu0 0
    %1299 = vmatprep.subr.bf16.mxu0 0
    %1300 = vmatpush1.bf16.msra.mxu0 0
    %1301 = vmatprep.subr.bf16.mxu0 0
    %1302 = vmatpush1.bf16.msra.mxu0 0
    %1303 = vmatprep.subr.bf16.mxu0 0
    %1304 = vmatpush1.bf16.msra.mxu0 0
    %1305 = vmatprep.subr.bf16.mxu0 0
    %1306 = vmatpush1.bf16.msra.mxu0 0
    %1307 = vmatprep.subr.bf16.mxu0 0
    %1308 = vmatpush1.bf16.msra.mxu0 0
    %1309 = vmatprep.subr.bf16.mxu0 0
    %1310 = vmatpush1.bf16.msra.mxu0 0
    %1311 = vmatprep.mubr.bf16.mxu0 0
    %1312 = vmatmul.mubr.bf16.gmra.mrb[0].mxu0 %v1274
    %v1313 = vpop.f32.mrb[0].mxu0
    %v1314 = vadd.f32 0.0, %v1313
    %v1315 = vpop.f32.mrb[0].mxu0
    %v1316 = vpop.f32.mrb[0].mxu0
    %v1317 = vpop.f32.mrb[0].mxu0
    %1318 = vdwg.mxu0
    %1320 = vrot.lane.b32.xlu0 %v1089, 112
    %v1321 = vpop.permute.xlu0 %1320
    %1322 = vrot.lane.b32.xlu0 %v1091, 80
    %v1323 = vpop.permute.xlu0 %1322
    %v1325 = vsel %vm181, %v1321, 0
    %v1328 = vsel %vm181, %v1323, 0
    %1330 = vmatprep.subr.bf16.mxu0 0
    %1331 = vmatpush1.bf16.xpose.msra.mxu0 %v1328
    %1332 = vmatprep.subr.bf16.mxu0 0
    %1333 = vmatpush1.bf16.xpose.msra.mxu0 0
    %1334 = vmatprep.subr.bf16.mxu0 0
    %1335 = vmatpush1.bf16.xpose.msra.mxu0 0
    %1336 = vmatprep.subr.bf16.mxu0 0
    %1337 = vmatpush1.bf16.xpose.msra.mxu0 0
    %1338 = vmatprep.subr.bf16.mxu0 0
    %1339 = vmatpush1.bf16.xpose.msra.mxu0 0
    %1340 = vmatprep.subr.bf16.mxu0 0
    %1341 = vmatpush1.bf16.xpose.msra.mxu0 0
    %1342 = vmatprep.subr.bf16.mxu0 0
    %1343 = vmatpush1.bf16.xpose.msra.mxu0 0
    %1344 = vmatprep.subr.bf16.mxu0 0
    %1345 = vmatpush1.bf16.xpose.msra.mxu0 0
    %1346 = vmatprep.subr.bf16.mxu0 0
    %1347 = vmatpush1.bf16.xpose.msra.mxu0 0
    %1348 = vmatprep.subr.bf16.mxu0 0
    %1349 = vmatpush1.bf16.xpose.msra.mxu0 0
    %1350 = vmatprep.subr.bf16.mxu0 0
    %1351 = vmatpush1.bf16.xpose.msra.mxu0 0
    %1352 = vmatprep.subr.bf16.mxu0 0
    %1353 = vmatpush1.bf16.xpose.msra.mxu0 0
    %1354 = vmatprep.subr.bf16.mxu0 0
    %1355 = vmatpush1.bf16.xpose.msra.mxu0 0
    %1356 = vmatprep.subr.bf16.mxu0 0
    %1357 = vmatpush1.bf16.xpose.msra.mxu0 0
    %1358 = vmatprep.subr.bf16.mxu0 0
    %1359 = vmatpush1.bf16.xpose.msra.mxu0 0
    %1360 = vmatprep.subr.bf16.mxu0 0
    %1361 = vmatpush1.bf16.xpose.msra.mxu0 0
    %1362 = vmatprep.mubr.bf16.mxu0 0
    %1363 = vmatmul.mubr.bf16.gmra.mrb[0].mxu0 %v1325
    %v1364 = vpop.f32.mrb[0].mxu0
    %v1365 = vadd.f32 0.0, %v1364
    %v1366 = vpop.f32.mrb[0].mxu0
    %v1367 = vpop.f32.mrb[0].mxu0
    %v1368 = vpop.f32.mrb[0].mxu0
    %1369 = vdwg.mxu0
    %1371 = vrot.lane.b32.xlu0 %v1090, 112
    %v1372 = vpop.permute.xlu0 %1371
    %1373 = vrot.lane.b32.xlu0 %v1092, 80
    %v1374 = vpop.permute.xlu0 %1373
    %v1376 = vsel %vm181, %v1372, 0
    %v1379 = vsel %vm181, %v1374, 0
    %1381 = vmatprep.subr.bf16.mxu0 0
    %1382 = vmatpush1.bf16.xpose.msra.mxu0 %v1379
    %1383 = vmatprep.subr.bf16.mxu0 0
    %1384 = vmatpush1.bf16.xpose.msra.mxu0 0
    %1385 = vmatprep.subr.bf16.mxu0 0
    %1386 = vmatpush1.bf16.xpose.msra.mxu0 0
    %1387 = vmatprep.subr.bf16.mxu0 0
    %1388 = vmatpush1.bf16.xpose.msra.mxu0 0
    %1389 = vmatprep.subr.bf16.mxu0 0
    %1390 = vmatpush1.bf16.xpose.msra.mxu0 0
    %1391 = vmatprep.subr.bf16.mxu0 0
    %1392 = vmatpush1.bf16.xpose.msra.mxu0 0
    %1393 = vmatprep.subr.bf16.mxu0 0
    %1394 = vmatpush1.bf16.xpose.msra.mxu0 0
    %1395 = vmatprep.subr.bf16.mxu0 0
    %1396 = vmatpush1.bf16.xpose.msra.mxu0 0
    %1397 = vmatprep.subr.bf16.mxu0 0
    %1398 = vmatpush1.bf16.xpose.msra.mxu0 0
    %1399 = vmatprep.subr.bf16.mxu0 0
    %1400 = vmatpush1.bf16.xpose.msra.mxu0 0
    %1401 = vmatprep.subr.bf16.mxu0 0
    %1402 = vmatpush1.bf16.xpose.msra.mxu0 0
    %1403 = vmatprep.subr.bf16.mxu0 0
    %1404 = vmatpush1.bf16.xpose.msra.mxu0 0
    %1405 = vmatprep.subr.bf16.mxu0 0
    %1406 = vmatpush1.bf16.xpose.msra.mxu0 0
    %1407 = vmatprep.subr.bf16.mxu0 0
    %1408 = vmatpush1.bf16.xpose.msra.mxu0 0
    %1409 = vmatprep.subr.bf16.mxu0 0
    %1410 = vmatpush1.bf16.xpose.msra.mxu0 0
    %1411 = vmatprep.subr.bf16.mxu0 0
    %1412 = vmatpush1.bf16.xpose.msra.mxu0 0
    %1413 = vmatprep.mubr.bf16.mxu0 0
    %1414 = vmatmul.mubr.bf16.gmra.mrb[0].mxu0 %v1376
    %v1415 = vpop.f32.mrb[0].mxu0
    %v1416 = vadd.f32 0.0, %v1415
    %v1417 = vpop.f32.mrb[0].mxu0
    %v1418 = vpop.f32.mrb[0].mxu0
    %v1419 = vpop.f32.mrb[0].mxu0
    %1420 = vdwg.mxu0
    %v1421 = vmul.f32 %v1365, 0.25
    %v1422 = vmul.f32 %v1416, 0.25
    %v1423 = vadd.f32 %v1421, %v284
    %v1424 = vadd.f32 %v1422, %v288
    %v1425 = vsel %vm293, %v1423, -inf
    %1426 = vmax.xlane.f32.xlu0 %v1425
    %v1427 = vpop.xlane.xlu0 %1426
    %v1428 = vsel %vm293, %v1424, -inf
    %1429 = vmax.xlane.f32.xlu0 %v1428
    %v1430 = vpop.xlane.xlu0 %1429
    %v1431 = vsub.f32 %v1423, %v1427
    %v1432 = vsub.f32 %v1424, %v1430
    %v1433 = vmul.f32 %v1431, 1.442695
    %v1434 = vpow.pop %v1433
    %v1435 = vmul.f32 %v1432, 1.442695
    %v1436 = vpow.pop %v1435
    %v1437 = vsel %vm293, %v1434, 0.0
    %1438 = vadd.xlane.f32.xlu0 %v1437
    %v1439 = vpop.xlane.xlu0 %1438
    %v1440 = vsel %vm293, %v1436, 0.0
    %1441 = vadd.xlane.f32.xlu0 %v1440
    %v1442 = vpop.xlane.xlu0 %1441
    %v1443 = vrcp.pop %v1439
    %v1444 = vrcp.pop %v1442
    %v1445 = vmul.f32 %v1434, %v1443
    %v1446 = vmul.f32 %v1436, %v1444
    %v1447 = vpack.c.bf16 %v1445, %v1445
    %v1448 = vpack.c.bf16 %v1446, %v1446
    %1449 = vrot.lane.b32.xlu0 %v1219, 48
    %v1450 = vpop.permute.xlu0 %1449
    %v1452 = vsel %vm293, %v1447, 0
    %v1455 = vsel %vm326, %v1450, 0
    %1457 = vmatprep.subr.bf16.mxu0 0
    %1458 = vmatpush1.bf16.msra.mxu0 %v1455
    %1459 = vmatprep.subr.bf16.mxu0 0
    %1460 = vmatpush1.bf16.msra.mxu0 0
    %1461 = vmatprep.subr.bf16.mxu0 0
    %1462 = vmatpush1.bf16.msra.mxu0 0
    %1463 = vmatprep.subr.bf16.mxu0 0
    %1464 = vmatpush1.bf16.msra.mxu0 0
    %1465 = vmatprep.subr.bf16.mxu0 0
    %1466 = vmatpush1.bf16.msra.mxu0 0
    %1467 = vmatprep.subr.bf16.mxu0 0
    %1468 = vmatpush1.bf16.msra.mxu0 0
    %1469 = vmatprep.subr.bf16.mxu0 0
    %1470 = vmatpush1.bf16.msra.mxu0 0
    %1471 = vmatprep.subr.bf16.mxu0 0
    %1472 = vmatpush1.bf16.msra.mxu0 0
    %1473 = vmatprep.subr.bf16.mxu0 0
    %1474 = vmatpush1.bf16.msra.mxu0 0
    %1475 = vmatprep.subr.bf16.mxu0 0
    %1476 = vmatpush1.bf16.msra.mxu0 0
    %1477 = vmatprep.subr.bf16.mxu0 0
    %1478 = vmatpush1.bf16.msra.mxu0 0
    %1479 = vmatprep.subr.bf16.mxu0 0
    %1480 = vmatpush1.bf16.msra.mxu0 0
    %1481 = vmatprep.subr.bf16.mxu0 0
    %1482 = vmatpush1.bf16.msra.mxu0 0
    %1483 = vmatprep.subr.bf16.mxu0 0
    %1484 = vmatpush1.bf16.msra.mxu0 0
    %1485 = vmatprep.subr.bf16.mxu0 0
    %1486 = vmatpush1.bf16.msra.mxu0 0
    %1487 = vmatprep.subr.bf16.mxu0 0
    %1488 = vmatpush1.bf16.msra.mxu0 0
    %1489 = vmatprep.mubr.bf16.mxu0 0
    %1490 = vmatmul.mubr.bf16.gmra.mrb[0].mxu0 %v1452
    %v1491 = vpop.f32.mrb[0].mxu0
    %v1492 = vadd.f32 0.0, %v1491
    %v1493 = vpop.f32.mrb[0].mxu0
    %v1494 = vpop.f32.mrb[0].mxu0
    %v1495 = vpop.f32.mrb[0].mxu0
    %1496 = vdwg.mxu0
    %1497 = vrot.lane.b32.xlu0 %v1220, 48
    %v1498 = vpop.permute.xlu0 %1497
    %v1500 = vsel %vm293, %v1448, 0
    %v1503 = vsel %vm326, %v1498, 0
    %1505 = vmatprep.subr.bf16.mxu0 0
    %1506 = vmatpush1.bf16.msra.mxu0 %v1503
    %1507 = vmatprep.subr.bf16.mxu0 0
    %1508 = vmatpush1.bf16.msra.mxu0 0
    %1509 = vmatprep.subr.bf16.mxu0 0
    %1510 = vmatpush1.bf16.msra.mxu0 0
    %1511 = vmatprep.subr.bf16.mxu0 0
    %1512 = vmatpush1.bf16.msra.mxu0 0
    %1513 = vmatprep.subr.bf16.mxu0 0
    %1514 = vmatpush1.bf16.msra.mxu0 0
    %1515 = vmatprep.subr.bf16.mxu0 0
    %1516 = vmatpush1.bf16.msra.mxu0 0
    %1517 = vmatprep.subr.bf16.mxu0 0
    %1518 = vmatpush1.bf16.msra.mxu0 0
    %1519 = vmatprep.subr.bf16.mxu0 0
    %1520 = vmatpush1.bf16.msra.mxu0 0
    %1521 = vmatprep.subr.bf16.mxu0 0
    %1522 = vmatpush1.bf16.msra.mxu0 0
    %1523 = vmatprep.subr.bf16.mxu0 0
    %1524 = vmatpush1.bf16.msra.mxu0 0
    %1525 = vmatprep.subr.bf16.mxu0 0
    %1526 = vmatpush1.bf16.msra.mxu0 0
    %1527 = vmatprep.subr.bf16.mxu0 0
    %1528 = vmatpush1.bf16.msra.mxu0 0
    %1529 = vmatprep.subr.bf16.mxu0 0
    %1530 = vmatpush1.bf16.msra.mxu0 0
    %1531 = vmatprep.subr.bf16.mxu0 0
    %1532 = vmatpush1.bf16.msra.mxu0 0
    %1533 = vmatprep.subr.bf16.mxu0 0
    %1534 = vmatpush1.bf16.msra.mxu0 0
    %1535 = vmatprep.subr.bf16.mxu0 0
    %1536 = vmatpush1.bf16.msra.mxu0 0
    %1537 = vmatprep.mubr.bf16.mxu0 0
    %1538 = vmatmul.mubr.bf16.gmra.mrb[0].mxu0 %v1500
    %v1539 = vpop.f32.mrb[0].mxu0
    %v1540 = vadd.f32 0.0, %v1539
    %v1541 = vpop.f32.mrb[0].mxu0
    %v1542 = vpop.f32.mrb[0].mxu0
    %v1543 = vpop.f32.mrb[0].mxu0
    %1544 = vdwg.mxu0
    %1547 = vrot.lane.b32.xlu0 %v1492, 16
    %v1548 = vpop.permute.xlu0 %1547
    %1549 = vrot.lane.b32.xlu0 %v1540, 16
    %v1550 = vpop.permute.xlu0 %1549
    %v1553 = vsel %vm181, %v1265, %v1548
    %v1554 = vsel %vm181, %v1314, %v1550
    %v1555 = vpack.c.bf16 %v1554, %v1553
    %v1556 = vlaneseq
    %v1557 = vshrl.u32 %v1556, 7
    %v1558 = vsub.s32 3, %v1557
    %v1559 = vrot.slane %v994, %v1558
    %v1564 = vunpack.c.l.b16 %v1002
    %v1565 = vunpack.c.l.b16 %v1003
    %v1566 = vunpack.c.l.b16 %v1004
    %v1567 = vunpack.c.l.b16 %v1005
    %v1568 = vpack.c.b16 %v1565, %v1564
    %v1569 = vpack.c.b16 %v1567, %v1566
    %v1573 = vsel %vm103, %v1555, 0
    %1575 = vmatprep.subr.bf16.mxu0 0
    %1576 = vmatpush1.bf16.msra.mxu0 %v1568
    %1577 = vmatprep.subr.bf16.mxu0 0
    %1578 = vmatpush1.bf16.msra.mxu0 %v1569
    %1579 = vmatprep.subr.bf16.mxu0 0
    %1580 = vmatpush1.bf16.msra.mxu0 0
    %1581 = vmatprep.subr.bf16.mxu0 0
    %1582 = vmatpush1.bf16.msra.mxu0 0
    %1583 = vmatprep.subr.bf16.mxu0 0
    %1584 = vmatpush1.bf16.msra.mxu0 0
    %1585 = vmatprep.subr.bf16.mxu0 0
    %1586 = vmatpush1.bf16.msra.mxu0 0
    %1587 = vmatprep.subr.bf16.mxu0 0
    %1588 = vmatpush1.bf16.msra.mxu0 0
    %1589 = vmatprep.subr.bf16.mxu0 0
    %1590 = vmatpush1.bf16.msra.mxu0 0
    %1591 = vmatprep.subr.bf16.mxu0 0
    %1592 = vmatpush1.bf16.msra.mxu0 0
    %1593 = vmatprep.subr.bf16.mxu0 0
    %1594 = vmatpush1.bf16.msra.mxu0 0
    %1595 = vmatprep.subr.bf16.mxu0 0
    %1596 = vmatpush1.bf16.msra.mxu0 0
    %1597 = vmatprep.subr.bf16.mxu0 0
    %1598 = vmatpush1.bf16.msra.mxu0 0
    %1599 = vmatprep.subr.bf16.mxu0 0
    %1600 = vmatpush1.bf16.msra.mxu0 0
    %1601 = vmatprep.subr.bf16.mxu0 0
    %1602 = vmatpush1.bf16.msra.mxu0 0
    %1603 = vmatprep.subr.bf16.mxu0 0
    %1604 = vmatpush1.bf16.msra.mxu0 0
    %1605 = vmatprep.subr.bf16.mxu0 0
    %1606 = vmatpush1.bf16.msra.mxu0 0
    %1607 = vmatprep.mubr.bf16.mxu0 0
    %1608 = vmatmul.mubr.bf16.gmra.mrb[0].mxu0 %v1573
    %v1609 = vpop.f32.mrb[0].mxu0
    %v1610 = vadd.f32 %v1559, %v1609
    %v1611 = vpop.f32.mrb[0].mxu0
    %v1612 = vpop.f32.mrb[0].mxu0
    %v1613 = vadd.f32 %v1559, %v1612
    %v1614 = vpop.f32.mrb[0].mxu0
    %1615 = vdwg.mxu0
    %v1616 = vadd.f32 %v991, %v1610
    %v1617 = vadd.f32 %v992, %v1613
    %v1618 = vsel %vm103, %v1616, 0.0
    %1619 = vadd.xlane.f32.xlu0 %v1618
    %v1620 = vpop.xlane.xlu0 %1619
    %v1621 = vsel %vm103, %v1617, 0.0
    %1622 = vadd.xlane.f32.xlu0 %v1621
    %v1623 = vpop.xlane.xlu0 %1622
    %v1624 = vmul.f32 %v1620, %v724
    %v1625 = vmul.f32 %v1623, %v724
    %v1626 = vsub.f32 %v1616, %v1624
    %v1627 = vsub.f32 %v1617, %v1625
    %v1628 = vmul.f32 %v1626, %v1626
    %v1629 = vmul.f32 %v1627, %v1627
    %v1630 = vsel %vm103, %v1628, 0.0
    %1631 = vadd.xlane.f32.xlu0 %v1630
    %v1632 = vpop.xlane.xlu0 %1631
    %v1633 = vsel %vm103, %v1629, 0.0
    %1634 = vadd.xlane.f32.xlu0 %v1633
    %v1635 = vpop.xlane.xlu0 %1634
    %v1636 = vmul.f32 %v1632, %v724
    %v1637 = vmul.f32 %v1635, %v724
    %v1638 = vadd.f32 %v1636, 1e-12
    %v1639 = vadd.f32 %v1637, 1e-12
    %v1640 = vrsqrt.pop %v1638
    %v1641 = vrsqrt.pop %v1639
    %v1642 = vmul.f32 %v1626, %v1640
    %v1643 = vmul.f32 %v1627, %v1641
    %v1644 = vlaneseq
    %v1645 = vshrl.u32 %v1644, 7
    %v1646 = vsub.s32 4, %v1645
    %v1647 = vrot.slane %v994, %v1646
    %v1648 = vmul.f32 %v1642, %v1647
    %v1649 = vmul.f32 %v1643, %v1647
    %v1650 = vlaneseq
    %v1651 = vshrl.u32 %v1650, 7
    %v1652 = vsub.s32 5, %v1651
    %v1653 = vrot.slane %v994, %v1652
    %v1654 = vadd.f32 %v1648, %v1653
    %v1655 = vadd.f32 %v1649, %v1653
    %s1656 = scalar_lea.vmem %s7, 16
    %v1657 = vld [vmem:[%s1656] sm:$0xf]
    %v1658 = vld [vmem:[%s1656 + $0x4] sm:$0xf]
    %v1659 = vld [vmem:[%s1656 + $0x8] sm:$0xf]
    %v1660 = vld [vmem:[%s1656 + $0xc] sm:$0xf]
    %s1661 = scalar_lea.vmem %s8, 1
    %v1662 = vld [vmem:[%s1661] sm:$0x1]
    %s1663 = scalar_lea.vmem %s9, 64
    %v1664 = vld [vmem:[%s1663] sm:$0xf]
    %v1665 = vld [vmem:[%s1663 + $0x4] sm:$0xf]
    %v1666 = vld [vmem:[%s1663 + $0x8] sm:$0xf]
    %v1667 = vld [vmem:[%s1663 + $0xc] sm:$0xf]
    %v1668 = vld [vmem:[%s1663 + $0x10] sm:$0xf]
    %v1669 = vld [vmem:[%s1663 + $0x14] sm:$0xf]
    %v1670 = vld [vmem:[%s1663 + $0x18] sm:$0xf]
    %v1671 = vld [vmem:[%s1663 + $0x1c] sm:$0xf]
    %v1672 = vld [vmem:[%s1663 + $0x20] sm:$0xf]
    %v1673 = vld [vmem:[%s1663 + $0x24] sm:$0xf]
    %v1674 = vld [vmem:[%s1663 + $0x28] sm:$0xf]
    %v1675 = vld [vmem:[%s1663 + $0x2c] sm:$0xf]
    %v1676 = vld [vmem:[%s1663 + $0x30] sm:$0xf]
    %v1677 = vld [vmem:[%s1663 + $0x34] sm:$0xf]
    %v1678 = vld [vmem:[%s1663 + $0x38] sm:$0xf]
    %v1679 = vld [vmem:[%s1663 + $0x3c] sm:$0xf]
    %v1680 = vpack.c.bf16 %v1655, %v1654
    %v1682 = vlaneseq
    %v1683 = vshrl.u32 %v1682, 7
    %v1684 = vsub.s32 0, %v1683
    %v1685 = vrot.slane %v1662, %v1684
    %v1691 = vunpack.c.l.b16 %v1657
    %v1692 = vunpack.c.l.b16 %v1658
    %v1693 = vunpack.c.l.b16 %v1659
    %v1694 = vunpack.c.l.b16 %v1660
    %v1695 = vpack.c.b16 %v1692, %v1691
    %v1696 = vpack.c.b16 %v1694, %v1693
    %v1700 = vsel %vm103, %v1680, 0
    %1702 = vmatprep.subr.bf16.mxu0 0
    %1703 = vmatpush1.bf16.msra.mxu0 %v1695
    %1704 = vmatprep.subr.bf16.mxu0 0
    %1705 = vmatpush1.bf16.msra.mxu0 %v1696
    %1706 = vmatprep.subr.bf16.mxu0 0
    %1707 = vmatpush1.bf16.msra.mxu0 0
    %1708 = vmatprep.subr.bf16.mxu0 0
    %1709 = vmatpush1.bf16.msra.mxu0 0
    %1710 = vmatprep.subr.bf16.mxu0 0
    %1711 = vmatpush1.bf16.msra.mxu0 0
    %1712 = vmatprep.subr.bf16.mxu0 0
    %1713 = vmatpush1.bf16.msra.mxu0 0
    %1714 = vmatprep.subr.bf16.mxu0 0
    %1715 = vmatpush1.bf16.msra.mxu0 0
    %1716 = vmatprep.subr.bf16.mxu0 0
    %1717 = vmatpush1.bf16.msra.mxu0 0
    %1718 = vmatprep.subr.bf16.mxu0 0
    %1719 = vmatpush1.bf16.msra.mxu0 0
    %1720 = vmatprep.subr.bf16.mxu0 0
    %1721 = vmatpush1.bf16.msra.mxu0 0
    %1722 = vmatprep.subr.bf16.mxu0 0
    %1723 = vmatpush1.bf16.msra.mxu0 0
    %1724 = vmatprep.subr.bf16.mxu0 0
    %1725 = vmatpush1.bf16.msra.mxu0 0
    %1726 = vmatprep.subr.bf16.mxu0 0
    %1727 = vmatpush1.bf16.msra.mxu0 0
    %1728 = vmatprep.subr.bf16.mxu0 0
    %1729 = vmatpush1.bf16.msra.mxu0 0
    %1730 = vmatprep.subr.bf16.mxu0 0
    %1731 = vmatpush1.bf16.msra.mxu0 0
    %1732 = vmatprep.subr.bf16.mxu0 0
    %1733 = vmatpush1.bf16.msra.mxu0 0
    %1734 = vmatprep.mubr.bf16.mxu0 0
    %1735 = vmatmul.mubr.bf16.gmra.mrb[0].mxu0 %v1700
    %v1736 = vpop.f32.mrb[0].mxu0
    %v1737 = vadd.f32 %v1685, %v1736
    %v1738 = vpop.f32.mrb[0].mxu0
    %v1739 = vpop.f32.mrb[0].mxu0
    %v1740 = vadd.f32 %v1685, %v1739
    %v1741 = vpop.f32.mrb[0].mxu0
    %1742 = vdwg.mxu0
    %v1743 = vmul.f32 %v1737, %v1737
    %v1744 = vmul.f32 %v1740, %v1740
    %v1745 = vmul.f32 %v1737, %v1743
    %v1746 = vmul.f32 %v1740, %v1744
    %v1747 = vmul.f32 %v1745, 0.044715
    %v1748 = vmul.f32 %v1746, 0.044715
    %v1749 = vadd.f32 %v1737, %v1747
    %v1750 = vadd.f32 %v1740, %v1748
    %v1751 = vmul.f32 %v1749, 0.7978846
    %v1752 = vmul.f32 %v1750, 0.7978846
    %v1753 = vtanh.pop %v1751
    %v1754 = vtanh.pop %v1752
    %v1755 = vadd.f32 %v1753, 1.0
    %v1756 = vadd.f32 %v1754, 1.0
    %v1757 = vmul.f32 %v1755, 0.5
    %v1758 = vmul.f32 %v1756, 0.5
    %v1759 = vmul.f32 %v1737, %v1757
    %v1760 = vmul.f32 %v1740, %v1758
    %v1761 = vpack.c.bf16 %v1760, %v1759
    %v1762 = vlaneseq
    %v1763 = vshrl.u32 %v1762, 7
    %v1764 = vsub.s32 6, %v1763
    %v1765 = vrot.slane %v994, %v1764
    %v1782 = vunpack.c.l.b16 %v1664
    %v1783 = vunpack.c.l.b16 %v1665
    %v1784 = vunpack.c.l.b16 %v1666
    %v1785 = vunpack.c.l.b16 %v1667
    %v1786 = vunpack.c.l.b16 %v1668
    %v1787 = vunpack.c.l.b16 %v1669
    %v1788 = vunpack.c.l.b16 %v1670
    %v1789 = vunpack.c.l.b16 %v1671
    %v1790 = vunpack.c.l.b16 %v1672
    %v1791 = vunpack.c.l.b16 %v1673
    %v1792 = vunpack.c.l.b16 %v1674
    %v1793 = vunpack.c.l.b16 %v1675
    %v1794 = vunpack.c.l.b16 %v1676
    %v1795 = vunpack.c.l.b16 %v1677
    %v1796 = vunpack.c.l.b16 %v1678
    %v1797 = vunpack.c.l.b16 %v1679
    %v1798 = vpack.c.b16 %v1783, %v1782
    %v1799 = vpack.c.b16 %v1785, %v1784
    %v1800 = vpack.c.b16 %v1787, %v1786
    %v1801 = vpack.c.b16 %v1789, %v1788
    %v1802 = vpack.c.b16 %v1791, %v1790
    %v1803 = vpack.c.b16 %v1793, %v1792
    %v1804 = vpack.c.b16 %v1795, %v1794
    %v1805 = vpack.c.b16 %v1797, %v1796
    %1814 = vmatprep.subr.bf16.mxu0 0
    %1815 = vmatpush1.bf16.msra.mxu0 %v1798
    %1816 = vmatprep.subr.bf16.mxu0 0
    %1817 = vmatpush1.bf16.msra.mxu0 %v1799
    %1818 = vmatprep.subr.bf16.mxu0 0
    %1819 = vmatpush1.bf16.msra.mxu0 %v1800
    %1820 = vmatprep.subr.bf16.mxu0 0
    %1821 = vmatpush1.bf16.msra.mxu0 %v1801
    %1822 = vmatprep.subr.bf16.mxu0 0
    %1823 = vmatpush1.bf16.msra.mxu0 %v1802
    %1824 = vmatprep.subr.bf16.mxu0 0
    %1825 = vmatpush1.bf16.msra.mxu0 %v1803
    %1826 = vmatprep.subr.bf16.mxu0 0
    %1827 = vmatpush1.bf16.msra.mxu0 %v1804
    %1828 = vmatprep.subr.bf16.mxu0 0
    %1829 = vmatpush1.bf16.msra.mxu0 %v1805
    %1830 = vmatprep.subr.bf16.mxu0 0
    %1831 = vmatpush1.bf16.msra.mxu0 0
    %1832 = vmatprep.subr.bf16.mxu0 0
    %1833 = vmatpush1.bf16.msra.mxu0 0
    %1834 = vmatprep.subr.bf16.mxu0 0
    %1835 = vmatpush1.bf16.msra.mxu0 0
    %1836 = vmatprep.subr.bf16.mxu0 0
    %1837 = vmatpush1.bf16.msra.mxu0 0
    %1838 = vmatprep.subr.bf16.mxu0 0
    %1839 = vmatpush1.bf16.msra.mxu0 0
    %1840 = vmatprep.subr.bf16.mxu0 0
    %1841 = vmatpush1.bf16.msra.mxu0 0
    %1842 = vmatprep.subr.bf16.mxu0 0
    %1843 = vmatpush1.bf16.msra.mxu0 0
    %1844 = vmatprep.subr.bf16.mxu0 0
    %1845 = vmatpush1.bf16.msra.mxu0 0
    %1846 = vmatprep.mubr.bf16.mxu0 0
    %1847 = vmatmul.mubr.bf16.gmra.mrb[0].mxu0 %v1761
    %v1848 = vpop.f32.mrb[0].mxu0
    %v1849 = vadd.f32 %v1765, %v1848
    %v1850 = vpop.f32.mrb[0].mxu0
    %v1851 = vpop.f32.mrb[0].mxu0
    %v1852 = vadd.f32 %v1765, %v1851
    %v1853 = vpop.f32.mrb[0].mxu0
    %1854 = vdwg.mxu0
    %v1855 = vadd.f32 %v1654, %v1849
    %v1856 = vadd.f32 %v1655, %v1852
    %v1857 = vsel %vm103, %v1855, 0.0
    %1858 = vadd.xlane.f32.xlu0 %v1857
    %v1859 = vpop.xlane.xlu0 %1858
    %v1860 = vsel %vm103, %v1856, 0.0
    %1861 = vadd.xlane.f32.xlu0 %v1860
    %v1862 = vpop.xlane.xlu0 %1861
    %v1863 = vmul.f32 %v1859, %v724
    %v1864 = vmul.f32 %v1862, %v724
    %v1865 = vsub.f32 %v1855, %v1863
    %v1866 = vsub.f32 %v1856, %v1864
    %v1867 = vmul.f32 %v1865, %v1865
    %v1868 = vmul.f32 %v1866, %v1866
    %v1869 = vsel %vm103, %v1867, 0.0
    %1870 = vadd.xlane.f32.xlu0 %v1869
    %v1871 = vpop.xlane.xlu0 %1870
    %v1872 = vsel %vm103, %v1868, 0.0
    %1873 = vadd.xlane.f32.xlu0 %v1872
    %v1874 = vpop.xlane.xlu0 %1873
    %v1875 = vmul.f32 %v1871, %v724
    %v1876 = vmul.f32 %v1874, %v724
    %v1877 = vadd.f32 %v1875, 1e-12
    %v1878 = vadd.f32 %v1876, 1e-12
    %v1879 = vrsqrt.pop %v1877
    %v1880 = vrsqrt.pop %v1878
    %v1881 = vmul.f32 %v1865, %v1879
    %v1882 = vmul.f32 %v1866, %v1880
    %v1883 = vlaneseq
    %v1884 = vshrl.u32 %v1883, 7
    %v1885 = vsub.s32 7, %v1884
    %v1886 = vrot.slane %v994, %v1885
    %v1887 = vmul.f32 %v1881, %v1886
    %v1888 = vmul.f32 %v1882, %v1886
    %v1889 = vlaneseq
    %v1890 = vshrl.u32 %v1889, 7
    %v1891 = vsub.s32 0, %v1890
    %v1892 = vrot.slane %v995, %v1891
    %v1893 = vadd.f32 %v1887, %v1892
    %v1894 = vadd.f32 %v1888, %v1892
    %s1895 = scalar_lea.vmem %s10, 32
    %v1896 = vld [vmem:[%s1895] sm:$0xff]
    %v1897 = vld [vmem:[%s1895 + $0x8] sm:$0x1]
    %s1898 = scalar_lea.vmem %s5, 32
    %v1899 = vld [vmem:[%s1898] sm:$0xf]
    %v1900 = vld [vmem:[%s1898 + $0x4] sm:$0xf]
    %v1901 = vld [vmem:[%s1898 + $0x8] sm:$0xf]
    %v1902 = vld [vmem:[%s1898 + $0xc] sm:$0xf]
    %s1903 = scalar_lea.vmem %s6, 32
    %v1904 = vld [vmem:[%s1903] sm:$0xf]
    %v1905 = vld [vmem:[%s1903 + $0x4] sm:$0xf]
    %v1906 = vld [vmem:[%s1903 + $0x8] sm:$0xf]
    %v1907 = vld [vmem:[%s1903 + $0xc] sm:$0xf]
    %v1908 = vpack.c.bf16 %v1894, %v1893
    %v1913 = vunpack.c.l.b16 %v1899
    %v1914 = vunpack.c.l.b16 %v1900
    %v1915 = vunpack.c.l.b16 %v1901
    %v1916 = vunpack.c.l.b16 %v1902
    %v1917 = vpack.c.b16 %v1914, %v1913
    %v1918 = vpack.c.b16 %v1916, %v1915
    %v1922 = vsel %vm103, %v1908, 0
    %1924 = vmatprep.subr.bf16.mxu0 0
    %1925 = vmatpush1.bf16.msra.mxu0 %v1917
    %1926 = vmatprep.subr.bf16.mxu0 0
    %1927 = vmatpush1.bf16.msra.mxu0 %v1918
    %1928 = vmatprep.subr.bf16.mxu0 0
    %1929 = vmatpush1.bf16.msra.mxu0 0
    %1930 = vmatprep.subr.bf16.mxu0 0
    %1931 = vmatpush1.bf16.msra.mxu0 0
    %1932 = vmatprep.subr.bf16.mxu0 0
    %1933 = vmatpush1.bf16.msra.mxu0 0
    %1934 = vmatprep.subr.bf16.mxu0 0
    %1935 = vmatpush1.bf16.msra.mxu0 0
    %1936 = vmatprep.subr.bf16.mxu0 0
    %1937 = vmatpush1.bf16.msra.mxu0 0
    %1938 = vmatprep.subr.bf16.mxu0 0
    %1939 = vmatpush1.bf16.msra.mxu0 0
    %1940 = vmatprep.subr.bf16.mxu0 0
    %1941 = vmatpush1.bf16.msra.mxu0 0
    %1942 = vmatprep.subr.bf16.mxu0 0
    %1943 = vmatpush1.bf16.msra.mxu0 0
    %1944 = vmatprep.subr.bf16.mxu0 0
    %1945 = vmatpush1.bf16.msra.mxu0 0
    %1946 = vmatprep.subr.bf16.mxu0 0
    %1947 = vmatpush1.bf16.msra.mxu0 0
    %1948 = vmatprep.subr.bf16.mxu0 0
    %1949 = vmatpush1.bf16.msra.mxu0 0
    %1950 = vmatprep.subr.bf16.mxu0 0
    %1951 = vmatpush1.bf16.msra.mxu0 0
    %1952 = vmatprep.subr.bf16.mxu0 0
    %1953 = vmatpush1.bf16.msra.mxu0 0
    %1954 = vmatprep.subr.bf16.mxu0 0
    %1955 = vmatpush1.bf16.msra.mxu0 0
    %1956 = vmatprep.mubr.bf16.mxu0 0
    %1957 = vmatmul.mubr.bf16.gmra.mrb[0].mxu0 %v1922
    %v1958 = vpop.f32.mrb[0].mxu0
    %v1959 = vadd.f32 0.0, %v1958
    %v1960 = vpop.f32.mrb[0].mxu0
    %v1961 = vpop.f32.mrb[0].mxu0
    %v1962 = vadd.f32 0.0, %v1961
    %v1963 = vpop.f32.mrb[0].mxu0
    %1964 = vdwg.mxu0
    %v1965 = vlaneseq
    %v1966 = vshrl.u32 %v1965, 7
    %v1967 = vsub.s32 0, %v1966
    %v1968 = vrot.slane %v1896, %v1967
    %v1969 = vadd.f32 %v1959, %v1968
    %v1970 = vadd.f32 %v1962, %v1968
    %v1971 = vlaneseq
    %v1972 = vshrl.u32 %v1971, 7
    %v1973 = vsub.s32 1, %v1972
    %v1974 = vrot.slane %v1896, %v1973
    %1976 = vrot.lane.b32.xlu0 %v1974, 32
    %v1977 = vpop.permute.xlu0 %1976
    %v1979 = vadd.f32 %v1959, %v1977
    %v1980 = vadd.f32 %v1962, %v1977
    %v1981 = vlaneseq
    %v1982 = vshrl.u32 %v1981, 7
    %v1983 = vsub.s32 2, %v1982
    %v1984 = vrot.slane %v1896, %v1983
    %1986 = vrot.lane.b32.xlu0 %v1984, 64
    %v1987 = vpop.permute.xlu0 %1986
    %v1989 = vadd.f32 %v1959, %v1987
    %v1990 = vadd.f32 %v1962, %v1987
    %v1991 = vpack.c.bf16 %v1969, %v1969
    %v1992 = vpack.c.bf16 %v1970, %v1970
    %v1993 = vpack.c.bf16 %v1979, %v1979
    %v1994 = vpack.c.bf16 %v1980, %v1980
    %1996 = vrot.lane.b32.xlu0 %v1993, 96
    %v1997 = vpop.permute.xlu0 %1996
    %v1999 = vsel %vm181, %v1991, 0
    %v2002 = vsel %vm181, %v1997, 0
    %2004 = vmatprep.subr.bf16.mxu0 0
    %2005 = vmatpush1.bf16.xpose.msra.mxu0 %v2002
    %2006 = vmatprep.subr.bf16.mxu0 0
    %2007 = vmatpush1.bf16.xpose.msra.mxu0 0
    %2008 = vmatprep.subr.bf16.mxu0 0
    %2009 = vmatpush1.bf16.xpose.msra.mxu0 0
    %2010 = vmatprep.subr.bf16.mxu0 0
    %2011 = vmatpush1.bf16.xpose.msra.mxu0 0
    %2012 = vmatprep.subr.bf16.mxu0 0
    %2013 = vmatpush1.bf16.xpose.msra.mxu0 0
    %2014 = vmatprep.subr.bf16.mxu0 0
    %2015 = vmatpush1.bf16.xpose.msra.mxu0 0
    %2016 = vmatprep.subr.bf16.mxu0 0
    %2017 = vmatpush1.bf16.xpose.msra.mxu0 0
    %2018 = vmatprep.subr.bf16.mxu0 0
    %2019 = vmatpush1.bf16.xpose.msra.mxu0 0
    %2020 = vmatprep.subr.bf16.mxu0 0
    %2021 = vmatpush1.bf16.xpose.msra.mxu0 0
    %2022 = vmatprep.subr.bf16.mxu0 0
    %2023 = vmatpush1.bf16.xpose.msra.mxu0 0
    %2024 = vmatprep.subr.bf16.mxu0 0
    %2025 = vmatpush1.bf16.xpose.msra.mxu0 0
    %2026 = vmatprep.subr.bf16.mxu0 0
    %2027 = vmatpush1.bf16.xpose.msra.mxu0 0
    %2028 = vmatprep.subr.bf16.mxu0 0
    %2029 = vmatpush1.bf16.xpose.msra.mxu0 0
    %2030 = vmatprep.subr.bf16.mxu0 0
    %2031 = vmatpush1.bf16.xpose.msra.mxu0 0
    %2032 = vmatprep.subr.bf16.mxu0 0
    %2033 = vmatpush1.bf16.xpose.msra.mxu0 0
    %2034 = vmatprep.subr.bf16.mxu0 0
    %2035 = vmatpush1.bf16.xpose.msra.mxu0 0
    %2036 = vmatprep.mubr.bf16.mxu0 0
    %2037 = vmatmul.mubr.bf16.gmra.mrb[0].mxu0 %v1999
    %v2038 = vpop.f32.mrb[0].mxu0
    %v2039 = vadd.f32 0.0, %v2038
    %v2040 = vpop.f32.mrb[0].mxu0
    %v2041 = vpop.f32.mrb[0].mxu0
    %v2042 = vpop.f32.mrb[0].mxu0
    %2043 = vdwg.mxu0
    %2045 = vrot.lane.b32.xlu0 %v1994, 96
    %v2046 = vpop.permute.xlu0 %2045
    %v2048 = vsel %vm181, %v1992, 0
    %v2051 = vsel %vm181, %v2046, 0
    %2053 = vmatprep.subr.bf16.mxu0 0
    %2054 = vmatpush1.bf16.xpose.msra.mxu0 %v2051
    %2055 = vmatprep.subr.bf16.mxu0 0
    %2056 = vmatpush1.bf16.xpose.msra.mxu0 0
    %2057 = vmatprep.subr.bf16.mxu0 0
    %2058 = vmatpush1.bf16.xpose.msra.mxu0 0
    %2059 = vmatprep.subr.bf16.mxu0 0
    %2060 = vmatpush1.bf16.xpose.msra.mxu0 0
    %2061 = vmatprep.subr.bf16.mxu0 0
    %2062 = vmatpush1.bf16.xpose.msra.mxu0 0
    %2063 = vmatprep.subr.bf16.mxu0 0
    %2064 = vmatpush1.bf16.xpose.msra.mxu0 0
    %2065 = vmatprep.subr.bf16.mxu0 0
    %2066 = vmatpush1.bf16.xpose.msra.mxu0 0
    %2067 = vmatprep.subr.bf16.mxu0 0
    %2068 = vmatpush1.bf16.xpose.msra.mxu0 0
    %2069 = vmatprep.subr.bf16.mxu0 0
    %2070 = vmatpush1.bf16.xpose.msra.mxu0 0
    %2071 = vmatprep.subr.bf16.mxu0 0
    %2072 = vmatpush1.bf16.xpose.msra.mxu0 0
    %2073 = vmatprep.subr.bf16.mxu0 0
    %2074 = vmatpush1.bf16.xpose.msra.mxu0 0
    %2075 = vmatprep.subr.bf16.mxu0 0
    %2076 = vmatpush1.bf16.xpose.msra.mxu0 0
    %2077 = vmatprep.subr.bf16.mxu0 0
    %2078 = vmatpush1.bf16.xpose.msra.mxu0 0
    %2079 = vmatprep.subr.bf16.mxu0 0
    %2080 = vmatpush1.bf16.xpose.msra.mxu0 0
    %2081 = vmatprep.subr.bf16.mxu0 0
    %2082 = vmatpush1.bf16.xpose.msra.mxu0 0
    %2083 = vmatprep.subr.bf16.mxu0 0
    %2084 = vmatpush1.bf16.xpose.msra.mxu0 0
    %2085 = vmatprep.mubr.bf16.mxu0 0
    %2086 = vmatmul.mubr.bf16.gmra.mrb[0].mxu0 %v2048
    %v2087 = vpop.f32.mrb[0].mxu0
    %v2088 = vadd.f32 0.0, %v2087
    %v2089 = vpop.f32.mrb[0].mxu0
    %v2090 = vpop.f32.mrb[0].mxu0
    %v2091 = vpop.f32.mrb[0].mxu0
    %2092 = vdwg.mxu0
    %v2093 = vmul.f32 %v2039, 0.25
    %v2094 = vmul.f32 %v2088, 0.25
    %v2095 = vadd.f32 %v2093, %v284
    %v2096 = vadd.f32 %v2094, %v288
    %v2097 = vsel %vm293, %v2095, -inf
    %2098 = vmax.xlane.f32.xlu0 %v2097
    %v2099 = vpop.xlane.xlu0 %2098
    %v2100 = vsel %vm293, %v2096, -inf
    %2101 = vmax.xlane.f32.xlu0 %v2100
    %v2102 = vpop.xlane.xlu0 %2101
    %v2103 = vsub.f32 %v2095, %v2099
    %v2104 = vsub.f32 %v2096, %v2102
    %v2105 = vmul.f32 %v2103, 1.442695
    %v2106 = vpow.pop %v2105
    %v2107 = vmul.f32 %v2104, 1.442695
    %v2108 = vpow.pop %v2107
    %v2109 = vsel %vm293, %v2106, 0.0
    %2110 = vadd.xlane.f32.xlu0 %v2109
    %v2111 = vpop.xlane.xlu0 %2110
    %v2112 = vsel %vm293, %v2108, 0.0
    %2113 = vadd.xlane.f32.xlu0 %v2112
    %v2114 = vpop.xlane.xlu0 %2113
    %v2115 = vrcp.pop %v2111
    %v2116 = vrcp.pop %v2114
    %v2117 = vmul.f32 %v2106, %v2115
    %v2118 = vmul.f32 %v2108, %v2116
    %v2119 = vpack.c.bf16 %v2117, %v2117
    %v2120 = vpack.c.bf16 %v2118, %v2118
    %v2121 = vpack.c.bf16 %v1989, %v1989
    %v2122 = vpack.c.bf16 %v1990, %v1990
    %2124 = vrot.lane.b32.xlu0 %v2121, 64
    %v2125 = vpop.permute.xlu0 %2124
    %v2127 = vsel %vm293, %v2119, 0
    %v2130 = vsel %vm326, %v2125, 0
    %2132 = vmatprep.subr.bf16.mxu0 0
    %2133 = vmatpush1.bf16.msra.mxu0 %v2130
    %2134 = vmatprep.subr.bf16.mxu0 0
    %2135 = vmatpush1.bf16.msra.mxu0 0
    %2136 = vmatprep.subr.bf16.mxu0 0
    %2137 = vmatpush1.bf16.msra.mxu0 0
    %2138 = vmatprep.subr.bf16.mxu0 0
    %2139 = vmatpush1.bf16.msra.mxu0 0
    %2140 = vmatprep.subr.bf16.mxu0 0
    %2141 = vmatpush1.bf16.msra.mxu0 0
    %2142 = vmatprep.subr.bf16.mxu0 0
    %2143 = vmatpush1.bf16.msra.mxu0 0
    %2144 = vmatprep.subr.bf16.mxu0 0
    %2145 = vmatpush1.bf16.msra.mxu0 0
    %2146 = vmatprep.subr.bf16.mxu0 0
    %2147 = vmatpush1.bf16.msra.mxu0 0
    %2148 = vmatprep.subr.bf16.mxu0 0
    %2149 = vmatpush1.bf16.msra.mxu0 0
    %2150 = vmatprep.subr.bf16.mxu0 0
    %2151 = vmatpush1.bf16.msra.mxu0 0
    %2152 = vmatprep.subr.bf16.mxu0 0
    %2153 = vmatpush1.bf16.msra.mxu0 0
    %2154 = vmatprep.subr.bf16.mxu0 0
    %2155 = vmatpush1.bf16.msra.mxu0 0
    %2156 = vmatprep.subr.bf16.mxu0 0
    %2157 = vmatpush1.bf16.msra.mxu0 0
    %2158 = vmatprep.subr.bf16.mxu0 0
    %2159 = vmatpush1.bf16.msra.mxu0 0
    %2160 = vmatprep.subr.bf16.mxu0 0
    %2161 = vmatpush1.bf16.msra.mxu0 0
    %2162 = vmatprep.subr.bf16.mxu0 0
    %2163 = vmatpush1.bf16.msra.mxu0 0
    %2164 = vmatprep.mubr.bf16.mxu0 0
    %2165 = vmatmul.mubr.bf16.gmra.mrb[0].mxu0 %v2127
    %v2166 = vpop.f32.mrb[0].mxu0
    %v2167 = vadd.f32 0.0, %v2166
    %v2168 = vpop.f32.mrb[0].mxu0
    %v2169 = vpop.f32.mrb[0].mxu0
    %v2170 = vpop.f32.mrb[0].mxu0
    %2171 = vdwg.mxu0
    %2173 = vrot.lane.b32.xlu0 %v2122, 64
    %v2174 = vpop.permute.xlu0 %2173
    %v2176 = vsel %vm293, %v2120, 0
    %v2179 = vsel %vm326, %v2174, 0
    %2181 = vmatprep.subr.bf16.mxu0 0
    %2182 = vmatpush1.bf16.msra.mxu0 %v2179
    %2183 = vmatprep.subr.bf16.mxu0 0
    %2184 = vmatpush1.bf16.msra.mxu0 0
    %2185 = vmatprep.subr.bf16.mxu0 0
    %2186 = vmatpush1.bf16.msra.mxu0 0
    %2187 = vmatprep.subr.bf16.mxu0 0
    %2188 = vmatpush1.bf16.msra.mxu0 0
    %2189 = vmatprep.subr.bf16.mxu0 0
    %2190 = vmatpush1.bf16.msra.mxu0 0
    %2191 = vmatprep.subr.bf16.mxu0 0
    %2192 = vmatpush1.bf16.msra.mxu0 0
    %2193 = vmatprep.subr.bf16.mxu0 0
    %2194 = vmatpush1.bf16.msra.mxu0 0
    %2195 = vmatprep.subr.bf16.mxu0 0
    %2196 = vmatpush1.bf16.msra.mxu0 0
    %2197 = vmatprep.subr.bf16.mxu0 0
    %2198 = vmatpush1.bf16.msra.mxu0 0
    %2199 = vmatprep.subr.bf16.mxu0 0
    %2200 = vmatpush1.bf16.msra.mxu0 0
    %2201 = vmatprep.subr.bf16.mxu0 0
    %2202 = vmatpush1.bf16.msra.mxu0 0
    %2203 = vmatprep.subr.bf16.mxu0 0
    %2204 = vmatpush1.bf16.msra.mxu0 0
    %2205 = vmatprep.subr.bf16.mxu0 0
    %2206 = vmatpush1.bf16.msra.mxu0 0
    %2207 = vmatprep.subr.bf16.mxu0 0
    %2208 = vmatpush1.bf16.msra.mxu0 0
    %2209 = vmatprep.subr.bf16.mxu0 0
    %2210 = vmatpush1.bf16.msra.mxu0 0
    %2211 = vmatprep.subr.bf16.mxu0 0
    %2212 = vmatpush1.bf16.msra.mxu0 0
    %2213 = vmatprep.mubr.bf16.mxu0 0
    %2214 = vmatmul.mubr.bf16.gmra.mrb[0].mxu0 %v2176
    %v2215 = vpop.f32.mrb[0].mxu0
    %v2216 = vadd.f32 0.0, %v2215
    %v2217 = vpop.f32.mrb[0].mxu0
    %v2218 = vpop.f32.mrb[0].mxu0
    %v2219 = vpop.f32.mrb[0].mxu0
    %2220 = vdwg.mxu0
    %2222 = vrot.lane.b32.xlu0 %v1991, 112
    %v2223 = vpop.permute.xlu0 %2222
    %2224 = vrot.lane.b32.xlu0 %v1993, 80
    %v2225 = vpop.permute.xlu0 %2224
    %v2227 = vsel %vm181, %v2223, 0
    %v2230 = vsel %vm181, %v2225, 0
    %2232 = vmatprep.subr.bf16.mxu0 0
    %2233 = vmatpush1.bf16.xpose.msra.mxu0 %v2230
    %2234 = vmatprep.subr.bf16.mxu0 0
    %2235 = vmatpush1.bf16.xpose.msra.mxu0 0
    %2236 = vmatprep.subr.bf16.mxu0 0
    %2237 = vmatpush1.bf16.xpose.msra.mxu0 0
    %2238 = vmatprep.subr.bf16.mxu0 0
    %2239 = vmatpush1.bf16.xpose.msra.mxu0 0
    %2240 = vmatprep.subr.bf16.mxu0 0
    %2241 = vmatpush1.bf16.xpose.msra.mxu0 0
    %2242 = vmatprep.subr.bf16.mxu0 0
    %2243 = vmatpush1.bf16.xpose.msra.mxu0 0
    %2244 = vmatprep.subr.bf16.mxu0 0
    %2245 = vmatpush1.bf16.xpose.msra.mxu0 0
    %2246 = vmatprep.subr.bf16.mxu0 0
    %2247 = vmatpush1.bf16.xpose.msra.mxu0 0
    %2248 = vmatprep.subr.bf16.mxu0 0
    %2249 = vmatpush1.bf16.xpose.msra.mxu0 0
    %2250 = vmatprep.subr.bf16.mxu0 0
    %2251 = vmatpush1.bf16.xpose.msra.mxu0 0
    %2252 = vmatprep.subr.bf16.mxu0 0
    %2253 = vmatpush1.bf16.xpose.msra.mxu0 0
    %2254 = vmatprep.subr.bf16.mxu0 0
    %2255 = vmatpush1.bf16.xpose.msra.mxu0 0
    %2256 = vmatprep.subr.bf16.mxu0 0
    %2257 = vmatpush1.bf16.xpose.msra.mxu0 0
    %2258 = vmatprep.subr.bf16.mxu0 0
    %2259 = vmatpush1.bf16.xpose.msra.mxu0 0
    %2260 = vmatprep.subr.bf16.mxu0 0
    %2261 = vmatpush1.bf16.xpose.msra.mxu0 0
    %2262 = vmatprep.subr.bf16.mxu0 0
    %2263 = vmatpush1.bf16.xpose.msra.mxu0 0
    %2264 = vmatprep.mubr.bf16.mxu0 0
    %2265 = vmatmul.mubr.bf16.gmra.mrb[0].mxu0 %v2227
    %v2266 = vpop.f32.mrb[0].mxu0
    %v2267 = vadd.f32 0.0, %v2266
    %v2268 = vpop.f32.mrb[0].mxu0
    %v2269 = vpop.f32.mrb[0].mxu0
    %v2270 = vpop.f32.mrb[0].mxu0
    %2271 = vdwg.mxu0
    %2273 = vrot.lane.b32.xlu0 %v1992, 112
    %v2274 = vpop.permute.xlu0 %2273
    %2275 = vrot.lane.b32.xlu0 %v1994, 80
    %v2276 = vpop.permute.xlu0 %2275
    %v2278 = vsel %vm181, %v2274, 0
    %v2281 = vsel %vm181, %v2276, 0
    %2283 = vmatprep.subr.bf16.mxu0 0
    %2284 = vmatpush1.bf16.xpose.msra.mxu0 %v2281
    %2285 = vmatprep.subr.bf16.mxu0 0
    %2286 = vmatpush1.bf16.xpose.msra.mxu0 0
    %2287 = vmatprep.subr.bf16.mxu0 0
    %2288 = vmatpush1.bf16.xpose.msra.mxu0 0
    %2289 = vmatprep.subr.bf16.mxu0 0
    %2290 = vmatpush1.bf16.xpose.msra.mxu0 0
    %2291 = vmatprep.subr.bf16.mxu0 0
    %2292 = vmatpush1.bf16.xpose.msra.mxu0 0
    %2293 = vmatprep.subr.bf16.mxu0 0
    %2294 = vmatpush1.bf16.xpose.msra.mxu0 0
    %2295 = vmatprep.subr.bf16.mxu0 0
    %2296 = vmatpush1.bf16.xpose.msra.mxu0 0
    %2297 = vmatprep.subr.bf16.mxu0 0
    %2298 = vmatpush1.bf16.xpose.msra.mxu0 0
    %2299 = vmatprep.subr.bf16.mxu0 0
    %2300 = vmatpush1.bf16.xpose.msra.mxu0 0
    %2301 = vmatprep.subr.bf16.mxu0 0
    %2302 = vmatpush1.bf16.xpose.msra.mxu0 0
    %2303 = vmatprep.subr.bf16.mxu0 0
    %2304 = vmatpush1.bf16.xpose.msra.mxu0 0
    %2305 = vmatprep.subr.bf16.mxu0 0
    %2306 = vmatpush1.bf16.xpose.msra.mxu0 0
    %2307 = vmatprep.subr.bf16.mxu0 0
    %2308 = vmatpush1.bf16.xpose.msra.mxu0 0
    %2309 = vmatprep.subr.bf16.mxu0 0
    %2310 = vmatpush1.bf16.xpose.msra.mxu0 0
    %2311 = vmatprep.subr.bf16.mxu0 0
    %2312 = vmatpush1.bf16.xpose.msra.mxu0 0
    %2313 = vmatprep.subr.bf16.mxu0 0
    %2314 = vmatpush1.bf16.xpose.msra.mxu0 0
    %2315 = vmatprep.mubr.bf16.mxu0 0
    %2316 = vmatmul.mubr.bf16.gmra.mrb[0].mxu0 %v2278
    %v2317 = vpop.f32.mrb[0].mxu0
    %v2318 = vadd.f32 0.0, %v2317
    %v2319 = vpop.f32.mrb[0].mxu0
    %v2320 = vpop.f32.mrb[0].mxu0
    %v2321 = vpop.f32.mrb[0].mxu0
    %2322 = vdwg.mxu0
    %v2323 = vmul.f32 %v2267, 0.25
    %v2324 = vmul.f32 %v2318, 0.25
    %v2325 = vadd.f32 %v2323, %v284
    %v2326 = vadd.f32 %v2324, %v288
    %v2327 = vsel %vm293, %v2325, -inf
    %2328 = vmax.xlane.f32.xlu0 %v2327
    %v2329 = vpop.xlane.xlu0 %2328
    %v2330 = vsel %vm293, %v2326, -inf
    %2331 = vmax.xlane.f32.xlu0 %v2330
    %v2332 = vpop.xlane.xlu0 %2331
    %v2333 = vsub.f32 %v2325, %v2329
    %v2334 = vsub.f32 %v2326, %v2332
    %v2335 = vmul.f32 %v2333, 1.442695
    %v2336 = vpow.pop %v2335
    %v2337 = vmul.f32 %v2334, 1.442695
    %v2338 = vpow.pop %v2337
    %v2339 = vsel %vm293, %v2336, 0.0
    %2340 = vadd.xlane.f32.xlu0 %v2339
    %v2341 = vpop.xlane.xlu0 %2340
    %v2342 = vsel %vm293, %v2338, 0.0
    %2343 = vadd.xlane.f32.xlu0 %v2342
    %v2344 = vpop.xlane.xlu0 %2343
    %v2345 = vrcp.pop %v2341
    %v2346 = vrcp.pop %v2344
    %v2347 = vmul.f32 %v2336, %v2345
    %v2348 = vmul.f32 %v2338, %v2346
    %v2349 = vpack.c.bf16 %v2347, %v2347
    %v2350 = vpack.c.bf16 %v2348, %v2348
    %2351 = vrot.lane.b32.xlu0 %v2121, 48
    %v2352 = vpop.permute.xlu0 %2351
    %v2354 = vsel %vm293, %v2349, 0
    %v2357 = vsel %vm326, %v2352, 0
    %2359 = vmatprep.subr.bf16.mxu0 0
    %2360 = vmatpush1.bf16.msra.mxu0 %v2357
    %2361 = vmatprep.subr.bf16.mxu0 0
    %2362 = vmatpush1.bf16.msra.mxu0 0
    %2363 = vmatprep.subr.bf16.mxu0 0
    %2364 = vmatpush1.bf16.msra.mxu0 0
    %2365 = vmatprep.subr.bf16.mxu0 0
    %2366 = vmatpush1.bf16.msra.mxu0 0
    %2367 = vmatprep.subr.bf16.mxu0 0
    %2368 = vmatpush1.bf16.msra.mxu0 0
    %2369 = vmatprep.subr.bf16.mxu0 0
    %2370 = vmatpush1.bf16.msra.mxu0 0
    %2371 = vmatprep.subr.bf16.mxu0 0
    %2372 = vmatpush1.bf16.msra.mxu0 0
    %2373 = vmatprep.subr.bf16.mxu0 0
    %2374 = vmatpush1.bf16.msra.mxu0 0
    %2375 = vmatprep.subr.bf16.mxu0 0
    %2376 = vmatpush1.bf16.msra.mxu0 0
    %2377 = vmatprep.subr.bf16.mxu0 0
    %2378 = vmatpush1.bf16.msra.mxu0 0
    %2379 = vmatprep.subr.bf16.mxu0 0
    %2380 = vmatpush1.bf16.msra.mxu0 0
    %2381 = vmatprep.subr.bf16.mxu0 0
    %2382 = vmatpush1.bf16.msra.mxu0 0
    %2383 = vmatprep.subr.bf16.mxu0 0
    %2384 = vmatpush1.bf16.msra.mxu0 0
    %2385 = vmatprep.subr.bf16.mxu0 0
    %2386 = vmatpush1.bf16.msra.mxu0 0
    %2387 = vmatprep.subr.bf16.mxu0 0
    %2388 = vmatpush1.bf16.msra.mxu0 0
    %2389 = vmatprep.subr.bf16.mxu0 0
    %2390 = vmatpush1.bf16.msra.mxu0 0
    %2391 = vmatprep.mubr.bf16.mxu0 0
    %2392 = vmatmul.mubr.bf16.gmra.mrb[0].mxu0 %v2354
    %v2393 = vpop.f32.mrb[0].mxu0
    %v2394 = vadd.f32 0.0, %v2393
    %v2395 = vpop.f32.mrb[0].mxu0
    %v2396 = vpop.f32.mrb[0].mxu0
    %v2397 = vpop.f32.mrb[0].mxu0
    %2398 = vdwg.mxu0
    %2399 = vrot.lane.b32.xlu0 %v2122, 48
    %v2400 = vpop.permute.xlu0 %2399
    %v2402 = vsel %vm293, %v2350, 0
    %v2405 = vsel %vm326, %v2400, 0
    %2407 = vmatprep.subr.bf16.mxu0 0
    %2408 = vmatpush1.bf16.msra.mxu0 %v2405
    %2409 = vmatprep.subr.bf16.mxu0 0
    %2410 = vmatpush1.bf16.msra.mxu0 0
    %2411 = vmatprep.subr.bf16.mxu0 0
    %2412 = vmatpush1.bf16.msra.mxu0 0
    %2413 = vmatprep.subr.bf16.mxu0 0
    %2414 = vmatpush1.bf16.msra.mxu0 0
    %2415 = vmatprep.subr.bf16.mxu0 0
    %2416 = vmatpush1.bf16.msra.mxu0 0
    %2417 = vmatprep.subr.bf16.mxu0 0
    %2418 = vmatpush1.bf16.msra.mxu0 0
    %2419 = vmatprep.subr.bf16.mxu0 0
    %2420 = vmatpush1.bf16.msra.mxu0 0
    %2421 = vmatprep.subr.bf16.mxu0 0
    %2422 = vmatpush1.bf16.msra.mxu0 0
    %2423 = vmatprep.subr.bf16.mxu0 0
    %2424 = vmatpush1.bf16.msra.mxu0 0
    %2425 = vmatprep.subr.bf16.mxu0 0
    %2426 = vmatpush1.bf16.msra.mxu0 0
    %2427 = vmatprep.subr.bf16.mxu0 0
    %2428 = vmatpush1.bf16.msra.mxu0 0
    %2429 = vmatprep.subr.bf16.mxu0 0
    %2430 = vmatpush1.bf16.msra.mxu0 0
    %2431 = vmatprep.subr.bf16.mxu0 0
    %2432 = vmatpush1.bf16.msra.mxu0 0
    %2433 = vmatprep.subr.bf16.mxu0 0
    %2434 = vmatpush1.bf16.msra.mxu0 0
    %2435 = vmatprep.subr.bf16.mxu0 0
    %2436 = vmatpush1.bf16.msra.mxu0 0
    %2437 = vmatprep.subr.bf16.mxu0 0
    %2438 = vmatpush1.bf16.msra.mxu0 0
    %2439 = vmatprep.mubr.bf16.mxu0 0
    %2440 = vmatmul.mubr.bf16.gmra.mrb[0].mxu0 %v2402
    %v2441 = vpop.f32.mrb[0].mxu0
    %v2442 = vadd.f32 0.0, %v2441
    %v2443 = vpop.f32.mrb[0].mxu0
    %v2444 = vpop.f32.mrb[0].mxu0
    %v2445 = vpop.f32.mrb[0].mxu0
    %2446 = vdwg.mxu0
    %2449 = vrot.lane.b32.xlu0 %v2394, 16
    %v2450 = vpop.permute.xlu0 %2449
    %2451 = vrot.lane.b32.xlu0 %v2442, 16
    %v2452 = vpop.permute.xlu0 %2451
    %v2455 = vsel %vm181, %v2167, %v2450
    %v2456 = vsel %vm181, %v2216, %v2452
    %v2457 = vpack.c.bf16 %v2456, %v2455
    %v2458 = vlaneseq
    %v2459 = vshrl.u32 %v2458, 7
    %v2460 = vsub.s32 3, %v2459
    %v2461 = vrot.slane %v1896, %v2460
    %v2466 = vunpack.c.l.b16 %v1904
    %v2467 = vunpack.c.l.b16 %v1905
    %v2468 = vunpack.c.l.b16 %v1906
    %v2469 = vunpack.c.l.b16 %v1907
    %v2470 = vpack.c.b16 %v2467, %v2466
    %v2471 = vpack.c.b16 %v2469, %v2468
    %v2475 = vsel %vm103, %v2457, 0
    %2477 = vmatprep.subr.bf16.mxu0 0
    %2478 = vmatpush1.bf16.msra.mxu0 %v2470
    %2479 = vmatprep.subr.bf16.mxu0 0
    %2480 = vmatpush1.bf16.msra.mxu0 %v2471
    %2481 = vmatprep.subr.bf16.mxu0 0
    %2482 = vmatpush1.bf16.msra.mxu0 0
    %2483 = vmatprep.subr.bf16.mxu0 0
    %2484 = vmatpush1.bf16.msra.mxu0 0
    %2485 = vmatprep.subr.bf16.mxu0 0
    %2486 = vmatpush1.bf16.msra.mxu0 0
    %2487 = vmatprep.subr.bf16.mxu0 0
    %2488 = vmatpush1.bf16.msra.mxu0 0
    %2489 = vmatprep.subr.bf16.mxu0 0
    %2490 = vmatpush1.bf16.msra.mxu0 0
    %2491 = vmatprep.subr.bf16.mxu0 0
    %2492 = vmatpush1.bf16.msra.mxu0 0
    %2493 = vmatprep.subr.bf16.mxu0 0
    %2494 = vmatpush1.bf16.msra.mxu0 0
    %2495 = vmatprep.subr.bf16.mxu0 0
    %2496 = vmatpush1.bf16.msra.mxu0 0
    %2497 = vmatprep.subr.bf16.mxu0 0
    %2498 = vmatpush1.bf16.msra.mxu0 0
    %2499 = vmatprep.subr.bf16.mxu0 0
    %2500 = vmatpush1.bf16.msra.mxu0 0
    %2501 = vmatprep.subr.bf16.mxu0 0
    %2502 = vmatpush1.bf16.msra.mxu0 0
    %2503 = vmatprep.subr.bf16.mxu0 0
    %2504 = vmatpush1.bf16.msra.mxu0 0
    %2505 = vmatprep.subr.bf16.mxu0 0
    %2506 = vmatpush1.bf16.msra.mxu0 0
    %2507 = vmatprep.subr.bf16.mxu0 0
    %2508 = vmatpush1.bf16.msra.mxu0 0
    %2509 = vmatprep.mubr.bf16.mxu0 0
    %2510 = vmatmul.mubr.bf16.gmra.mrb[0].mxu0 %v2475
    %v2511 = vpop.f32.mrb[0].mxu0
    %v2512 = vadd.f32 %v2461, %v2511
    %v2513 = vpop.f32.mrb[0].mxu0
    %v2514 = vpop.f32.mrb[0].mxu0
    %v2515 = vadd.f32 %v2461, %v2514
    %v2516 = vpop.f32.mrb[0].mxu0
    %2517 = vdwg.mxu0
    %v2518 = vadd.f32 %v1893, %v2512
    %v2519 = vadd.f32 %v1894, %v2515
    %v2520 = vsel %vm103, %v2518, 0.0
    %2521 = vadd.xlane.f32.xlu0 %v2520
    %v2522 = vpop.xlane.xlu0 %2521
    %v2523 = vsel %vm103, %v2519, 0.0
    %2524 = vadd.xlane.f32.xlu0 %v2523
    %v2525 = vpop.xlane.xlu0 %2524
    %v2526 = vmul.f32 %v2522, %v724
    %v2527 = vmul.f32 %v2525, %v724
    %v2528 = vsub.f32 %v2518, %v2526
    %v2529 = vsub.f32 %v2519, %v2527
    %v2530 = vmul.f32 %v2528, %v2528
    %v2531 = vmul.f32 %v2529, %v2529
    %v2532 = vsel %vm103, %v2530, 0.0
    %2533 = vadd.xlane.f32.xlu0 %v2532
    %v2534 = vpop.xlane.xlu0 %2533
    %v2535 = vsel %vm103, %v2531, 0.0
    %2536 = vadd.xlane.f32.xlu0 %v2535
    %v2537 = vpop.xlane.xlu0 %2536
    %v2538 = vmul.f32 %v2534, %v724
    %v2539 = vmul.f32 %v2537, %v724
    %v2540 = vadd.f32 %v2538, 1e-12
    %v2541 = vadd.f32 %v2539, 1e-12
    %v2542 = vrsqrt.pop %v2540
    %v2543 = vrsqrt.pop %v2541
    %v2544 = vmul.f32 %v2528, %v2542
    %v2545 = vmul.f32 %v2529, %v2543
    %v2546 = vlaneseq
    %v2547 = vshrl.u32 %v2546, 7
    %v2548 = vsub.s32 4, %v2547
    %v2549 = vrot.slane %v1896, %v2548
    %v2550 = vmul.f32 %v2544, %v2549
    %v2551 = vmul.f32 %v2545, %v2549
    %v2552 = vlaneseq
    %v2553 = vshrl.u32 %v2552, 7
    %v2554 = vsub.s32 5, %v2553
    %v2555 = vrot.slane %v1896, %v2554
    %v2556 = vadd.f32 %v2550, %v2555
    %v2557 = vadd.f32 %v2551, %v2555
    %v2558 = vld [vmem:[%s14] sm:$0x3f]
    %v2559 = vld [vmem:[%s11] sm:$0xf]
    %v2560 = vld [vmem:[%s11 + $0x4] sm:$0xf]
    %v2561 = vld [vmem:[%s11 + $0x8] sm:$0xf]
    %v2562 = vld [vmem:[%s11 + $0xc] sm:$0xf]
    %v2563 = vld [vmem:[%s12] sm:$0xf]
    %v2564 = vld [vmem:[%s12 + $0x4] sm:$0xf]
    %v2565 = vld [vmem:[%s12 + $0x8] sm:$0xf]
    %v2566 = vld [vmem:[%s12 + $0xc] sm:$0xf]
    %v2567 = vld [vmem:[%s13] sm:$0xf]
    %v2568 = vld [vmem:[%s13 + $0x4] sm:$0xf]
    %v2569 = vld [vmem:[%s13 + $0x8] sm:$0xf]
    %v2570 = vld [vmem:[%s13 + $0xc] sm:$0xf]
    %v2571 = vpack.c.bf16 %v2557, %v2556
    %v2572 = vlaneseq
    %v2573 = vshrl.u32 %v2572, 7
    %v2574 = vsub.s32 0, %v2573
    %v2575 = vrot.slane %v2558, %v2574
    %v2580 = vunpack.c.l.b16 %v2559
    %v2581 = vunpack.c.l.b16 %v2560
    %v2582 = vunpack.c.l.b16 %v2561
    %v2583 = vunpack.c.l.b16 %v2562
    %v2584 = vpack.c.b16 %v2581, %v2580
    %v2585 = vpack.c.b16 %v2583, %v2582
    %v2589 = vsel %vm103, %v2571, 0
    %2591 = vmatprep.subr.bf16.mxu0 0
    %2592 = vmatpush1.bf16.msra.mxu0 %v2584
    %2593 = vmatprep.subr.bf16.mxu0 0
    %2594 = vmatpush1.bf16.msra.mxu0 %v2585
    %2595 = vmatprep.subr.bf16.mxu0 0
    %2596 = vmatpush1.bf16.msra.mxu0 0
    %2597 = vmatprep.subr.bf16.mxu0 0
    %2598 = vmatpush1.bf16.msra.mxu0 0
    %2599 = vmatprep.subr.bf16.mxu0 0
    %2600 = vmatpush1.bf16.msra.mxu0 0
    %2601 = vmatprep.subr.bf16.mxu0 0
    %2602 = vmatpush1.bf16.msra.mxu0 0
    %2603 = vmatprep.subr.bf16.mxu0 0
    %2604 = vmatpush1.bf16.msra.mxu0 0
    %2605 = vmatprep.subr.bf16.mxu0 0
    %2606 = vmatpush1.bf16.msra.mxu0 0
    %2607 = vmatprep.subr.bf16.mxu0 0
    %2608 = vmatpush1.bf16.msra.mxu0 0
    %2609 = vmatprep.subr.bf16.mxu0 0
    %2610 = vmatpush1.bf16.msra.mxu0 0
    %2611 = vmatprep.subr.bf16.mxu0 0
    %2612 = vmatpush1.bf16.msra.mxu0 0
    %2613 = vmatprep.subr.bf16.mxu0 0
    %2614 = vmatpush1.bf16.msra.mxu0 0
    %2615 = vmatprep.subr.bf16.mxu0 0
    %2616 = vmatpush1.bf16.msra.mxu0 0
    %2617 = vmatprep.subr.bf16.mxu0 0
    %2618 = vmatpush1.bf16.msra.mxu0 0
    %2619 = vmatprep.subr.bf16.mxu0 0
    %2620 = vmatpush1.bf16.msra.mxu0 0
    %2621 = vmatprep.subr.bf16.mxu0 0
    %2622 = vmatpush1.bf16.msra.mxu0 0
    %2623 = vmatprep.mubr.bf16.mxu0 0
    %2624 = vmatmul.mubr.bf16.gmra.mrb[0].mxu0 %v2589
    %v2625 = vpop.f32.mrb[0].mxu0
    %v2626 = vadd.f32 %v2575, %v2625
    %v2627 = vpop.f32.mrb[0].mxu0
    %v2628 = vpop.f32.mrb[0].mxu0
    %v2629 = vadd.f32 %v2575, %v2628
    %v2630 = vpop.f32.mrb[0].mxu0
    %2631 = vdwg.mxu0
    %v2636 = vunpack.c.l.b16 %v2563
    %v2637 = vunpack.c.l.b16 %v2564
    %v2638 = vunpack.c.l.b16 %v2565
    %v2639 = vunpack.c.l.b16 %v2566
    %v2640 = vpack.c.b16 %v2637, %v2636
    %v2641 = vpack.c.b16 %v2639, %v2638
    %v2645 = vsel %vm103, %v77, 0
    %2647 = vmatprep.subr.bf16.mxu0 0
    %2648 = vmatpush1.bf16.msra.mxu0 %v2640
    %2649 = vmatprep.subr.bf16.mxu0 0
    %2650 = vmatpush1.bf16.msra.mxu0 %v2641
    %2651 = vmatprep.subr.bf16.mxu0 0
    %2652 = vmatpush1.bf16.msra.mxu0 0
    %2653 = vmatprep.subr.bf16.mxu0 0
    %2654 = vmatpush1.bf16.msra.mxu0 0
    %2655 = vmatprep.subr.bf16.mxu0 0
    %2656 = vmatpush1.bf16.msra.mxu0 0
    %2657 = vmatprep.subr.bf16.mxu0 0
    %2658 = vmatpush1.bf16.msra.mxu0 0
    %2659 = vmatprep.subr.bf16.mxu0 0
    %2660 = vmatpush1.bf16.msra.mxu0 0
    %2661 = vmatprep.subr.bf16.mxu0 0
    %2662 = vmatpush1.bf16.msra.mxu0 0
    %2663 = vmatprep.subr.bf16.mxu0 0
    %2664 = vmatpush1.bf16.msra.mxu0 0
    %2665 = vmatprep.subr.bf16.mxu0 0
    %2666 = vmatpush1.bf16.msra.mxu0 0
    %2667 = vmatprep.subr.bf16.mxu0 0
    %2668 = vmatpush1.bf16.msra.mxu0 0
    %2669 = vmatprep.subr.bf16.mxu0 0
    %2670 = vmatpush1.bf16.msra.mxu0 0
    %2671 = vmatprep.subr.bf16.mxu0 0
    %2672 = vmatpush1.bf16.msra.mxu0 0
    %2673 = vmatprep.subr.bf16.mxu0 0
    %2674 = vmatpush1.bf16.msra.mxu0 0
    %2675 = vmatprep.subr.bf16.mxu0 0
    %2676 = vmatpush1.bf16.msra.mxu0 0
    %2677 = vmatprep.subr.bf16.mxu0 0
    %2678 = vmatpush1.bf16.msra.mxu0 0
    %2679 = vmatprep.mubr.bf16.mxu0 0
    %2680 = vmatmul.mubr.bf16.gmra.mrb[0].mxu0 %v2645
    %v2681 = vpop.f32.mrb[0].mxu0
    %v2682 = vadd.f32 0.0, %v2681
    %v2683 = vpop.f32.mrb[0].mxu0
    %v2684 = vpop.f32.mrb[0].mxu0
    %v2685 = vpop.f32.mrb[0].mxu0
    %2686 = vdwg.mxu0
    %v2687 = vlaneseq
    %v2688 = vshrl.u32 %v2687, 7
    %v2689 = vsub.s32 1, %v2688
    %v2690 = vrot.slane %v2558, %v2689
    %v2691 = vadd.f32 %v2682, %v2690
    %v2693 = vcombine.high %v2691, %v2691
    %v2695 = vlaneseq
    %v2696 = vshrl.u32 %v2695, 7
    %v2697 = vsub.s32 2, %v2696
    %v2698 = vrot.slane %v2558, %v2697
    %2700 = vrot.lane.b32.xlu0 %v2698, 32
    %v2701 = vpop.permute.xlu0 %2700
    %v2703 = vadd.f32 %v2682, %v2701
    %v2705 = vcombine.high %v2703, %v2703
    %v2707 = vpack.c.bf16 %v2626, %v2626
    %v2708 = vpack.c.bf16 %v2629, %v2629
    %v2709 = vpack.c.bf16 %v2691, %v2691
    %v2710 = vpack.c.bf16 %v2693, %v2693
    %v2712 = vsel %vm181, %v2707, 0
    %v2715 = vsel %vm181, %v2709, 0
    %2717 = vmatprep.subr.bf16.mxu0 0
    %2718 = vmatpush1.bf16.xpose.msra.mxu0 %v2715
    %2719 = vmatprep.subr.bf16.mxu0 0
    %2720 = vmatpush1.bf16.xpose.msra.mxu0 0
    %2721 = vmatprep.subr.bf16.mxu0 0
    %2722 = vmatpush1.bf16.xpose.msra.mxu0 0
    %2723 = vmatprep.subr.bf16.mxu0 0
    %2724 = vmatpush1.bf16.xpose.msra.mxu0 0
    %2725 = vmatprep.subr.bf16.mxu0 0
    %2726 = vmatpush1.bf16.xpose.msra.mxu0 0
    %2727 = vmatprep.subr.bf16.mxu0 0
    %2728 = vmatpush1.bf16.xpose.msra.mxu0 0
    %2729 = vmatprep.subr.bf16.mxu0 0
    %2730 = vmatpush1.bf16.xpose.msra.mxu0 0
    %2731 = vmatprep.subr.bf16.mxu0 0
    %2732 = vmatpush1.bf16.xpose.msra.mxu0 0
    %2733 = vmatprep.subr.bf16.mxu0 0
    %2734 = vmatpush1.bf16.xpose.msra.mxu0 0
    %2735 = vmatprep.subr.bf16.mxu0 0
    %2736 = vmatpush1.bf16.xpose.msra.mxu0 0
    %2737 = vmatprep.subr.bf16.mxu0 0
    %2738 = vmatpush1.bf16.xpose.msra.mxu0 0
    %2739 = vmatprep.subr.bf16.mxu0 0
    %2740 = vmatpush1.bf16.xpose.msra.mxu0 0
    %2741 = vmatprep.subr.bf16.mxu0 0
    %2742 = vmatpush1.bf16.xpose.msra.mxu0 0
    %2743 = vmatprep.subr.bf16.mxu0 0
    %2744 = vmatpush1.bf16.xpose.msra.mxu0 0
    %2745 = vmatprep.subr.bf16.mxu0 0
    %2746 = vmatpush1.bf16.xpose.msra.mxu0 0
    %2747 = vmatprep.subr.bf16.mxu0 0
    %2748 = vmatpush1.bf16.xpose.msra.mxu0 0
    %2749 = vmatprep.mubr.bf16.mxu0 0
    %2750 = vmatmul.mubr.bf16.gmra.mrb[0].mxu0 %v2712
    %v2751 = vpop.f32.mrb[0].mxu0
    %v2752 = vadd.f32 0.0, %v2751
    %v2753 = vpop.f32.mrb[0].mxu0
    %v2754 = vpop.f32.mrb[0].mxu0
    %v2755 = vpop.f32.mrb[0].mxu0
    %2756 = vdwg.mxu0
    %v2758 = vsel %vm181, %v2708, 0
    %v2761 = vsel %vm181, %v2710, 0
    %2763 = vmatprep.subr.bf16.mxu0 0
    %2764 = vmatpush1.bf16.xpose.msra.mxu0 %v2761
    %2765 = vmatprep.subr.bf16.mxu0 0
    %2766 = vmatpush1.bf16.xpose.msra.mxu0 0
    %2767 = vmatprep.subr.bf16.mxu0 0
    %2768 = vmatpush1.bf16.xpose.msra.mxu0 0
    %2769 = vmatprep.subr.bf16.mxu0 0
    %2770 = vmatpush1.bf16.xpose.msra.mxu0 0
    %2771 = vmatprep.subr.bf16.mxu0 0
    %2772 = vmatpush1.bf16.xpose.msra.mxu0 0
    %2773 = vmatprep.subr.bf16.mxu0 0
    %2774 = vmatpush1.bf16.xpose.msra.mxu0 0
    %2775 = vmatprep.subr.bf16.mxu0 0
    %2776 = vmatpush1.bf16.xpose.msra.mxu0 0
    %2777 = vmatprep.subr.bf16.mxu0 0
    %2778 = vmatpush1.bf16.xpose.msra.mxu0 0
    %2779 = vmatprep.subr.bf16.mxu0 0
    %2780 = vmatpush1.bf16.xpose.msra.mxu0 0
    %2781 = vmatprep.subr.bf16.mxu0 0
    %2782 = vmatpush1.bf16.xpose.msra.mxu0 0
    %2783 = vmatprep.subr.bf16.mxu0 0
    %2784 = vmatpush1.bf16.xpose.msra.mxu0 0
    %2785 = vmatprep.subr.bf16.mxu0 0
    %2786 = vmatpush1.bf16.xpose.msra.mxu0 0
    %2787 = vmatprep.subr.bf16.mxu0 0
    %2788 = vmatpush1.bf16.xpose.msra.mxu0 0
    %2789 = vmatprep.subr.bf16.mxu0 0
    %2790 = vmatpush1.bf16.xpose.msra.mxu0 0
    %2791 = vmatprep.subr.bf16.mxu0 0
    %2792 = vmatpush1.bf16.xpose.msra.mxu0 0
    %2793 = vmatprep.subr.bf16.mxu0 0
    %2794 = vmatpush1.bf16.xpose.msra.mxu0 0
    %2795 = vmatprep.mubr.bf16.mxu0 0
    %2796 = vmatmul.mubr.bf16.gmra.mrb[0].mxu0 %v2758
    %v2797 = vpop.f32.mrb[0].mxu0
    %v2798 = vadd.f32 0.0, %v2797
    %v2799 = vpop.f32.mrb[0].mxu0
    %v2800 = vpop.f32.mrb[0].mxu0
    %v2801 = vpop.f32.mrb[0].mxu0
    %2802 = vdwg.mxu0
    %v2803 = vmul.f32 %v2752, 0.25
    %v2804 = vmul.f32 %v2798, 0.25
    %v2807 = vlaneseq
    %v2808 = vshrl.u32 %v2807, 7
    %v2809 = vsub.s32 0, %v2808
    %v2810 = vrot.slane %v69, %v2809
    %v2811 = vlaneseq
    %v2812 = vshrl.u32 %v2811, 7
    %v2813 = vsub.s32 0, %v2812
    %v2814 = vrot.slane %v70, %v2813
    %v2817 = vadd.f32 %v2803, %v2810
    %v2818 = vadd.f32 %v2804, %v2814
    %vm2819 = vcmask 31744
    %v2820 = vsel %vm2819, %v2817, -inf
    %2821 = vmax.xlane.f32.xlu0 %v2820
    %v2822 = vpop.xlane.xlu0 %2821
    %v2823 = vsel %vm2819, %v2818, -inf
    %2824 = vmax.xlane.f32.xlu0 %v2823
    %v2825 = vpop.xlane.xlu0 %2824
    %v2826 = vsub.f32 %v2817, %v2822
    %v2827 = vsub.f32 %v2818, %v2825
    %v2828 = vmul.f32 %v2826, 1.442695
    %v2829 = vpow.pop %v2828
    %v2830 = vmul.f32 %v2827, 1.442695
    %v2831 = vpow.pop %v2830
    %v2832 = vsel %vm2819, %v2829, 0.0
    %2833 = vadd.xlane.f32.xlu0 %v2832
    %v2834 = vpop.xlane.xlu0 %2833
    %v2835 = vsel %vm2819, %v2831, 0.0
    %2836 = vadd.xlane.f32.xlu0 %v2835
    %v2837 = vpop.xlane.xlu0 %2836
    %v2838 = vrcp.pop %v2834
    %v2839 = vrcp.pop %v2837
    %v2840 = vmul.f32 %v2829, %v2838
    %v2841 = vmul.f32 %v2831, %v2839
    %v2842 = vpack.c.bf16 %v2840, %v2840
    %v2843 = vpack.c.bf16 %v2841, %v2841
    %v2844 = vpack.c.bf16 %v2703, %v2703
    %v2845 = vpack.c.bf16 %v2705, %v2705
    %2847 = vrot.lane.b32.xlu0 %v2844, 96
    %v2848 = vpop.permute.xlu0 %2847
    %v2850 = vsel %vm2819, %v2842, 0
    %vm2852 = vcmask 1041408
    %v2854 = vsel %vm2852, %v2848, 0
    %2856 = vmatprep.subr.bf16.mxu0 0
    %2857 = vmatpush1.bf16.msra.mxu0 %v2854
    %2858 = vmatprep.subr.bf16.mxu0 0
    %2859 = vmatpush1.bf16.msra.mxu0 0
    %2860 = vmatprep.subr.bf16.mxu0 0
    %2861 = vmatpush1.bf16.msra.mxu0 0
    %2862 = vmatprep.subr.bf16.mxu0 0
    %2863 = vmatpush1.bf16.msra.mxu0 0
    %2864 = vmatprep.subr.bf16.mxu0 0
    %2865 = vmatpush1.bf16.msra.mxu0 0
    %2866 = vmatprep.subr.bf16.mxu0 0
    %2867 = vmatpush1.bf16.msra.mxu0 0
    %2868 = vmatprep.subr.bf16.mxu0 0
    %2869 = vmatpush1.bf16.msra.mxu0 0
    %2870 = vmatprep.subr.bf16.mxu0 0
    %2871 = vmatpush1.bf16.msra.mxu0 0
    %2872 = vmatprep.subr.bf16.mxu0 0
    %2873 = vmatpush1.bf16.msra.mxu0 0
    %2874 = vmatprep.subr.bf16.mxu0 0
    %2875 = vmatpush1.bf16.msra.mxu0 0
    %2876 = vmatprep.subr.bf16.mxu0 0
    %2877 = vmatpush1.bf16.msra.mxu0 0
    %2878 = vmatprep.subr.bf16.mxu0 0
    %2879 = vmatpush1.bf16.msra.mxu0 0
    %2880 = vmatprep.subr.bf16.mxu0 0
    %2881 = vmatpush1.bf16.msra.mxu0 0
    %2882 = vmatprep.subr.bf16.mxu0 0
    %2883 = vmatpush1.bf16.msra.mxu0 0
    %2884 = vmatprep.subr.bf16.mxu0 0
    %2885 = vmatpush1.bf16.msra.mxu0 0
    %2886 = vmatprep.subr.bf16.mxu0 0
    %2887 = vmatpush1.bf16.msra.mxu0 0
    %2888 = vmatprep.mubr.bf16.mxu0 0
    %2889 = vmatmul.mubr.bf16.gmra.mrb[0].mxu0 %v2850
    %v2890 = vpop.f32.mrb[0].mxu0
    %v2891 = vadd.f32 0.0, %v2890
    %v2892 = vpop.f32.mrb[0].mxu0
    %v2893 = vpop.f32.mrb[0].mxu0
    %v2894 = vpop.f32.mrb[0].mxu0
    %2895 = vdwg.mxu0
    %2897 = vrot.lane.b32.xlu0 %v2845, 96
    %v2898 = vpop.permute.xlu0 %2897
    %v2900 = vsel %vm2819, %v2843, 0
    %v2903 = vsel %vm2852, %v2898, 0
    %2905 = vmatprep.subr.bf16.mxu0 0
    %2906 = vmatpush1.bf16.msra.mxu0 %v2903
    %2907 = vmatprep.subr.bf16.mxu0 0
    %2908 = vmatpush1.bf16.msra.mxu0 0
    %2909 = vmatprep.subr.bf16.mxu0 0
    %2910 = vmatpush1.bf16.msra.mxu0 0
    %2911 = vmatprep.subr.bf16.mxu0 0
    %2912 = vmatpush1.bf16.msra.mxu0 0
    %2913 = vmatprep.subr.bf16.mxu0 0
    %2914 = vmatpush1.bf16.msra.mxu0 0
    %2915 = vmatprep.subr.bf16.mxu0 0
    %2916 = vmatpush1.bf16.msra.mxu0 0
    %2917 = vmatprep.subr.bf16.mxu0 0
    %2918 = vmatpush1.bf16.msra.mxu0 0
    %2919 = vmatprep.subr.bf16.mxu0 0
    %2920 = vmatpush1.bf16.msra.mxu0 0
    %2921 = vmatprep.subr.bf16.mxu0 0
    %2922 = vmatpush1.bf16.msra.mxu0 0
    %2923 = vmatprep.subr.bf16.mxu0 0
    %2924 = vmatpush1.bf16.msra.mxu0 0
    %2925 = vmatprep.subr.bf16.mxu0 0
    %2926 = vmatpush1.bf16.msra.mxu0 0
    %2927 = vmatprep.subr.bf16.mxu0 0
    %2928 = vmatpush1.bf16.msra.mxu0 0
    %2929 = vmatprep.subr.bf16.mxu0 0
    %2930 = vmatpush1.bf16.msra.mxu0 0
    %2931 = vmatprep.subr.bf16.mxu0 0
    %2932 = vmatpush1.bf16.msra.mxu0 0
    %2933 = vmatprep.subr.bf16.mxu0 0
    %2934 = vmatpush1.bf16.msra.mxu0 0
    %2935 = vmatprep.subr.bf16.mxu0 0
    %2936 = vmatpush1.bf16.msra.mxu0 0
    %2937 = vmatprep.mubr.bf16.mxu0 0
    %2938 = vmatmul.mubr.bf16.gmra.mrb[0].mxu0 %v2900
    %v2939 = vpop.f32.mrb[0].mxu0
    %v2940 = vadd.f32 0.0, %v2939
    %v2941 = vpop.f32.mrb[0].mxu0
    %v2942 = vpop.f32.mrb[0].mxu0
    %v2943 = vpop.f32.mrb[0].mxu0
    %2944 = vdwg.mxu0
    %2946 = vrot.lane.b32.xlu0 %v2707, 112
    %v2947 = vpop.permute.xlu0 %2946
    %2949 = vrot.lane.b32.xlu0 %v2709, 112
    %v2950 = vpop.permute.xlu0 %2949
    %v2952 = vsel %vm181, %v2947, 0
    %v2955 = vsel %vm181, %v2950, 0
    %2957 = vmatprep.subr.bf16.mxu0 0
    %2958 = vmatpush1.bf16.xpose.msra.mxu0 %v2955
    %2959 = vmatprep.subr.bf16.mxu0 0
    %2960 = vmatpush1.bf16.xpose.msra.mxu0 0
    %2961 = vmatprep.subr.bf16.mxu0 0
    %2962 = vmatpush1.bf16.xpose.msra.mxu0 0
    %2963 = vmatprep.subr.bf16.mxu0 0
    %2964 = vmatpush1.bf16.xpose.msra.mxu0 0
    %2965 = vmatprep.subr.bf16.mxu0 0
    %2966 = vmatpush1.bf16.xpose.msra.mxu0 0
    %2967 = vmatprep.subr.bf16.mxu0 0
    %2968 = vmatpush1.bf16.xpose.msra.mxu0 0
    %2969 = vmatprep.subr.bf16.mxu0 0
    %2970 = vmatpush1.bf16.xpose.msra.mxu0 0
    %2971 = vmatprep.subr.bf16.mxu0 0
    %2972 = vmatpush1.bf16.xpose.msra.mxu0 0
    %2973 = vmatprep.subr.bf16.mxu0 0
    %2974 = vmatpush1.bf16.xpose.msra.mxu0 0
    %2975 = vmatprep.subr.bf16.mxu0 0
    %2976 = vmatpush1.bf16.xpose.msra.mxu0 0
    %2977 = vmatprep.subr.bf16.mxu0 0
    %2978 = vmatpush1.bf16.xpose.msra.mxu0 0
    %2979 = vmatprep.subr.bf16.mxu0 0
    %2980 = vmatpush1.bf16.xpose.msra.mxu0 0
    %2981 = vmatprep.subr.bf16.mxu0 0
    %2982 = vmatpush1.bf16.xpose.msra.mxu0 0
    %2983 = vmatprep.subr.bf16.mxu0 0
    %2984 = vmatpush1.bf16.xpose.msra.mxu0 0
    %2985 = vmatprep.subr.bf16.mxu0 0
    %2986 = vmatpush1.bf16.xpose.msra.mxu0 0
    %2987 = vmatprep.subr.bf16.mxu0 0
    %2988 = vmatpush1.bf16.xpose.msra.mxu0 0
    %2989 = vmatprep.mubr.bf16.mxu0 0
    %2990 = vmatmul.mubr.bf16.gmra.mrb[0].mxu0 %v2952
    %v2991 = vpop.f32.mrb[0].mxu0
    %v2992 = vadd.f32 0.0, %v2991
    %v2993 = vpop.f32.mrb[0].mxu0
    %v2994 = vpop.f32.mrb[0].mxu0
    %v2995 = vpop.f32.mrb[0].mxu0
    %2996 = vdwg.mxu0
    %2998 = vrot.lane.b32.xlu0 %v2708, 112
    %v2999 = vpop.permute.xlu0 %2998
    %3001 = vrot.lane.b32.xlu0 %v2710, 112
    %v3002 = vpop.permute.xlu0 %3001
    %v3004 = vsel %vm181, %v2999, 0
    %v3007 = vsel %vm181, %v3002, 0
    %3009 = vmatprep.subr.bf16.mxu0 0
    %3010 = vmatpush1.bf16.xpose.msra.mxu0 %v3007
    %3011 = vmatprep.subr.bf16.mxu0 0
    %3012 = vmatpush1.bf16.xpose.msra.mxu0 0
    %3013 = vmatprep.subr.bf16.mxu0 0
    %3014 = vmatpush1.bf16.xpose.msra.mxu0 0
    %3015 = vmatprep.subr.bf16.mxu0 0
    %3016 = vmatpush1.bf16.xpose.msra.mxu0 0
    %3017 = vmatprep.subr.bf16.mxu0 0
    %3018 = vmatpush1.bf16.xpose.msra.mxu0 0
    %3019 = vmatprep.subr.bf16.mxu0 0
    %3020 = vmatpush1.bf16.xpose.msra.mxu0 0
    %3021 = vmatprep.subr.bf16.mxu0 0
    %3022 = vmatpush1.bf16.xpose.msra.mxu0 0
    %3023 = vmatprep.subr.bf16.mxu0 0
    %3024 = vmatpush1.bf16.xpose.msra.mxu0 0
    %3025 = vmatprep.subr.bf16.mxu0 0
    %3026 = vmatpush1.bf16.xpose.msra.mxu0 0
    %3027 = vmatprep.subr.bf16.mxu0 0
    %3028 = vmatpush1.bf16.xpose.msra.mxu0 0
    %3029 = vmatprep.subr.bf16.mxu0 0
    %3030 = vmatpush1.bf16.xpose.msra.mxu0 0
    %3031 = vmatprep.subr.bf16.mxu0 0
    %3032 = vmatpush1.bf16.xpose.msra.mxu0 0
    %3033 = vmatprep.subr.bf16.mxu0 0
    %3034 = vmatpush1.bf16.xpose.msra.mxu0 0
    %3035 = vmatprep.subr.bf16.mxu0 0
    %3036 = vmatpush1.bf16.xpose.msra.mxu0 0
    %3037 = vmatprep.subr.bf16.mxu0 0
    %3038 = vmatpush1.bf16.xpose.msra.mxu0 0
    %3039 = vmatprep.subr.bf16.mxu0 0
    %3040 = vmatpush1.bf16.xpose.msra.mxu0 0
    %3041 = vmatprep.mubr.bf16.mxu0 0
    %3042 = vmatmul.mubr.bf16.gmra.mrb[0].mxu0 %v3004
    %v3043 = vpop.f32.mrb[0].mxu0
    %v3044 = vadd.f32 0.0, %v3043
    %v3045 = vpop.f32.mrb[0].mxu0
    %v3046 = vpop.f32.mrb[0].mxu0
    %v3047 = vpop.f32.mrb[0].mxu0
    %3048 = vdwg.mxu0
    %v3049 = vmul.f32 %v2992, 0.25
    %v3050 = vmul.f32 %v3044, 0.25
    %v3051 = vadd.f32 %v3049, %v2810
    %v3052 = vadd.f32 %v3050, %v2814
    %v3053 = vsel %vm2819, %v3051, -inf
    %3054 = vmax.xlane.f32.xlu0 %v3053
    %v3055 = vpop.xlane.xlu0 %3054
    %v3056 = vsel %vm2819, %v3052, -inf
    %3057 = vmax.xlane.f32.xlu0 %v3056
    %v3058 = vpop.xlane.xlu0 %3057
    %v3059 = vsub.f32 %v3051, %v3055
    %v3060 = vsub.f32 %v3052, %v3058
    %v3061 = vmul.f32 %v3059, 1.442695
    %v3062 = vpow.pop %v3061
    %v3063 = vmul.f32 %v3060, 1.442695
    %v3064 = vpow.pop %v3063
    %v3065 = vsel %vm2819, %v3062, 0.0
    %3066 = vadd.xlane.f32.xlu0 %v3065
    %v3067 = vpop.xlane.xlu0 %3066
    %v3068 = vsel %vm2819, %v3064, 0.0
    %3069 = vadd.xlane.f32.xlu0 %v3068
    %v3070 = vpop.xlane.xlu0 %3069
    %v3071 = vrcp.pop %v3067
    %v3072 = vrcp.pop %v3070
    %v3073 = vmul.f32 %v3062, %v3071
    %v3074 = vmul.f32 %v3064, %v3072
    %v3075 = vpack.c.bf16 %v3073, %v3073
    %v3076 = vpack.c.bf16 %v3074, %v3074
    %3077 = vrot.lane.b32.xlu0 %v2844, 80
    %v3078 = vpop.permute.xlu0 %3077
    %v3080 = vsel %vm2819, %v3075, 0
    %v3083 = vsel %vm2852, %v3078, 0
    %3085 = vmatprep.subr.bf16.mxu0 0
    %3086 = vmatpush1.bf16.msra.mxu0 %v3083
    %3087 = vmatprep.subr.bf16.mxu0 0
    %3088 = vmatpush1.bf16.msra.mxu0 0
    %3089 = vmatprep.subr.bf16.mxu0 0
    %3090 = vmatpush1.bf16.msra.mxu0 0
    %3091 = vmatprep.subr.bf16.mxu0 0
    %3092 = vmatpush1.bf16.msra.mxu0 0
    %3093 = vmatprep.subr.bf16.mxu0 0
    %3094 = vmatpush1.bf16.msra.mxu0 0
    %3095 = vmatprep.subr.bf16.mxu0 0
    %3096 = vmatpush1.bf16.msra.mxu0 0
    %3097 = vmatprep.subr.bf16.mxu0 0
    %3098 = vmatpush1.bf16.msra.mxu0 0
    %3099 = vmatprep.subr.bf16.mxu0 0
    %3100 = vmatpush1.bf16.msra.mxu0 0
    %3101 = vmatprep.subr.bf16.mxu0 0
    %3102 = vmatpush1.bf16.msra.mxu0 0
    %3103 = vmatprep.subr.bf16.mxu0 0
    %3104 = vmatpush1.bf16.msra.mxu0 0
    %3105 = vmatprep.subr.bf16.mxu0 0
    %3106 = vmatpush1.bf16.msra.mxu0 0
    %3107 = vmatprep.subr.bf16.mxu0 0
    %3108 = vmatpush1.bf16.msra.mxu0 0
    %3109 = vmatprep.subr.bf16.mxu0 0
    %3110 = vmatpush1.bf16.msra.mxu0 0
    %3111 = vmatprep.subr.bf16.mxu0 0
    %3112 = vmatpush1.bf16.msra.mxu0 0
    %3113 = vmatprep.subr.bf16.mxu0 0
    %3114 = vmatpush1.bf16.msra.mxu0 0
    %3115 = vmatprep.subr.bf16.mxu0 0
    %3116 = vmatpush1.bf16.msra.mxu0 0
    %3117 = vmatprep.mubr.bf16.mxu0 0
    %3118 = vmatmul.mubr.bf16.gmra.mrb[0].mxu0 %v3080
    %v3119 = vpop.f32.mrb[0].mxu0
    %v3120 = vadd.f32 0.0, %v3119
    %v3121 = vpop.f32.mrb[0].mxu0
    %v3122 = vpop.f32.mrb[0].mxu0
    %v3123 = vpop.f32.mrb[0].mxu0
    %3124 = vdwg.mxu0
    %3125 = vrot.lane.b32.xlu0 %v2845, 80
    %v3126 = vpop.permute.xlu0 %3125
    %v3128 = vsel %vm2819, %v3076, 0
    %v3131 = vsel %vm2852, %v3126, 0
    %3133 = vmatprep.subr.bf16.mxu0 0
    %3134 = vmatpush1.bf16.msra.mxu0 %v3131
    %3135 = vmatprep.subr.bf16.mxu0 0
    %3136 = vmatpush1.bf16.msra.mxu0 0
    %3137 = vmatprep.subr.bf16.mxu0 0
    %3138 = vmatpush1.bf16.msra.mxu0 0
    %3139 = vmatprep.subr.bf16.mxu0 0
    %3140 = vmatpush1.bf16.msra.mxu0 0
    %3141 = vmatprep.subr.bf16.mxu0 0
    %3142 = vmatpush1.bf16.msra.mxu0 0
    %3143 = vmatprep.subr.bf16.mxu0 0
    %3144 = vmatpush1.bf16.msra.mxu0 0
    %3145 = vmatprep.subr.bf16.mxu0 0
    %3146 = vmatpush1.bf16.msra.mxu0 0
    %3147 = vmatprep.subr.bf16.mxu0 0
    %3148 = vmatpush1.bf16.msra.mxu0 0
    %3149 = vmatprep.subr.bf16.mxu0 0
    %3150 = vmatpush1.bf16.msra.mxu0 0
    %3151 = vmatprep.subr.bf16.mxu0 0
    %3152 = vmatpush1.bf16.msra.mxu0 0
    %3153 = vmatprep.subr.bf16.mxu0 0
    %3154 = vmatpush1.bf16.msra.mxu0 0
    %3155 = vmatprep.subr.bf16.mxu0 0
    %3156 = vmatpush1.bf16.msra.mxu0 0
    %3157 = vmatprep.subr.bf16.mxu0 0
    %3158 = vmatpush1.bf16.msra.mxu0 0
    %3159 = vmatprep.subr.bf16.mxu0 0
    %3160 = vmatpush1.bf16.msra.mxu0 0
    %3161 = vmatprep.subr.bf16.mxu0 0
    %3162 = vmatpush1.bf16.msra.mxu0 0
    %3163 = vmatprep.subr.bf16.mxu0 0
    %3164 = vmatpush1.bf16.msra.mxu0 0
    %3165 = vmatprep.mubr.bf16.mxu0 0
    %3166 = vmatmul.mubr.bf16.gmra.mrb[0].mxu0 %v3128
    %v3167 = vpop.f32.mrb[0].mxu0
    %v3168 = vadd.f32 0.0, %v3167
    %v3169 = vpop.f32.mrb[0].mxu0
    %v3170 = vpop.f32.mrb[0].mxu0
    %v3171 = vpop.f32.mrb[0].mxu0
    %3172 = vdwg.mxu0
    %3175 = vrot.lane.b32.xlu0 %v3120, 16
    %v3176 = vpop.permute.xlu0 %3175
    %3177 = vrot.lane.b32.xlu0 %v3168, 16
    %v3178 = vpop.permute.xlu0 %3177
    %v3181 = vsel %vm181, %v2891, %v3176
    %v3182 = vsel %vm181, %v2940, %v3178
    %v3183 = vpack.c.bf16 %v3182, %v3181
    %v3184 = vlaneseq
    %v3185 = vshrl.u32 %v3184, 7
    %v3186 = vsub.s32 3, %v3185
    %v3187 = vrot.slane %v2558, %v3186
    %v3192 = vunpack.c.l.b16 %v2567
    %v3193 = vunpack.c.l.b16 %v2568
    %v3194 = vunpack.c.l.b16 %v2569
    %v3195 = vunpack.c.l.b16 %v2570
    %v3196 = vpack.c.b16 %v3193, %v3192
    %v3197 = vpack.c.b16 %v3195, %v3194
    %v3201 = vsel %vm103, %v3183, 0
    %3203 = vmatprep.subr.bf16.mxu0 0
    %3204 = vmatpush1.bf16.msra.mxu0 %v3196
    %3205 = vmatprep.subr.bf16.mxu0 0
    %3206 = vmatpush1.bf16.msra.mxu0 %v3197
    %3207 = vmatprep.subr.bf16.mxu0 0
    %3208 = vmatpush1.bf16.msra.mxu0 0
    %3209 = vmatprep.subr.bf16.mxu0 0
    %3210 = vmatpush1.bf16.msra.mxu0 0
    %3211 = vmatprep.subr.bf16.mxu0 0
    %3212 = vmatpush1.bf16.msra.mxu0 0
    %3213 = vmatprep.subr.bf16.mxu0 0
    %3214 = vmatpush1.bf16.msra.mxu0 0
    %3215 = vmatprep.subr.bf16.mxu0 0
    %3216 = vmatpush1.bf16.msra.mxu0 0
    %3217 = vmatprep.subr.bf16.mxu0 0
    %3218 = vmatpush1.bf16.msra.mxu0 0
    %3219 = vmatprep.subr.bf16.mxu0 0
    %3220 = vmatpush1.bf16.msra.mxu0 0
    %3221 = vmatprep.subr.bf16.mxu0 0
    %3222 = vmatpush1.bf16.msra.mxu0 0
    %3223 = vmatprep.subr.bf16.mxu0 0
    %3224 = vmatpush1.bf16.msra.mxu0 0
    %3225 = vmatprep.subr.bf16.mxu0 0
    %3226 = vmatpush1.bf16.msra.mxu0 0
    %3227 = vmatprep.subr.bf16.mxu0 0
    %3228 = vmatpush1.bf16.msra.mxu0 0
    %3229 = vmatprep.subr.bf16.mxu0 0
    %3230 = vmatpush1.bf16.msra.mxu0 0
    %3231 = vmatprep.subr.bf16.mxu0 0
    %3232 = vmatpush1.bf16.msra.mxu0 0
    %3233 = vmatprep.subr.bf16.mxu0 0
    %3234 = vmatpush1.bf16.msra.mxu0 0
    %3235 = vmatprep.mubr.bf16.mxu0 0
    %3236 = vmatmul.mubr.bf16.gmra.mrb[0].mxu0 %v3201
    %v3237 = vpop.f32.mrb[0].mxu0
    %v3238 = vadd.f32 %v3187, %v3237
    %v3239 = vpop.f32.mrb[0].mxu0
    %v3240 = vpop.f32.mrb[0].mxu0
    %v3241 = vadd.f32 %v3187, %v3240
    %v3242 = vpop.f32.mrb[0].mxu0
    %3243 = vdwg.mxu0
    %v3244 = vadd.f32 %v2556, %v3238
    %v3245 = vadd.f32 %v2557, %v3241
    %v3246 = vsel %vm103, %v3244, 0.0
    %3247 = vadd.xlane.f32.xlu0 %v3246
    %v3248 = vpop.xlane.xlu0 %3247
    %v3249 = vsel %vm103, %v3245, 0.0
    %3250 = vadd.xlane.f32.xlu0 %v3249
    %v3251 = vpop.xlane.xlu0 %3250
    %v3252 = vmul.f32 %v3248, %v724
    %v3253 = vmul.f32 %v3251, %v724
    %v3254 = vsub.f32 %v3244, %v3252
    %v3255 = vsub.f32 %v3245, %v3253
    %v3256 = vmul.f32 %v3254, %v3254
    %v3257 = vmul.f32 %v3255, %v3255
    %v3258 = vsel %vm103, %v3256, 0.0
    %3259 = vadd.xlane.f32.xlu0 %v3258
    %v3260 = vpop.xlane.xlu0 %3259
    %v3261 = vsel %vm103, %v3257, 0.0
    %3262 = vadd.xlane.f32.xlu0 %v3261
    %v3263 = vpop.xlane.xlu0 %3262
    %v3264 = vmul.f32 %v3260, %v724
    %v3265 = vmul.f32 %v3263, %v724
    %v3266 = vadd.f32 %v3264, 1e-12
    %v3267 = vadd.f32 %v3265, 1e-12
    %v3268 = vrsqrt.pop %v3266
    %v3269 = vrsqrt.pop %v3267
    %v3270 = vmul.f32 %v3254, %v3268
    %v3271 = vmul.f32 %v3255, %v3269
    %v3272 = vlaneseq
    %v3273 = vshrl.u32 %v3272, 7
    %v3274 = vsub.s32 4, %v3273
    %v3275 = vrot.slane %v2558, %v3274
    %v3276 = vmul.f32 %v3270, %v3275
    %v3277 = vmul.f32 %v3271, %v3275
    %v3278 = vlaneseq
    %v3279 = vshrl.u32 %v3278, 7
    %v3280 = vsub.s32 5, %v3279
    %v3281 = vrot.slane %v2558, %v3280
    %v3282 = vadd.f32 %v3276, %v3281
    %v3283 = vadd.f32 %v3277, %v3281
    %s3284 = scalar_lea.vmem %s7, 32
    %v3285 = vld [vmem:[%s3284] sm:$0xf]
    %v3286 = vld [vmem:[%s3284 + $0x4] sm:$0xf]
    %v3287 = vld [vmem:[%s3284 + $0x8] sm:$0xf]
    %v3288 = vld [vmem:[%s3284 + $0xc] sm:$0xf]
    %s3289 = scalar_lea.vmem %s8, 2
    %v3290 = vld [vmem:[%s3289] sm:$0x1]
    %s3291 = scalar_lea.vmem %s9, 128
    %v3292 = vld [vmem:[%s3291] sm:$0xf]
    %v3293 = vld [vmem:[%s3291 + $0x4] sm:$0xf]
    %v3294 = vld [vmem:[%s3291 + $0x8] sm:$0xf]
    %v3295 = vld [vmem:[%s3291 + $0xc] sm:$0xf]
    %v3296 = vld [vmem:[%s3291 + $0x10] sm:$0xf]
    %v3297 = vld [vmem:[%s3291 + $0x14] sm:$0xf]
    %v3298 = vld [vmem:[%s3291 + $0x18] sm:$0xf]
    %v3299 = vld [vmem:[%s3291 + $0x1c] sm:$0xf]
    %v3300 = vld [vmem:[%s3291 + $0x20] sm:$0xf]
    %v3301 = vld [vmem:[%s3291 + $0x24] sm:$0xf]
    %v3302 = vld [vmem:[%s3291 + $0x28] sm:$0xf]
    %v3303 = vld [vmem:[%s3291 + $0x2c] sm:$0xf]
    %v3304 = vld [vmem:[%s3291 + $0x30] sm:$0xf]
    %v3305 = vld [vmem:[%s3291 + $0x34] sm:$0xf]
    %v3306 = vld [vmem:[%s3291 + $0x38] sm:$0xf]
    %v3307 = vld [vmem:[%s3291 + $0x3c] sm:$0xf]
    %v3308 = vpack.c.bf16 %v3283, %v3282
    %v3310 = vlaneseq
    %v3311 = vshrl.u32 %v3310, 7
    %v3312 = vsub.s32 0, %v3311
    %v3313 = vrot.slane %v3290, %v3312
    %v3319 = vunpack.c.l.b16 %v3285
    %v3320 = vunpack.c.l.b16 %v3286
    %v3321 = vunpack.c.l.b16 %v3287
    %v3322 = vunpack.c.l.b16 %v3288
    %v3323 = vpack.c.b16 %v3320, %v3319
    %v3324 = vpack.c.b16 %v3322, %v3321
    %v3328 = vsel %vm103, %v3308, 0
    %3330 = vmatprep.subr.bf16.mxu0 0
    %3331 = vmatpush1.bf16.msra.mxu0 %v3323
    %3332 = vmatprep.subr.bf16.mxu0 0
    %3333 = vmatpush1.bf16.msra.mxu0 %v3324
    %3334 = vmatprep.subr.bf16.mxu0 0
    %3335 = vmatpush1.bf16.msra.mxu0 0
    %3336 = vmatprep.subr.bf16.mxu0 0
    %3337 = vmatpush1.bf16.msra.mxu0 0
    %3338 = vmatprep.subr.bf16.mxu0 0
    %3339 = vmatpush1.bf16.msra.mxu0 0
    %3340 = vmatprep.subr.bf16.mxu0 0
    %3341 = vmatpush1.bf16.msra.mxu0 0
    %3342 = vmatprep.subr.bf16.mxu0 0
    %3343 = vmatpush1.bf16.msra.mxu0 0
    %3344 = vmatprep.subr.bf16.mxu0 0
    %3345 = vmatpush1.bf16.msra.mxu0 0
    %3346 = vmatprep.subr.bf16.mxu0 0
    %3347 = vmatpush1.bf16.msra.mxu0 0
    %3348 = vmatprep.subr.bf16.mxu0 0
    %3349 = vmatpush1.bf16.msra.mxu0 0
    %3350 = vmatprep.subr.bf16.mxu0 0
    %3351 = vmatpush1.bf16.msra.mxu0 0
    %3352 = vmatprep.subr.bf16.mxu0 0
    %3353 = vmatpush1.bf16.msra.mxu0 0
    %3354 = vmatprep.subr.bf16.mxu0 0
    %3355 = vmatpush1.bf16.msra.mxu0 0
    %3356 = vmatprep.subr.bf16.mxu0 0
    %3357 = vmatpush1.bf16.msra.mxu0 0
    %3358 = vmatprep.subr.bf16.mxu0 0
    %3359 = vmatpush1.bf16.msra.mxu0 0
    %3360 = vmatprep.subr.bf16.mxu0 0
    %3361 = vmatpush1.bf16.msra.mxu0 0
    %3362 = vmatprep.mubr.bf16.mxu0 0
    %3363 = vmatmul.mubr.bf16.gmra.mrb[0].mxu0 %v3328
    %v3364 = vpop.f32.mrb[0].mxu0
    %v3365 = vadd.f32 %v3313, %v3364
    %v3366 = vpop.f32.mrb[0].mxu0
    %v3367 = vpop.f32.mrb[0].mxu0
    %v3368 = vadd.f32 %v3313, %v3367
    %v3369 = vpop.f32.mrb[0].mxu0
    %3370 = vdwg.mxu0
    %v3371 = vmul.f32 %v3365, %v3365
    %v3372 = vmul.f32 %v3368, %v3368
    %v3373 = vmul.f32 %v3365, %v3371
    %v3374 = vmul.f32 %v3368, %v3372
    %v3375 = vmul.f32 %v3373, 0.044715
    %v3376 = vmul.f32 %v3374, 0.044715
    %v3377 = vadd.f32 %v3365, %v3375
    %v3378 = vadd.f32 %v3368, %v3376
    %v3379 = vmul.f32 %v3377, 0.7978846
    %v3380 = vmul.f32 %v3378, 0.7978846
    %v3381 = vtanh.pop %v3379
    %v3382 = vtanh.pop %v3380
    %v3383 = vadd.f32 %v3381, 1.0
    %v3384 = vadd.f32 %v3382, 1.0
    %v3385 = vmul.f32 %v3383, 0.5
    %v3386 = vmul.f32 %v3384, 0.5
    %v3387 = vmul.f32 %v3365, %v3385
    %v3388 = vmul.f32 %v3368, %v3386
    %v3389 = vpack.c.bf16 %v3388, %v3387
    %v3390 = vlaneseq
    %v3391 = vshrl.u32 %v3390, 7
    %v3392 = vsub.s32 6, %v3391
    %v3393 = vrot.slane %v1896, %v3392
    %v3410 = vunpack.c.l.b16 %v3292
    %v3411 = vunpack.c.l.b16 %v3293
    %v3412 = vunpack.c.l.b16 %v3294
    %v3413 = vunpack.c.l.b16 %v3295
    %v3414 = vunpack.c.l.b16 %v3296
    %v3415 = vunpack.c.l.b16 %v3297
    %v3416 = vunpack.c.l.b16 %v3298
    %v3417 = vunpack.c.l.b16 %v3299
    %v3418 = vunpack.c.l.b16 %v3300
    %v3419 = vunpack.c.l.b16 %v3301
    %v3420 = vunpack.c.l.b16 %v3302
    %v3421 = vunpack.c.l.b16 %v3303
    %v3422 = vunpack.c.l.b16 %v3304
    %v3423 = vunpack.c.l.b16 %v3305
    %v3424 = vunpack.c.l.b16 %v3306
    %v3425 = vunpack.c.l.b16 %v3307
    %v3426 = vpack.c.b16 %v3411, %v3410
    %v3427 = vpack.c.b16 %v3413, %v3412
    %v3428 = vpack.c.b16 %v3415, %v3414
    %v3429 = vpack.c.b16 %v3417, %v3416
    %v3430 = vpack.c.b16 %v3419, %v3418
    %v3431 = vpack.c.b16 %v3421, %v3420
    %v3432 = vpack.c.b16 %v3423, %v3422
    %v3433 = vpack.c.b16 %v3425, %v3424
    %3442 = vmatprep.subr.bf16.mxu0 0
    %3443 = vmatpush1.bf16.msra.mxu0 %v3426
    %3444 = vmatprep.subr.bf16.mxu0 0
    %3445 = vmatpush1.bf16.msra.mxu0 %v3427
    %3446 = vmatprep.subr.bf16.mxu0 0
    %3447 = vmatpush1.bf16.msra.mxu0 %v3428
    %3448 = vmatprep.subr.bf16.mxu0 0
    %3449 = vmatpush1.bf16.msra.mxu0 %v3429
    %3450 = vmatprep.subr.bf16.mxu0 0
    %3451 = vmatpush1.bf16.msra.mxu0 %v3430
    %3452 = vmatprep.subr.bf16.mxu0 0
    %3453 = vmatpush1.bf16.msra.mxu0 %v3431
    %3454 = vmatprep.subr.bf16.mxu0 0
    %3455 = vmatpush1.bf16.msra.mxu0 %v3432
    %3456 = vmatprep.subr.bf16.mxu0 0
    %3457 = vmatpush1.bf16.msra.mxu0 %v3433
    %3458 = vmatprep.subr.bf16.mxu0 0
    %3459 = vmatpush1.bf16.msra.mxu0 0
    %3460 = vmatprep.subr.bf16.mxu0 0
    %3461 = vmatpush1.bf16.msra.mxu0 0
    %3462 = vmatprep.subr.bf16.mxu0 0
    %3463 = vmatpush1.bf16.msra.mxu0 0
    %3464 = vmatprep.subr.bf16.mxu0 0
    %3465 = vmatpush1.bf16.msra.mxu0 0
    %3466 = vmatprep.subr.bf16.mxu0 0
    %3467 = vmatpush1.bf16.msra.mxu0 0
    %3468 = vmatprep.subr.bf16.mxu0 0
    %3469 = vmatpush1.bf16.msra.mxu0 0
    %3470 = vmatprep.subr.bf16.mxu0 0
    %3471 = vmatpush1.bf16.msra.mxu0 0
    %3472 = vmatprep.subr.bf16.mxu0 0
    %3473 = vmatpush1.bf16.msra.mxu0 0
    %3474 = vmatprep.mubr.bf16.mxu0 0
    %3475 = vmatmul.mubr.bf16.gmra.mrb[0].mxu0 %v3389
    %v3476 = vpop.f32.mrb[0].mxu0
    %v3477 = vadd.f32 %v3393, %v3476
    %v3478 = vpop.f32.mrb[0].mxu0
    %v3479 = vpop.f32.mrb[0].mxu0
    %v3480 = vadd.f32 %v3393, %v3479
    %v3481 = vpop.f32.mrb[0].mxu0
    %3482 = vdwg.mxu0
    %v3483 = vadd.f32 %v3282, %v3477
    %v3484 = vadd.f32 %v3283, %v3480
    %v3485 = vsel %vm103, %v3483, 0.0
    %3486 = vadd.xlane.f32.xlu0 %v3485
    %v3487 = vpop.xlane.xlu0 %3486
    %v3488 = vsel %vm103, %v3484, 0.0
    %3489 = vadd.xlane.f32.xlu0 %v3488
    %v3490 = vpop.xlane.xlu0 %3489
    %v3491 = vmul.f32 %v3487, %v724
    %v3492 = vmul.f32 %v3490, %v724
    %v3493 = vsub.f32 %v3483, %v3491
    %v3494 = vsub.f32 %v3484, %v3492
    %v3495 = vmul.f32 %v3493, %v3493
    %v3496 = vmul.f32 %v3494, %v3494
    %v3497 = vsel %vm103, %v3495, 0.0
    %3498 = vadd.xlane.f32.xlu0 %v3497
    %v3499 = vpop.xlane.xlu0 %3498
    %v3500 = vsel %vm103, %v3496, 0.0
    %3501 = vadd.xlane.f32.xlu0 %v3500
    %v3502 = vpop.xlane.xlu0 %3501
    %v3503 = vmul.f32 %v3499, %v724
    %v3504 = vmul.f32 %v3502, %v724
    %v3505 = vadd.f32 %v3503, 1e-12
    %v3506 = vadd.f32 %v3504, 1e-12
    %v3507 = vrsqrt.pop %v3505
    %v3508 = vrsqrt.pop %v3506
    %v3509 = vmul.f32 %v3493, %v3507
    %v3510 = vmul.f32 %v3494, %v3508
    %v3511 = vlaneseq
    %v3512 = vshrl.u32 %v3511, 7
    %v3513 = vsub.s32 7, %v3512
    %v3514 = vrot.slane %v1896, %v3513
    %v3515 = vmul.f32 %v3509, %v3514
    %v3516 = vmul.f32 %v3510, %v3514
    %v3517 = vlaneseq
    %v3518 = vshrl.u32 %v3517, 7
    %v3519 = vsub.s32 0, %v3518
    %v3520 = vrot.slane %v1897, %v3519
    %v3521 = vadd.f32 %v3515, %v3520
    %v3522 = vadd.f32 %v3516, %v3520
    %s3523 = scalar_lea.vmem %s10, 48
    %v3524 = vld [vmem:[%s3523] sm:$0xff]
    %v3525 = vld [vmem:[%s3523 + $0x8] sm:$0x1]
    %s3526 = scalar_lea.vmem %s5, 48
    %v3527 = vld [vmem:[%s3526] sm:$0xf]
    %v3528 = vld [vmem:[%s3526 + $0x4] sm:$0xf]
    %v3529 = vld [vmem:[%s3526 + $0x8] sm:$0xf]
    %v3530 = vld [vmem:[%s3526 + $0xc] sm:$0xf]
    %s3531 = scalar_lea.vmem %s6, 48
    %v3532 = vld [vmem:[%s3531] sm:$0xf]
    %v3533 = vld [vmem:[%s3531 + $0x4] sm:$0xf]
    %v3534 = vld [vmem:[%s3531 + $0x8] sm:$0xf]
    %v3535 = vld [vmem:[%s3531 + $0xc] sm:$0xf]
    %v3536 = vpack.c.bf16 %v3522, %v3521
    %v3541 = vunpack.c.l.b16 %v3527
    %v3542 = vunpack.c.l.b16 %v3528
    %v3543 = vunpack.c.l.b16 %v3529
    %v3544 = vunpack.c.l.b16 %v3530
    %v3545 = vpack.c.b16 %v3542, %v3541
    %v3546 = vpack.c.b16 %v3544, %v3543
    %v3550 = vsel %vm103, %v3536, 0
    %3552 = vmatprep.subr.bf16.mxu0 0
    %3553 = vmatpush1.bf16.msra.mxu0 %v3545
    %3554 = vmatprep.subr.bf16.mxu0 0
    %3555 = vmatpush1.bf16.msra.mxu0 %v3546
    %3556 = vmatprep.subr.bf16.mxu0 0
    %3557 = vmatpush1.bf16.msra.mxu0 0
    %3558 = vmatprep.subr.bf16.mxu0 0
    %3559 = vmatpush1.bf16.msra.mxu0 0
    %3560 = vmatprep.subr.bf16.mxu0 0
    %3561 = vmatpush1.bf16.msra.mxu0 0
    %3562 = vmatprep.subr.bf16.mxu0 0
    %3563 = vmatpush1.bf16.msra.mxu0 0
    %3564 = vmatprep.subr.bf16.mxu0 0
    %3565 = vmatpush1.bf16.msra.mxu0 0
    %3566 = vmatprep.subr.bf16.mxu0 0
    %3567 = vmatpush1.bf16.msra.mxu0 0
    %3568 = vmatprep.subr.bf16.mxu0 0
    %3569 = vmatpush1.bf16.msra.mxu0 0
    %3570 = vmatprep.subr.bf16.mxu0 0
    %3571 = vmatpush1.bf16.msra.mxu0 0
    %3572 = vmatprep.subr.bf16.mxu0 0
    %3573 = vmatpush1.bf16.msra.mxu0 0
    %3574 = vmatprep.subr.bf16.mxu0 0
    %3575 = vmatpush1.bf16.msra.mxu0 0
    %3576 = vmatprep.subr.bf16.mxu0 0
    %3577 = vmatpush1.bf16.msra.mxu0 0
    %3578 = vmatprep.subr.bf16.mxu0 0
    %3579 = vmatpush1.bf16.msra.mxu0 0
    %3580 = vmatprep.subr.bf16.mxu0 0
    %3581 = vmatpush1.bf16.msra.mxu0 0
    %3582 = vmatprep.subr.bf16.mxu0 0
    %3583 = vmatpush1.bf16.msra.mxu0 0
    %3584 = vmatprep.mubr.bf16.mxu0 0
    %3585 = vmatmul.mubr.bf16.gmra.mrb[0].mxu0 %v3550
    %v3586 = vpop.f32.mrb[0].mxu0
    %v3587 = vadd.f32 0.0, %v3586
    %v3588 = vpop.f32.mrb[0].mxu0
    %v3589 = vpop.f32.mrb[0].mxu0
    %v3590 = vadd.f32 0.0, %v3589
    %v3591 = vpop.f32.mrb[0].mxu0
    %3592 = vdwg.mxu0
    %v3593 = vlaneseq
    %v3594 = vshrl.u32 %v3593, 7
    %v3595 = vsub.s32 0, %v3594
    %v3596 = vrot.slane %v3524, %v3595
    %v3597 = vadd.f32 %v3587, %v3596
    %v3598 = vadd.f32 %v3590, %v3596
    %v3599 = vlaneseq
    %v3600 = vshrl.u32 %v3599, 7
    %v3601 = vsub.s32 1, %v3600
    %v3602 = vrot.slane %v3524, %v3601
    %3604 = vrot.lane.b32.xlu0 %v3602, 32
    %v3605 = vpop.permute.xlu0 %3604
    %v3607 = vadd.f32 %v3587, %v3605
    %v3608 = vadd.f32 %v3590, %v3605
    %v3609 = vlaneseq
    %v3610 = vshrl.u32 %v3609, 7
    %v3611 = vsub.s32 2, %v3610
    %v3612 = vrot.slane %v3524, %v3611
    %3614 = vrot.lane.b32.xlu0 %v3612, 64
    %v3615 = vpop.permute.xlu0 %3614
    %v3617 = vadd.f32 %v3587, %v3615
    %v3618 = vadd.f32 %v3590, %v3615
    %v3619 = vpack.c.bf16 %v3597, %v3597
    %v3620 = vpack.c.bf16 %v3598, %v3598
    %v3621 = vpack.c.bf16 %v3607, %v3607
    %v3622 = vpack.c.bf16 %v3608, %v3608
    %3624 = vrot.lane.b32.xlu0 %v3621, 96
    %v3625 = vpop.permute.xlu0 %3624
    %v3627 = vsel %vm181, %v3619, 0
    %v3630 = vsel %vm181, %v3625, 0
    %3632 = vmatprep.subr.bf16.mxu0 0
    %3633 = vmatpush1.bf16.xpose.msra.mxu0 %v3630
    %3634 = vmatprep.subr.bf16.mxu0 0
    %3635 = vmatpush1.bf16.xpose.msra.mxu0 0
    %3636 = vmatprep.subr.bf16.mxu0 0
    %3637 = vmatpush1.bf16.xpose.msra.mxu0 0
    %3638 = vmatprep.subr.bf16.mxu0 0
    %3639 = vmatpush1.bf16.xpose.msra.mxu0 0
    %3640 = vmatprep.subr.bf16.mxu0 0
    %3641 = vmatpush1.bf16.xpose.msra.mxu0 0
    %3642 = vmatprep.subr.bf16.mxu0 0
    %3643 = vmatpush1.bf16.xpose.msra.mxu0 0
    %3644 = vmatprep.subr.bf16.mxu0 0
    %3645 = vmatpush1.bf16.xpose.msra.mxu0 0
    %3646 = vmatprep.subr.bf16.mxu0 0
    %3647 = vmatpush1.bf16.xpose.msra.mxu0 0
    %3648 = vmatprep.subr.bf16.mxu0 0
    %3649 = vmatpush1.bf16.xpose.msra.mxu0 0
    %3650 = vmatprep.subr.bf16.mxu0 0
    %3651 = vmatpush1.bf16.xpose.msra.mxu0 0
    %3652 = vmatprep.subr.bf16.mxu0 0
    %3653 = vmatpush1.bf16.xpose.msra.mxu0 0
    %3654 = vmatprep.subr.bf16.mxu0 0
    %3655 = vmatpush1.bf16.xpose.msra.mxu0 0
    %3656 = vmatprep.subr.bf16.mxu0 0
    %3657 = vmatpush1.bf16.xpose.msra.mxu0 0
    %3658 = vmatprep.subr.bf16.mxu0 0
    %3659 = vmatpush1.bf16.xpose.msra.mxu0 0
    %3660 = vmatprep.subr.bf16.mxu0 0
    %3661 = vmatpush1.bf16.xpose.msra.mxu0 0
    %3662 = vmatprep.subr.bf16.mxu0 0
    %3663 = vmatpush1.bf16.xpose.msra.mxu0 0
    %3664 = vmatprep.mubr.bf16.mxu0 0
    %3665 = vmatmul.mubr.bf16.gmra.mrb[0].mxu0 %v3627
    %v3666 = vpop.f32.mrb[0].mxu0
    %v3667 = vadd.f32 0.0, %v3666
    %v3668 = vpop.f32.mrb[0].mxu0
    %v3669 = vpop.f32.mrb[0].mxu0
    %v3670 = vpop.f32.mrb[0].mxu0
    %3671 = vdwg.mxu0
    %3673 = vrot.lane.b32.xlu0 %v3622, 96
    %v3674 = vpop.permute.xlu0 %3673
    %v3676 = vsel %vm181, %v3620, 0
    %v3679 = vsel %vm181, %v3674, 0
    %3681 = vmatprep.subr.bf16.mxu0 0
    %3682 = vmatpush1.bf16.xpose.msra.mxu0 %v3679
    %3683 = vmatprep.subr.bf16.mxu0 0
    %3684 = vmatpush1.bf16.xpose.msra.mxu0 0
    %3685 = vmatprep.subr.bf16.mxu0 0
    %3686 = vmatpush1.bf16.xpose.msra.mxu0 0
    %3687 = vmatprep.subr.bf16.mxu0 0
    %3688 = vmatpush1.bf16.xpose.msra.mxu0 0
    %3689 = vmatprep.subr.bf16.mxu0 0
    %3690 = vmatpush1.bf16.xpose.msra.mxu0 0
    %3691 = vmatprep.subr.bf16.mxu0 0
    %3692 = vmatpush1.bf16.xpose.msra.mxu0 0
    %3693 = vmatprep.subr.bf16.mxu0 0
    %3694 = vmatpush1.bf16.xpose.msra.mxu0 0
    %3695 = vmatprep.subr.bf16.mxu0 0
    %3696 = vmatpush1.bf16.xpose.msra.mxu0 0
    %3697 = vmatprep.subr.bf16.mxu0 0
    %3698 = vmatpush1.bf16.xpose.msra.mxu0 0
    %3699 = vmatprep.subr.bf16.mxu0 0
    %3700 = vmatpush1.bf16.xpose.msra.mxu0 0
    %3701 = vmatprep.subr.bf16.mxu0 0
    %3702 = vmatpush1.bf16.xpose.msra.mxu0 0
    %3703 = vmatprep.subr.bf16.mxu0 0
    %3704 = vmatpush1.bf16.xpose.msra.mxu0 0
    %3705 = vmatprep.subr.bf16.mxu0 0
    %3706 = vmatpush1.bf16.xpose.msra.mxu0 0
    %3707 = vmatprep.subr.bf16.mxu0 0
    %3708 = vmatpush1.bf16.xpose.msra.mxu0 0
    %3709 = vmatprep.subr.bf16.mxu0 0
    %3710 = vmatpush1.bf16.xpose.msra.mxu0 0
    %3711 = vmatprep.subr.bf16.mxu0 0
    %3712 = vmatpush1.bf16.xpose.msra.mxu0 0
    %3713 = vmatprep.mubr.bf16.mxu0 0
    %3714 = vmatmul.mubr.bf16.gmra.mrb[0].mxu0 %v3676
    %v3715 = vpop.f32.mrb[0].mxu0
    %v3716 = vadd.f32 0.0, %v3715
    %v3717 = vpop.f32.mrb[0].mxu0
    %v3718 = vpop.f32.mrb[0].mxu0
    %v3719 = vpop.f32.mrb[0].mxu0
    %3720 = vdwg.mxu0
    %v3721 = vmul.f32 %v3667, 0.25
    %v3722 = vmul.f32 %v3716, 0.25
    %v3723 = vadd.f32 %v3721, %v284
    %v3724 = vadd.f32 %v3722, %v288
    %v3725 = vsel %vm293, %v3723, -inf
    %3726 = vmax.xlane.f32.xlu0 %v3725
    %v3727 = vpop.xlane.xlu0 %3726
    %v3728 = vsel %vm293, %v3724, -inf
    %3729 = vmax.xlane.f32.xlu0 %v3728
    %v3730 = vpop.xlane.xlu0 %3729
    %v3731 = vsub.f32 %v3723, %v3727
    %v3732 = vsub.f32 %v3724, %v3730
    %v3733 = vmul.f32 %v3731, 1.442695
    %v3734 = vpow.pop %v3733
    %v3735 = vmul.f32 %v3732, 1.442695
    %v3736 = vpow.pop %v3735
    %v3737 = vsel %vm293, %v3734, 0.0
    %3738 = vadd.xlane.f32.xlu0 %v3737
    %v3739 = vpop.xlane.xlu0 %3738
    %v3740 = vsel %vm293, %v3736, 0.0
    %3741 = vadd.xlane.f32.xlu0 %v3740
    %v3742 = vpop.xlane.xlu0 %3741
    %v3743 = vrcp.pop %v3739
    %v3744 = vrcp.pop %v3742
    %v3745 = vmul.f32 %v3734, %v3743
    %v3746 = vmul.f32 %v3736, %v3744
    %v3747 = vpack.c.bf16 %v3745, %v3745
    %v3748 = vpack.c.bf16 %v3746, %v3746
    %v3749 = vpack.c.bf16 %v3617, %v3617
    %v3750 = vpack.c.bf16 %v3618, %v3618
    %3752 = vrot.lane.b32.xlu0 %v3749, 64
    %v3753 = vpop.permute.xlu0 %3752
    %v3755 = vsel %vm293, %v3747, 0
    %v3758 = vsel %vm326, %v3753, 0
    %3760 = vmatprep.subr.bf16.mxu0 0
    %3761 = vmatpush1.bf16.msra.mxu0 %v3758
    %3762 = vmatprep.subr.bf16.mxu0 0
    %3763 = vmatpush1.bf16.msra.mxu0 0
    %3764 = vmatprep.subr.bf16.mxu0 0
    %3765 = vmatpush1.bf16.msra.mxu0 0
    %3766 = vmatprep.subr.bf16.mxu0 0
    %3767 = vmatpush1.bf16.msra.mxu0 0
    %3768 = vmatprep.subr.bf16.mxu0 0
    %3769 = vmatpush1.bf16.msra.mxu0 0
    %3770 = vmatprep.subr.bf16.mxu0 0
    %3771 = vmatpush1.bf16.msra.mxu0 0
    %3772 = vmatprep.subr.bf16.mxu0 0
    %3773 = vmatpush1.bf16.msra.mxu0 0
    %3774 = vmatprep.subr.bf16.mxu0 0
    %3775 = vmatpush1.bf16.msra.mxu0 0
    %3776 = vmatprep.subr.bf16.mxu0 0
    %3777 = vmatpush1.bf16.msra.mxu0 0
    %3778 = vmatprep.subr.bf16.mxu0 0
    %3779 = vmatpush1.bf16.msra.mxu0 0
    %3780 = vmatprep.subr.bf16.mxu0 0
    %3781 = vmatpush1.bf16.msra.mxu0 0
    %3782 = vmatprep.subr.bf16.mxu0 0
    %3783 = vmatpush1.bf16.msra.mxu0 0
    %3784 = vmatprep.subr.bf16.mxu0 0
    %3785 = vmatpush1.bf16.msra.mxu0 0
    %3786 = vmatprep.subr.bf16.mxu0 0
    %3787 = vmatpush1.bf16.msra.mxu0 0
    %3788 = vmatprep.subr.bf16.mxu0 0
    %3789 = vmatpush1.bf16.msra.mxu0 0
    %3790 = vmatprep.subr.bf16.mxu0 0
    %3791 = vmatpush1.bf16.msra.mxu0 0
    %3792 = vmatprep.mubr.bf16.mxu0 0
    %3793 = vmatmul.mubr.bf16.gmra.mrb[0].mxu0 %v3755
    %v3794 = vpop.f32.mrb[0].mxu0
    %v3795 = vadd.f32 0.0, %v3794
    %v3796 = vpop.f32.mrb[0].mxu0
    %v3797 = vpop.f32.mrb[0].mxu0
    %v3798 = vpop.f32.mrb[0].mxu0
    %3799 = vdwg.mxu0
    %3801 = vrot.lane.b32.xlu0 %v3750, 64
    %v3802 = vpop.permute.xlu0 %3801
    %v3804 = vsel %vm293, %v3748, 0
    %v3807 = vsel %vm326, %v3802, 0
    %3809 = vmatprep.subr.bf16.mxu0 0
    %3810 = vmatpush1.bf16.msra.mxu0 %v3807
    %3811 = vmatprep.subr.bf16.mxu0 0
    %3812 = vmatpush1.bf16.msra.mxu0 0
    %3813 = vmatprep.subr.bf16.mxu0 0
    %3814 = vmatpush1.bf16.msra.mxu0 0
    %3815 = vmatprep.subr.bf16.mxu0 0
    %3816 = vmatpush1.bf16.msra.mxu0 0
    %3817 = vmatprep.subr.bf16.mxu0 0
    %3818 = vmatpush1.bf16.msra.mxu0 0
    %3819 = vmatprep.subr.bf16.mxu0 0
    %3820 = vmatpush1.bf16.msra.mxu0 0
    %3821 = vmatprep.subr.bf16.mxu0 0
    %3822 = vmatpush1.bf16.msra.mxu0 0
    %3823 = vmatprep.subr.bf16.mxu0 0
    %3824 = vmatpush1.bf16.msra.mxu0 0
    %3825 = vmatprep.subr.bf16.mxu0 0
    %3826 = vmatpush1.bf16.msra.mxu0 0
    %3827 = vmatprep.subr.bf16.mxu0 0
    %3828 = vmatpush1.bf16.msra.mxu0 0
    %3829 = vmatprep.subr.bf16.mxu0 0
    %3830 = vmatpush1.bf16.msra.mxu0 0
    %3831 = vmatprep.subr.bf16.mxu0 0
    %3832 = vmatpush1.bf16.msra.mxu0 0
    %3833 = vmatprep.subr.bf16.mxu0 0
    %3834 = vmatpush1.bf16.msra.mxu0 0
    %3835 = vmatprep.subr.bf16.mxu0 0
    %3836 = vmatpush1.bf16.msra.mxu0 0
    %3837 = vmatprep.subr.bf16.mxu0 0
    %3838 = vmatpush1.bf16.msra.mxu0 0
    %3839 = vmatprep.subr.bf16.mxu0 0
    %3840 = vmatpush1.bf16.msra.mxu0 0
    %3841 = vmatprep.mubr.bf16.mxu0 0
    %3842 = vmatmul.mubr.bf16.gmra.mrb[0].mxu0 %v3804
    %v3843 = vpop.f32.mrb[0].mxu0
    %v3844 = vadd.f32 0.0, %v3843
    %v3845 = vpop.f32.mrb[0].mxu0
    %v3846 = vpop.f32.mrb[0].mxu0
    %v3847 = vpop.f32.mrb[0].mxu0
    %3848 = vdwg.mxu0
    %3850 = vrot.lane.b32.xlu0 %v3619, 112
    %v3851 = vpop.permute.xlu0 %3850
    %3852 = vrot.lane.b32.xlu0 %v3621, 80
    %v3853 = vpop.permute.xlu0 %3852
    %v3855 = vsel %vm181, %v3851, 0
    %v3858 = vsel %vm181, %v3853, 0
    %3860 = vmatprep.subr.bf16.mxu0 0
    %3861 = vmatpush1.bf16.xpose.msra.mxu0 %v3858
    %3862 = vmatprep.subr.bf16.mxu0 0
    %3863 = vmatpush1.bf16.xpose.msra.mxu0 0
    %3864 = vmatprep.subr.bf16.mxu0 0
    %3865 = vmatpush1.bf16.xpose.msra.mxu0 0
    %3866 = vmatprep.subr.bf16.mxu0 0
    %3867 = vmatpush1.bf16.xpose.msra.mxu0 0
    %3868 = vmatprep.subr.bf16.mxu0 0
    %3869 = vmatpush1.bf16.xpose.msra.mxu0 0
    %3870 = vmatprep.subr.bf16.mxu0 0
    %3871 = vmatpush1.bf16.xpose.msra.mxu0 0
    %3872 = vmatprep.subr.bf16.mxu0 0
    %3873 = vmatpush1.bf16.xpose.msra.mxu0 0
    %3874 = vmatprep.subr.bf16.mxu0 0
    %3875 = vmatpush1.bf16.xpose.msra.mxu0 0
    %3876 = vmatprep.subr.bf16.mxu0 0
    %3877 = vmatpush1.bf16.xpose.msra.mxu0 0
    %3878 = vmatprep.subr.bf16.mxu0 0
    %3879 = vmatpush1.bf16.xpose.msra.mxu0 0
    %3880 = vmatprep.subr.bf16.mxu0 0
    %3881 = vmatpush1.bf16.xpose.msra.mxu0 0
    %3882 = vmatprep.subr.bf16.mxu0 0
    %3883 = vmatpush1.bf16.xpose.msra.mxu0 0
    %3884 = vmatprep.subr.bf16.mxu0 0
    %3885 = vmatpush1.bf16.xpose.msra.mxu0 0
    %3886 = vmatprep.subr.bf16.mxu0 0
    %3887 = vmatpush1.bf16.xpose.msra.mxu0 0
    %3888 = vmatprep.subr.bf16.mxu0 0
    %3889 = vmatpush1.bf16.xpose.msra.mxu0 0
    %3890 = vmatprep.subr.bf16.mxu0 0
    %3891 = vmatpush1.bf16.xpose.msra.mxu0 0
    %3892 = vmatprep.mubr.bf16.mxu0 0
    %3893 = vmatmul.mubr.bf16.gmra.mrb[0].mxu0 %v3855
    %v3894 = vpop.f32.mrb[0].mxu0
    %v3895 = vadd.f32 0.0, %v3894
    %v3896 = vpop.f32.mrb[0].mxu0
    %v3897 = vpop.f32.mrb[0].mxu0
    %v3898 = vpop.f32.mrb[0].mxu0
    %3899 = vdwg.mxu0
    %3901 = vrot.lane.b32.xlu0 %v3620, 112
    %v3902 = vpop.permute.xlu0 %3901
    %3903 = vrot.lane.b32.xlu0 %v3622, 80
    %v3904 = vpop.permute.xlu0 %3903
    %v3906 = vsel %vm181, %v3902, 0
    %v3909 = vsel %vm181, %v3904, 0
    %3911 = vmatprep.subr.bf16.mxu0 0
    %3912 = vmatpush1.bf16.xpose.msra.mxu0 %v3909
    %3913 = vmatprep.subr.bf16.mxu0 0
    %3914 = vmatpush1.bf16.xpose.msra.mxu0 0
    %3915 = vmatprep.subr.bf16.mxu0 0
    %3916 = vmatpush1.bf16.xpose.msra.mxu0 0
    %3917 = vmatprep.subr.bf16.mxu0 0
    %3918 = vmatpush1.bf16.xpose.msra.mxu0 0
    %3919 = vmatprep.subr.bf16.mxu0 0
    %3920 = vmatpush1.bf16.xpose.msra.mxu0 0
    %3921 = vmatprep.subr.bf16.mxu0 0
    %3922 = vmatpush1.bf16.xpose.msra.mxu0 0
    %3923 = vmatprep.subr.bf16.mxu0 0
    %3924 = vmatpush1.bf16.xpose.msra.mxu0 0
    %3925 = vmatprep.subr.bf16.mxu0 0
    %3926 = vmatpush1.bf16.xpose.msra.mxu0 0
    %3927 = vmatprep.subr.bf16.mxu0 0
    %3928 = vmatpush1.bf16.xpose.msra.mxu0 0
    %3929 = vmatprep.subr.bf16.mxu0 0
    %3930 = vmatpush1.bf16.xpose.msra.mxu0 0
    %3931 = vmatprep.subr.bf16.mxu0 0
    %3932 = vmatpush1.bf16.xpose.msra.mxu0 0
    %3933 = vmatprep.subr.bf16.mxu0 0
    %3934 = vmatpush1.bf16.xpose.msra.mxu0 0
    %3935 = vmatprep.subr.bf16.mxu0 0
    %3936 = vmatpush1.bf16.xpose.msra.mxu0 0
    %3937 = vmatprep.subr.bf16.mxu0 0
    %3938 = vmatpush1.bf16.xpose.msra.mxu0 0
    %3939 = vmatprep.subr.bf16.mxu0 0
    %3940 = vmatpush1.bf16.xpose.msra.mxu0 0
    %3941 = vmatprep.subr.bf16.mxu0 0
    %3942 = vmatpush1.bf16.xpose.msra.mxu0 0
    %3943 = vmatprep.mubr.bf16.mxu0 0
    %3944 = vmatmul.mubr.bf16.gmra.mrb[0].mxu0 %v3906
    %v3945 = vpop.f32.mrb[0].mxu0
    %v3946 = vadd.f32 0.0, %v3945
    %v3947 = vpop.f32.mrb[0].mxu0
    %v3948 = vpop.f32.mrb[0].mxu0
    %v3949 = vpop.f32.mrb[0].mxu0
    %3950 = vdwg.mxu0
    %v3951 = vmul.f32 %v3895, 0.25
    %v3952 = vmul.f32 %v3946, 0.25
    %v3953 = vadd.f32 %v3951, %v284
    %v3954 = vadd.f32 %v3952, %v288
    %v3955 = vsel %vm293, %v3953, -inf
    %3956 = vmax.xlane.f32.xlu0 %v3955
    %v3957 = vpop.xlane.xlu0 %3956
    %v3958 = vsel %vm293, %v3954, -inf
    %3959 = vmax.xlane.f32.xlu0 %v3958
    %v3960 = vpop.xlane.xlu0 %3959
    %v3961 = vsub.f32 %v3953, %v3957
    %v3962 = vsub.f32 %v3954, %v3960
    %v3963 = vmul.f32 %v3961, 1.442695
    %v3964 = vpow.pop %v3963
    %v3965 = vmul.f32 %v3962, 1.442695
    %v3966 = vpow.pop %v3965
    %v3967 = vsel %vm293, %v3964, 0.0
    %3968 = vadd.xlane.f32.xlu0 %v3967
    %v3969 = vpop.xlane.xlu0 %3968
    %v3970 = vsel %vm293, %v3966, 0.0
    %3971 = vadd.xlane.f32.xlu0 %v3970
    %v3972 = vpop.xlane.xlu0 %3971
    %v3973 = vrcp.pop %v3969
    %v3974 = vrcp.pop %v3972
    %v3975 = vmul.f32 %v3964, %v3973
    %v3976 = vmul.f32 %v3966, %v3974
    %v3977 = vpack.c.bf16 %v3975, %v3975
    %v3978 = vpack.c.bf16 %v3976, %v3976
    %3979 = vrot.lane.b32.xlu0 %v3749, 48
    %v3980 = vpop.permute.xlu0 %3979
    %v3982 = vsel %vm293, %v3977, 0
    %v3985 = vsel %vm326, %v3980, 0
    %3987 = vmatprep.subr.bf16.mxu0 0
    %3988 = vmatpush1.bf16.msra.mxu0 %v3985
    %3989 = vmatprep.subr.bf16.mxu0 0
    %3990 = vmatpush1.bf16.msra.mxu0 0
    %3991 = vmatprep.subr.bf16.mxu0 0
    %3992 = vmatpush1.bf16.msra.mxu0 0
    %3993 = vmatprep.subr.bf16.mxu0 0
    %3994 = vmatpush1.bf16.msra.mxu0 0
    %3995 = vmatprep.subr.bf16.mxu0 0
    %3996 = vmatpush1.bf16.msra.mxu0 0
    %3997 = vmatprep.subr.bf16.mxu0 0
    %3998 = vmatpush1.bf16.msra.mxu0 0
    %3999 = vmatprep.subr.bf16.mxu0 0
    %4000 = vmatpush1.bf16.msra.mxu0 0
    %4001 = vmatprep.subr.bf16.mxu0 0
    %4002 = vmatpush1.bf16.msra.mxu0 0
    %4003 = vmatprep.subr.bf16.mxu0 0
    %4004 = vmatpush1.bf16.msra.mxu0 0
    %4005 = vmatprep.subr.bf16.mxu0 0
    %4006 = vmatpush1.bf16.msra.mxu0 0
    %4007 = vmatprep.subr.bf16.mxu0 0
    %4008 = vmatpush1.bf16.msra.mxu0 0
    %4009 = vmatprep.subr.bf16.mxu0 0
    %4010 = vmatpush1.bf16.msra.mxu0 0
    %4011 = vmatprep.subr.bf16.mxu0 0
    %4012 = vmatpush1.bf16.msra.mxu0 0
    %4013 = vmatprep.subr.bf16.mxu0 0
    %4014 = vmatpush1.bf16.msra.mxu0 0
    %4015 = vmatprep.subr.bf16.mxu0 0
    %4016 = vmatpush1.bf16.msra.mxu0 0
    %4017 = vmatprep.subr.bf16.mxu0 0
    %4018 = vmatpush1.bf16.msra.mxu0 0
    %4019 = vmatprep.mubr.bf16.mxu0 0
    %4020 = vmatmul.mubr.bf16.gmra.mrb[0].mxu0 %v3982
    %v4021 = vpop.f32.mrb[0].mxu0
    %v4022 = vadd.f32 0.0, %v4021
    %v4023 = vpop.f32.mrb[0].mxu0
    %v4024 = vpop.f32.mrb[0].mxu0
    %v4025 = vpop.f32.mrb[0].mxu0
    %4026 = vdwg.mxu0
    %4027 = vrot.lane.b32.xlu0 %v3750, 48
    %v4028 = vpop.permute.xlu0 %4027
    %v4030 = vsel %vm293, %v3978, 0
    %v4033 = vsel %vm326, %v4028, 0
    %4035 = vmatprep.subr.bf16.mxu0 0
    %4036 = vmatpush1.bf16.msra.mxu0 %v4033
    %4037 = vmatprep.subr.bf16.mxu0 0
    %4038 = vmatpush1.bf16.msra.mxu0 0
    %4039 = vmatprep.subr.bf16.mxu0 0
    %4040 = vmatpush1.bf16.msra.mxu0 0
    %4041 = vmatprep.subr.bf16.mxu0 0
    %4042 = vmatpush1.bf16.msra.mxu0 0
    %4043 = vmatprep.subr.bf16.mxu0 0
    %4044 = vmatpush1.bf16.msra.mxu0 0
    %4045 = vmatprep.subr.bf16.mxu0 0
    %4046 = vmatpush1.bf16.msra.mxu0 0
    %4047 = vmatprep.subr.bf16.mxu0 0
    %4048 = vmatpush1.bf16.msra.mxu0 0
    %4049 = vmatprep.subr.bf16.mxu0 0
    %4050 = vmatpush1.bf16.msra.mxu0 0
    %4051 = vmatprep.subr.bf16.mxu0 0
    %4052 = vmatpush1.bf16.msra.mxu0 0
    %4053 = vmatprep.subr.bf16.mxu0 0
    %4054 = vmatpush1.bf16.msra.mxu0 0
    %4055 = vmatprep.subr.bf16.mxu0 0
    %4056 = vmatpush1.bf16.msra.mxu0 0
    %4057 = vmatprep.subr.bf16.mxu0 0
    %4058 = vmatpush1.bf16.msra.mxu0 0
    %4059 = vmatprep.subr.bf16.mxu0 0
    %4060 = vmatpush1.bf16.msra.mxu0 0
    %4061 = vmatprep.subr.bf16.mxu0 0
    %4062 = vmatpush1.bf16.msra.mxu0 0
    %4063 = vmatprep.subr.bf16.mxu0 0
    %4064 = vmatpush1.bf16.msra.mxu0 0
    %4065 = vmatprep.subr.bf16.mxu0 0
    %4066 = vmatpush1.bf16.msra.mxu0 0
    %4067 = vmatprep.mubr.bf16.mxu0 0
    %4068 = vmatmul.mubr.bf16.gmra.mrb[0].mxu0 %v4030
    %v4069 = vpop.f32.mrb[0].mxu0
    %v4070 = vadd.f32 0.0, %v4069
    %v4071 = vpop.f32.mrb[0].mxu0
    %v4072 = vpop.f32.mrb[0].mxu0
    %v4073 = vpop.f32.mrb[0].mxu0
    %4074 = vdwg.mxu0
    %4077 = vrot.lane.b32.xlu0 %v4022, 16
    %v4078 = vpop.permute.xlu0 %4077
    %4079 = vrot.lane.b32.xlu0 %v4070, 16
    %v4080 = vpop.permute.xlu0 %4079
    %v4083 = vsel %vm181, %v3795, %v4078
    %v4084 = vsel %vm181, %v3844, %v4080
    %v4085 = vpack.c.bf16 %v4084, %v4083
    %v4086 = vlaneseq
    %v4087 = vshrl.u32 %v4086, 7
    %v4088 = vsub.s32 3, %v4087
    %v4089 = vrot.slane %v3524, %v4088
    %v4094 = vunpack.c.l.b16 %v3532
    %v4095 = vunpack.c.l.b16 %v3533
    %v4096 = vunpack.c.l.b16 %v3534
    %v4097 = vunpack.c.l.b16 %v3535
    %v4098 = vpack.c.b16 %v4095, %v4094
    %v4099 = vpack.c.b16 %v4097, %v4096
    %v4103 = vsel %vm103, %v4085, 0
    %4105 = vmatprep.subr.bf16.mxu0 0
    %4106 = vmatpush1.bf16.msra.mxu0 %v4098
    %4107 = vmatprep.subr.bf16.mxu0 0
    %4108 = vmatpush1.bf16.msra.mxu0 %v4099
    %4109 = vmatprep.subr.bf16.mxu0 0
    %4110 = vmatpush1.bf16.msra.mxu0 0
    %4111 = vmatprep.subr.bf16.mxu0 0
    %4112 = vmatpush1.bf16.msra.mxu0 0
    %4113 = vmatprep.subr.bf16.mxu0 0
    %4114 = vmatpush1.bf16.msra.mxu0 0
    %4115 = vmatprep.subr.bf16.mxu0 0
    %4116 = vmatpush1.bf16.msra.mxu0 0
    %4117 = vmatprep.subr.bf16.mxu0 0
    %4118 = vmatpush1.bf16.msra.mxu0 0
    %4119 = vmatprep.subr.bf16.mxu0 0
    %4120 = vmatpush1.bf16.msra.mxu0 0
    %4121 = vmatprep.subr.bf16.mxu0 0
    %4122 = vmatpush1.bf16.msra.mxu0 0
    %4123 = vmatprep.subr.bf16.mxu0 0
    %4124 = vmatpush1.bf16.msra.mxu0 0
    %4125 = vmatprep.subr.bf16.mxu0 0
    %4126 = vmatpush1.bf16.msra.mxu0 0
    %4127 = vmatprep.subr.bf16.mxu0 0
    %4128 = vmatpush1.bf16.msra.mxu0 0
    %4129 = vmatprep.subr.bf16.mxu0 0
    %4130 = vmatpush1.bf16.msra.mxu0 0
    %4131 = vmatprep.subr.bf16.mxu0 0
    %4132 = vmatpush1.bf16.msra.mxu0 0
    %4133 = vmatprep.subr.bf16.mxu0 0
    %4134 = vmatpush1.bf16.msra.mxu0 0
    %4135 = vmatprep.subr.bf16.mxu0 0
    %4136 = vmatpush1.bf16.msra.mxu0 0
    %4137 = vmatprep.mubr.bf16.mxu0 0
    %4138 = vmatmul.mubr.bf16.gmra.mrb[0].mxu0 %v4103
    %v4139 = vpop.f32.mrb[0].mxu0
    %v4140 = vadd.f32 %v4089, %v4139
    %v4141 = vpop.f32.mrb[0].mxu0
    %v4142 = vpop.f32.mrb[0].mxu0
    %v4143 = vadd.f32 %v4089, %v4142
    %v4144 = vpop.f32.mrb[0].mxu0
    %4145 = vdwg.mxu0
    %v4146 = vadd.f32 %v3521, %v4140
    %v4147 = vadd.f32 %v3522, %v4143
    %v4148 = vsel %vm103, %v4146, 0.0
    %4149 = vadd.xlane.f32.xlu0 %v4148
    %v4150 = vpop.xlane.xlu0 %4149
    %v4151 = vsel %vm103, %v4147, 0.0
    %4152 = vadd.xlane.f32.xlu0 %v4151
    %v4153 = vpop.xlane.xlu0 %4152
    %v4154 = vmul.f32 %v4150, %v724
    %v4155 = vmul.f32 %v4153, %v724
    %v4156 = vsub.f32 %v4146, %v4154
    %v4157 = vsub.f32 %v4147, %v4155
    %v4158 = vmul.f32 %v4156, %v4156
    %v4159 = vmul.f32 %v4157, %v4157
    %v4160 = vsel %vm103, %v4158, 0.0
    %4161 = vadd.xlane.f32.xlu0 %v4160
    %v4162 = vpop.xlane.xlu0 %4161
    %v4163 = vsel %vm103, %v4159, 0.0
    %4164 = vadd.xlane.f32.xlu0 %v4163
    %v4165 = vpop.xlane.xlu0 %4164
    %v4166 = vmul.f32 %v4162, %v724
    %v4167 = vmul.f32 %v4165, %v724
    %v4168 = vadd.f32 %v4166, 1e-12
    %v4169 = vadd.f32 %v4167, 1e-12
    %v4170 = vrsqrt.pop %v4168
    %v4171 = vrsqrt.pop %v4169
    %v4172 = vmul.f32 %v4156, %v4170
    %v4173 = vmul.f32 %v4157, %v4171
    %v4174 = vlaneseq
    %v4175 = vshrl.u32 %v4174, 7
    %v4176 = vsub.s32 4, %v4175
    %v4177 = vrot.slane %v3524, %v4176
    %v4178 = vmul.f32 %v4172, %v4177
    %v4179 = vmul.f32 %v4173, %v4177
    %v4180 = vlaneseq
    %v4181 = vshrl.u32 %v4180, 7
    %v4182 = vsub.s32 5, %v4181
    %v4183 = vrot.slane %v3524, %v4182
    %v4184 = vadd.f32 %v4178, %v4183
    %v4185 = vadd.f32 %v4179, %v4183
    %s4186 = scalar_lea.vmem %s14, 8
    %v4187 = vld [vmem:[%s4186] sm:$0x3f]
    %s4188 = scalar_lea.vmem %s11, 16
    %v4189 = vld [vmem:[%s4188] sm:$0xf]
    %v4190 = vld [vmem:[%s4188 + $0x4] sm:$0xf]
    %v4191 = vld [vmem:[%s4188 + $0x8] sm:$0xf]
    %v4192 = vld [vmem:[%s4188 + $0xc] sm:$0xf]
    %s4193 = scalar_lea.vmem %s12, 16
    %v4194 = vld [vmem:[%s4193] sm:$0xf]
    %v4195 = vld [vmem:[%s4193 + $0x4] sm:$0xf]
    %v4196 = vld [vmem:[%s4193 + $0x8] sm:$0xf]
    %v4197 = vld [vmem:[%s4193 + $0xc] sm:$0xf]
    %s4198 = scalar_lea.vmem %s13, 16
    %v4199 = vld [vmem:[%s4198] sm:$0xf]
    %v4200 = vld [vmem:[%s4198 + $0x4] sm:$0xf]
    %v4201 = vld [vmem:[%s4198 + $0x8] sm:$0xf]
    %v4202 = vld [vmem:[%s4198 + $0xc] sm:$0xf]
    %v4203 = vpack.c.bf16 %v4185, %v4184
    %v4204 = vlaneseq
    %v4205 = vshrl.u32 %v4204, 7
    %v4206 = vsub.s32 0, %v4205
    %v4207 = vrot.slane %v4187, %v4206
    %v4212 = vunpack.c.l.b16 %v4189
    %v4213 = vunpack.c.l.b16 %v4190
    %v4214 = vunpack.c.l.b16 %v4191
    %v4215 = vunpack.c.l.b16 %v4192
    %v4216 = vpack.c.b16 %v4213, %v4212
    %v4217 = vpack.c.b16 %v4215, %v4214
    %v4221 = vsel %vm103, %v4203, 0
    %4223 = vmatprep.subr.bf16.mxu0 0
    %4224 = vmatpush1.bf16.msra.mxu0 %v4216
    %4225 = vmatprep.subr.bf16.mxu0 0
    %4226 = vmatpush1.bf16.msra.mxu0 %v4217
    %4227 = vmatprep.subr.bf16.mxu0 0
    %4228 = vmatpush1.bf16.msra.mxu0 0
    %4229 = vmatprep.subr.bf16.mxu0 0
    %4230 = vmatpush1.bf16.msra.mxu0 0
    %4231 = vmatprep.subr.bf16.mxu0 0
    %4232 = vmatpush1.bf16.msra.mxu0 0
    %4233 = vmatprep.subr.bf16.mxu0 0
    %4234 = vmatpush1.bf16.msra.mxu0 0
    %4235 = vmatprep.subr.bf16.mxu0 0
    %4236 = vmatpush1.bf16.msra.mxu0 0
    %4237 = vmatprep.subr.bf16.mxu0 0
    %4238 = vmatpush1.bf16.msra.mxu0 0
    %4239 = vmatprep.subr.bf16.mxu0 0
    %4240 = vmatpush1.bf16.msra.mxu0 0
    %4241 = vmatprep.subr.bf16.mxu0 0
    %4242 = vmatpush1.bf16.msra.mxu0 0
    %4243 = vmatprep.subr.bf16.mxu0 0
    %4244 = vmatpush1.bf16.msra.mxu0 0
    %4245 = vmatprep.subr.bf16.mxu0 0
    %4246 = vmatpush1.bf16.msra.mxu0 0
    %4247 = vmatprep.subr.bf16.mxu0 0
    %4248 = vmatpush1.bf16.msra.mxu0 0
    %4249 = vmatprep.subr.bf16.mxu0 0
    %4250 = vmatpush1.bf16.msra.mxu0 0
    %4251 = vmatprep.subr.bf16.mxu0 0
    %4252 = vmatpush1.bf16.msra.mxu0 0
    %4253 = vmatprep.subr.bf16.mxu0 0
    %4254 = vmatpush1.bf16.msra.mxu0 0
    %4255 = vmatprep.mubr.bf16.mxu0 0
    %4256 = vmatmul.mubr.bf16.gmra.mrb[0].mxu0 %v4221
    %v4257 = vpop.f32.mrb[0].mxu0
    %v4258 = vadd.f32 %v4207, %v4257
    %v4259 = vpop.f32.mrb[0].mxu0
    %v4260 = vpop.f32.mrb[0].mxu0
    %v4261 = vadd.f32 %v4207, %v4260
    %v4262 = vpop.f32.mrb[0].mxu0
    %4263 = vdwg.mxu0
    %v4268 = vunpack.c.l.b16 %v4194
    %v4269 = vunpack.c.l.b16 %v4195
    %v4270 = vunpack.c.l.b16 %v4196
    %v4271 = vunpack.c.l.b16 %v4197
    %v4272 = vpack.c.b16 %v4269, %v4268
    %v4273 = vpack.c.b16 %v4271, %v4270
    %4276 = vmatprep.subr.bf16.mxu0 0
    %4277 = vmatpush1.bf16.msra.mxu0 %v4272
    %4278 = vmatprep.subr.bf16.mxu0 0
    %4279 = vmatpush1.bf16.msra.mxu0 %v4273
    %4280 = vmatprep.subr.bf16.mxu0 0
    %4281 = vmatpush1.bf16.msra.mxu0 0
    %4282 = vmatprep.subr.bf16.mxu0 0
    %4283 = vmatpush1.bf16.msra.mxu0 0
    %4284 = vmatprep.subr.bf16.mxu0 0
    %4285 = vmatpush1.bf16.msra.mxu0 0
    %4286 = vmatprep.subr.bf16.mxu0 0
    %4287 = vmatpush1.bf16.msra.mxu0 0
    %4288 = vmatprep.subr.bf16.mxu0 0
    %4289 = vmatpush1.bf16.msra.mxu0 0
    %4290 = vmatprep.subr.bf16.mxu0 0
    %4291 = vmatpush1.bf16.msra.mxu0 0
    %4292 = vmatprep.subr.bf16.mxu0 0
    %4293 = vmatpush1.bf16.msra.mxu0 0
    %4294 = vmatprep.subr.bf16.mxu0 0
    %4295 = vmatpush1.bf16.msra.mxu0 0
    %4296 = vmatprep.subr.bf16.mxu0 0
    %4297 = vmatpush1.bf16.msra.mxu0 0
    %4298 = vmatprep.subr.bf16.mxu0 0
    %4299 = vmatpush1.bf16.msra.mxu0 0
    %4300 = vmatprep.subr.bf16.mxu0 0
    %4301 = vmatpush1.bf16.msra.mxu0 0
    %4302 = vmatprep.subr.bf16.mxu0 0
    %4303 = vmatpush1.bf16.msra.mxu0 0
    %4304 = vmatprep.subr.bf16.mxu0 0
    %4305 = vmatpush1.bf16.msra.mxu0 0
    %4306 = vmatprep.subr.bf16.mxu0 0
    %4307 = vmatpush1.bf16.msra.mxu0 0
    %4308 = vmatprep.mubr.bf16.mxu0 0
    %4309 = vmatmul.mubr.bf16.gmra.mrb[0].mxu0 %v2645
    %v4310 = vpop.f32.mrb[0].mxu0
    %v4311 = vadd.f32 0.0, %v4310
    %v4312 = vpop.f32.mrb[0].mxu0
    %v4313 = vpop.f32.mrb[0].mxu0
    %v4314 = vpop.f32.mrb[0].mxu0
    %4315 = vdwg.mxu0
    %v4316 = vlaneseq
    %v4317 = vshrl.u32 %v4316, 7
    %v4318 = vsub.s32 1, %v4317
    %v4319 = vrot.slane %v4187, %v4318
    %v4320 = vadd.f32 %v4311, %v4319
    %v4322 = vcombine.high %v4320, %v4320
    %v4324 = vlaneseq
    %v4325 = vshrl.u32 %v4324, 7
    %v4326 = vsub.s32 2, %v4325
    %v4327 = vrot.slane %v4187, %v4326
    %4329 = vrot.lane.b32.xlu0 %v4327, 32
    %v4330 = vpop.permute.xlu0 %4329
    %v4332 = vadd.f32 %v4311, %v4330
    %v4334 = vcombine.high %v4332, %v4332
    %v4336 = vpack.c.bf16 %v4258, %v4258
    %v4337 = vpack.c.bf16 %v4261, %v4261
    %v4338 = vpack.c.bf16 %v4320, %v4320
    %v4339 = vpack.c.bf16 %v4322, %v4322
    %v4341 = vsel %vm181, %v4336, 0
    %v4344 = vsel %vm181, %v4338, 0
    %4346 = vmatprep.subr.bf16.mxu0 0
    %4347 = vmatpush1.bf16.xpose.msra.mxu0 %v4344
    %4348 = vmatprep.subr.bf16.mxu0 0
    %4349 = vmatpush1.bf16.xpose.msra.mxu0 0
    %4350 = vmatprep.subr.bf16.mxu0 0
    %4351 = vmatpush1.bf16.xpose.msra.mxu0 0
    %4352 = vmatprep.subr.bf16.mxu0 0
    %4353 = vmatpush1.bf16.xpose.msra.mxu0 0
    %4354 = vmatprep.subr.bf16.mxu0 0
    %4355 = vmatpush1.bf16.xpose.msra.mxu0 0
    %4356 = vmatprep.subr.bf16.mxu0 0
    %4357 = vmatpush1.bf16.xpose.msra.mxu0 0
    %4358 = vmatprep.subr.bf16.mxu0 0
    %4359 = vmatpush1.bf16.xpose.msra.mxu0 0
    %4360 = vmatprep.subr.bf16.mxu0 0
    %4361 = vmatpush1.bf16.xpose.msra.mxu0 0
    %4362 = vmatprep.subr.bf16.mxu0 0
    %4363 = vmatpush1.bf16.xpose.msra.mxu0 0
    %4364 = vmatprep.subr.bf16.mxu0 0
    %4365 = vmatpush1.bf16.xpose.msra.mxu0 0
    %4366 = vmatprep.subr.bf16.mxu0 0
    %4367 = vmatpush1.bf16.xpose.msra.mxu0 0
    %4368 = vmatprep.subr.bf16.mxu0 0
    %4369 = vmatpush1.bf16.xpose.msra.mxu0 0
    %4370 = vmatprep.subr.bf16.mxu0 0
    %4371 = vmatpush1.bf16.xpose.msra.mxu0 0
    %4372 = vmatprep.subr.bf16.mxu0 0
    %4373 = vmatpush1.bf16.xpose.msra.mxu0 0
    %4374 = vmatprep.subr.bf16.mxu0 0
    %4375 = vmatpush1.bf16.xpose.msra.mxu0 0
    %4376 = vmatprep.subr.bf16.mxu0 0
    %4377 = vmatpush1.bf16.xpose.msra.mxu0 0
    %4378 = vmatprep.mubr.bf16.mxu0 0
    %4379 = vmatmul.mubr.bf16.gmra.mrb[0].mxu0 %v4341
    %v4380 = vpop.f32.mrb[0].mxu0
    %v4381 = vadd.f32 0.0, %v4380
    %v4382 = vpop.f32.mrb[0].mxu0
    %v4383 = vpop.f32.mrb[0].mxu0
    %v4384 = vpop.f32.mrb[0].mxu0
    %4385 = vdwg.mxu0
    %v4387 = vsel %vm181, %v4337, 0
    %v4390 = vsel %vm181, %v4339, 0
    %4392 = vmatprep.subr.bf16.mxu0 0
    %4393 = vmatpush1.bf16.xpose.msra.mxu0 %v4390
    %4394 = vmatprep.subr.bf16.mxu0 0
    %4395 = vmatpush1.bf16.xpose.msra.mxu0 0
    %4396 = vmatprep.subr.bf16.mxu0 0
    %4397 = vmatpush1.bf16.xpose.msra.mxu0 0
    %4398 = vmatprep.subr.bf16.mxu0 0
    %4399 = vmatpush1.bf16.xpose.msra.mxu0 0
    %4400 = vmatprep.subr.bf16.mxu0 0
    %4401 = vmatpush1.bf16.xpose.msra.mxu0 0
    %4402 = vmatprep.subr.bf16.mxu0 0
    %4403 = vmatpush1.bf16.xpose.msra.mxu0 0
    %4404 = vmatprep.subr.bf16.mxu0 0
    %4405 = vmatpush1.bf16.xpose.msra.mxu0 0
    %4406 = vmatprep.subr.bf16.mxu0 0
    %4407 = vmatpush1.bf16.xpose.msra.mxu0 0
    %4408 = vmatprep.subr.bf16.mxu0 0
    %4409 = vmatpush1.bf16.xpose.msra.mxu0 0
    %4410 = vmatprep.subr.bf16.mxu0 0
    %4411 = vmatpush1.bf16.xpose.msra.mxu0 0
    %4412 = vmatprep.subr.bf16.mxu0 0
    %4413 = vmatpush1.bf16.xpose.msra.mxu0 0
    %4414 = vmatprep.subr.bf16.mxu0 0
    %4415 = vmatpush1.bf16.xpose.msra.mxu0 0
    %4416 = vmatprep.subr.bf16.mxu0 0
    %4417 = vmatpush1.bf16.xpose.msra.mxu0 0
    %4418 = vmatprep.subr.bf16.mxu0 0
    %4419 = vmatpush1.bf16.xpose.msra.mxu0 0
    %4420 = vmatprep.subr.bf16.mxu0 0
    %4421 = vmatpush1.bf16.xpose.msra.mxu0 0
    %4422 = vmatprep.subr.bf16.mxu0 0
    %4423 = vmatpush1.bf16.xpose.msra.mxu0 0
    %4424 = vmatprep.mubr.bf16.mxu0 0
    %4425 = vmatmul.mubr.bf16.gmra.mrb[0].mxu0 %v4387
    %v4426 = vpop.f32.mrb[0].mxu0
    %v4427 = vadd.f32 0.0, %v4426
    %v4428 = vpop.f32.mrb[0].mxu0
    %v4429 = vpop.f32.mrb[0].mxu0
    %v4430 = vpop.f32.mrb[0].mxu0
    %4431 = vdwg.mxu0
    %v4432 = vmul.f32 %v4381, 0.25
    %v4433 = vmul.f32 %v4427, 0.25
    %v4434 = vadd.f32 %v4432, %v2810
    %v4435 = vadd.f32 %v4433, %v2814
    %v4436 = vsel %vm2819, %v4434, -inf
    %4437 = vmax.xlane.f32.xlu0 %v4436
    %v4438 = vpop.xlane.xlu0 %4437
    %v4439 = vsel %vm2819, %v4435, -inf
    %4440 = vmax.xlane.f32.xlu0 %v4439
    %v4441 = vpop.xlane.xlu0 %4440
    %v4442 = vsub.f32 %v4434, %v4438
    %v4443 = vsub.f32 %v4435, %v4441
    %v4444 = vmul.f32 %v4442, 1.442695
    %v4445 = vpow.pop %v4444
    %v4446 = vmul.f32 %v4443, 1.442695
    %v4447 = vpow.pop %v4446
    %v4448 = vsel %vm2819, %v4445, 0.0
    %4449 = vadd.xlane.f32.xlu0 %v4448
    %v4450 = vpop.xlane.xlu0 %4449
    %v4451 = vsel %vm2819, %v4447, 0.0
    %4452 = vadd.xlane.f32.xlu0 %v4451
    %v4453 = vpop.xlane.xlu0 %4452
    %v4454 = vrcp.pop %v4450
    %v4455 = vrcp.pop %v4453
    %v4456 = vmul.f32 %v4445, %v4454
    %v4457 = vmul.f32 %v4447, %v4455
    %v4458 = vpack.c.bf16 %v4456, %v4456
    %v4459 = vpack.c.bf16 %v4457, %v4457
    %v4460 = vpack.c.bf16 %v4332, %v4332
    %v4461 = vpack.c.bf16 %v4334, %v4334
    %4463 = vrot.lane.b32.xlu0 %v4460, 96
    %v4464 = vpop.permute.xlu0 %4463
    %v4466 = vsel %vm2819, %v4458, 0
    %v4469 = vsel %vm2852, %v4464, 0
    %4471 = vmatprep.subr.bf16.mxu0 0
    %4472 = vmatpush1.bf16.msra.mxu0 %v4469
    %4473 = vmatprep.subr.bf16.mxu0 0
    %4474 = vmatpush1.bf16.msra.mxu0 0
    %4475 = vmatprep.subr.bf16.mxu0 0
    %4476 = vmatpush1.bf16.msra.mxu0 0
    %4477 = vmatprep.subr.bf16.mxu0 0
    %4478 = vmatpush1.bf16.msra.mxu0 0
    %4479 = vmatprep.subr.bf16.mxu0 0
    %4480 = vmatpush1.bf16.msra.mxu0 0
    %4481 = vmatprep.subr.bf16.mxu0 0
    %4482 = vmatpush1.bf16.msra.mxu0 0
    %4483 = vmatprep.subr.bf16.mxu0 0
    %4484 = vmatpush1.bf16.msra.mxu0 0
    %4485 = vmatprep.subr.bf16.mxu0 0
    %4486 = vmatpush1.bf16.msra.mxu0 0
    %4487 = vmatprep.subr.bf16.mxu0 0
    %4488 = vmatpush1.bf16.msra.mxu0 0
    %4489 = vmatprep.subr.bf16.mxu0 0
    %4490 = vmatpush1.bf16.msra.mxu0 0
    %4491 = vmatprep.subr.bf16.mxu0 0
    %4492 = vmatpush1.bf16.msra.mxu0 0
    %4493 = vmatprep.subr.bf16.mxu0 0
    %4494 = vmatpush1.bf16.msra.mxu0 0
    %4495 = vmatprep.subr.bf16.mxu0 0
    %4496 = vmatpush1.bf16.msra.mxu0 0
    %4497 = vmatprep.subr.bf16.mxu0 0
    %4498 = vmatpush1.bf16.msra.mxu0 0
    %4499 = vmatprep.subr.bf16.mxu0 0
    %4500 = vmatpush1.bf16.msra.mxu0 0
    %4501 = vmatprep.subr.bf16.mxu0 0
    %4502 = vmatpush1.bf16.msra.mxu0 0
    %4503 = vmatprep.mubr.bf16.mxu0 0
    %4504 = vmatmul.mubr.bf16.gmra.mrb[0].mxu0 %v4466
    %v4505 = vpop.f32.mrb[0].mxu0
    %v4506 = vadd.f32 0.0, %v4505
    %v4507 = vpop.f32.mrb[0].mxu0
    %v4508 = vpop.f32.mrb[0].mxu0
    %v4509 = vpop.f32.mrb[0].mxu0
    %4510 = vdwg.mxu0
    %4512 = vrot.lane.b32.xlu0 %v4461, 96
    %v4513 = vpop.permute.xlu0 %4512
    %v4515 = vsel %vm2819, %v4459, 0
    %v4518 = vsel %vm2852, %v4513, 0
    %4520 = vmatprep.subr.bf16.mxu0 0
    %4521 = vmatpush1.bf16.msra.mxu0 %v4518
    %4522 = vmatprep.subr.bf16.mxu0 0
    %4523 = vmatpush1.bf16.msra.mxu0 0
    %4524 = vmatprep.subr.bf16.mxu0 0
    %4525 = vmatpush1.bf16.msra.mxu0 0
    %4526 = vmatprep.subr.bf16.mxu0 0
    %4527 = vmatpush1.bf16.msra.mxu0 0
    %4528 = vmatprep.subr.bf16.mxu0 0
    %4529 = vmatpush1.bf16.msra.mxu0 0
    %4530 = vmatprep.subr.bf16.mxu0 0
    %4531 = vmatpush1.bf16.msra.mxu0 0
    %4532 = vmatprep.subr.bf16.mxu0 0
    %4533 = vmatpush1.bf16.msra.mxu0 0
    %4534 = vmatprep.subr.bf16.mxu0 0
    %4535 = vmatpush1.bf16.msra.mxu0 0
    %4536 = vmatprep.subr.bf16.mxu0 0
    %4537 = vmatpush1.bf16.msra.mxu0 0
    %4538 = vmatprep.subr.bf16.mxu0 0
    %4539 = vmatpush1.bf16.msra.mxu0 0
    %4540 = vmatprep.subr.bf16.mxu0 0
    %4541 = vmatpush1.bf16.msra.mxu0 0
    %4542 = vmatprep.subr.bf16.mxu0 0
    %4543 = vmatpush1.bf16.msra.mxu0 0
    %4544 = vmatprep.subr.bf16.mxu0 0
    %4545 = vmatpush1.bf16.msra.mxu0 0
    %4546 = vmatprep.subr.bf16.mxu0 0
    %4547 = vmatpush1.bf16.msra.mxu0 0
    %4548 = vmatprep.subr.bf16.mxu0 0
    %4549 = vmatpush1.bf16.msra.mxu0 0
    %4550 = vmatprep.subr.bf16.mxu0 0
    %4551 = vmatpush1.bf16.msra.mxu0 0
    %4552 = vmatprep.mubr.bf16.mxu0 0
    %4553 = vmatmul.mubr.bf16.gmra.mrb[0].mxu0 %v4515
    %v4554 = vpop.f32.mrb[0].mxu0
    %v4555 = vadd.f32 0.0, %v4554
    %v4556 = vpop.f32.mrb[0].mxu0
    %v4557 = vpop.f32.mrb[0].mxu0
    %v4558 = vpop.f32.mrb[0].mxu0
    %4559 = vdwg.mxu0
    %4561 = vrot.lane.b32.xlu0 %v4336, 112
    %v4562 = vpop.permute.xlu0 %4561
    %4564 = vrot.lane.b32.xlu0 %v4338, 112
    %v4565 = vpop.permute.xlu0 %4564
    %v4567 = vsel %vm181, %v4562, 0
    %v4570 = vsel %vm181, %v4565, 0
    %4572 = vmatprep.subr.bf16.mxu0 0
    %4573 = vmatpush1.bf16.xpose.msra.mxu0 %v4570
    %4574 = vmatprep.subr.bf16.mxu0 0
    %4575 = vmatpush1.bf16.xpose.msra.mxu0 0
    %4576 = vmatprep.subr.bf16.mxu0 0
    %4577 = vmatpush1.bf16.xpose.msra.mxu0 0
    %4578 = vmatprep.subr.bf16.mxu0 0
    %4579 = vmatpush1.bf16.xpose.msra.mxu0 0
    %4580 = vmatprep.subr.bf16.mxu0 0
    %4581 = vmatpush1.bf16.xpose.msra.mxu0 0
    %4582 = vmatprep.subr.bf16.mxu0 0
    %4583 = vmatpush1.bf16.xpose.msra.mxu0 0
    %4584 = vmatprep.subr.bf16.mxu0 0
    %4585 = vmatpush1.bf16.xpose.msra.mxu0 0
    %4586 = vmatprep.subr.bf16.mxu0 0
    %4587 = vmatpush1.bf16.xpose.msra.mxu0 0
    %4588 = vmatprep.subr.bf16.mxu0 0
    %4589 = vmatpush1.bf16.xpose.msra.mxu0 0
    %4590 = vmatprep.subr.bf16.mxu0 0
    %4591 = vmatpush1.bf16.xpose.msra.mxu0 0
    %4592 = vmatprep.subr.bf16.mxu0 0
    %4593 = vmatpush1.bf16.xpose.msra.mxu0 0
    %4594 = vmatprep.subr.bf16.mxu0 0
    %4595 = vmatpush1.bf16.xpose.msra.mxu0 0
    %4596 = vmatprep.subr.bf16.mxu0 0
    %4597 = vmatpush1.bf16.xpose.msra.mxu0 0
    %4598 = vmatprep.subr.bf16.mxu0 0
    %4599 = vmatpush1.bf16.xpose.msra.mxu0 0
    %4600 = vmatprep.subr.bf16.mxu0 0
    %4601 = vmatpush1.bf16.xpose.msra.mxu0 0
    %4602 = vmatprep.subr.bf16.mxu0 0
    %4603 = vmatpush1.bf16.xpose.msra.mxu0 0
    %4604 = vmatprep.mubr.bf16.mxu0 0
    %4605 = vmatmul.mubr.bf16.gmra.mrb[0].mxu0 %v4567
    %v4606 = vpop.f32.mrb[0].mxu0
    %v4607 = vadd.f32 0.0, %v4606
    %v4608 = vpop.f32.mrb[0].mxu0
    %v4609 = vpop.f32.mrb[0].mxu0
    %v4610 = vpop.f32.mrb[0].mxu0
    %4611 = vdwg.mxu0
    %4613 = vrot.lane.b32.xlu0 %v4337, 112
    %v4614 = vpop.permute.xlu0 %4613
    %4616 = vrot.lane.b32.xlu0 %v4339, 112
    %v4617 = vpop.permute.xlu0 %4616
    %v4619 = vsel %vm181, %v4614, 0
    %v4622 = vsel %vm181, %v4617, 0
    %4624 = vmatprep.subr.bf16.mxu0 0
    %4625 = vmatpush1.bf16.xpose.msra.mxu0 %v4622
    %4626 = vmatprep.subr.bf16.mxu0 0
    %4627 = vmatpush1.bf16.xpose.msra.mxu0 0
    %4628 = vmatprep.subr.bf16.mxu0 0
    %4629 = vmatpush1.bf16.xpose.msra.mxu0 0
    %4630 = vmatprep.subr.bf16.mxu0 0
    %4631 = vmatpush1.bf16.xpose.msra.mxu0 0
    %4632 = vmatprep.subr.bf16.mxu0 0
    %4633 = vmatpush1.bf16.xpose.msra.mxu0 0
    %4634 = vmatprep.subr.bf16.mxu0 0
    %4635 = vmatpush1.bf16.xpose.msra.mxu0 0
    %4636 = vmatprep.subr.bf16.mxu0 0
    %4637 = vmatpush1.bf16.xpose.msra.mxu0 0
    %4638 = vmatprep.subr.bf16.mxu0 0
    %4639 = vmatpush1.bf16.xpose.msra.mxu0 0
    %4640 = vmatprep.subr.bf16.mxu0 0
    %4641 = vmatpush1.bf16.xpose.msra.mxu0 0
    %4642 = vmatprep.subr.bf16.mxu0 0
    %4643 = vmatpush1.bf16.xpose.msra.mxu0 0
    %4644 = vmatprep.subr.bf16.mxu0 0
    %4645 = vmatpush1.bf16.xpose.msra.mxu0 0
    %4646 = vmatprep.subr.bf16.mxu0 0
    %4647 = vmatpush1.bf16.xpose.msra.mxu0 0
    %4648 = vmatprep.subr.bf16.mxu0 0
    %4649 = vmatpush1.bf16.xpose.msra.mxu0 0
    %4650 = vmatprep.subr.bf16.mxu0 0
    %4651 = vmatpush1.bf16.xpose.msra.mxu0 0
    %4652 = vmatprep.subr.bf16.mxu0 0
    %4653 = vmatpush1.bf16.xpose.msra.mxu0 0
    %4654 = vmatprep.subr.bf16.mxu0 0
    %4655 = vmatpush1.bf16.xpose.msra.mxu0 0
    %4656 = vmatprep.mubr.bf16.mxu0 0
    %4657 = vmatmul.mubr.bf16.gmra.mrb[0].mxu0 %v4619
    %v4658 = vpop.f32.mrb[0].mxu0
    %v4659 = vadd.f32 0.0, %v4658
    %v4660 = vpop.f32.mrb[0].mxu0
    %v4661 = vpop.f32.mrb[0].mxu0
    %v4662 = vpop.f32.mrb[0].mxu0
    %4663 = vdwg.mxu0
    %v4664 = vmul.f32 %v4607, 0.25
    %v4665 = vmul.f32 %v4659, 0.25
    %v4666 = vadd.f32 %v4664, %v2810
    %v4667 = vadd.f32 %v4665, %v2814
    %v4668 = vsel %vm2819, %v4666, -inf
    %4669 = vmax.xlane.f32.xlu0 %v4668
    %v4670 = vpop.xlane.xlu0 %4669
    %v4671 = vsel %vm2819, %v4667, -inf
    %4672 = vmax.xlane.f32.xlu0 %v4671
    %v4673 = vpop.xlane.xlu0 %4672
    %v4674 = vsub.f32 %v4666, %v4670
    %v4675 = vsub.f32 %v4667, %v4673
    %v4676 = vmul.f32 %v4674, 1.442695
    %v4677 = vpow.pop %v4676
    %v4678 = vmul.f32 %v4675, 1.442695
    %v4679 = vpow.pop %v4678
    %v4680 = vsel %vm2819, %v4677, 0.0
    %4681 = vadd.xlane.f32.xlu0 %v4680
    %v4682 = vpop.xlane.xlu0 %4681
    %v4683 = vsel %vm2819, %v4679, 0.0
    %4684 = vadd.xlane.f32.xlu0 %v4683
    %v4685 = vpop.xlane.xlu0 %4684
    %v4686 = vrcp.pop %v4682
    %v4687 = vrcp.pop %v4685
    %v4688 = vmul.f32 %v4677, %v4686
    %v4689 = vmul.f32 %v4679, %v4687
    %v4690 = vpack.c.bf16 %v4688, %v4688
    %v4691 = vpack.c.bf16 %v4689, %v4689
    %4692 = vrot.lane.b32.xlu0 %v4460, 80
    %v4693 = vpop.permute.xlu0 %4692
    %v4695 = vsel %vm2819, %v4690, 0
    %v4698 = vsel %vm2852, %v4693, 0
    %4700 = vmatprep.subr.bf16.mxu0 0
    %4701 = vmatpush1.bf16.msra.mxu0 %v4698
    %4702 = vmatprep.subr.bf16.mxu0 0
    %4703 = vmatpush1.bf16.msra.mxu0 0
    %4704 = vmatprep.subr.bf16.mxu0 0
    %4705 = vmatpush1.bf16.msra.mxu0 0
    %4706 = vmatprep.subr.bf16.mxu0 0
    %4707 = vmatpush1.bf16.msra.mxu0 0
    %4708 = vmatprep.subr.bf16.mxu0 0
    %4709 = vmatpush1.bf16.msra.mxu0 0
    %4710 = vmatprep.subr.bf16.mxu0 0
    %4711 = vmatpush1.bf16.msra.mxu0 0
    %4712 = vmatprep.subr.bf16.mxu0 0
    %4713 = vmatpush1.bf16.msra.mxu0 0
    %4714 = vmatprep.subr.bf16.mxu0 0
    %4715 = vmatpush1.bf16.msra.mxu0 0
    %4716 = vmatprep.subr.bf16.mxu0 0
    %4717 = vmatpush1.bf16.msra.mxu0 0
    %4718 = vmatprep.subr.bf16.mxu0 0
    %4719 = vmatpush1.bf16.msra.mxu0 0
    %4720 = vmatprep.subr.bf16.mxu0 0
    %4721 = vmatpush1.bf16.msra.mxu0 0
    %4722 = vmatprep.subr.bf16.mxu0 0
    %4723 = vmatpush1.bf16.msra.mxu0 0
    %4724 = vmatprep.subr.bf16.mxu0 0
    %4725 = vmatpush1.bf16.msra.mxu0 0
    %4726 = vmatprep.subr.bf16.mxu0 0
    %4727 = vmatpush1.bf16.msra.mxu0 0
    %4728 = vmatprep.subr.bf16.mxu0 0
    %4729 = vmatpush1.bf16.msra.mxu0 0
    %4730 = vmatprep.subr.bf16.mxu0 0
    %4731 = vmatpush1.bf16.msra.mxu0 0
    %4732 = vmatprep.mubr.bf16.mxu0 0
    %4733 = vmatmul.mubr.bf16.gmra.mrb[0].mxu0 %v4695
    %v4734 = vpop.f32.mrb[0].mxu0
    %v4735 = vadd.f32 0.0, %v4734
    %v4736 = vpop.f32.mrb[0].mxu0
    %v4737 = vpop.f32.mrb[0].mxu0
    %v4738 = vpop.f32.mrb[0].mxu0
    %4739 = vdwg.mxu0
    %4740 = vrot.lane.b32.xlu0 %v4461, 80
    %v4741 = vpop.permute.xlu0 %4740
    %v4743 = vsel %vm2819, %v4691, 0
    %v4746 = vsel %vm2852, %v4741, 0
    %4748 = vmatprep.subr.bf16.mxu0 0
    %4749 = vmatpush1.bf16.msra.mxu0 %v4746
    %4750 = vmatprep.subr.bf16.mxu0 0
    %4751 = vmatpush1.bf16.msra.mxu0 0
    %4752 = vmatprep.subr.bf16.mxu0 0
    %4753 = vmatpush1.bf16.msra.mxu0 0
    %4754 = vmatprep.subr.bf16.mxu0 0
    %4755 = vmatpush1.bf16.msra.mxu0 0
    %4756 = vmatprep.subr.bf16.mxu0 0
    %4757 = vmatpush1.bf16.msra.mxu0 0
    %4758 = vmatprep.subr.bf16.mxu0 0
    %4759 = vmatpush1.bf16.msra.mxu0 0
    %4760 = vmatprep.subr.bf16.mxu0 0
    %4761 = vmatpush1.bf16.msra.mxu0 0
    %4762 = vmatprep.subr.bf16.mxu0 0
    %4763 = vmatpush1.bf16.msra.mxu0 0
    %4764 = vmatprep.subr.bf16.mxu0 0
    %4765 = vmatpush1.bf16.msra.mxu0 0
    %4766 = vmatprep.subr.bf16.mxu0 0
    %4767 = vmatpush1.bf16.msra.mxu0 0
    %4768 = vmatprep.subr.bf16.mxu0 0
    %4769 = vmatpush1.bf16.msra.mxu0 0
    %4770 = vmatprep.subr.bf16.mxu0 0
    %4771 = vmatpush1.bf16.msra.mxu0 0
    %4772 = vmatprep.subr.bf16.mxu0 0
    %4773 = vmatpush1.bf16.msra.mxu0 0
    %4774 = vmatprep.subr.bf16.mxu0 0
    %4775 = vmatpush1.bf16.msra.mxu0 0
    %4776 = vmatprep.subr.bf16.mxu0 0
    %4777 = vmatpush1.bf16.msra.mxu0 0
    %4778 = vmatprep.subr.bf16.mxu0 0
    %4779 = vmatpush1.bf16.msra.mxu0 0
    %4780 = vmatprep.mubr.bf16.mxu0 0
    %4781 = vmatmul.mubr.bf16.gmra.mrb[0].mxu0 %v4743
    %v4782 = vpop.f32.mrb[0].mxu0
    %v4783 = vadd.f32 0.0, %v4782
    %v4784 = vpop.f32.mrb[0].mxu0
    %v4785 = vpop.f32.mrb[0].mxu0
    %v4786 = vpop.f32.mrb[0].mxu0
    %4787 = vdwg.mxu0
    %4790 = vrot.lane.b32.xlu0 %v4735, 16
    %v4791 = vpop.permute.xlu0 %4790
    %4792 = vrot.lane.b32.xlu0 %v4783, 16
    %v4793 = vpop.permute.xlu0 %4792
    %v4796 = vsel %vm181, %v4506, %v4791
    %v4797 = vsel %vm181, %v4555, %v4793
    %v4798 = vpack.c.bf16 %v4797, %v4796
    %v4799 = vlaneseq
    %v4800 = vshrl.u32 %v4799, 7
    %v4801 = vsub.s32 3, %v4800
    %v4802 = vrot.slane %v4187, %v4801
    %v4807 = vunpack.c.l.b16 %v4199
    %v4808 = vunpack.c.l.b16 %v4200
    %v4809 = vunpack.c.l.b16 %v4201
    %v4810 = vunpack.c.l.b16 %v4202
    %v4811 = vpack.c.b16 %v4808, %v4807
    %v4812 = vpack.c.b16 %v4810, %v4809
    %v4816 = vsel %vm103, %v4798, 0
    %4818 = vmatprep.subr.bf16.mxu0 0
    %4819 = vmatpush1.bf16.msra.mxu0 %v4811
    %4820 = vmatprep.subr.bf16.mxu0 0
    %4821 = vmatpush1.bf16.msra.mxu0 %v4812
    %4822 = vmatprep.subr.bf16.mxu0 0
    %4823 = vmatpush1.bf16.msra.mxu0 0
    %4824 = vmatprep.subr.bf16.mxu0 0
    %4825 = vmatpush1.bf16.msra.mxu0 0
    %4826 = vmatprep.subr.bf16.mxu0 0
    %4827 = vmatpush1.bf16.msra.mxu0 0
    %4828 = vmatprep.subr.bf16.mxu0 0
    %4829 = vmatpush1.bf16.msra.mxu0 0
    %4830 = vmatprep.subr.bf16.mxu0 0
    %4831 = vmatpush1.bf16.msra.mxu0 0
    %4832 = vmatprep.subr.bf16.mxu0 0
    %4833 = vmatpush1.bf16.msra.mxu0 0
    %4834 = vmatprep.subr.bf16.mxu0 0
    %4835 = vmatpush1.bf16.msra.mxu0 0
    %4836 = vmatprep.subr.bf16.mxu0 0
    %4837 = vmatpush1.bf16.msra.mxu0 0
    %4838 = vmatprep.subr.bf16.mxu0 0
    %4839 = vmatpush1.bf16.msra.mxu0 0
    %4840 = vmatprep.subr.bf16.mxu0 0
    %4841 = vmatpush1.bf16.msra.mxu0 0
    %4842 = vmatprep.subr.bf16.mxu0 0
    %4843 = vmatpush1.bf16.msra.mxu0 0
    %4844 = vmatprep.subr.bf16.mxu0 0
    %4845 = vmatpush1.bf16.msra.mxu0 0
    %4846 = vmatprep.subr.bf16.mxu0 0
    %4847 = vmatpush1.bf16.msra.mxu0 0
    %4848 = vmatprep.subr.bf16.mxu0 0
    %4849 = vmatpush1.bf16.msra.mxu0 0
    %4850 = vmatprep.mubr.bf16.mxu0 0
    %4851 = vmatmul.mubr.bf16.gmra.mrb[0].mxu0 %v4816
    %v4852 = vpop.f32.mrb[0].mxu0
    %v4853 = vadd.f32 %v4802, %v4852
    %v4854 = vpop.f32.mrb[0].mxu0
    %v4855 = vpop.f32.mrb[0].mxu0
    %v4856 = vadd.f32 %v4802, %v4855
    %v4857 = vpop.f32.mrb[0].mxu0
    %4858 = vdwg.mxu0
    %v4859 = vadd.f32 %v4184, %v4853
    %v4860 = vadd.f32 %v4185, %v4856
    %v4861 = vsel %vm103, %v4859, 0.0
    %4862 = vadd.xlane.f32.xlu0 %v4861
    %v4863 = vpop.xlane.xlu0 %4862
    %v4864 = vsel %vm103, %v4860, 0.0
    %4865 = vadd.xlane.f32.xlu0 %v4864
    %v4866 = vpop.xlane.xlu0 %4865
    %v4867 = vmul.f32 %v4863, %v724
    %v4868 = vmul.f32 %v4866, %v724
    %v4869 = vsub.f32 %v4859, %v4867
    %v4870 = vsub.f32 %v4860, %v4868
    %v4871 = vmul.f32 %v4869, %v4869
    %v4872 = vmul.f32 %v4870, %v4870
    %v4873 = vsel %vm103, %v4871, 0.0
    %4874 = vadd.xlane.f32.xlu0 %v4873
    %v4875 = vpop.xlane.xlu0 %4874
    %v4876 = vsel %vm103, %v4872, 0.0
    %4877 = vadd.xlane.f32.xlu0 %v4876
    %v4878 = vpop.xlane.xlu0 %4877
    %v4879 = vmul.f32 %v4875, %v724
    %v4880 = vmul.f32 %v4878, %v724
    %v4881 = vadd.f32 %v4879, 1e-12
    %v4882 = vadd.f32 %v4880, 1e-12
    %v4883 = vrsqrt.pop %v4881
    %v4884 = vrsqrt.pop %v4882
    %v4885 = vmul.f32 %v4869, %v4883
    %v4886 = vmul.f32 %v4870, %v4884
    %v4887 = vlaneseq
    %v4888 = vshrl.u32 %v4887, 7
    %v4889 = vsub.s32 4, %v4888
    %v4890 = vrot.slane %v4187, %v4889
    %v4891 = vmul.f32 %v4885, %v4890
    %v4892 = vmul.f32 %v4886, %v4890
    %v4893 = vlaneseq
    %v4894 = vshrl.u32 %v4893, 7
    %v4895 = vsub.s32 5, %v4894
    %v4896 = vrot.slane %v4187, %v4895
    %v4897 = vadd.f32 %v4891, %v4896
    %v4898 = vadd.f32 %v4892, %v4896
    %s4899 = scalar_lea.vmem %s7, 48
    %v4900 = vld [vmem:[%s4899] sm:$0xf]
    %v4901 = vld [vmem:[%s4899 + $0x4] sm:$0xf]
    %v4902 = vld [vmem:[%s4899 + $0x8] sm:$0xf]
    %v4903 = vld [vmem:[%s4899 + $0xc] sm:$0xf]
    %s4904 = scalar_lea.vmem %s8, 3
    %v4905 = vld [vmem:[%s4904] sm:$0x1]
    %s4906 = scalar_lea.vmem %s9, 192
    %v4907 = vld [vmem:[%s4906] sm:$0xf]
    %v4908 = vld [vmem:[%s4906 + $0x4] sm:$0xf]
    %v4909 = vld [vmem:[%s4906 + $0x8] sm:$0xf]
    %v4910 = vld [vmem:[%s4906 + $0xc] sm:$0xf]
    %v4911 = vld [vmem:[%s4906 + $0x10] sm:$0xf]
    %v4912 = vld [vmem:[%s4906 + $0x14] sm:$0xf]
    %v4913 = vld [vmem:[%s4906 + $0x18] sm:$0xf]
    %v4914 = vld [vmem:[%s4906 + $0x1c] sm:$0xf]
    %v4915 = vld [vmem:[%s4906 + $0x20] sm:$0xf]
    %v4916 = vld [vmem:[%s4906 + $0x24] sm:$0xf]
    %v4917 = vld [vmem:[%s4906 + $0x28] sm:$0xf]
    %v4918 = vld [vmem:[%s4906 + $0x2c] sm:$0xf]
    %v4919 = vld [vmem:[%s4906 + $0x30] sm:$0xf]
    %v4920 = vld [vmem:[%s4906 + $0x34] sm:$0xf]
    %v4921 = vld [vmem:[%s4906 + $0x38] sm:$0xf]
    %v4922 = vld [vmem:[%s4906 + $0x3c] sm:$0xf]
    %v4923 = vpack.c.bf16 %v4898, %v4897
    %v4925 = vlaneseq
    %v4926 = vshrl.u32 %v4925, 7
    %v4927 = vsub.s32 0, %v4926
    %v4928 = vrot.slane %v4905, %v4927
    %v4934 = vunpack.c.l.b16 %v4900
    %v4935 = vunpack.c.l.b16 %v4901
    %v4936 = vunpack.c.l.b16 %v4902
    %v4937 = vunpack.c.l.b16 %v4903
    %v4938 = vpack.c.b16 %v4935, %v4934
    %v4939 = vpack.c.b16 %v4937, %v4936
    %v4943 = vsel %vm103, %v4923, 0
    %4945 = vmatprep.subr.bf16.mxu0 0
    %4946 = vmatpush1.bf16.msra.mxu0 %v4938
    %4947 = vmatprep.subr.bf16.mxu0 0
    %4948 = vmatpush1.bf16.msra.mxu0 %v4939
    %4949 = vmatprep.subr.bf16.mxu0 0
    %4950 = vmatpush1.bf16.msra.mxu0 0
    %4951 = vmatprep.subr.bf16.mxu0 0
    %4952 = vmatpush1.bf16.msra.mxu0 0
    %4953 = vmatprep.subr.bf16.mxu0 0
    %4954 = vmatpush1.bf16.msra.mxu0 0
    %4955 = vmatprep.subr.bf16.mxu0 0
    %4956 = vmatpush1.bf16.msra.mxu0 0
    %4957 = vmatprep.subr.bf16.mxu0 0
    %4958 = vmatpush1.bf16.msra.mxu0 0
    %4959 = vmatprep.subr.bf16.mxu0 0
    %4960 = vmatpush1.bf16.msra.mxu0 0
    %4961 = vmatprep.subr.bf16.mxu0 0
    %4962 = vmatpush1.bf16.msra.mxu0 0
    %4963 = vmatprep.subr.bf16.mxu0 0
    %4964 = vmatpush1.bf16.msra.mxu0 0
    %4965 = vmatprep.subr.bf16.mxu0 0
    %4966 = vmatpush1.bf16.msra.mxu0 0
    %4967 = vmatprep.subr.bf16.mxu0 0
    %4968 = vmatpush1.bf16.msra.mxu0 0
    %4969 = vmatprep.subr.bf16.mxu0 0
    %4970 = vmatpush1.bf16.msra.mxu0 0
    %4971 = vmatprep.subr.bf16.mxu0 0
    %4972 = vmatpush1.bf16.msra.mxu0 0
    %4973 = vmatprep.subr.bf16.mxu0 0
    %4974 = vmatpush1.bf16.msra.mxu0 0
    %4975 = vmatprep.subr.bf16.mxu0 0
    %4976 = vmatpush1.bf16.msra.mxu0 0
    %4977 = vmatprep.mubr.bf16.mxu0 0
    %4978 = vmatmul.mubr.bf16.gmra.mrb[0].mxu0 %v4943
    %v4979 = vpop.f32.mrb[0].mxu0
    %v4980 = vadd.f32 %v4928, %v4979
    %v4981 = vpop.f32.mrb[0].mxu0
    %v4982 = vpop.f32.mrb[0].mxu0
    %v4983 = vadd.f32 %v4928, %v4982
    %v4984 = vpop.f32.mrb[0].mxu0
    %4985 = vdwg.mxu0
    %v4986 = vmul.f32 %v4980, %v4980
    %v4987 = vmul.f32 %v4983, %v4983
    %v4988 = vmul.f32 %v4980, %v4986
    %v4989 = vmul.f32 %v4983, %v4987
    %v4990 = vmul.f32 %v4988, 0.044715
    %v4991 = vmul.f32 %v4989, 0.044715
    %v4992 = vadd.f32 %v4980, %v4990
    %v4993 = vadd.f32 %v4983, %v4991
    %v4994 = vmul.f32 %v4992, 0.7978846
    %v4995 = vmul.f32 %v4993, 0.7978846
    %v4996 = vtanh.pop %v4994
    %v4997 = vtanh.pop %v4995
    %v4998 = vadd.f32 %v4996, 1.0
    %v4999 = vadd.f32 %v4997, 1.0
    %v5000 = vmul.f32 %v4998, 0.5
    %v5001 = vmul.f32 %v4999, 0.5
    %v5002 = vmul.f32 %v4980, %v5000
    %v5003 = vmul.f32 %v4983, %v5001
    %v5004 = vpack.c.bf16 %v5003, %v5002
    %v5005 = vlaneseq
    %v5006 = vshrl.u32 %v5005, 7
    %v5007 = vsub.s32 6, %v5006
    %v5008 = vrot.slane %v3524, %v5007
    %v5025 = vunpack.c.l.b16 %v4907
    %v5026 = vunpack.c.l.b16 %v4908
    %v5027 = vunpack.c.l.b16 %v4909
    %v5028 = vunpack.c.l.b16 %v4910
    %v5029 = vunpack.c.l.b16 %v4911
    %v5030 = vunpack.c.l.b16 %v4912
    %v5031 = vunpack.c.l.b16 %v4913
    %v5032 = vunpack.c.l.b16 %v4914
    %v5033 = vunpack.c.l.b16 %v4915
    %v5034 = vunpack.c.l.b16 %v4916
    %v5035 = vunpack.c.l.b16 %v4917
    %v5036 = vunpack.c.l.b16 %v4918
    %v5037 = vunpack.c.l.b16 %v4919
    %v5038 = vunpack.c.l.b16 %v4920
    %v5039 = vunpack.c.l.b16 %v4921
    %v5040 = vunpack.c.l.b16 %v4922
    %v5041 = vpack.c.b16 %v5026, %v5025
    %v5042 = vpack.c.b16 %v5028, %v5027
    %v5043 = vpack.c.b16 %v5030, %v5029
    %v5044 = vpack.c.b16 %v5032, %v5031
    %v5045 = vpack.c.b16 %v5034, %v5033
    %v5046 = vpack.c.b16 %v5036, %v5035
    %v5047 = vpack.c.b16 %v5038, %v5037
    %v5048 = vpack.c.b16 %v5040, %v5039
    %5057 = vmatprep.subr.bf16.mxu0 0
    %5058 = vmatpush1.bf16.msra.mxu0 %v5041
    %5059 = vmatprep.subr.bf16.mxu0 0
    %5060 = vmatpush1.bf16.msra.mxu0 %v5042
    %5061 = vmatprep.subr.bf16.mxu0 0
    %5062 = vmatpush1.bf16.msra.mxu0 %v5043
    %5063 = vmatprep.subr.bf16.mxu0 0
    %5064 = vmatpush1.bf16.msra.mxu0 %v5044
    %5065 = vmatprep.subr.bf16.mxu0 0
    %5066 = vmatpush1.bf16.msra.mxu0 %v5045
    %5067 = vmatprep.subr.bf16.mxu0 0
    %5068 = vmatpush1.bf16.msra.mxu0 %v5046
    %5069 = vmatprep.subr.bf16.mxu0 0
    %5070 = vmatpush1.bf16.msra.mxu0 %v5047
    %5071 = vmatprep.subr.bf16.mxu0 0
    %5072 = vmatpush1.bf16.msra.mxu0 %v5048
    %5073 = vmatprep.subr.bf16.mxu0 0
    %5074 = vmatpush1.bf16.msra.mxu0 0
    %5075 = vmatprep.subr.bf16.mxu0 0
    %5076 = vmatpush1.bf16.msra.mxu0 0
    %5077 = vmatprep.subr.bf16.mxu0 0
    %5078 = vmatpush1.bf16.msra.mxu0 0
    %5079 = vmatprep.subr.bf16.mxu0 0
    %5080 = vmatpush1.bf16.msra.mxu0 0
    %5081 = vmatprep.subr.bf16.mxu0 0
    %5082 = vmatpush1.bf16.msra.mxu0 0
    %5083 = vmatprep.subr.bf16.mxu0 0
    %5084 = vmatpush1.bf16.msra.mxu0 0
    %5085 = vmatprep.subr.bf16.mxu0 0
    %5086 = vmatpush1.bf16.msra.mxu0 0
    %5087 = vmatprep.subr.bf16.mxu0 0
    %5088 = vmatpush1.bf16.msra.mxu0 0
    %5089 = vmatprep.mubr.bf16.mxu0 0
    %5090 = vmatmul.mubr.bf16.gmra.mrb[0].mxu0 %v5004
    %v5091 = vpop.f32.mrb[0].mxu0
    %v5092 = vadd.f32 %v5008, %v5091
    %v5093 = vpop.f32.mrb[0].mxu0
    %v5094 = vpop.f32.mrb[0].mxu0
    %v5095 = vadd.f32 %v5008, %v5094
    %v5096 = vpop.f32.mrb[0].mxu0
    %5097 = vdwg.mxu0
    %v5098 = vadd.f32 %v4897, %v5092
    %v5099 = vadd.f32 %v4898, %v5095
    %v5100 = vsel %vm103, %v5098, 0.0
    %5101 = vadd.xlane.f32.xlu0 %v5100
    %v5102 = vpop.xlane.xlu0 %5101
    %v5103 = vsel %vm103, %v5099, 0.0
    %5104 = vadd.xlane.f32.xlu0 %v5103
    %v5105 = vpop.xlane.xlu0 %5104
    %v5106 = vmul.f32 %v5102, %v724
    %v5107 = vmul.f32 %v5105, %v724
    %v5108 = vsub.f32 %v5098, %v5106
    %v5109 = vsub.f32 %v5099, %v5107
    %v5110 = vmul.f32 %v5108, %v5108
    %v5111 = vmul.f32 %v5109, %v5109
    %v5112 = vsel %vm103, %v5110, 0.0
    %5113 = vadd.xlane.f32.xlu0 %v5112
    %v5114 = vpop.xlane.xlu0 %5113
    %v5115 = vsel %vm103, %v5111, 0.0
    %5116 = vadd.xlane.f32.xlu0 %v5115
    %v5117 = vpop.xlane.xlu0 %5116
    %v5118 = vmul.f32 %v5114, %v724
    %v5119 = vmul.f32 %v5117, %v724
    %v5120 = vadd.f32 %v5118, 1e-12
    %v5121 = vadd.f32 %v5119, 1e-12
    %v5122 = vrsqrt.pop %v5120
    %v5123 = vrsqrt.pop %v5121
    %v5124 = vmul.f32 %v5108, %v5122
    %v5125 = vmul.f32 %v5109, %v5123
    %v5126 = vlaneseq
    %v5127 = vshrl.u32 %v5126, 7
    %v5128 = vsub.s32 7, %v5127
    %v5129 = vrot.slane %v3524, %v5128
    %v5130 = vmul.f32 %v5124, %v5129
    %v5131 = vmul.f32 %v5125, %v5129
    %v5132 = vlaneseq
    %v5133 = vshrl.u32 %v5132, 7
    %v5134 = vsub.s32 0, %v5133
    %v5135 = vrot.slane %v3525, %v5134
    %v5136 = vadd.f32 %v5130, %v5135
    %v5137 = vadd.f32 %v5131, %v5135
    %v5138 = vld [vmem:[%s15] sm:$0xff]
    %v5139 = vld [vmem:[%s15 + $0x8] sm:$0xff]
    %v5140 = vld [vmem:[%s15 + $0x10] sm:$0xff]
    %v5141 = vld [vmem:[%s15 + $0x18] sm:$0xff]
    %v5142 = vld [vmem:[%s15 + $0x20] sm:$0x1]
    %v5143 = vlaneseq
    %v5144 = vshrl.u32 %v5143, 7
    %vm5145 = vcmp.eq.s32.totalorder %v5144, 0
    %s5146 = sld [smem:[#allocation2]]
    %v5147 = vstv %s5146
    %v5148 = vsel %vm5145, %v5147, 0
    %vm5149 = vcmp.eq.s32.totalorder %v5144, 1
    %s5150 = sld [smem:[#allocation2 + $0x1]]
    %v5151 = vstv %s5150
    %v5152 = vsel %vm5149, %v5151, %v5148
    %v5153 = vsel %vm103, %v5136, 0.0
    %v5154 = vrot.slane %v5153, 4
    %v5155 = vadd.f32 %v5153, %v5154
    %v5156 = vrot.slane %v5155, 2
    %v5157 = vadd.f32 %v5155, %v5156
    %v5158 = vrot.slane %v5157, 1
    %v5159 = vadd.f32 %v5157, %v5158
    %v5160 = vsel %vm103, %v5137, 0.0
    %v5161 = vrot.slane %v5160, 4
    %v5162 = vadd.f32 %v5160, %v5161
    %v5163 = vrot.slane %v5162, 2
    %v5164 = vadd.f32 %v5162, %v5163
    %v5165 = vrot.slane %v5164, 1
    %v5166 = vadd.f32 %v5164, %v5165
    %v5167 = vrcp.pop 8.0
    %v5168 = vmul.f32 %v5159, %v5167
    %v5169 = vmul.f32 %v5166, %v5167
    %v5170 = vpack.c.bf16 %v5168, %v5168
    %v5171 = vpack.c.bf16 %v5169, %v5169
    %v5172 = vpack.c.bf16 %v5139, %v5138
    %v5173 = vpack.c.bf16 %v5141, %v5140
    %v5174 = vlaneseq
    %v5175 = vshrl.u32 %v5174, 7
    %v5176 = vsub.s32 0, %v5175
    %v5177 = vrot.slane %v5142, %v5176
    %v5180 = vunpack.c.l.b16 %v5170
    %v5181 = vunpack.c.l.b16 %v5171
    %vm5182 = vcmask 1041409
    %v5183 = vsel %vm5182, %v5181, %v5180
    %v5184 = vpack.c.b16 %v5183, %v5183
    %v5186 = vsel %vm103, %v5184, 0
    %5188 = vmatprep.subr.bf16.mxu0 0
    %5189 = vmatpush1.bf16.msra.mxu0 %v5172
    %5190 = vmatprep.subr.bf16.mxu0 0
    %5191 = vmatpush1.bf16.msra.mxu0 %v5173
    %5192 = vmatprep.subr.bf16.mxu0 0
    %5193 = vmatpush1.bf16.msra.mxu0 0
    %5194 = vmatprep.subr.bf16.mxu0 0
    %5195 = vmatpush1.bf16.msra.mxu0 0
    %5196 = vmatprep.subr.bf16.mxu0 0
    %5197 = vmatpush1.bf16.msra.mxu0 0
    %5198 = vmatprep.subr.bf16.mxu0 0
    %5199 = vmatpush1.bf16.msra.mxu0 0
    %5200 = vmatprep.subr.bf16.mxu0 0
    %5201 = vmatpush1.bf16.msra.mxu0 0
    %5202 = vmatprep.subr.bf16.mxu0 0
    %5203 = vmatpush1.bf16.msra.mxu0 0
    %5204 = vmatprep.subr.bf16.mxu0 0
    %5205 = vmatpush1.bf16.msra.mxu0 0
    %5206 = vmatprep.subr.bf16.mxu0 0
    %5207 = vmatpush1.bf16.msra.mxu0 0
    %5208 = vmatprep.subr.bf16.mxu0 0
    %5209 = vmatpush1.bf16.msra.mxu0 0
    %5210 = vmatprep.subr.bf16.mxu0 0
    %5211 = vmatpush1.bf16.msra.mxu0 0
    %5212 = vmatprep.subr.bf16.mxu0 0
    %5213 = vmatpush1.bf16.msra.mxu0 0
    %5214 = vmatprep.subr.bf16.mxu0 0
    %5215 = vmatpush1.bf16.msra.mxu0 0
    %5216 = vmatprep.subr.bf16.mxu0 0
    %5217 = vmatpush1.bf16.msra.mxu0 0
    %5218 = vmatprep.subr.bf16.mxu0 0
    %5219 = vmatpush1.bf16.msra.mxu0 0
    %5220 = vmatprep.mubr.bf16.mxu0 0
    %5221 = vmatmul.mubr.bf16.gmra.mrb[0].mxu0 %v5186
    %v5222 = vpop.f32.mrb[0].mxu0
    %v5223 = vadd.f32 %v5177, %v5222
    %v5224 = vpop.f32.mrb[0].mxu0
    %v5225 = vpop.f32.mrb[0].mxu0
    %v5226 = vpop.f32.mrb[0].mxu0
    %5227 = vdwg.mxu0
    %v5228 = vlaneseq
    %v5229 = vand.u32 %v5228, 127
    %vm5230 = vcmp.eq.s32.totalorder %v5229, %v5152
    %v5231 = vsel %vm5230, 1, 0
    %v5232 = vcvt.s32.f32 %v5231
    %vm5233 = vcmask 74752
    %v5234 = vsel %vm5233, %v5223, -inf
    %5235 = vmax.xlane.f32.xlu0 %v5234
    %v5236 = vpop.xlane.xlu0 %5235
    %v5237 = vsub.f32 %v5223, %v5236
    %v5238 = vmul.f32 %v5237, 1.442695
    %v5239 = vpow.pop %v5238
    %v5240 = vsel %vm5233, %v5239, 0.0
    %5241 = vadd.xlane.f32.xlu0 %v5240
    %v5242 = vpop.xlane.xlu0 %5241
    %v5243 = vlog2.pop %v5242
    %v5244 = vmul.f32 %v5243, 0.6931472
    %v5245 = vadd.f32 %v5244, %v5236
    %v5246 = vmul.f32 %v5223, %v5232
    %v5247 = vsel %vm5233, %v5246, 0.0
    %5248 = vadd.xlane.f32.xlu0 %v5247
    %v5249 = vpop.xlane.xlu0 %5248
    %v5250 = vsub.f32 %v5245, %v5249
    %vm5251 = vcmask 1024
    %v5252 = vsel %vm5251, %v5250, 0.0
    %5253 = vadd.xlane.f32.xlu0 %v5252
    %v5254 = vpop.xlane.xlu0 %5253
    %v5255 = vrot.slane %v5254, 4
    %v5256 = vadd.f32 %v5254, %v5255
    %v5257 = vrot.slane %v5256, 2
    %v5258 = vadd.f32 %v5256, %v5257
    %v5259 = vrot.slane %v5258, 1
    %v5260 = vadd.f32 %v5258, %v5259
    %s5261 = vtos %v5260
    %v5262 = vrcp.pop 2.0
    %s5263 = vtos %v5262
    %s5264 = smul.f32 %s5261, %s5263
    %vm5265 = vcmp.eq.f32.partialorder %v5223, %v5236
    %v5266 = vsel %vm5265, %v5229, 10
    %v5267 = vsel %vm5233, %v5266, 2147483647
    %v5268 = vand.u32 %v5267, 65535
    %v5269 = vshra.s32 %v5267, 16
    %v5270 = vcvt.s32.f32 %v5268
    %v5271 = vcvt.s32.f32 %v5269
    %5272 = vmin.xlane.f32.xlu0 %v5271
    %v5273 = vpop.xlane.xlu0 %5272
    %vm5274 = vcmp.eq.f32.partialorder %v5271, %v5273
    %v5275 = vsel %vm5274, %v5270, inf
    %5276 = vmin.xlane.f32.xlu0 %v5275
    %v5277 = vpop.xlane.xlu0 %5276
    %v5278 = vcvt.f32.s32 %v5277
    %v5279 = vcvt.f32.s32 %v5273
    %v5280 = vshll.u32 %v5279, 16
    %v5281 = vadd.s32 %v5280, %v5278
    %vm5282 = vcmp.eq.s32.totalorder %v5281, %v5152
    %v5283 = vsel %vm5282, 1, 0
    %v5284 = vcvt.s32.f32 %v5283
    %v5285 = vsel %vm5251, %v5284, 0.0
    %5286 = vadd.xlane.f32.xlu0 %v5285
    %v5287 = vpop.xlane.xlu0 %5286
    %v5288 = vrot.slane %v5287, 4
    %v5289 = vadd.f32 %v5287, %v5288
    %v5290 = vrot.slane %v5289, 2
    %v5291 = vadd.f32 %v5289, %v5290
    %v5292 = vrot.slane %v5291, 1
    %v5293 = vadd.f32 %v5291, %v5292
    %s5294 = vtos %v5293
    %v5295 = vrcp.pop 2.0
    %s5296 = vtos %v5295
    %s5297 = smul.f32 %s5294, %s5296
    %vm5298 = vcmp.eq.s32.totalorder %v5229, 0
    %v5299 = vcvt.s32.f32 %v5281
    %vm5300 = vcmp.eq.s32.totalorder %v5229, 1
    %vm5301 = vcmp.eq.s32.totalorder %v5229, 2
    %v5302 = vstv %s5297
    %v5303 = vsel %vm5301, %v5302, 0.0
    %v5304 = vstv %s5264
    %v5305 = vsel %vm5300, %v5304, %v5303
    %v5306 = vsel %vm5298, %v5299, %v5305
    %5307 = vst [vmem:[%s16] sm:$0x3] %v5306
    // Predicated region
    $region70: #{albef_forward.1} parent=1 // pred_check
      _
    $region71: #{albef_forward.1} parent=1 // pred_check_branch
      %5309 = sbr.rel (0) target = $region73
    $region72: #{albef_forward.1} parent=1 // pred_region
      _
    $region73: #{albef_forward.1} parent=1 // pred_fallthru
      _
    // Predicated region
    $region74: #{albef_forward.1} parent=1 // pred_check
      _
    $region75: #{albef_forward.1} parent=1 // pred_check_branch
      %5311 = sbr.rel (0) target = $region77
    $region76: #{albef_forward.1} parent=1 // pred_region
      _
    $region77: #{albef_forward.1} parent=1 // pred_fallthru
      _
    %5312 = vsyncpa [#allocation3], 1

</llo_original>
